<compile_context>
chip_gen: v7x
topology: tpu7x:2x2x1
jax: 0.10.0
libtpu: 0.0.40
codegen_flags: <defaults>
</compile_context>

<pallas_src>
import math
from functools import partial

import numpy as np
import jax
import jax.numpy as jnp
from jax import lax
from jax.experimental import pallas as pl
from jax.experimental.pallas import tpu as pltpu


def _triple(v):
    return (v, v, v) if isinstance(v, int) else tuple(v)


def _round_up(v, m):
    return ((v + m - 1) // m) * m


def _convt_fused_kernel(x_ref, w_ref, b_ref, o_ref, p_ref, *,
                        c_in, kd, kh, kw, wd_dil, od_tile, l2,
                        min_value, inv_divisor):
    # x_ref : (1, C_in, Dd_pad, LWpad)   bf16  whole dilated sample, VMEM resident
    # w_ref : (C_out, K)                 bf16  K ordered (ic, b, c, a) [depth innermost]
    # b_ref : (C_out, 1)                 f32
    # o_ref : (1, C_out, od_tile*L2)     f32   lane-dense (depth, h*w) flattened last
    # p_ref : (K, od_tile*L2)            bf16  VMEM scratch (im2col tile, never in HBM)
    od0 = pl.multiple_of(pl.program_id(1) * od_tile, od_tile)
    d_win = od_tile + kd - 1

    # ---- Patch assembly ---------------------------------------------------
    # One big load per input channel; the 9 (b,c) lane-shifted views are static
    # slices of that value (reused across all od_sub); each scratch write
    # covers kd contiguous rows (depth taps grouped innermost in K).
    for ic in range(c_in):
        slab = x_ref[0, ic, pl.ds(od0, d_win), :]          # (d_win, LWpad) value
        for b in range(kh):
            for c in range(kw):
                off2 = b * wd_dil + c
                sh = slab[:, off2:off2 + l2]               # (d_win, L2) static lane slice
                row0 = ((ic * kh + b) * kw + c) * kd
                for s in range(od_tile):
                    p_ref[row0:row0 + kd, s * l2:(s + 1) * l2] = sh[s:s + kd, :]

    # ---- One MXU matmul for the whole depth tile + fused epilogue ---------
    acc = jnp.dot(w_ref[...], p_ref[...],
                  preferred_element_type=jnp.float32)      # (C_out, od_tile*L2)
    acc = acc + b_ref[...]
    acc = jnp.maximum(acc, min_value) * inv_divisor
    o_ref[0, :, :] = acc.astype(o_ref.dtype)               # single aligned slab store


def _convt3d_clamp_div_forward(x, w_mat, bias_col, *, kernel_size, stride,
                               padding, min_value, divisor, od_tile=8):
    N, C_in, D, H, W = x.shape
    kd, kh, kw = kernel_size
    sd, sh_, sw = stride
    pd, ph, pw = padding
    C_out, K = w_mat.shape

    Do = max(0, (D - 1) * sd + kd - 2 * pd)
    Ho = max(0, (H - 1) * sh_ + kh - 2 * ph)
    Wo = max(0, (W - 1) * sw + kw - 2 * pw)

    Do_pad = _round_up(max(Do, 1), od_tile)
    Dd_pad = Do_pad + kd - 1
    Hd = Ho + kh - 1
    Wd = Wo + kw - 1

    L2 = _round_up(max(Ho * Wd, 1), 128)                    # lane-dense compute width
    LWpad = _round_up(L2 + (kh - 1) * Wd + (kw - 1), 128)   # headroom for static taps
    # In-bounds invariants for every static/dynamic slice in the kernel
    # (VMEM reads have no runtime bounds check) — keep these asserted.
    assert LWpad >= L2 + (kh - 1) * Wd + (kw - 1)
    assert Dd_pad == Do_pad + kd - 1
    assert Hd * Wd <= LWpad

    # ConvTranspose == stride-1 correlation of the zero-dilated, edge-padded
    # input with the flipped kernel. Cast to bf16 BEFORE dilation; fold the
    # trailing lane pad into the same lax.pad via extra high rows on H.
    extra_h = -(-max(LWpad - Hd * Wd, 0) // Wd)             # ceil division
    lo_d, lo_h, lo_w = kd - 1 - pd, kh - 1 - ph, kw - 1 - pw
    x_b = x.astype(jnp.bfloat16)
    x_dil = lax.pad(x_b, jnp.zeros((), jnp.bfloat16),
                    ((0, 0, 0), (0, 0, 0),
                     (lo_d, lo_d + (Do_pad - Do), sd - 1),
                     (lo_h, lo_h + extra_h, sh_ - 1),
                     (lo_w, lo_w, sw - 1)))
    x2 = x_dil.reshape(N, C_in, Dd_pad, (Hd + extra_h) * Wd)[..., :LWpad]

    grid = (N, Do_pad // od_tile)

    # Explicit VMEM budget (double-buffered in/out blocks + scratch + weights).
    vmem_est = (2 * C_in * Dd_pad * LWpad * 2               # x block, bf16, 2 buffers
                + 2 * C_out * od_tile * L2 * 4              # out block, f32, 2 buffers
                + K * od_tile * L2 * 2                      # im2col scratch, bf16
                + 2 * (C_out * K * 2 + C_out * 4)           # weights + bias
                + (1 << 20))                                # slack
    vmem_limit = int(min(max(2 * vmem_est, 32 << 20), 128 << 20))

    out = pl.pallas_call(
        partial(_convt_fused_kernel, c_in=C_in, kd=kd, kh=kh, kw=kw,
                wd_dil=Wd, od_tile=od_tile, l2=L2,
                min_value=float(min_value), inv_divisor=float(1.0 / divisor)),
        out_shape=jax.ShapeDtypeStruct((N, C_out, Do_pad * L2), jnp.float32),
        grid_spec=pltpu.PrefetchScalarGridSpec(
            num_scalar_prefetch=0,
            grid=grid,
            in_specs=[
                # whole dilated sample resident in VMEM (block == full last dims);
                # block index is constant over t, so it is fetched once per n.
                pl.BlockSpec((1, C_in, Dd_pad, LWpad), lambda n, t: (n, 0, 0, 0)),
                pl.BlockSpec((C_out, K), lambda n, t: (0, 0)),
                pl.BlockSpec((C_out, 1), lambda n, t: (0, 0)),
            ],
            out_specs=pl.BlockSpec((1, C_out, od_tile * L2),
                                   lambda n, t: (n, 0, t)),
            scratch_shapes=[pltpu.VMEM((K, od_tile * L2), jnp.bfloat16)],
        ),
        compiler_params=pltpu.CompilerParams(
            dimension_semantics=("parallel", "parallel"),
            vmem_limit_bytes=vmem_limit),
        cost_estimate=pl.CostEstimate(
            flops=2 * N * Do_pad * L2 * K * C_out,
            transcendentals=0,
            bytes_accessed=N * C_in * Dd_pad * LWpad * 2
                           + C_out * K * 2
                           + N * C_out * Do_pad * L2 * 4),
    )(x2, w_mat, bias_col)

    # Cheap reshapes/slices only (no transpose): flat (depth, h*w) -> NCDHW.
    out = out.reshape(N, C_out, Do_pad, L2)
    y = out[:, :, :Do, :Ho * Wd].reshape(N, C_out, Do, Ho, Wd)
    return y[:, :, :, :, :Wo]


class ModelNew:
    """JAX/Pallas equivalent of the PyTorch ModelNew:
    ConvTranspose3d -> clamp(min=min_value) -> divide(divisor)."""

    def __init__(self, in_channels, out_channels, kernel_size, stride, padding,
                 min_value, divisor, *, key):
        self.in_channels = in_channels
        self.out_channels = out_channels
        self.kernel_size = _triple(kernel_size)
        self.stride = _triple(stride)
        self.padding = _triple(padding)
        self.min_value = float(min_value)
        self.divisor = float(divisor)

        kd, kh, kw = self.kernel_size
        fan_in = in_channels * kd * kh * kw
        fan_out = out_channels * kd * kh * kw
        std_dev = math.sqrt(2.0 / (fan_in + fan_out))
        # Same parameterization as the PyTorch module:
        # weight (C_in, C_out, kD, kH, kW), bias (C_out,)
        self.weight = (jax.random.normal(
            key, (in_channels, out_channels, kd, kh, kw), jnp.float32) * std_dev)
        self.bias = jnp.zeros((out_channels,), jnp.float32)

        # Hoisted, kernel-ready parameters: spatially flipped weight as a bf16
        # (C_out, K) matrix with K ordered (ic, b, c, a) — depth tap innermost
        # so the kernel can write kd-row slabs into the im2col scratch.
        wf = jnp.flip(self.weight, axis=(2, 3, 4))          # (C_in, C_out, kd, kh, kw)
        w_perm = jnp.transpose(wf, (1, 0, 3, 4, 2))         # (C_out, C_in, kh, kw, kd)
        self._w_mat = w_perm.reshape(
            out_channels, in_channels * kh * kw * kd).astype(jnp.bfloat16)
        self._bias_col = self.bias.reshape(out_channels, 1).astype(jnp.float32)

        self._forward = jax.jit(partial(
            _convt3d_clamp_div_forward,
            kernel_size=self.kernel_size, stride=self.stride,
            padding=self.padding, min_value=self.min_value,
            divisor=self.divisor))

    def __call__(self, x):
        # Note: operands are cast to bf16 (f32 accumulation), so numerics differ
        # slightly from a pure-f32 ConvTranspose3d (tolerance ~2e-2).
        return self._forward(x, self._w_mat, self._bias_col)


if __name__ == "__main__":
    key = jax.random.PRNGKey(0)
    k_x, k_w = jax.random.split(key)

    N, C_in, D, H, W = 2, 4, 8, 8, 8
    C_out = 8
    model = ModelNew(in_channels=C_in, out_channels=C_out, kernel_size=3,
                     stride=2, padding=1, min_value=-1.0, divisor=2.0, key=k_w)

    x = jax.random.normal(k_x, (N, C_in, D, H, W), jnp.float32)
    out = jax.block_until_ready(model(x))

    # Independent fp64 reference: direct scatter-add ConvTranspose3d
    # (not the same dilated/im2col formulation as the kernel).
    xn = np.asarray(x, np.float64)
    wn = np.asarray(model.weight, np.float64)
    kd, kh, kw = model.kernel_size
    sd, sh, sw = model.stride
    pd, ph, pw = model.padding
    Do = (D - 1) * sd + kd - 2 * pd
    Ho = (H - 1) * sh + kh - 2 * ph
    Wo = (W - 1) * sw + kw - 2 * pw
    full = np.zeros((N, C_out, (D - 1) * sd + kd, (H - 1) * sh + kh,
                     (W - 1) * sw + kw), np.float64)
    for a in range(kd):
        for b in range(kh):
            for c in range(kw):
                contrib = np.einsum('ncdhw,co->nodhw', xn, wn[:, :, a, b, c])
                full[:, :, a:a + (D - 1) * sd + 1:sd,
                     b:b + (H - 1) * sh + 1:sh,
                     c:c + (W - 1) * sw + 1:sw] += contrib
    ref = full[:, :, pd:pd + Do, ph:ph + Ho, pw:pw + Wo]
    ref = ref + np.asarray(model.bias, np.float64)[None, :, None, None, None]
    ref = np.maximum(ref, model.min_value) / model.divisor

    out_np = np.asarray(out, np.float64)
    assert out.shape == (N, C_out, Do, Ho, Wo), out.shape
    # bf16 operands with f32 accumulation -> loosened tolerance vs fp64 reference.
    assert np.allclose(out_np, ref, rtol=2e-2, atol=2e-2), \
        float(np.max(np.abs(out_np - ref)))

    print("KERNEL_OK")
</pallas_src>

<mosaic_0001>
module attributes {stable_mosaic.version = 11 : i64} {
  func.func @_convt_fused_kernel(%arg0: i32, %arg1: i32, %arg2: memref<1x4x18x384xbf16, #tpu.memory_space<vmem>>, %arg3: memref<8x108xbf16, #tpu.memory_space<vmem>>, %arg4: memref<8x1xf32, #tpu.memory_space<vmem>>, %arg5: memref<1x8x2048xf32, #tpu.memory_space<vmem>>, %arg6: memref<108x2048xbf16, #tpu.memory_space<vmem>>) attributes {dimension_semantics = [#tpu.dimension_semantics<parallel>, #tpu.dimension_semantics<parallel>], iteration_bounds = array<i64: 2, 2>, scalar_prefetch = 0 : i64, scratch_operands = 1 : i64, tpu.core_type = #tpu.core_type<tc>, window_params = [{transform_indices = @transform_0, window_bounds = array<i64: 1, 4, 18, 384>}, {pipeline_mode = #tpu.pipeline_mode<synchronous>, transform_indices = @transform_1, window_bounds = array<i64: 8, 108>}, {pipeline_mode = #tpu.pipeline_mode<synchronous>, transform_indices = @transform_2, window_bounds = array<i64: 8, 1>}, {transform_indices = @transform_3, window_bounds = array<i64: 1, 8, 2048>}]} {
    %c8_i32 = arith.constant 8 : i32
    %0 = arith.muli %arg1, %c8_i32 : i32
    %1 = tpu.assume_multiple %0, 8 : i32
    %c0 = arith.constant 0 : index
    %c0_0 = arith.constant 0 : index
    %2 = arith.index_cast %1 : i32 to index
    %c0_1 = arith.constant 0 : index
    %3 = vector.load %arg2[%c0, %c0_0, %2, %c0_1] : memref<1x4x18x384xbf16, #tpu.memory_space<vmem>>, vector<1x1x10x384xbf16>
    %4 = vector.shape_cast %3 : vector<1x1x10x384xbf16> to vector<10x384xbf16>
    %5 = vector.extract_strided_slice %4 {offsets = [0, 0], sizes = [10, 256], strides = [1, 1]} : vector<10x384xbf16> to vector<10x256xbf16>
    %6 = vector.extract_strided_slice %5 {offsets = [0, 0], sizes = [3, 256], strides = [1, 1]} : vector<10x256xbf16> to vector<3x256xbf16>
    %c0_2 = arith.constant 0 : index
    %c0_3 = arith.constant 0 : index
    %7 = vector.load %arg6[%c0_2, %c0_3] : memref<108x2048xbf16, #tpu.memory_space<vmem>>, vector<3x256xbf16>
    tpu.vector_store %arg6[%c0_2, %c0_3], %6 {strides = array<i32>} : memref<108x2048xbf16, #tpu.memory_space<vmem>>, vector<3x256xbf16>,
    %8 = vector.extract_strided_slice %5 {offsets = [1, 0], sizes = [3, 256], strides = [1, 1]} : vector<10x256xbf16> to vector<3x256xbf16>
    %c0_4 = arith.constant 0 : index
    %c256 = arith.constant 256 : index
    %9 = vector.load %arg6[%c0_4, %c256] : memref<108x2048xbf16, #tpu.memory_space<vmem>>, vector<3x256xbf16>
    tpu.vector_store %arg6[%c0_4, %c256], %8 {strides = array<i32>} : memref<108x2048xbf16, #tpu.memory_space<vmem>>, vector<3x256xbf16>,
    %10 = vector.extract_strided_slice %5 {offsets = [2, 0], sizes = [3, 256], strides = [1, 1]} : vector<10x256xbf16> to vector<3x256xbf16>
    %c0_5 = arith.constant 0 : index
    %c512 = arith.constant 512 : index
    %11 = vector.load %arg6[%c0_5, %c512] : memref<108x2048xbf16, #tpu.memory_space<vmem>>, vector<3x256xbf16>
    tpu.vector_store %arg6[%c0_5, %c512], %10 {strides = array<i32>} : memref<108x2048xbf16, #tpu.memory_space<vmem>>, vector<3x256xbf16>,
    %12 = vector.extract_strided_slice %5 {offsets = [3, 0], sizes = [3, 256], strides = [1, 1]} : vector<10x256xbf16> to vector<3x256xbf16>
    %c0_6 = arith.constant 0 : index
    %c768 = arith.constant 768 : index
    %13 = vector.load %arg6[%c0_6, %c768] : memref<108x2048xbf16, #tpu.memory_space<vmem>>, vector<3x256xbf16>
    tpu.vector_store %arg6[%c0_6, %c768], %12 {strides = array<i32>} : memref<108x2048xbf16, #tpu.memory_space<vmem>>, vector<3x256xbf16>,
    %14 = vector.extract_strided_slice %5 {offsets = [4, 0], sizes = [3, 256], strides = [1, 1]} : vector<10x256xbf16> to vector<3x256xbf16>
    %c0_7 = arith.constant 0 : index
    %c1024 = arith.constant 1024 : index
    %15 = vector.load %arg6[%c0_7, %c1024] : memref<108x2048xbf16, #tpu.memory_space<vmem>>, vector<3x256xbf16>
    tpu.vector_store %arg6[%c0_7, %c1024], %14 {strides = array<i32>} : memref<108x2048xbf16, #tpu.memory_space<vmem>>, vector<3x256xbf16>,
    %16 = vector.extract_strided_slice %5 {offsets = [5, 0], sizes = [3, 256], strides = [1, 1]} : vector<10x256xbf16> to vector<3x256xbf16>
    %c0_8 = arith.constant 0 : index
    %c1280 = arith.constant 1280 : index
    %17 = vector.load %arg6[%c0_8, %c1280] : memref<108x2048xbf16, #tpu.memory_space<vmem>>, vector<3x256xbf16>
    tpu.vector_store %arg6[%c0_8, %c1280], %16 {strides = array<i32>} : memref<108x2048xbf16, #tpu.memory_space<vmem>>, vector<3x256xbf16>,
    %18 = vector.extract_strided_slice %5 {offsets = [6, 0], sizes = [3, 256], strides = [1, 1]} : vector<10x256xbf16> to vector<3x256xbf16>
    %c0_9 = arith.constant 0 : index
    %c1536 = arith.constant 1536 : index
    %19 = vector.load %arg6[%c0_9, %c1536] : memref<108x2048xbf16, #tpu.memory_space<vmem>>, vector<3x256xbf16>
    tpu.vector_store %arg6[%c0_9, %c1536], %18 {strides = array<i32>} : memref<108x2048xbf16, #tpu.memory_space<vmem>>, vector<3x256xbf16>,
    %20 = vector.extract_strided_slice %5 {offsets = [7, 0], sizes = [3, 256], strides = [1, 1]} : vector<10x256xbf16> to vector<3x256xbf16>
    %c0_10 = arith.constant 0 : index
    %c1792 = arith.constant 1792 : index
    %21 = vector.load %arg6[%c0_10, %c1792] : memref<108x2048xbf16, #tpu.memory_space<vmem>>, vector<3x256xbf16>
    tpu.vector_store %arg6[%c0_10, %c1792], %20 {strides = array<i32>} : memref<108x2048xbf16, #tpu.memory_space<vmem>>, vector<3x256xbf16>,
    %22 = vector.extract_strided_slice %4 {offsets = [0, 1], sizes = [10, 256], strides = [1, 1]} : vector<10x384xbf16> to vector<10x256xbf16>
    %23 = vector.extract_strided_slice %22 {offsets = [0, 0], sizes = [3, 256], strides = [1, 1]} : vector<10x256xbf16> to vector<3x256xbf16>
    %c3 = arith.constant 3 : index
    %c0_11 = arith.constant 0 : index
    %24 = vector.load %arg6[%c3, %c0_11] : memref<108x2048xbf16, #tpu.memory_space<vmem>>, vector<3x256xbf16>
    tpu.vector_store %arg6[%c3, %c0_11], %23 {strides = array<i32>} : memref<108x2048xbf16, #tpu.memory_space<vmem>>, vector<3x256xbf16>,
    %25 = vector.extract_strided_slice %22 {offsets = [1, 0], sizes = [3, 256], strides = [1, 1]} : vector<10x256xbf16> to vector<3x256xbf16>
    %c3_12 = arith.constant 3 : index
    %c256_13 = arith.constant 256 : index
    %26 = vector.load %arg6[%c3_12, %c256_13] : memref<108x2048xbf16, #tpu.memory_space<vmem>>, vector<3x256xbf16>
    tpu.vector_store %arg6[%c3_12, %c256_13], %25 {strides = array<i32>} : memref<108x2048xbf16, #tpu.memory_space<vmem>>, vector<3x256xbf16>,
    %27 = vector.extract_strided_slice %22 {offsets = [2, 0], sizes = [3, 256], strides = [1, 1]} : vector<10x256xbf16> to vector<3x256xbf16>
    %c3_14 = arith.constant 3 : index
    %c512_15 = arith.constant 512 : index
    %28 = vector.load %arg6[%c3_14, %c512_15] : memref<108x2048xbf16, #tpu.memory_space<vmem>>, vector<3x256xbf16>
    tpu.vector_store %arg6[%c3_14, %c512_15], %27 {strides = array<i32>} : memref<108x2048xbf16, #tpu.memory_space<vmem>>, vector<3x256xbf16>,
    %29 = vector.extract_strided_slice %22 {offsets = [3, 0], sizes = [3, 256], strides = [1, 1]} : vector<10x256xbf16> to vector<3x256xbf16>
    %c3_16 = arith.constant 3 : index
    %c768_17 = arith.constant 768 : index
    %30 = vector.load %arg6[%c3_16, %c768_17] : memref<108x2048xbf16, #tpu.memory_space<vmem>>, vector<3x256xbf16>
    tpu.vector_store %arg6[%c3_16, %c768_17], %29 {strides = array<i32>} : memref<108x2048xbf16, #tpu.memory_space<vmem>>, vector<3x256xbf16>,
    %31 = vector.extract_strided_slice %22 {offsets = [4, 0], sizes = [3, 256], strides = [1, 1]} : vector<10x256xbf16> to vector<3x256xbf16>
    %c3_18 = arith.constant 3 : index
    %c1024_19 = arith.constant 1024 : index
    %32 = vector.load %arg6[%c3_18, %c1024_19] : memref<108x2048xbf16, #tpu.memory_space<vmem>>, vector<3x256xbf16>
    tpu.vector_store %arg6[%c3_18, %c1024_19], %31 {strides = array<i32>} : memref<108x2048xbf16, #tpu.memory_space<vmem>>, vector<3x256xbf16>,
    %33 = vector.extract_strided_slice %22 {offsets = [5, 0], sizes = [3, 256], strides = [1, 1]} : vector<10x256xbf16> to vector<3x256xbf16>
    %c3_20 = arith.constant 3 : index
    %c1280_21 = arith.constant 1280 : index
    %34 = vector.load %arg6[%c3_20, %c1280_21] : memref<108x2048xbf16, #tpu.memory_space<vmem>>, vector<3x256xbf16>
    tpu.vector_store %arg6[%c3_20, %c1280_21], %33 {strides = array<i32>} : memref<108x2048xbf16, #tpu.memory_space<vmem>>, vector<3x256xbf16>,
    %35 = vector.extract_strided_slice %22 {offsets = [6, 0], sizes = [3, 256], strides = [1, 1]} : vector<10x256xbf16> to vector<3x256xbf16>
    %c3_22 = arith.constant 3 : index
    %c1536_23 = arith.constant 1536 : index
    %36 = vector.load %arg6[%c3_22, %c1536_23] : memref<108x2048xbf16, #tpu.memory_space<vmem>>, vector<3x256xbf16>
    tpu.vector_store %arg6[%c3_22, %c1536_23], %35 {strides = array<i32>} : memref<108x2048xbf16, #tpu.memory_space<vmem>>, vector<3x256xbf16>,
    %37 = vector.extract_strided_slice %22 {offsets = [7, 0], sizes = [3, 256], strides = [1, 1]} : vector<10x256xbf16> to vector<3x256xbf16>
    %c3_24 = arith.constant 3 : index
    %c1792_25 = arith.constant 1792 : index
    %38 = vector.load %arg6[%c3_24, %c1792_25] : memref<108x2048xbf16, #tpu.memory_space<vmem>>, vector<3x256xbf16>
    tpu.vector_store %arg6[%c3_24, %c1792_25], %37 {strides = array<i32>} : memref<108x2048xbf16, #tpu.memory_space<vmem>>, vector<3x256xbf16>,
    %39 = vector.extract_strided_slice %4 {offsets = [0, 2], sizes = [10, 256], strides = [1, 1]} : vector<10x384xbf16> to vector<10x256xbf16>
    %40 = vector.extract_strided_slice %39 {offsets = [0, 0], sizes = [3, 256], strides = [1, 1]} : vector<10x256xbf16> to vector<3x256xbf16>
    %c6 = arith.constant 6 : index
    %c0_26 = arith.constant 0 : index
    %41 = vector.load %arg6[%c6, %c0_26] : memref<108x2048xbf16, #tpu.memory_space<vmem>>, vector<3x256xbf16>
    tpu.vector_store %arg6[%c6, %c0_26], %40 {strides = array<i32>} : memref<108x2048xbf16, #tpu.memory_space<vmem>>, vector<3x256xbf16>,
    %42 = vector.extract_strided_slice %39 {offsets = [1, 0], sizes = [3, 256], strides = [1, 1]} : vector<10x256xbf16> to vector<3x256xbf16>
    %c6_27 = arith.constant 6 : index
    %c256_28 = arith.constant 256 : index
    %43 = vector.load %arg6[%c6_27, %c256_28] : memref<108x2048xbf16, #tpu.memory_space<vmem>>, vector<3x256xbf16>
    tpu.vector_store %arg6[%c6_27, %c256_28], %42 {strides = array<i32>} : memref<108x2048xbf16, #tpu.memory_space<vmem>>, vector<3x256xbf16>,
    %44 = vector.extract_strided_slice %39 {offsets = [2, 0], sizes = [3, 256], strides = [1, 1]} : vector<10x256xbf16> to vector<3x256xbf16>
    %c6_29 = arith.constant 6 : index
    %c512_30 = arith.constant 512 : index
    %45 = vector.load %arg6[%c6_29, %c512_30] : memref<108x2048xbf16, #tpu.memory_space<vmem>>, vector<3x256xbf16>
    tpu.vector_store %arg6[%c6_29, %c512_30], %44 {strides = array<i32>} : memref<108x2048xbf16, #tpu.memory_space<vmem>>, vector<3x256xbf16>,
    %46 = vector.extract_strided_slice %39 {offsets = [3, 0], sizes = [3, 256], strides = [1, 1]} : vector<10x256xbf16> to vector<3x256xbf16>
    %c6_31 = arith.constant 6 : index
    %c768_32 = arith.constant 768 : index
    %47 = vector.load %arg6[%c6_31, %c768_32] : memref<108x2048xbf16, #tpu.memory_space<vmem>>, vector<3x256xbf16>
    tpu.vector_store %arg6[%c6_31, %c768_32], %46 {strides = array<i32>} : memref<108x2048xbf16, #tpu.memory_space<vmem>>, vector<3x256xbf16>,
    %48 = vector.extract_strided_slice %39 {offsets = [4, 0], sizes = [3, 256], strides = [1, 1]} : vector<10x256xbf16> to vector<3x256xbf16>
    %c6_33 = arith.constant 6 : index
    %c1024_34 = arith.constant 1024 : index
    %49 = vector.load %arg6[%c6_33, %c1024_34] : memref<108x2048xbf16, #tpu.memory_space<vmem>>, vector<3x256xbf16>
    tpu.vector_store %arg6[%c6_33, %c1024_34], %48 {strides = array<i32>} : memref<108x2048xbf16, #tpu.memory_space<vmem>>, vector<3x256xbf16>,
    %50 = vector.extract_strided_slice %39 {offsets = [5, 0], sizes = [3, 256], strides = [1, 1]} : vector<10x256xbf16> to vector<3x256xbf16>
    %c6_35 = arith.constant 6 : index
    %c1280_36 = arith.constant 1280 : index
    %51 = vector.load %arg6[%c6_35, %c1280_36] : memref<108x2048xbf16, #tpu.memory_space<vmem>>, vector<3x256xbf16>
    tpu.vector_store %arg6[%c6_35, %c1280_36], %50 {strides = array<i32>} : memref<108x2048xbf16, #tpu.memory_space<vmem>>, vector<3x256xbf16>,
    %52 = vector.extract_strided_slice %39 {offsets = [6, 0], sizes = [3, 256], strides = [1, 1]} : vector<10x256xbf16> to vector<3x256xbf16>
    %c6_37 = arith.constant 6 : index
    %c1536_38 = arith.constant 1536 : index
    %53 = vector.load %arg6[%c6_37, %c1536_38] : memref<108x2048xbf16, #tpu.memory_space<vmem>>, vector<3x256xbf16>
    tpu.vector_store %arg6[%c6_37, %c1536_38], %52 {strides = array<i32>} : memref<108x2048xbf16, #tpu.memory_space<vmem>>, vector<3x256xbf16>,
    %54 = vector.extract_strided_slice %39 {offsets = [7, 0], sizes = [3, 256], strides = [1, 1]} : vector<10x256xbf16> to vector<3x256xbf16>
    %c6_39 = arith.constant 6 : index
    %c1792_40 = arith.constant 1792 : index
    %55 = vector.load %arg6[%c6_39, %c1792_40] : memref<108x2048xbf16, #tpu.memory_space<vmem>>, vector<3x256xbf16>
    tpu.vector_store %arg6[%c6_39, %c1792_40], %54 {strides = array<i32>} : memref<108x2048xbf16, #tpu.memory_space<vmem>>, vector<3x256xbf16>,
    %56 = vector.extract_strided_slice %4 {offsets = [0, 17], sizes = [10, 256], strides = [1, 1]} : vector<10x384xbf16> to vector<10x256xbf16>
    %57 = vector.extract_strided_slice %56 {offsets = [0, 0], sizes = [3, 256], strides = [1, 1]} : vector<10x256xbf16> to vector<3x256xbf16>
    %c9 = arith.constant 9 : index
    %c0_41 = arith.constant 0 : index
    %58 = vector.load %arg6[%c9, %c0_41] : memref<108x2048xbf16, #tpu.memory_space<vmem>>, vector<3x256xbf16>
    tpu.vector_store %arg6[%c9, %c0_41], %57 {strides = array<i32>} : memref<108x2048xbf16, #tpu.memory_space<vmem>>, vector<3x256xbf16>,
    %59 = vector.extract_strided_slice %56 {offsets = [1, 0], sizes = [3, 256], strides = [1, 1]} : vector<10x256xbf16> to vector<3x256xbf16>
    %c9_42 = arith.constant 9 : index
    %c256_43 = arith.constant 256 : index
    %60 = vector.load %arg6[%c9_42, %c256_43] : memref<108x2048xbf16, #tpu.memory_space<vmem>>, vector<3x256xbf16>
    tpu.vector_store %arg6[%c9_42, %c256_43], %59 {strides = array<i32>} : memref<108x2048xbf16, #tpu.memory_space<vmem>>, vector<3x256xbf16>,
    %61 = vector.extract_strided_slice %56 {offsets = [2, 0], sizes = [3, 256], strides = [1, 1]} : vector<10x256xbf16> to vector<3x256xbf16>
    %c9_44 = arith.constant 9 : index
    %c512_45 = arith.constant 512 : index
    %62 = vector.load %arg6[%c9_44, %c512_45] : memref<108x2048xbf16, #tpu.memory_space<vmem>>, vector<3x256xbf16>
    tpu.vector_store %arg6[%c9_44, %c512_45], %61 {strides = array<i32>} : memref<108x2048xbf16, #tpu.memory_space<vmem>>, vector<3x256xbf16>,
    %63 = vector.extract_strided_slice %56 {offsets = [3, 0], sizes = [3, 256], strides = [1, 1]} : vector<10x256xbf16> to vector<3x256xbf16>
    %c9_46 = arith.constant 9 : index
    %c768_47 = arith.constant 768 : index
    %64 = vector.load %arg6[%c9_46, %c768_47] : memref<108x2048xbf16, #tpu.memory_space<vmem>>, vector<3x256xbf16>
    tpu.vector_store %arg6[%c9_46, %c768_47], %63 {strides = array<i32>} : memref<108x2048xbf16, #tpu.memory_space<vmem>>, vector<3x256xbf16>,
    %65 = vector.extract_strided_slice %56 {offsets = [4, 0], sizes = [3, 256], strides = [1, 1]} : vector<10x256xbf16> to vector<3x256xbf16>
    %c9_48 = arith.constant 9 : index
    %c1024_49 = arith.constant 1024 : index
    %66 = vector.load %arg6[%c9_48, %c1024_49] : memref<108x2048xbf16, #tpu.memory_space<vmem>>, vector<3x256xbf16>
    tpu.vector_store %arg6[%c9_48, %c1024_49], %65 {strides = array<i32>} : memref<108x2048xbf16, #tpu.memory_space<vmem>>, vector<3x256xbf16>,
    %67 = vector.extract_strided_slice %56 {offsets = [5, 0], sizes = [3, 256], strides = [1, 1]} : vector<10x256xbf16> to vector<3x256xbf16>
    %c9_50 = arith.constant 9 : index
    %c1280_51 = arith.constant 1280 : index
    %68 = vector.load %arg6[%c9_50, %c1280_51] : memref<108x2048xbf16, #tpu.memory_space<vmem>>, vector<3x256xbf16>
    tpu.vector_store %arg6[%c9_50, %c1280_51], %67 {strides = array<i32>} : memref<108x2048xbf16, #tpu.memory_space<vmem>>, vector<3x256xbf16>,
    %69 = vector.extract_strided_slice %56 {offsets = [6, 0], sizes = [3, 256], strides = [1, 1]} : vector<10x256xbf16> to vector<3x256xbf16>
    %c9_52 = arith.constant 9 : index
    %c1536_53 = arith.constant 1536 : index
    %70 = vector.load %arg6[%c9_52, %c1536_53] : memref<108x2048xbf16, #tpu.memory_space<vmem>>, vector<3x256xbf16>
    tpu.vector_store %arg6[%c9_52, %c1536_53], %69 {strides = array<i32>} : memref<108x2048xbf16, #tpu.memory_space<vmem>>, vector<3x256xbf16>,
    %71 = vector.extract_strided_slice %56 {offsets = [7, 0], sizes = [3, 256], strides = [1, 1]} : vector<10x256xbf16> to vector<3x256xbf16>
    %c9_54 = arith.constant 9 : index
    %c1792_55 = arith.constant 1792 : index
    %72 = vector.load %arg6[%c9_54, %c1792_55] : memref<108x2048xbf16, #tpu.memory_space<vmem>>, vector<3x256xbf16>
    tpu.vector_store %arg6[%c9_54, %c1792_55], %71 {strides = array<i32>} : memref<108x2048xbf16, #tpu.memory_space<vmem>>, vector<3x256xbf16>,
    %73 = vector.extract_strided_slice %4 {offsets = [0, 18], sizes = [10, 256], strides = [1, 1]} : vector<10x384xbf16> to vector<10x256xbf16>
    %74 = vector.extract_strided_slice %73 {offsets = [0, 0], sizes = [3, 256], strides = [1, 1]} : vector<10x256xbf16> to vector<3x256xbf16>
    %c12 = arith.constant 12 : index
    %c0_56 = arith.constant 0 : index
    %75 = vector.load %arg6[%c12, %c0_56] : memref<108x2048xbf16, #tpu.memory_space<vmem>>, vector<3x256xbf16>
    tpu.vector_store %arg6[%c12, %c0_56], %74 {strides = array<i32>} : memref<108x2048xbf16, #tpu.memory_space<vmem>>, vector<3x256xbf16>,
    %76 = vector.extract_strided_slice %73 {offsets = [1, 0], sizes = [3, 256], strides = [1, 1]} : vector<10x256xbf16> to vector<3x256xbf16>
    %c12_57 = arith.constant 12 : index
    %c256_58 = arith.constant 256 : index
    %77 = vector.load %arg6[%c12_57, %c256_58] : memref<108x2048xbf16, #tpu.memory_space<vmem>>, vector<3x256xbf16>
    tpu.vector_store %arg6[%c12_57, %c256_58], %76 {strides = array<i32>} : memref<108x2048xbf16, #tpu.memory_space<vmem>>, vector<3x256xbf16>,
    %78 = vector.extract_strided_slice %73 {offsets = [2, 0], sizes = [3, 256], strides = [1, 1]} : vector<10x256xbf16> to vector<3x256xbf16>
    %c12_59 = arith.constant 12 : index
    %c512_60 = arith.constant 512 : index
    %79 = vector.load %arg6[%c12_59, %c512_60] : memref<108x2048xbf16, #tpu.memory_space<vmem>>, vector<3x256xbf16>
    tpu.vector_store %arg6[%c12_59, %c512_60], %78 {strides = array<i32>} : memref<108x2048xbf16, #tpu.memory_space<vmem>>, vector<3x256xbf16>,
    %80 = vector.extract_strided_slice %73 {offsets = [3, 0], sizes = [3, 256], strides = [1, 1]} : vector<10x256xbf16> to vector<3x256xbf16>
    %c12_61 = arith.constant 12 : index
    %c768_62 = arith.constant 768 : index
    %81 = vector.load %arg6[%c12_61, %c768_62] : memref<108x2048xbf16, #tpu.memory_space<vmem>>, vector<3x256xbf16>
    tpu.vector_store %arg6[%c12_61, %c768_62], %80 {strides = array<i32>} : memref<108x2048xbf16, #tpu.memory_space<vmem>>, vector<3x256xbf16>,
    %82 = vector.extract_strided_slice %73 {offsets = [4, 0], sizes = [3, 256], strides = [1, 1]} : vector<10x256xbf16> to vector<3x256xbf16>
    %c12_63 = arith.constant 12 : index
    %c1024_64 = arith.constant 1024 : index
    %83 = vector.load %arg6[%c12_63, %c1024_64] : memref<108x2048xbf16, #tpu.memory_space<vmem>>, vector<3x256xbf16>
    tpu.vector_store %arg6[%c12_63, %c1024_64], %82 {strides = array<i32>} : memref<108x2048xbf16, #tpu.memory_space<vmem>>, vector<3x256xbf16>,
    %84 = vector.extract_strided_slice %73 {offsets = [5, 0], sizes = [3, 256], strides = [1, 1]} : vector<10x256xbf16> to vector<3x256xbf16>
    %c12_65 = arith.constant 12 : index
    %c1280_66 = arith.constant 1280 : index
    %85 = vector.load %arg6[%c12_65, %c1280_66] : memref<108x2048xbf16, #tpu.memory_space<vmem>>, vector<3x256xbf16>
    tpu.vector_store %arg6[%c12_65, %c1280_66], %84 {strides = array<i32>} : memref<108x2048xbf16, #tpu.memory_space<vmem>>, vector<3x256xbf16>,
    %86 = vector.extract_strided_slice %73 {offsets = [6, 0], sizes = [3, 256], strides = [1, 1]} : vector<10x256xbf16> to vector<3x256xbf16>
    %c12_67 = arith.constant 12 : index
    %c1536_68 = arith.constant 1536 : index
    %87 = vector.load %arg6[%c12_67, %c1536_68] : memref<108x2048xbf16, #tpu.memory_space<vmem>>, vector<3x256xbf16>
    tpu.vector_store %arg6[%c12_67, %c1536_68], %86 {strides = array<i32>} : memref<108x2048xbf16, #tpu.memory_space<vmem>>, vector<3x256xbf16>,
    %88 = vector.extract_strided_slice %73 {offsets = [7, 0], sizes = [3, 256], strides = [1, 1]} : vector<10x256xbf16> to vector<3x256xbf16>
    %c12_69 = arith.constant 12 : index
    %c1792_70 = arith.constant 1792 : index
    %89 = vector.load %arg6[%c12_69, %c1792_70] : memref<108x2048xbf16, #tpu.memory_space<vmem>>, vector<3x256xbf16>
    tpu.vector_store %arg6[%c12_69, %c1792_70], %88 {strides = array<i32>} : memref<108x2048xbf16, #tpu.memory_space<vmem>>, vector<3x256xbf16>,
    %90 = vector.extract_strided_slice %4 {offsets = [0, 19], sizes = [10, 256], strides = [1, 1]} : vector<10x384xbf16> to vector<10x256xbf16>
    %91 = vector.extract_strided_slice %90 {offsets = [0, 0], sizes = [3, 256], strides = [1, 1]} : vector<10x256xbf16> to vector<3x256xbf16>
    %c15 = arith.constant 15 : index
    %c0_71 = arith.constant 0 : index
    %92 = vector.load %arg6[%c15, %c0_71] : memref<108x2048xbf16, #tpu.memory_space<vmem>>, vector<3x256xbf16>
    tpu.vector_store %arg6[%c15, %c0_71], %91 {strides = array<i32>} : memref<108x2048xbf16, #tpu.memory_space<vmem>>, vector<3x256xbf16>,
    %93 = vector.extract_strided_slice %90 {offsets = [1, 0], sizes = [3, 256], strides = [1, 1]} : vector<10x256xbf16> to vector<3x256xbf16>
    %c15_72 = arith.constant 15 : index
    %c256_73 = arith.constant 256 : index
    %94 = vector.load %arg6[%c15_72, %c256_73] : memref<108x2048xbf16, #tpu.memory_space<vmem>>, vector<3x256xbf16>
    tpu.vector_store %arg6[%c15_72, %c256_73], %93 {strides = array<i32>} : memref<108x2048xbf16, #tpu.memory_space<vmem>>, vector<3x256xbf16>,
    %95 = vector.extract_strided_slice %90 {offsets = [2, 0], sizes = [3, 256], strides = [1, 1]} : vector<10x256xbf16> to vector<3x256xbf16>
    %c15_74 = arith.constant 15 : index
    %c512_75 = arith.constant 512 : index
    %96 = vector.load %arg6[%c15_74, %c512_75] : memref<108x2048xbf16, #tpu.memory_space<vmem>>, vector<3x256xbf16>
    tpu.vector_store %arg6[%c15_74, %c512_75], %95 {strides = array<i32>} : memref<108x2048xbf16, #tpu.memory_space<vmem>>, vector<3x256xbf16>,
    %97 = vector.extract_strided_slice %90 {offsets = [3, 0], sizes = [3, 256], strides = [1, 1]} : vector<10x256xbf16> to vector<3x256xbf16>
    %c15_76 = arith.constant 15 : index
    %c768_77 = arith.constant 768 : index
    %98 = vector.load %arg6[%c15_76, %c768_77] : memref<108x2048xbf16, #tpu.memory_space<vmem>>, vector<3x256xbf16>
    tpu.vector_store %arg6[%c15_76, %c768_77], %97 {strides = array<i32>} : memref<108x2048xbf16, #tpu.memory_space<vmem>>, vector<3x256xbf16>,
    %99 = vector.extract_strided_slice %90 {offsets = [4, 0], sizes = [3, 256], strides = [1, 1]} : vector<10x256xbf16> to vector<3x256xbf16>
    %c15_78 = arith.constant 15 : index
    %c1024_79 = arith.constant 1024 : index
    %100 = vector.load %arg6[%c15_78, %c1024_79] : memref<108x2048xbf16, #tpu.memory_space<vmem>>, vector<3x256xbf16>
    tpu.vector_store %arg6[%c15_78, %c1024_79], %99 {strides = array<i32>} : memref<108x2048xbf16, #tpu.memory_space<vmem>>, vector<3x256xbf16>,
    %101 = vector.extract_strided_slice %90 {offsets = [5, 0], sizes = [3, 256], strides = [1, 1]} : vector<10x256xbf16> to vector<3x256xbf16>
    %c15_80 = arith.constant 15 : index
    %c1280_81 = arith.constant 1280 : index
    %102 = vector.load %arg6[%c15_80, %c1280_81] : memref<108x2048xbf16, #tpu.memory_space<vmem>>, vector<3x256xbf16>
    tpu.vector_store %arg6[%c15_80, %c1280_81], %101 {strides = array<i32>} : memref<108x2048xbf16, #tpu.memory_space<vmem>>, vector<3x256xbf16>,
    %103 = vector.extract_strided_slice %90 {offsets = [6, 0], sizes = [3, 256], strides = [1, 1]} : vector<10x256xbf16> to vector<3x256xbf16>
    %c15_82 = arith.constant 15 : index
    %c1536_83 = arith.constant 1536 : index
    %104 = vector.load %arg6[%c15_82, %c1536_83] : memref<108x2048xbf16, #tpu.memory_space<vmem>>, vector<3x256xbf16>
    tpu.vector_store %arg6[%c15_82, %c1536_83], %103 {strides = array<i32>} : memref<108x2048xbf16, #tpu.memory_space<vmem>>, vector<3x256xbf16>,
    %105 = vector.extract_strided_slice %90 {offsets = [7, 0], sizes = [3, 256], strides = [1, 1]} : vector<10x256xbf16> to vector<3x256xbf16>
    %c15_84 = arith.constant 15 : index
    %c1792_85 = arith.constant 1792 : index
    %106 = vector.load %arg6[%c15_84, %c1792_85] : memref<108x2048xbf16, #tpu.memory_space<vmem>>, vector<3x256xbf16>
    tpu.vector_store %arg6[%c15_84, %c1792_85], %105 {strides = array<i32>} : memref<108x2048xbf16, #tpu.memory_space<vmem>>, vector<3x256xbf16>,
    %107 = vector.extract_strided_slice %4 {offsets = [0, 34], sizes = [10, 256], strides = [1, 1]} : vector<10x384xbf16> to vector<10x256xbf16>
    %108 = vector.extract_strided_slice %107 {offsets = [0, 0], sizes = [3, 256], strides = [1, 1]} : vector<10x256xbf16> to vector<3x256xbf16>
    %c18 = arith.constant 18 : index
    %c0_86 = arith.constant 0 : index
    %109 = vector.load %arg6[%c18, %c0_86] : memref<108x2048xbf16, #tpu.memory_space<vmem>>, vector<3x256xbf16>
    tpu.vector_store %arg6[%c18, %c0_86], %108 {strides = array<i32>} : memref<108x2048xbf16, #tpu.memory_space<vmem>>, vector<3x256xbf16>,
    %110 = vector.extract_strided_slice %107 {offsets = [1, 0], sizes = [3, 256], strides = [1, 1]} : vector<10x256xbf16> to vector<3x256xbf16>
    %c18_87 = arith.constant 18 : index
    %c256_88 = arith.constant 256 : index
    %111 = vector.load %arg6[%c18_87, %c256_88] : memref<108x2048xbf16, #tpu.memory_space<vmem>>, vector<3x256xbf16>
    tpu.vector_store %arg6[%c18_87, %c256_88], %110 {strides = array<i32>} : memref<108x2048xbf16, #tpu.memory_space<vmem>>, vector<3x256xbf16>,
    %112 = vector.extract_strided_slice %107 {offsets = [2, 0], sizes = [3, 256], strides = [1, 1]} : vector<10x256xbf16> to vector<3x256xbf16>
    %c18_89 = arith.constant 18 : index
    %c512_90 = arith.constant 512 : index
    %113 = vector.load %arg6[%c18_89, %c512_90] : memref<108x2048xbf16, #tpu.memory_space<vmem>>, vector<3x256xbf16>
    tpu.vector_store %arg6[%c18_89, %c512_90], %112 {strides = array<i32>} : memref<108x2048xbf16, #tpu.memory_space<vmem>>, vector<3x256xbf16>,
    %114 = vector.extract_strided_slice %107 {offsets = [3, 0], sizes = [3, 256], strides = [1, 1]} : vector<10x256xbf16> to vector<3x256xbf16>
    %c18_91 = arith.constant 18 : index
    %c768_92 = arith.constant 768 : index
    %115 = vector.load %arg6[%c18_91, %c768_92] : memref<108x2048xbf16, #tpu.memory_space<vmem>>, vector<3x256xbf16>
    tpu.vector_store %arg6[%c18_91, %c768_92], %114 {strides = array<i32>} : memref<108x2048xbf16, #tpu.memory_space<vmem>>, vector<3x256xbf16>,
    %116 = vector.extract_strided_slice %107 {offsets = [4, 0], sizes = [3, 256], strides = [1, 1]} : vector<10x256xbf16> to vector<3x256xbf16>
    %c18_93 = arith.constant 18 : index
    %c1024_94 = arith.constant 1024 : index
    %117 = vector.load %arg6[%c18_93, %c1024_94] : memref<108x2048xbf16, #tpu.memory_space<vmem>>, vector<3x256xbf16>
    tpu.vector_store %arg6[%c18_93, %c1024_94], %116 {strides = array<i32>} : memref<108x2048xbf16, #tpu.memory_space<vmem>>, vector<3x256xbf16>,
    %118 = vector.extract_strided_slice %107 {offsets = [5, 0], sizes = [3, 256], strides = [1, 1]} : vector<10x256xbf16> to vector<3x256xbf16>
    %c18_95 = arith.constant 18 : index
    %c1280_96 = arith.constant 1280 : index
    %119 = vector.load %arg6[%c18_95, %c1280_96] : memref<108x2048xbf16, #tpu.memory_space<vmem>>, vector<3x256xbf16>
    tpu.vector_store %arg6[%c18_95, %c1280_96], %118 {strides = array<i32>} : memref<108x2048xbf16, #tpu.memory_space<vmem>>, vector<3x256xbf16>,
    %120 = vector.extract_strided_slice %107 {offsets = [6, 0], sizes = [3, 256], strides = [1, 1]} : vector<10x256xbf16> to vector<3x256xbf16>
    %c18_97 = arith.constant 18 : index
    %c1536_98 = arith.constant 1536 : index
    %121 = vector.load %arg6[%c18_97, %c1536_98] : memref<108x2048xbf16, #tpu.memory_space<vmem>>, vector<3x256xbf16>
    tpu.vector_store %arg6[%c18_97, %c1536_98], %120 {strides = array<i32>} : memref<108x2048xbf16, #tpu.memory_space<vmem>>, vector<3x256xbf16>,
    %122 = vector.extract_strided_slice %107 {offsets = [7, 0], sizes = [3, 256], strides = [1, 1]} : vector<10x256xbf16> to vector<3x256xbf16>
    %c18_99 = arith.constant 18 : index
    %c1792_100 = arith.constant 1792 : index
    %123 = vector.load %arg6[%c18_99, %c1792_100] : memref<108x2048xbf16, #tpu.memory_space<vmem>>, vector<3x256xbf16>
    tpu.vector_store %arg6[%c18_99, %c1792_100], %122 {strides = array<i32>} : memref<108x2048xbf16, #tpu.memory_space<vmem>>, vector<3x256xbf16>,
    %124 = vector.extract_strided_slice %4 {offsets = [0, 35], sizes = [10, 256], strides = [1, 1]} : vector<10x384xbf16> to vector<10x256xbf16>
    %125 = vector.extract_strided_slice %124 {offsets = [0, 0], sizes = [3, 256], strides = [1, 1]} : vector<10x256xbf16> to vector<3x256xbf16>
    %c21 = arith.constant 21 : index
    %c0_101 = arith.constant 0 : index
    %126 = vector.load %arg6[%c21, %c0_101] : memref<108x2048xbf16, #tpu.memory_space<vmem>>, vector<3x256xbf16>
    tpu.vector_store %arg6[%c21, %c0_101], %125 {strides = array<i32>} : memref<108x2048xbf16, #tpu.memory_space<vmem>>, vector<3x256xbf16>,
    %127 = vector.extract_strided_slice %124 {offsets = [1, 0], sizes = [3, 256], strides = [1, 1]} : vector<10x256xbf16> to vector<3x256xbf16>
    %c21_102 = arith.constant 21 : index
    %c256_103 = arith.constant 256 : index
    %128 = vector.load %arg6[%c21_102, %c256_103] : memref<108x2048xbf16, #tpu.memory_space<vmem>>, vector<3x256xbf16>
    tpu.vector_store %arg6[%c21_102, %c256_103], %127 {strides = array<i32>} : memref<108x2048xbf16, #tpu.memory_space<vmem>>, vector<3x256xbf16>,
    %129 = vector.extract_strided_slice %124 {offsets = [2, 0], sizes = [3, 256], strides = [1, 1]} : vector<10x256xbf16> to vector<3x256xbf16>
    %c21_104 = arith.constant 21 : index
    %c512_105 = arith.constant 512 : index
    %130 = vector.load %arg6[%c21_104, %c512_105] : memref<108x2048xbf16, #tpu.memory_space<vmem>>, vector<3x256xbf16>
    tpu.vector_store %arg6[%c21_104, %c512_105], %129 {strides = array<i32>} : memref<108x2048xbf16, #tpu.memory_space<vmem>>, vector<3x256xbf16>,
    %131 = vector.extract_strided_slice %124 {offsets = [3, 0], sizes = [3, 256], strides = [1, 1]} : vector<10x256xbf16> to vector<3x256xbf16>
    %c21_106 = arith.constant 21 : index
    %c768_107 = arith.constant 768 : index
    %132 = vector.load %arg6[%c21_106, %c768_107] : memref<108x2048xbf16, #tpu.memory_space<vmem>>, vector<3x256xbf16>
    tpu.vector_store %arg6[%c21_106, %c768_107], %131 {strides = array<i32>} : memref<108x2048xbf16, #tpu.memory_space<vmem>>, vector<3x256xbf16>,
    %133 = vector.extract_strided_slice %124 {offsets = [4, 0], sizes = [3, 256], strides = [1, 1]} : vector<10x256xbf16> to vector<3x256xbf16>
    %c21_108 = arith.constant 21 : index
    %c1024_109 = arith.constant 1024 : index
    %134 = vector.load %arg6[%c21_108, %c1024_109] : memref<108x2048xbf16, #tpu.memory_space<vmem>>, vector<3x256xbf16>
    tpu.vector_store %arg6[%c21_108, %c1024_109], %133 {strides = array<i32>} : memref<108x2048xbf16, #tpu.memory_space<vmem>>, vector<3x256xbf16>,
    %135 = vector.extract_strided_slice %124 {offsets = [5, 0], sizes = [3, 256], strides = [1, 1]} : vector<10x256xbf16> to vector<3x256xbf16>
    %c21_110 = arith.constant 21 : index
    %c1280_111 = arith.constant 1280 : index
    %136 = vector.load %arg6[%c21_110, %c1280_111] : memref<108x2048xbf16, #tpu.memory_space<vmem>>, vector<3x256xbf16>
    tpu.vector_store %arg6[%c21_110, %c1280_111], %135 {strides = array<i32>} : memref<108x2048xbf16, #tpu.memory_space<vmem>>, vector<3x256xbf16>,
    %137 = vector.extract_strided_slice %124 {offsets = [6, 0], sizes = [3, 256], strides = [1, 1]} : vector<10x256xbf16> to vector<3x256xbf16>
    %c21_112 = arith.constant 21 : index
    %c1536_113 = arith.constant 1536 : index
    %138 = vector.load %arg6[%c21_112, %c1536_113] : memref<108x2048xbf16, #tpu.memory_space<vmem>>, vector<3x256xbf16>
    tpu.vector_store %arg6[%c21_112, %c1536_113], %137 {strides = array<i32>} : memref<108x2048xbf16, #tpu.memory_space<vmem>>, vector<3x256xbf16>,
    %139 = vector.extract_strided_slice %124 {offsets = [7, 0], sizes = [3, 256], strides = [1, 1]} : vector<10x256xbf16> to vector<3x256xbf16>
    %c21_114 = arith.constant 21 : index
    %c1792_115 = arith.constant 1792 : index
    %140 = vector.load %arg6[%c21_114, %c1792_115] : memref<108x2048xbf16, #tpu.memory_space<vmem>>, vector<3x256xbf16>
    tpu.vector_store %arg6[%c21_114, %c1792_115], %139 {strides = array<i32>} : memref<108x2048xbf16, #tpu.memory_space<vmem>>, vector<3x256xbf16>,
    %141 = vector.extract_strided_slice %4 {offsets = [0, 36], sizes = [10, 256], strides = [1, 1]} : vector<10x384xbf16> to vector<10x256xbf16>
    %142 = vector.extract_strided_slice %141 {offsets = [0, 0], sizes = [3, 256], strides = [1, 1]} : vector<10x256xbf16> to vector<3x256xbf16>
    %c24 = arith.constant 24 : index
    %c0_116 = arith.constant 0 : index
    %143 = vector.load %arg6[%c24, %c0_116] : memref<108x2048xbf16, #tpu.memory_space<vmem>>, vector<3x256xbf16>
    tpu.vector_store %arg6[%c24, %c0_116], %142 {strides = array<i32>} : memref<108x2048xbf16, #tpu.memory_space<vmem>>, vector<3x256xbf16>,
    %144 = vector.extract_strided_slice %141 {offsets = [1, 0], sizes = [3, 256], strides = [1, 1]} : vector<10x256xbf16> to vector<3x256xbf16>
    %c24_117 = arith.constant 24 : index
    %c256_118 = arith.constant 256 : index
    %145 = vector.load %arg6[%c24_117, %c256_118] : memref<108x2048xbf16, #tpu.memory_space<vmem>>, vector<3x256xbf16>
    tpu.vector_store %arg6[%c24_117, %c256_118], %144 {strides = array<i32>} : memref<108x2048xbf16, #tpu.memory_space<vmem>>, vector<3x256xbf16>,
    %146 = vector.extract_strided_slice %141 {offsets = [2, 0], sizes = [3, 256], strides = [1, 1]} : vector<10x256xbf16> to vector<3x256xbf16>
    %c24_119 = arith.constant 24 : index
    %c512_120 = arith.constant 512 : index
    %147 = vector.load %arg6[%c24_119, %c512_120] : memref<108x2048xbf16, #tpu.memory_space<vmem>>, vector<3x256xbf16>
    tpu.vector_store %arg6[%c24_119, %c512_120], %146 {strides = array<i32>} : memref<108x2048xbf16, #tpu.memory_space<vmem>>, vector<3x256xbf16>,
    %148 = vector.extract_strided_slice %141 {offsets = [3, 0], sizes = [3, 256], strides = [1, 1]} : vector<10x256xbf16> to vector<3x256xbf16>
    %c24_121 = arith.constant 24 : index
    %c768_122 = arith.constant 768 : index
    %149 = vector.load %arg6[%c24_121, %c768_122] : memref<108x2048xbf16, #tpu.memory_space<vmem>>, vector<3x256xbf16>
    tpu.vector_store %arg6[%c24_121, %c768_122], %148 {strides = array<i32>} : memref<108x2048xbf16, #tpu.memory_space<vmem>>, vector<3x256xbf16>,
    %150 = vector.extract_strided_slice %141 {offsets = [4, 0], sizes = [3, 256], strides = [1, 1]} : vector<10x256xbf16> to vector<3x256xbf16>
    %c24_123 = arith.constant 24 : index
    %c1024_124 = arith.constant 1024 : index
    %151 = vector.load %arg6[%c24_123, %c1024_124] : memref<108x2048xbf16, #tpu.memory_space<vmem>>, vector<3x256xbf16>
    tpu.vector_store %arg6[%c24_123, %c1024_124], %150 {strides = array<i32>} : memref<108x2048xbf16, #tpu.memory_space<vmem>>, vector<3x256xbf16>,
    %152 = vector.extract_strided_slice %141 {offsets = [5, 0], sizes = [3, 256], strides = [1, 1]} : vector<10x256xbf16> to vector<3x256xbf16>
    %c24_125 = arith.constant 24 : index
    %c1280_126 = arith.constant 1280 : index
    %153 = vector.load %arg6[%c24_125, %c1280_126] : memref<108x2048xbf16, #tpu.memory_space<vmem>>, vector<3x256xbf16>
    tpu.vector_store %arg6[%c24_125, %c1280_126], %152 {strides = array<i32>} : memref<108x2048xbf16, #tpu.memory_space<vmem>>, vector<3x256xbf16>,
    %154 = vector.extract_strided_slice %141 {offsets = [6, 0], sizes = [3, 256], strides = [1, 1]} : vector<10x256xbf16> to vector<3x256xbf16>
    %c24_127 = arith.constant 24 : index
    %c1536_128 = arith.constant 1536 : index
    %155 = vector.load %arg6[%c24_127, %c1536_128] : memref<108x2048xbf16, #tpu.memory_space<vmem>>, vector<3x256xbf16>
    tpu.vector_store %arg6[%c24_127, %c1536_128], %154 {strides = array<i32>} : memref<108x2048xbf16, #tpu.memory_space<vmem>>, vector<3x256xbf16>,
    %156 = vector.extract_strided_slice %141 {offsets = [7, 0], sizes = [3, 256], strides = [1, 1]} : vector<10x256xbf16> to vector<3x256xbf16>
    %c24_129 = arith.constant 24 : index
    %c1792_130 = arith.constant 1792 : index
    %157 = vector.load %arg6[%c24_129, %c1792_130] : memref<108x2048xbf16, #tpu.memory_space<vmem>>, vector<3x256xbf16>
    tpu.vector_store %arg6[%c24_129, %c1792_130], %156 {strides = array<i32>} : memref<108x2048xbf16, #tpu.memory_space<vmem>>, vector<3x256xbf16>,
    %c0_131 = arith.constant 0 : index
    %c1 = arith.constant 1 : index
    %158 = arith.index_cast %1 : i32 to index
    %c0_132 = arith.constant 0 : index
    %159 = vector.load %arg2[%c0_131, %c1, %158, %c0_132] : memref<1x4x18x384xbf16, #tpu.memory_space<vmem>>, vector<1x1x10x384xbf16>
    %160 = vector.shape_cast %159 : vector<1x1x10x384xbf16> to vector<10x384xbf16>
    %161 = vector.extract_strided_slice %160 {offsets = [0, 0], sizes = [10, 256], strides = [1, 1]} : vector<10x384xbf16> to vector<10x256xbf16>
    %162 = vector.extract_strided_slice %161 {offsets = [0, 0], sizes = [3, 256], strides = [1, 1]} : vector<10x256xbf16> to vector<3x256xbf16>
    %c27 = arith.constant 27 : index
    %c0_133 = arith.constant 0 : index
    %163 = vector.load %arg6[%c27, %c0_133] : memref<108x2048xbf16, #tpu.memory_space<vmem>>, vector<3x256xbf16>
    tpu.vector_store %arg6[%c27, %c0_133], %162 {strides = array<i32>} : memref<108x2048xbf16, #tpu.memory_space<vmem>>, vector<3x256xbf16>,
    %164 = vector.extract_strided_slice %161 {offsets = [1, 0], sizes = [3, 256], strides = [1, 1]} : vector<10x256xbf16> to vector<3x256xbf16>
    %c27_134 = arith.constant 27 : index
    %c256_135 = arith.constant 256 : index
    %165 = vector.load %arg6[%c27_134, %c256_135] : memref<108x2048xbf16, #tpu.memory_space<vmem>>, vector<3x256xbf16>
    tpu.vector_store %arg6[%c27_134, %c256_135], %164 {strides = array<i32>} : memref<108x2048xbf16, #tpu.memory_space<vmem>>, vector<3x256xbf16>,
    %166 = vector.extract_strided_slice %161 {offsets = [2, 0], sizes = [3, 256], strides = [1, 1]} : vector<10x256xbf16> to vector<3x256xbf16>
    %c27_136 = arith.constant 27 : index
    %c512_137 = arith.constant 512 : index
    %167 = vector.load %arg6[%c27_136, %c512_137] : memref<108x2048xbf16, #tpu.memory_space<vmem>>, vector<3x256xbf16>
    tpu.vector_store %arg6[%c27_136, %c512_137], %166 {strides = array<i32>} : memref<108x2048xbf16, #tpu.memory_space<vmem>>, vector<3x256xbf16>,
    %168 = vector.extract_strided_slice %161 {offsets = [3, 0], sizes = [3, 256], strides = [1, 1]} : vector<10x256xbf16> to vector<3x256xbf16>
    %c27_138 = arith.constant 27 : index
    %c768_139 = arith.constant 768 : index
    %169 = vector.load %arg6[%c27_138, %c768_139] : memref<108x2048xbf16, #tpu.memory_space<vmem>>, vector<3x256xbf16>
    tpu.vector_store %arg6[%c27_138, %c768_139], %168 {strides = array<i32>} : memref<108x2048xbf16, #tpu.memory_space<vmem>>, vector<3x256xbf16>,
    %170 = vector.extract_strided_slice %161 {offsets = [4, 0], sizes = [3, 256], strides = [1, 1]} : vector<10x256xbf16> to vector<3x256xbf16>
    %c27_140 = arith.constant 27 : index
    %c1024_141 = arith.constant 1024 : index
    %171 = vector.load %arg6[%c27_140, %c1024_141] : memref<108x2048xbf16, #tpu.memory_space<vmem>>, vector<3x256xbf16>
    tpu.vector_store %arg6[%c27_140, %c1024_141], %170 {strides = array<i32>} : memref<108x2048xbf16, #tpu.memory_space<vmem>>, vector<3x256xbf16>,
    %172 = vector.extract_strided_slice %161 {offsets = [5, 0], sizes = [3, 256], strides = [1, 1]} : vector<10x256xbf16> to vector<3x256xbf16>
    %c27_142 = arith.constant 27 : index
    %c1280_143 = arith.constant 1280 : index
    %173 = vector.load %arg6[%c27_142, %c1280_143] : memref<108x2048xbf16, #tpu.memory_space<vmem>>, vector<3x256xbf16>
    tpu.vector_store %arg6[%c27_142, %c1280_143], %172 {strides = array<i32>} : memref<108x2048xbf16, #tpu.memory_space<vmem>>, vector<3x256xbf16>,
    %174 = vector.extract_strided_slice %161 {offsets = [6, 0], sizes = [3, 256], strides = [1, 1]} : vector<10x256xbf16> to vector<3x256xbf16>
    %c27_144 = arith.constant 27 : index
    %c1536_145 = arith.constant 1536 : index
    %175 = vector.load %arg6[%c27_144, %c1536_145] : memref<108x2048xbf16, #tpu.memory_space<vmem>>, vector<3x256xbf16>
    tpu.vector_store %arg6[%c27_144, %c1536_145], %174 {strides = array<i32>} : memref<108x2048xbf16, #tpu.memory_space<vmem>>, vector<3x256xbf16>,
    %176 = vector.extract_strided_slice %161 {offsets = [7, 0], sizes = [3, 256], strides = [1, 1]} : vector<10x256xbf16> to vector<3x256xbf16>
    %c27_146 = arith.constant 27 : index
    %c1792_147 = arith.constant 1792 : index
    %177 = vector.load %arg6[%c27_146, %c1792_147] : memref<108x2048xbf16, #tpu.memory_space<vmem>>, vector<3x256xbf16>
    tpu.vector_store %arg6[%c27_146, %c1792_147], %176 {strides = array<i32>} : memref<108x2048xbf16, #tpu.memory_space<vmem>>, vector<3x256xbf16>,
    %178 = vector.extract_strided_slice %160 {offsets = [0, 1], sizes = [10, 256], strides = [1, 1]} : vector<10x384xbf16> to vector<10x256xbf16>
    %179 = vector.extract_strided_slice %178 {offsets = [0, 0], sizes = [3, 256], strides = [1, 1]} : vector<10x256xbf16> to vector<3x256xbf16>
    %c30 = arith.constant 30 : index
    %c0_148 = arith.constant 0 : index
    %180 = vector.load %arg6[%c30, %c0_148] : memref<108x2048xbf16, #tpu.memory_space<vmem>>, vector<3x256xbf16>
    tpu.vector_store %arg6[%c30, %c0_148], %179 {strides = array<i32>} : memref<108x2048xbf16, #tpu.memory_space<vmem>>, vector<3x256xbf16>,
    %181 = vector.extract_strided_slice %178 {offsets = [1, 0], sizes = [3, 256], strides = [1, 1]} : vector<10x256xbf16> to vector<3x256xbf16>
    %c30_149 = arith.constant 30 : index
    %c256_150 = arith.constant 256 : index
    %182 = vector.load %arg6[%c30_149, %c256_150] : memref<108x2048xbf16, #tpu.memory_space<vmem>>, vector<3x256xbf16>
    tpu.vector_store %arg6[%c30_149, %c256_150], %181 {strides = array<i32>} : memref<108x2048xbf16, #tpu.memory_space<vmem>>, vector<3x256xbf16>,
    %183 = vector.extract_strided_slice %178 {offsets = [2, 0], sizes = [3, 256], strides = [1, 1]} : vector<10x256xbf16> to vector<3x256xbf16>
    %c30_151 = arith.constant 30 : index
    %c512_152 = arith.constant 512 : index
    %184 = vector.load %arg6[%c30_151, %c512_152] : memref<108x2048xbf16, #tpu.memory_space<vmem>>, vector<3x256xbf16>
    tpu.vector_store %arg6[%c30_151, %c512_152], %183 {strides = array<i32>} : memref<108x2048xbf16, #tpu.memory_space<vmem>>, vector<3x256xbf16>,
    %185 = vector.extract_strided_slice %178 {offsets = [3, 0], sizes = [3, 256], strides = [1, 1]} : vector<10x256xbf16> to vector<3x256xbf16>
    %c30_153 = arith.constant 30 : index
    %c768_154 = arith.constant 768 : index
    %186 = vector.load %arg6[%c30_153, %c768_154] : memref<108x2048xbf16, #tpu.memory_space<vmem>>, vector<3x256xbf16>
    tpu.vector_store %arg6[%c30_153, %c768_154], %185 {strides = array<i32>} : memref<108x2048xbf16, #tpu.memory_space<vmem>>, vector<3x256xbf16>,
    %187 = vector.extract_strided_slice %178 {offsets = [4, 0], sizes = [3, 256], strides = [1, 1]} : vector<10x256xbf16> to vector<3x256xbf16>
    %c30_155 = arith.constant 30 : index
    %c1024_156 = arith.constant 1024 : index
    %188 = vector.load %arg6[%c30_155, %c1024_156] : memref<108x2048xbf16, #tpu.memory_space<vmem>>, vector<3x256xbf16>
    tpu.vector_store %arg6[%c30_155, %c1024_156], %187 {strides = array<i32>} : memref<108x2048xbf16, #tpu.memory_space<vmem>>, vector<3x256xbf16>,
    %189 = vector.extract_strided_slice %178 {offsets = [5, 0], sizes = [3, 256], strides = [1, 1]} : vector<10x256xbf16> to vector<3x256xbf16>
    %c30_157 = arith.constant 30 : index
    %c1280_158 = arith.constant 1280 : index
    %190 = vector.load %arg6[%c30_157, %c1280_158] : memref<108x2048xbf16, #tpu.memory_space<vmem>>, vector<3x256xbf16>
    tpu.vector_store %arg6[%c30_157, %c1280_158], %189 {strides = array<i32>} : memref<108x2048xbf16, #tpu.memory_space<vmem>>, vector<3x256xbf16>,
    %191 = vector.extract_strided_slice %178 {offsets = [6, 0], sizes = [3, 256], strides = [1, 1]} : vector<10x256xbf16> to vector<3x256xbf16>
    %c30_159 = arith.constant 30 : index
    %c1536_160 = arith.constant 1536 : index
    %192 = vector.load %arg6[%c30_159, %c1536_160] : memref<108x2048xbf16, #tpu.memory_space<vmem>>, vector<3x256xbf16>
    tpu.vector_store %arg6[%c30_159, %c1536_160], %191 {strides = array<i32>} : memref<108x2048xbf16, #tpu.memory_space<vmem>>, vector<3x256xbf16>,
    %193 = vector.extract_strided_slice %178 {offsets = [7, 0], sizes = [3, 256], strides = [1, 1]} : vector<10x256xbf16> to vector<3x256xbf16>
    %c30_161 = arith.constant 30 : index
    %c1792_162 = arith.constant 1792 : index
    %194 = vector.load %arg6[%c30_161, %c1792_162] : memref<108x2048xbf16, #tpu.memory_space<vmem>>, vector<3x256xbf16>
    tpu.vector_store %arg6[%c30_161, %c1792_162], %193 {strides = array<i32>} : memref<108x2048xbf16, #tpu.memory_space<vmem>>, vector<3x256xbf16>,
    %195 = vector.extract_strided_slice %160 {offsets = [0, 2], sizes = [10, 256], strides = [1, 1]} : vector<10x384xbf16> to vector<10x256xbf16>
    %196 = vector.extract_strided_slice %195 {offsets = [0, 0], sizes = [3, 256], strides = [1, 1]} : vector<10x256xbf16> to vector<3x256xbf16>
    %c33 = arith.constant 33 : index
    %c0_163 = arith.constant 0 : index
    %197 = vector.load %arg6[%c33, %c0_163] : memref<108x2048xbf16, #tpu.memory_space<vmem>>, vector<3x256xbf16>
    tpu.vector_store %arg6[%c33, %c0_163], %196 {strides = array<i32>} : memref<108x2048xbf16, #tpu.memory_space<vmem>>, vector<3x256xbf16>,
    %198 = vector.extract_strided_slice %195 {offsets = [1, 0], sizes = [3, 256], strides = [1, 1]} : vector<10x256xbf16> to vector<3x256xbf16>
    %c33_164 = arith.constant 33 : index
    %c256_165 = arith.constant 256 : index
    %199 = vector.load %arg6[%c33_164, %c256_165] : memref<108x2048xbf16, #tpu.memory_space<vmem>>, vector<3x256xbf16>
    tpu.vector_store %arg6[%c33_164, %c256_165], %198 {strides = array<i32>} : memref<108x2048xbf16, #tpu.memory_space<vmem>>, vector<3x256xbf16>,
    %200 = vector.extract_strided_slice %195 {offsets = [2, 0], sizes = [3, 256], strides = [1, 1]} : vector<10x256xbf16> to vector<3x256xbf16>
    %c33_166 = arith.constant 33 : index
    %c512_167 = arith.constant 512 : index
    %201 = vector.load %arg6[%c33_166, %c512_167] : memref<108x2048xbf16, #tpu.memory_space<vmem>>, vector<3x256xbf16>
    tpu.vector_store %arg6[%c33_166, %c512_167], %200 {strides = array<i32>} : memref<108x2048xbf16, #tpu.memory_space<vmem>>, vector<3x256xbf16>,
    %202 = vector.extract_strided_slice %195 {offsets = [3, 0], sizes = [3, 256], strides = [1, 1]} : vector<10x256xbf16> to vector<3x256xbf16>
    %c33_168 = arith.constant 33 : index
    %c768_169 = arith.constant 768 : index
    %203 = vector.load %arg6[%c33_168, %c768_169] : memref<108x2048xbf16, #tpu.memory_space<vmem>>, vector<3x256xbf16>
    tpu.vector_store %arg6[%c33_168, %c768_169], %202 {strides = array<i32>} : memref<108x2048xbf16, #tpu.memory_space<vmem>>, vector<3x256xbf16>,
    %204 = vector.extract_strided_slice %195 {offsets = [4, 0], sizes = [3, 256], strides = [1, 1]} : vector<10x256xbf16> to vector<3x256xbf16>
    %c33_170 = arith.constant 33 : index
    %c1024_171 = arith.constant 1024 : index
    %205 = vector.load %arg6[%c33_170, %c1024_171] : memref<108x2048xbf16, #tpu.memory_space<vmem>>, vector<3x256xbf16>
    tpu.vector_store %arg6[%c33_170, %c1024_171], %204 {strides = array<i32>} : memref<108x2048xbf16, #tpu.memory_space<vmem>>, vector<3x256xbf16>,
    %206 = vector.extract_strided_slice %195 {offsets = [5, 0], sizes = [3, 256], strides = [1, 1]} : vector<10x256xbf16> to vector<3x256xbf16>
    %c33_172 = arith.constant 33 : index
    %c1280_173 = arith.constant 1280 : index
    %207 = vector.load %arg6[%c33_172, %c1280_173] : memref<108x2048xbf16, #tpu.memory_space<vmem>>, vector<3x256xbf16>
    tpu.vector_store %arg6[%c33_172, %c1280_173], %206 {strides = array<i32>} : memref<108x2048xbf16, #tpu.memory_space<vmem>>, vector<3x256xbf16>,
    %208 = vector.extract_strided_slice %195 {offsets = [6, 0], sizes = [3, 256], strides = [1, 1]} : vector<10x256xbf16> to vector<3x256xbf16>
    %c33_174 = arith.constant 33 : index
    %c1536_175 = arith.constant 1536 : index
    %209 = vector.load %arg6[%c33_174, %c1536_175] : memref<108x2048xbf16, #tpu.memory_space<vmem>>, vector<3x256xbf16>
    tpu.vector_store %arg6[%c33_174, %c1536_175], %208 {strides = array<i32>} : memref<108x2048xbf16, #tpu.memory_space<vmem>>, vector<3x256xbf16>,
    %210 = vector.extract_strided_slice %195 {offsets = [7, 0], sizes = [3, 256], strides = [1, 1]} : vector<10x256xbf16> to vector<3x256xbf16>
    %c33_176 = arith.constant 33 : index
    %c1792_177 = arith.constant 1792 : index
    %211 = vector.load %arg6[%c33_176, %c1792_177] : memref<108x2048xbf16, #tpu.memory_space<vmem>>, vector<3x256xbf16>
    tpu.vector_store %arg6[%c33_176, %c1792_177], %210 {strides = array<i32>} : memref<108x2048xbf16, #tpu.memory_space<vmem>>, vector<3x256xbf16>,
    %212 = vector.extract_strided_slice %160 {offsets = [0, 17], sizes = [10, 256], strides = [1, 1]} : vector<10x384xbf16> to vector<10x256xbf16>
    %213 = vector.extract_strided_slice %212 {offsets = [0, 0], sizes = [3, 256], strides = [1, 1]} : vector<10x256xbf16> to vector<3x256xbf16>
    %c36 = arith.constant 36 : index
    %c0_178 = arith.constant 0 : index
    %214 = vector.load %arg6[%c36, %c0_178] : memref<108x2048xbf16, #tpu.memory_space<vmem>>, vector<3x256xbf16>
    tpu.vector_store %arg6[%c36, %c0_178], %213 {strides = array<i32>} : memref<108x2048xbf16, #tpu.memory_space<vmem>>, vector<3x256xbf16>,
    %215 = vector.extract_strided_slice %212 {offsets = [1, 0], sizes = [3, 256], strides = [1, 1]} : vector<10x256xbf16> to vector<3x256xbf16>
    %c36_179 = arith.constant 36 : index
    %c256_180 = arith.constant 256 : index
    %216 = vector.load %arg6[%c36_179, %c256_180] : memref<108x2048xbf16, #tpu.memory_space<vmem>>, vector<3x256xbf16>
    tpu.vector_store %arg6[%c36_179, %c256_180], %215 {strides = array<i32>} : memref<108x2048xbf16, #tpu.memory_space<vmem>>, vector<3x256xbf16>,
    %217 = vector.extract_strided_slice %212 {offsets = [2, 0], sizes = [3, 256], strides = [1, 1]} : vector<10x256xbf16> to vector<3x256xbf16>
    %c36_181 = arith.constant 36 : index
    %c512_182 = arith.constant 512 : index
    %218 = vector.load %arg6[%c36_181, %c512_182] : memref<108x2048xbf16, #tpu.memory_space<vmem>>, vector<3x256xbf16>
    tpu.vector_store %arg6[%c36_181, %c512_182], %217 {strides = array<i32>} : memref<108x2048xbf16, #tpu.memory_space<vmem>>, vector<3x256xbf16>,
    %219 = vector.extract_strided_slice %212 {offsets = [3, 0], sizes = [3, 256], strides = [1, 1]} : vector<10x256xbf16> to vector<3x256xbf16>
    %c36_183 = arith.constant 36 : index
    %c768_184 = arith.constant 768 : index
    %220 = vector.load %arg6[%c36_183, %c768_184] : memref<108x2048xbf16, #tpu.memory_space<vmem>>, vector<3x256xbf16>
    tpu.vector_store %arg6[%c36_183, %c768_184], %219 {strides = array<i32>} : memref<108x2048xbf16, #tpu.memory_space<vmem>>, vector<3x256xbf16>,
    %221 = vector.extract_strided_slice %212 {offsets = [4, 0], sizes = [3, 256], strides = [1, 1]} : vector<10x256xbf16> to vector<3x256xbf16>
    %c36_185 = arith.constant 36 : index
    %c1024_186 = arith.constant 1024 : index
    %222 = vector.load %arg6[%c36_185, %c1024_186] : memref<108x2048xbf16, #tpu.memory_space<vmem>>, vector<3x256xbf16>
    tpu.vector_store %arg6[%c36_185, %c1024_186], %221 {strides = array<i32>} : memref<108x2048xbf16, #tpu.memory_space<vmem>>, vector<3x256xbf16>,
    %223 = vector.extract_strided_slice %212 {offsets = [5, 0], sizes = [3, 256], strides = [1, 1]} : vector<10x256xbf16> to vector<3x256xbf16>
    %c36_187 = arith.constant 36 : index
    %c1280_188 = arith.constant 1280 : index
    %224 = vector.load %arg6[%c36_187, %c1280_188] : memref<108x2048xbf16, #tpu.memory_space<vmem>>, vector<3x256xbf16>
    tpu.vector_store %arg6[%c36_187, %c1280_188], %223 {strides = array<i32>} : memref<108x2048xbf16, #tpu.memory_space<vmem>>, vector<3x256xbf16>,
    %225 = vector.extract_strided_slice %212 {offsets = [6, 0], sizes = [3, 256], strides = [1, 1]} : vector<10x256xbf16> to vector<3x256xbf16>
    %c36_189 = arith.constant 36 : index
    %c1536_190 = arith.constant 1536 : index
    %226 = vector.load %arg6[%c36_189, %c1536_190] : memref<108x2048xbf16, #tpu.memory_space<vmem>>, vector<3x256xbf16>
    tpu.vector_store %arg6[%c36_189, %c1536_190], %225 {strides = array<i32>} : memref<108x2048xbf16, #tpu.memory_space<vmem>>, vector<3x256xbf16>,
    %227 = vector.extract_strided_slice %212 {offsets = [7, 0], sizes = [3, 256], strides = [1, 1]} : vector<10x256xbf16> to vector<3x256xbf16>
    %c36_191 = arith.constant 36 : index
    %c1792_192 = arith.constant 1792 : index
    %228 = vector.load %arg6[%c36_191, %c1792_192] : memref<108x2048xbf16, #tpu.memory_space<vmem>>, vector<3x256xbf16>
    tpu.vector_store %arg6[%c36_191, %c1792_192], %227 {strides = array<i32>} : memref<108x2048xbf16, #tpu.memory_space<vmem>>, vector<3x256xbf16>,
    %229 = vector.extract_strided_slice %160 {offsets = [0, 18], sizes = [10, 256], strides = [1, 1]} : vector<10x384xbf16> to vector<10x256xbf16>
    %230 = vector.extract_strided_slice %229 {offsets = [0, 0], sizes = [3, 256], strides = [1, 1]} : vector<10x256xbf16> to vector<3x256xbf16>
    %c39 = arith.constant 39 : index
    %c0_193 = arith.constant 0 : index
    %231 = vector.load %arg6[%c39, %c0_193] : memref<108x2048xbf16, #tpu.memory_space<vmem>>, vector<3x256xbf16>
    tpu.vector_store %arg6[%c39, %c0_193], %230 {strides = array<i32>} : memref<108x2048xbf16, #tpu.memory_space<vmem>>, vector<3x256xbf16>,
    %232 = vector.extract_strided_slice %229 {offsets = [1, 0], sizes = [3, 256], strides = [1, 1]} : vector<10x256xbf16> to vector<3x256xbf16>
    %c39_194 = arith.constant 39 : index
    %c256_195 = arith.constant 256 : index
    %233 = vector.load %arg6[%c39_194, %c256_195] : memref<108x2048xbf16, #tpu.memory_space<vmem>>, vector<3x256xbf16>
    tpu.vector_store %arg6[%c39_194, %c256_195], %232 {strides = array<i32>} : memref<108x2048xbf16, #tpu.memory_space<vmem>>, vector<3x256xbf16>,
    %234 = vector.extract_strided_slice %229 {offsets = [2, 0], sizes = [3, 256], strides = [1, 1]} : vector<10x256xbf16> to vector<3x256xbf16>
    %c39_196 = arith.constant 39 : index
    %c512_197 = arith.constant 512 : index
    %235 = vector.load %arg6[%c39_196, %c512_197] : memref<108x2048xbf16, #tpu.memory_space<vmem>>, vector<3x256xbf16>
    tpu.vector_store %arg6[%c39_196, %c512_197], %234 {strides = array<i32>} : memref<108x2048xbf16, #tpu.memory_space<vmem>>, vector<3x256xbf16>,
    %236 = vector.extract_strided_slice %229 {offsets = [3, 0], sizes = [3, 256], strides = [1, 1]} : vector<10x256xbf16> to vector<3x256xbf16>
    %c39_198 = arith.constant 39 : index
    %c768_199 = arith.constant 768 : index
    %237 = vector.load %arg6[%c39_198, %c768_199] : memref<108x2048xbf16, #tpu.memory_space<vmem>>, vector<3x256xbf16>
    tpu.vector_store %arg6[%c39_198, %c768_199], %236 {strides = array<i32>} : memref<108x2048xbf16, #tpu.memory_space<vmem>>, vector<3x256xbf16>,
    %238 = vector.extract_strided_slice %229 {offsets = [4, 0], sizes = [3, 256], strides = [1, 1]} : vector<10x256xbf16> to vector<3x256xbf16>
    %c39_200 = arith.constant 39 : index
    %c1024_201 = arith.constant 1024 : index
    %239 = vector.load %arg6[%c39_200, %c1024_201] : memref<108x2048xbf16, #tpu.memory_space<vmem>>, vector<3x256xbf16>
    tpu.vector_store %arg6[%c39_200, %c1024_201], %238 {strides = array<i32>} : memref<108x2048xbf16, #tpu.memory_space<vmem>>, vector<3x256xbf16>,
    %240 = vector.extract_strided_slice %229 {offsets = [5, 0], sizes = [3, 256], strides = [1, 1]} : vector<10x256xbf16> to vector<3x256xbf16>
    %c39_202 = arith.constant 39 : index
    %c1280_203 = arith.constant 1280 : index
    %241 = vector.load %arg6[%c39_202, %c1280_203] : memref<108x2048xbf16, #tpu.memory_space<vmem>>, vector<3x256xbf16>
    tpu.vector_store %arg6[%c39_202, %c1280_203], %240 {strides = array<i32>} : memref<108x2048xbf16, #tpu.memory_space<vmem>>, vector<3x256xbf16>,
    %242 = vector.extract_strided_slice %229 {offsets = [6, 0], sizes = [3, 256], strides = [1, 1]} : vector<10x256xbf16> to vector<3x256xbf16>
    %c39_204 = arith.constant 39 : index
    %c1536_205 = arith.constant 1536 : index
    %243 = vector.load %arg6[%c39_204, %c1536_205] : memref<108x2048xbf16, #tpu.memory_space<vmem>>, vector<3x256xbf16>
    tpu.vector_store %arg6[%c39_204, %c1536_205], %242 {strides = array<i32>} : memref<108x2048xbf16, #tpu.memory_space<vmem>>, vector<3x256xbf16>,
    %244 = vector.extract_strided_slice %229 {offsets = [7, 0], sizes = [3, 256], strides = [1, 1]} : vector<10x256xbf16> to vector<3x256xbf16>
    %c39_206 = arith.constant 39 : index
    %c1792_207 = arith.constant 1792 : index
    %245 = vector.load %arg6[%c39_206, %c1792_207] : memref<108x2048xbf16, #tpu.memory_space<vmem>>, vector<3x256xbf16>
    tpu.vector_store %arg6[%c39_206, %c1792_207], %244 {strides = array<i32>} : memref<108x2048xbf16, #tpu.memory_space<vmem>>, vector<3x256xbf16>,
    %246 = vector.extract_strided_slice %160 {offsets = [0, 19], sizes = [10, 256], strides = [1, 1]} : vector<10x384xbf16> to vector<10x256xbf16>
    %247 = vector.extract_strided_slice %246 {offsets = [0, 0], sizes = [3, 256], strides = [1, 1]} : vector<10x256xbf16> to vector<3x256xbf16>
    %c42 = arith.constant 42 : index
    %c0_208 = arith.constant 0 : index
    %248 = vector.load %arg6[%c42, %c0_208] : memref<108x2048xbf16, #tpu.memory_space<vmem>>, vector<3x256xbf16>
    tpu.vector_store %arg6[%c42, %c0_208], %247 {strides = array<i32>} : memref<108x2048xbf16, #tpu.memory_space<vmem>>, vector<3x256xbf16>,
    %249 = vector.extract_strided_slice %246 {offsets = [1, 0], sizes = [3, 256], strides = [1, 1]} : vector<10x256xbf16> to vector<3x256xbf16>
    %c42_209 = arith.constant 42 : index
    %c256_210 = arith.constant 256 : index
    %250 = vector.load %arg6[%c42_209, %c256_210] : memref<108x2048xbf16, #tpu.memory_space<vmem>>, vector<3x256xbf16>
    tpu.vector_store %arg6[%c42_209, %c256_210], %249 {strides = array<i32>} : memref<108x2048xbf16, #tpu.memory_space<vmem>>, vector<3x256xbf16>,
    %251 = vector.extract_strided_slice %246 {offsets = [2, 0], sizes = [3, 256], strides = [1, 1]} : vector<10x256xbf16> to vector<3x256xbf16>
    %c42_211 = arith.constant 42 : index
    %c512_212 = arith.constant 512 : index
    %252 = vector.load %arg6[%c42_211, %c512_212] : memref<108x2048xbf16, #tpu.memory_space<vmem>>, vector<3x256xbf16>
    tpu.vector_store %arg6[%c42_211, %c512_212], %251 {strides = array<i32>} : memref<108x2048xbf16, #tpu.memory_space<vmem>>, vector<3x256xbf16>,
    %253 = vector.extract_strided_slice %246 {offsets = [3, 0], sizes = [3, 256], strides = [1, 1]} : vector<10x256xbf16> to vector<3x256xbf16>
    %c42_213 = arith.constant 42 : index
    %c768_214 = arith.constant 768 : index
    %254 = vector.load %arg6[%c42_213, %c768_214] : memref<108x2048xbf16, #tpu.memory_space<vmem>>, vector<3x256xbf16>
    tpu.vector_store %arg6[%c42_213, %c768_214], %253 {strides = array<i32>} : memref<108x2048xbf16, #tpu.memory_space<vmem>>, vector<3x256xbf16>,
    %255 = vector.extract_strided_slice %246 {offsets = [4, 0], sizes = [3, 256], strides = [1, 1]} : vector<10x256xbf16> to vector<3x256xbf16>
    %c42_215 = arith.constant 42 : index
    %c1024_216 = arith.constant 1024 : index
    %256 = vector.load %arg6[%c42_215, %c1024_216] : memref<108x2048xbf16, #tpu.memory_space<vmem>>, vector<3x256xbf16>
    tpu.vector_store %arg6[%c42_215, %c1024_216], %255 {strides = array<i32>} : memref<108x2048xbf16, #tpu.memory_space<vmem>>, vector<3x256xbf16>,
    %257 = vector.extract_strided_slice %246 {offsets = [5, 0], sizes = [3, 256], strides = [1, 1]} : vector<10x256xbf16> to vector<3x256xbf16>
    %c42_217 = arith.constant 42 : index
    %c1280_218 = arith.constant 1280 : index
    %258 = vector.load %arg6[%c42_217, %c1280_218] : memref<108x2048xbf16, #tpu.memory_space<vmem>>, vector<3x256xbf16>
    tpu.vector_store %arg6[%c42_217, %c1280_218], %257 {strides = array<i32>} : memref<108x2048xbf16, #tpu.memory_space<vmem>>, vector<3x256xbf16>,
    %259 = vector.extract_strided_slice %246 {offsets = [6, 0], sizes = [3, 256], strides = [1, 1]} : vector<10x256xbf16> to vector<3x256xbf16>
    %c42_219 = arith.constant 42 : index
    %c1536_220 = arith.constant 1536 : index
    %260 = vector.load %arg6[%c42_219, %c1536_220] : memref<108x2048xbf16, #tpu.memory_space<vmem>>, vector<3x256xbf16>
    tpu.vector_store %arg6[%c42_219, %c1536_220], %259 {strides = array<i32>} : memref<108x2048xbf16, #tpu.memory_space<vmem>>, vector<3x256xbf16>,
    %261 = vector.extract_strided_slice %246 {offsets = [7, 0], sizes = [3, 256], strides = [1, 1]} : vector<10x256xbf16> to vector<3x256xbf16>
    %c42_221 = arith.constant 42 : index
    %c1792_222 = arith.constant 1792 : index
    %262 = vector.load %arg6[%c42_221, %c1792_222] : memref<108x2048xbf16, #tpu.memory_space<vmem>>, vector<3x256xbf16>
    tpu.vector_store %arg6[%c42_221, %c1792_222], %261 {strides = array<i32>} : memref<108x2048xbf16, #tpu.memory_space<vmem>>, vector<3x256xbf16>,
    %263 = vector.extract_strided_slice %160 {offsets = [0, 34], sizes = [10, 256], strides = [1, 1]} : vector<10x384xbf16> to vector<10x256xbf16>
    %264 = vector.extract_strided_slice %263 {offsets = [0, 0], sizes = [3, 256], strides = [1, 1]} : vector<10x256xbf16> to vector<3x256xbf16>
    %c45 = arith.constant 45 : index
    %c0_223 = arith.constant 0 : index
    %265 = vector.load %arg6[%c45, %c0_223] : memref<108x2048xbf16, #tpu.memory_space<vmem>>, vector<3x256xbf16>
    tpu.vector_store %arg6[%c45, %c0_223], %264 {strides = array<i32>} : memref<108x2048xbf16, #tpu.memory_space<vmem>>, vector<3x256xbf16>,
    %266 = vector.extract_strided_slice %263 {offsets = [1, 0], sizes = [3, 256], strides = [1, 1]} : vector<10x256xbf16> to vector<3x256xbf16>
    %c45_224 = arith.constant 45 : index
    %c256_225 = arith.constant 256 : index
    %267 = vector.load %arg6[%c45_224, %c256_225] : memref<108x2048xbf16, #tpu.memory_space<vmem>>, vector<3x256xbf16>
    tpu.vector_store %arg6[%c45_224, %c256_225], %266 {strides = array<i32>} : memref<108x2048xbf16, #tpu.memory_space<vmem>>, vector<3x256xbf16>,
    %268 = vector.extract_strided_slice %263 {offsets = [2, 0], sizes = [3, 256], strides = [1, 1]} : vector<10x256xbf16> to vector<3x256xbf16>
    %c45_226 = arith.constant 45 : index
    %c512_227 = arith.constant 512 : index
    %269 = vector.load %arg6[%c45_226, %c512_227] : memref<108x2048xbf16, #tpu.memory_space<vmem>>, vector<3x256xbf16>
    tpu.vector_store %arg6[%c45_226, %c512_227], %268 {strides = array<i32>} : memref<108x2048xbf16, #tpu.memory_space<vmem>>, vector<3x256xbf16>,
    %270 = vector.extract_strided_slice %263 {offsets = [3, 0], sizes = [3, 256], strides = [1, 1]} : vector<10x256xbf16> to vector<3x256xbf16>
    %c45_228 = arith.constant 45 : index
    %c768_229 = arith.constant 768 : index
    %271 = vector.load %arg6[%c45_228, %c768_229] : memref<108x2048xbf16, #tpu.memory_space<vmem>>, vector<3x256xbf16>
    tpu.vector_store %arg6[%c45_228, %c768_229], %270 {strides = array<i32>} : memref<108x2048xbf16, #tpu.memory_space<vmem>>, vector<3x256xbf16>,
    %272 = vector.extract_strided_slice %263 {offsets = [4, 0], sizes = [3, 256], strides = [1, 1]} : vector<10x256xbf16> to vector<3x256xbf16>
    %c45_230 = arith.constant 45 : index
    %c1024_231 = arith.constant 1024 : index
    %273 = vector.load %arg6[%c45_230, %c1024_231] : memref<108x2048xbf16, #tpu.memory_space<vmem>>, vector<3x256xbf16>
    tpu.vector_store %arg6[%c45_230, %c1024_231], %272 {strides = array<i32>} : memref<108x2048xbf16, #tpu.memory_space<vmem>>, vector<3x256xbf16>,
    %274 = vector.extract_strided_slice %263 {offsets = [5, 0], sizes = [3, 256], strides = [1, 1]} : vector<10x256xbf16> to vector<3x256xbf16>
    %c45_232 = arith.constant 45 : index
    %c1280_233 = arith.constant 1280 : index
    %275 = vector.load %arg6[%c45_232, %c1280_233] : memref<108x2048xbf16, #tpu.memory_space<vmem>>, vector<3x256xbf16>
    tpu.vector_store %arg6[%c45_232, %c1280_233], %274 {strides = array<i32>} : memref<108x2048xbf16, #tpu.memory_space<vmem>>, vector<3x256xbf16>,
    %276 = vector.extract_strided_slice %263 {offsets = [6, 0], sizes = [3, 256], strides = [1, 1]} : vector<10x256xbf16> to vector<3x256xbf16>
    %c45_234 = arith.constant 45 : index
    %c1536_235 = arith.constant 1536 : index
    %277 = vector.load %arg6[%c45_234, %c1536_235] : memref<108x2048xbf16, #tpu.memory_space<vmem>>, vector<3x256xbf16>
    tpu.vector_store %arg6[%c45_234, %c1536_235], %276 {strides = array<i32>} : memref<108x2048xbf16, #tpu.memory_space<vmem>>, vector<3x256xbf16>,
    %278 = vector.extract_strided_slice %263 {offsets = [7, 0], sizes = [3, 256], strides = [1, 1]} : vector<10x256xbf16> to vector<3x256xbf16>
    %c45_236 = arith.constant 45 : index
    %c1792_237 = arith.constant 1792 : index
    %279 = vector.load %arg6[%c45_236, %c1792_237] : memref<108x2048xbf16, #tpu.memory_space<vmem>>, vector<3x256xbf16>
    tpu.vector_store %arg6[%c45_236, %c1792_237], %278 {strides = array<i32>} : memref<108x2048xbf16, #tpu.memory_space<vmem>>, vector<3x256xbf16>,
    %280 = vector.extract_strided_slice %160 {offsets = [0, 35], sizes = [10, 256], strides = [1, 1]} : vector<10x384xbf16> to vector<10x256xbf16>
    %281 = vector.extract_strided_slice %280 {offsets = [0, 0], sizes = [3, 256], strides = [1, 1]} : vector<10x256xbf16> to vector<3x256xbf16>
    %c48 = arith.constant 48 : index
    %c0_238 = arith.constant 0 : index
    %282 = vector.load %arg6[%c48, %c0_238] : memref<108x2048xbf16, #tpu.memory_space<vmem>>, vector<3x256xbf16>
    tpu.vector_store %arg6[%c48, %c0_238], %281 {strides = array<i32>} : memref<108x2048xbf16, #tpu.memory_space<vmem>>, vector<3x256xbf16>,
    %283 = vector.extract_strided_slice %280 {offsets = [1, 0], sizes = [3, 256], strides = [1, 1]} : vector<10x256xbf16> to vector<3x256xbf16>
    %c48_239 = arith.constant 48 : index
    %c256_240 = arith.constant 256 : index
    %284 = vector.load %arg6[%c48_239, %c256_240] : memref<108x2048xbf16, #tpu.memory_space<vmem>>, vector<3x256xbf16>
    tpu.vector_store %arg6[%c48_239, %c256_240], %283 {strides = array<i32>} : memref<108x2048xbf16, #tpu.memory_space<vmem>>, vector<3x256xbf16>,
    %285 = vector.extract_strided_slice %280 {offsets = [2, 0], sizes = [3, 256], strides = [1, 1]} : vector<10x256xbf16> to vector<3x256xbf16>
    %c48_241 = arith.constant 48 : index
    %c512_242 = arith.constant 512 : index
    %286 = vector.load %arg6[%c48_241, %c512_242] : memref<108x2048xbf16, #tpu.memory_space<vmem>>, vector<3x256xbf16>
    tpu.vector_store %arg6[%c48_241, %c512_242], %285 {strides = array<i32>} : memref<108x2048xbf16, #tpu.memory_space<vmem>>, vector<3x256xbf16>,
    %287 = vector.extract_strided_slice %280 {offsets = [3, 0], sizes = [3, 256], strides = [1, 1]} : vector<10x256xbf16> to vector<3x256xbf16>
    %c48_243 = arith.constant 48 : index
    %c768_244 = arith.constant 768 : index
    %288 = vector.load %arg6[%c48_243, %c768_244] : memref<108x2048xbf16, #tpu.memory_space<vmem>>, vector<3x256xbf16>
    tpu.vector_store %arg6[%c48_243, %c768_244], %287 {strides = array<i32>} : memref<108x2048xbf16, #tpu.memory_space<vmem>>, vector<3x256xbf16>,
    %289 = vector.extract_strided_slice %280 {offsets = [4, 0], sizes = [3, 256], strides = [1, 1]} : vector<10x256xbf16> to vector<3x256xbf16>
    %c48_245 = arith.constant 48 : index
    %c1024_246 = arith.constant 1024 : index
    %290 = vector.load %arg6[%c48_245, %c1024_246] : memref<108x2048xbf16, #tpu.memory_space<vmem>>, vector<3x256xbf16>
    tpu.vector_store %arg6[%c48_245, %c1024_246], %289 {strides = array<i32>} : memref<108x2048xbf16, #tpu.memory_space<vmem>>, vector<3x256xbf16>,
    %291 = vector.extract_strided_slice %280 {offsets = [5, 0], sizes = [3, 256], strides = [1, 1]} : vector<10x256xbf16> to vector<3x256xbf16>
    %c48_247 = arith.constant 48 : index
    %c1280_248 = arith.constant 1280 : index
    %292 = vector.load %arg6[%c48_247, %c1280_248] : memref<108x2048xbf16, #tpu.memory_space<vmem>>, vector<3x256xbf16>
    tpu.vector_store %arg6[%c48_247, %c1280_248], %291 {strides = array<i32>} : memref<108x2048xbf16, #tpu.memory_space<vmem>>, vector<3x256xbf16>,
    %293 = vector.extract_strided_slice %280 {offsets = [6, 0], sizes = [3, 256], strides = [1, 1]} : vector<10x256xbf16> to vector<3x256xbf16>
    %c48_249 = arith.constant 48 : index
    %c1536_250 = arith.constant 1536 : index
    %294 = vector.load %arg6[%c48_249, %c1536_250] : memref<108x2048xbf16, #tpu.memory_space<vmem>>, vector<3x256xbf16>
    tpu.vector_store %arg6[%c48_249, %c1536_250], %293 {strides = array<i32>} : memref<108x2048xbf16, #tpu.memory_space<vmem>>, vector<3x256xbf16>,
    %295 = vector.extract_strided_slice %280 {offsets = [7, 0], sizes = [3, 256], strides = [1, 1]} : vector<10x256xbf16> to vector<3x256xbf16>
    %c48_251 = arith.constant 48 : index
    %c1792_252 = arith.constant 1792 : index
    %296 = vector.load %arg6[%c48_251, %c1792_252] : memref<108x2048xbf16, #tpu.memory_space<vmem>>, vector<3x256xbf16>
    tpu.vector_store %arg6[%c48_251, %c1792_252], %295 {strides = array<i32>} : memref<108x2048xbf16, #tpu.memory_space<vmem>>, vector<3x256xbf16>,
    %297 = vector.extract_strided_slice %160 {offsets = [0, 36], sizes = [10, 256], strides = [1, 1]} : vector<10x384xbf16> to vector<10x256xbf16>
    %298 = vector.extract_strided_slice %297 {offsets = [0, 0], sizes = [3, 256], strides = [1, 1]} : vector<10x256xbf16> to vector<3x256xbf16>
    %c51 = arith.constant 51 : index
    %c0_253 = arith.constant 0 : index
    %299 = vector.load %arg6[%c51, %c0_253] : memref<108x2048xbf16, #tpu.memory_space<vmem>>, vector<3x256xbf16>
    tpu.vector_store %arg6[%c51, %c0_253], %298 {strides = array<i32>} : memref<108x2048xbf16, #tpu.memory_space<vmem>>, vector<3x256xbf16>,
    %300 = vector.extract_strided_slice %297 {offsets = [1, 0], sizes = [3, 256], strides = [1, 1]} : vector<10x256xbf16> to vector<3x256xbf16>
    %c51_254 = arith.constant 51 : index
    %c256_255 = arith.constant 256 : index
    %301 = vector.load %arg6[%c51_254, %c256_255] : memref<108x2048xbf16, #tpu.memory_space<vmem>>, vector<3x256xbf16>
    tpu.vector_store %arg6[%c51_254, %c256_255], %300 {strides = array<i32>} : memref<108x2048xbf16, #tpu.memory_space<vmem>>, vector<3x256xbf16>,
    %302 = vector.extract_strided_slice %297 {offsets = [2, 0], sizes = [3, 256], strides = [1, 1]} : vector<10x256xbf16> to vector<3x256xbf16>
    %c51_256 = arith.constant 51 : index
    %c512_257 = arith.constant 512 : index
    %303 = vector.load %arg6[%c51_256, %c512_257] : memref<108x2048xbf16, #tpu.memory_space<vmem>>, vector<3x256xbf16>
    tpu.vector_store %arg6[%c51_256, %c512_257], %302 {strides = array<i32>} : memref<108x2048xbf16, #tpu.memory_space<vmem>>, vector<3x256xbf16>,
    %304 = vector.extract_strided_slice %297 {offsets = [3, 0], sizes = [3, 256], strides = [1, 1]} : vector<10x256xbf16> to vector<3x256xbf16>
    %c51_258 = arith.constant 51 : index
    %c768_259 = arith.constant 768 : index
    %305 = vector.load %arg6[%c51_258, %c768_259] : memref<108x2048xbf16, #tpu.memory_space<vmem>>, vector<3x256xbf16>
    tpu.vector_store %arg6[%c51_258, %c768_259], %304 {strides = array<i32>} : memref<108x2048xbf16, #tpu.memory_space<vmem>>, vector<3x256xbf16>,
    %306 = vector.extract_strided_slice %297 {offsets = [4, 0], sizes = [3, 256], strides = [1, 1]} : vector<10x256xbf16> to vector<3x256xbf16>
    %c51_260 = arith.constant 51 : index
    %c1024_261 = arith.constant 1024 : index
    %307 = vector.load %arg6[%c51_260, %c1024_261] : memref<108x2048xbf16, #tpu.memory_space<vmem>>, vector<3x256xbf16>
    tpu.vector_store %arg6[%c51_260, %c1024_261], %306 {strides = array<i32>} : memref<108x2048xbf16, #tpu.memory_space<vmem>>, vector<3x256xbf16>,
    %308 = vector.extract_strided_slice %297 {offsets = [5, 0], sizes = [3, 256], strides = [1, 1]} : vector<10x256xbf16> to vector<3x256xbf16>
    %c51_262 = arith.constant 51 : index
    %c1280_263 = arith.constant 1280 : index
    %309 = vector.load %arg6[%c51_262, %c1280_263] : memref<108x2048xbf16, #tpu.memory_space<vmem>>, vector<3x256xbf16>
    tpu.vector_store %arg6[%c51_262, %c1280_263], %308 {strides = array<i32>} : memref<108x2048xbf16, #tpu.memory_space<vmem>>, vector<3x256xbf16>,
    %310 = vector.extract_strided_slice %297 {offsets = [6, 0], sizes = [3, 256], strides = [1, 1]} : vector<10x256xbf16> to vector<3x256xbf16>
    %c51_264 = arith.constant 51 : index
    %c1536_265 = arith.constant 1536 : index
    %311 = vector.load %arg6[%c51_264, %c1536_265] : memref<108x2048xbf16, #tpu.memory_space<vmem>>, vector<3x256xbf16>
    tpu.vector_store %arg6[%c51_264, %c1536_265], %310 {strides = array<i32>} : memref<108x2048xbf16, #tpu.memory_space<vmem>>, vector<3x256xbf16>,
    %312 = vector.extract_strided_slice %297 {offsets = [7, 0], sizes = [3, 256], strides = [1, 1]} : vector<10x256xbf16> to vector<3x256xbf16>
    %c51_266 = arith.constant 51 : index
    %c1792_267 = arith.constant 1792 : index
    %313 = vector.load %arg6[%c51_266, %c1792_267] : memref<108x2048xbf16, #tpu.memory_space<vmem>>, vector<3x256xbf16>
    tpu.vector_store %arg6[%c51_266, %c1792_267], %312 {strides = array<i32>} : memref<108x2048xbf16, #tpu.memory_space<vmem>>, vector<3x256xbf16>,
    %c0_268 = arith.constant 0 : index
    %c2 = arith.constant 2 : index
    %314 = arith.index_cast %1 : i32 to index
    %c0_269 = arith.constant 0 : index
    %315 = vector.load %arg2[%c0_268, %c2, %314, %c0_269] : memref<1x4x18x384xbf16, #tpu.memory_space<vmem>>, vector<1x1x10x384xbf16>
    %316 = vector.shape_cast %315 : vector<1x1x10x384xbf16> to vector<10x384xbf16>
    %317 = vector.extract_strided_slice %316 {offsets = [0, 0], sizes = [10, 256], strides = [1, 1]} : vector<10x384xbf16> to vector<10x256xbf16>
    %318 = vector.extract_strided_slice %317 {offsets = [0, 0], sizes = [3, 256], strides = [1, 1]} : vector<10x256xbf16> to vector<3x256xbf16>
    %c54 = arith.constant 54 : index
    %c0_270 = arith.constant 0 : index
    %319 = vector.load %arg6[%c54, %c0_270] : memref<108x2048xbf16, #tpu.memory_space<vmem>>, vector<3x256xbf16>
    tpu.vector_store %arg6[%c54, %c0_270], %318 {strides = array<i32>} : memref<108x2048xbf16, #tpu.memory_space<vmem>>, vector<3x256xbf16>,
    %320 = vector.extract_strided_slice %317 {offsets = [1, 0], sizes = [3, 256], strides = [1, 1]} : vector<10x256xbf16> to vector<3x256xbf16>
    %c54_271 = arith.constant 54 : index
    %c256_272 = arith.constant 256 : index
    %321 = vector.load %arg6[%c54_271, %c256_272] : memref<108x2048xbf16, #tpu.memory_space<vmem>>, vector<3x256xbf16>
    tpu.vector_store %arg6[%c54_271, %c256_272], %320 {strides = array<i32>} : memref<108x2048xbf16, #tpu.memory_space<vmem>>, vector<3x256xbf16>,
    %322 = vector.extract_strided_slice %317 {offsets = [2, 0], sizes = [3, 256], strides = [1, 1]} : vector<10x256xbf16> to vector<3x256xbf16>
    %c54_273 = arith.constant 54 : index
    %c512_274 = arith.constant 512 : index
    %323 = vector.load %arg6[%c54_273, %c512_274] : memref<108x2048xbf16, #tpu.memory_space<vmem>>, vector<3x256xbf16>
    tpu.vector_store %arg6[%c54_273, %c512_274], %322 {strides = array<i32>} : memref<108x2048xbf16, #tpu.memory_space<vmem>>, vector<3x256xbf16>,
    %324 = vector.extract_strided_slice %317 {offsets = [3, 0], sizes = [3, 256], strides = [1, 1]} : vector<10x256xbf16> to vector<3x256xbf16>
    %c54_275 = arith.constant 54 : index
    %c768_276 = arith.constant 768 : index
    %325 = vector.load %arg6[%c54_275, %c768_276] : memref<108x2048xbf16, #tpu.memory_space<vmem>>, vector<3x256xbf16>
    tpu.vector_store %arg6[%c54_275, %c768_276], %324 {strides = array<i32>} : memref<108x2048xbf16, #tpu.memory_space<vmem>>, vector<3x256xbf16>,
    %326 = vector.extract_strided_slice %317 {offsets = [4, 0], sizes = [3, 256], strides = [1, 1]} : vector<10x256xbf16> to vector<3x256xbf16>
    %c54_277 = arith.constant 54 : index
    %c1024_278 = arith.constant 1024 : index
    %327 = vector.load %arg6[%c54_277, %c1024_278] : memref<108x2048xbf16, #tpu.memory_space<vmem>>, vector<3x256xbf16>
    tpu.vector_store %arg6[%c54_277, %c1024_278], %326 {strides = array<i32>} : memref<108x2048xbf16, #tpu.memory_space<vmem>>, vector<3x256xbf16>,
    %328 = vector.extract_strided_slice %317 {offsets = [5, 0], sizes = [3, 256], strides = [1, 1]} : vector<10x256xbf16> to vector<3x256xbf16>
    %c54_279 = arith.constant 54 : index
    %c1280_280 = arith.constant 1280 : index
    %329 = vector.load %arg6[%c54_279, %c1280_280] : memref<108x2048xbf16, #tpu.memory_space<vmem>>, vector<3x256xbf16>
    tpu.vector_store %arg6[%c54_279, %c1280_280], %328 {strides = array<i32>} : memref<108x2048xbf16, #tpu.memory_space<vmem>>, vector<3x256xbf16>,
    %330 = vector.extract_strided_slice %317 {offsets = [6, 0], sizes = [3, 256], strides = [1, 1]} : vector<10x256xbf16> to vector<3x256xbf16>
    %c54_281 = arith.constant 54 : index
    %c1536_282 = arith.constant 1536 : index
    %331 = vector.load %arg6[%c54_281, %c1536_282] : memref<108x2048xbf16, #tpu.memory_space<vmem>>, vector<3x256xbf16>
    tpu.vector_store %arg6[%c54_281, %c1536_282], %330 {strides = array<i32>} : memref<108x2048xbf16, #tpu.memory_space<vmem>>, vector<3x256xbf16>,
    %332 = vector.extract_strided_slice %317 {offsets = [7, 0], sizes = [3, 256], strides = [1, 1]} : vector<10x256xbf16> to vector<3x256xbf16>
    %c54_283 = arith.constant 54 : index
    %c1792_284 = arith.constant 1792 : index
    %333 = vector.load %arg6[%c54_283, %c1792_284] : memref<108x2048xbf16, #tpu.memory_space<vmem>>, vector<3x256xbf16>
    tpu.vector_store %arg6[%c54_283, %c1792_284], %332 {strides = array<i32>} : memref<108x2048xbf16, #tpu.memory_space<vmem>>, vector<3x256xbf16>,
    %334 = vector.extract_strided_slice %316 {offsets = [0, 1], sizes = [10, 256], strides = [1, 1]} : vector<10x384xbf16> to vector<10x256xbf16>
    %335 = vector.extract_strided_slice %334 {offsets = [0, 0], sizes = [3, 256], strides = [1, 1]} : vector<10x256xbf16> to vector<3x256xbf16>
    %c57 = arith.constant 57 : index
    %c0_285 = arith.constant 0 : index
    %336 = vector.load %arg6[%c57, %c0_285] : memref<108x2048xbf16, #tpu.memory_space<vmem>>, vector<3x256xbf16>
    tpu.vector_store %arg6[%c57, %c0_285], %335 {strides = array<i32>} : memref<108x2048xbf16, #tpu.memory_space<vmem>>, vector<3x256xbf16>,
    %337 = vector.extract_strided_slice %334 {offsets = [1, 0], sizes = [3, 256], strides = [1, 1]} : vector<10x256xbf16> to vector<3x256xbf16>
    %c57_286 = arith.constant 57 : index
    %c256_287 = arith.constant 256 : index
    %338 = vector.load %arg6[%c57_286, %c256_287] : memref<108x2048xbf16, #tpu.memory_space<vmem>>, vector<3x256xbf16>
    tpu.vector_store %arg6[%c57_286, %c256_287], %337 {strides = array<i32>} : memref<108x2048xbf16, #tpu.memory_space<vmem>>, vector<3x256xbf16>,
    %339 = vector.extract_strided_slice %334 {offsets = [2, 0], sizes = [3, 256], strides = [1, 1]} : vector<10x256xbf16> to vector<3x256xbf16>
    %c57_288 = arith.constant 57 : index
    %c512_289 = arith.constant 512 : index
    %340 = vector.load %arg6[%c57_288, %c512_289] : memref<108x2048xbf16, #tpu.memory_space<vmem>>, vector<3x256xbf16>
    tpu.vector_store %arg6[%c57_288, %c512_289], %339 {strides = array<i32>} : memref<108x2048xbf16, #tpu.memory_space<vmem>>, vector<3x256xbf16>,
    %341 = vector.extract_strided_slice %334 {offsets = [3, 0], sizes = [3, 256], strides = [1, 1]} : vector<10x256xbf16> to vector<3x256xbf16>
    %c57_290 = arith.constant 57 : index
    %c768_291 = arith.constant 768 : index
    %342 = vector.load %arg6[%c57_290, %c768_291] : memref<108x2048xbf16, #tpu.memory_space<vmem>>, vector<3x256xbf16>
    tpu.vector_store %arg6[%c57_290, %c768_291], %341 {strides = array<i32>} : memref<108x2048xbf16, #tpu.memory_space<vmem>>, vector<3x256xbf16>,
    %343 = vector.extract_strided_slice %334 {offsets = [4, 0], sizes = [3, 256], strides = [1, 1]} : vector<10x256xbf16> to vector<3x256xbf16>
    %c57_292 = arith.constant 57 : index
    %c1024_293 = arith.constant 1024 : index
    %344 = vector.load %arg6[%c57_292, %c1024_293] : memref<108x2048xbf16, #tpu.memory_space<vmem>>, vector<3x256xbf16>
    tpu.vector_store %arg6[%c57_292, %c1024_293], %343 {strides = array<i32>} : memref<108x2048xbf16, #tpu.memory_space<vmem>>, vector<3x256xbf16>,
    %345 = vector.extract_strided_slice %334 {offsets = [5, 0], sizes = [3, 256], strides = [1, 1]} : vector<10x256xbf16> to vector<3x256xbf16>
    %c57_294 = arith.constant 57 : index
    %c1280_295 = arith.constant 1280 : index
    %346 = vector.load %arg6[%c57_294, %c1280_295] : memref<108x2048xbf16, #tpu.memory_space<vmem>>, vector<3x256xbf16>
    tpu.vector_store %arg6[%c57_294, %c1280_295], %345 {strides = array<i32>} : memref<108x2048xbf16, #tpu.memory_space<vmem>>, vector<3x256xbf16>,
    %347 = vector.extract_strided_slice %334 {offsets = [6, 0], sizes = [3, 256], strides = [1, 1]} : vector<10x256xbf16> to vector<3x256xbf16>
    %c57_296 = arith.constant 57 : index
    %c1536_297 = arith.constant 1536 : index
    %348 = vector.load %arg6[%c57_296, %c1536_297] : memref<108x2048xbf16, #tpu.memory_space<vmem>>, vector<3x256xbf16>
    tpu.vector_store %arg6[%c57_296, %c1536_297], %347 {strides = array<i32>} : memref<108x2048xbf16, #tpu.memory_space<vmem>>, vector<3x256xbf16>,
    %349 = vector.extract_strided_slice %334 {offsets = [7, 0], sizes = [3, 256], strides = [1, 1]} : vector<10x256xbf16> to vector<3x256xbf16>
    %c57_298 = arith.constant 57 : index
    %c1792_299 = arith.constant 1792 : index
    %350 = vector.load %arg6[%c57_298, %c1792_299] : memref<108x2048xbf16, #tpu.memory_space<vmem>>, vector<3x256xbf16>
    tpu.vector_store %arg6[%c57_298, %c1792_299], %349 {strides = array<i32>} : memref<108x2048xbf16, #tpu.memory_space<vmem>>, vector<3x256xbf16>,
    %351 = vector.extract_strided_slice %316 {offsets = [0, 2], sizes = [10, 256], strides = [1, 1]} : vector<10x384xbf16> to vector<10x256xbf16>
    %352 = vector.extract_strided_slice %351 {offsets = [0, 0], sizes = [3, 256], strides = [1, 1]} : vector<10x256xbf16> to vector<3x256xbf16>
    %c60 = arith.constant 60 : index
    %c0_300 = arith.constant 0 : index
    %353 = vector.load %arg6[%c60, %c0_300] : memref<108x2048xbf16, #tpu.memory_space<vmem>>, vector<3x256xbf16>
    tpu.vector_store %arg6[%c60, %c0_300], %352 {strides = array<i32>} : memref<108x2048xbf16, #tpu.memory_space<vmem>>, vector<3x256xbf16>,
    %354 = vector.extract_strided_slice %351 {offsets = [1, 0], sizes = [3, 256], strides = [1, 1]} : vector<10x256xbf16> to vector<3x256xbf16>
    %c60_301 = arith.constant 60 : index
    %c256_302 = arith.constant 256 : index
    %355 = vector.load %arg6[%c60_301, %c256_302] : memref<108x2048xbf16, #tpu.memory_space<vmem>>, vector<3x256xbf16>
    tpu.vector_store %arg6[%c60_301, %c256_302], %354 {strides = array<i32>} : memref<108x2048xbf16, #tpu.memory_space<vmem>>, vector<3x256xbf16>,
    %356 = vector.extract_strided_slice %351 {offsets = [2, 0], sizes = [3, 256], strides = [1, 1]} : vector<10x256xbf16> to vector<3x256xbf16>
    %c60_303 = arith.constant 60 : index
    %c512_304 = arith.constant 512 : index
    %357 = vector.load %arg6[%c60_303, %c512_304] : memref<108x2048xbf16, #tpu.memory_space<vmem>>, vector<3x256xbf16>
    tpu.vector_store %arg6[%c60_303, %c512_304], %356 {strides = array<i32>} : memref<108x2048xbf16, #tpu.memory_space<vmem>>, vector<3x256xbf16>,
    %358 = vector.extract_strided_slice %351 {offsets = [3, 0], sizes = [3, 256], strides = [1, 1]} : vector<10x256xbf16> to vector<3x256xbf16>
    %c60_305 = arith.constant 60 : index
    %c768_306 = arith.constant 768 : index
    %359 = vector.load %arg6[%c60_305, %c768_306] : memref<108x2048xbf16, #tpu.memory_space<vmem>>, vector<3x256xbf16>
    tpu.vector_store %arg6[%c60_305, %c768_306], %358 {strides = array<i32>} : memref<108x2048xbf16, #tpu.memory_space<vmem>>, vector<3x256xbf16>,
    %360 = vector.extract_strided_slice %351 {offsets = [4, 0], sizes = [3, 256], strides = [1, 1]} : vector<10x256xbf16> to vector<3x256xbf16>
    %c60_307 = arith.constant 60 : index
    %c1024_308 = arith.constant 1024 : index
    %361 = vector.load %arg6[%c60_307, %c1024_308] : memref<108x2048xbf16, #tpu.memory_space<vmem>>, vector<3x256xbf16>
    tpu.vector_store %arg6[%c60_307, %c1024_308], %360 {strides = array<i32>} : memref<108x2048xbf16, #tpu.memory_space<vmem>>, vector<3x256xbf16>,
    %362 = vector.extract_strided_slice %351 {offsets = [5, 0], sizes = [3, 256], strides = [1, 1]} : vector<10x256xbf16> to vector<3x256xbf16>
    %c60_309 = arith.constant 60 : index
    %c1280_310 = arith.constant 1280 : index
    %363 = vector.load %arg6[%c60_309, %c1280_310] : memref<108x2048xbf16, #tpu.memory_space<vmem>>, vector<3x256xbf16>
    tpu.vector_store %arg6[%c60_309, %c1280_310], %362 {strides = array<i32>} : memref<108x2048xbf16, #tpu.memory_space<vmem>>, vector<3x256xbf16>,
    %364 = vector.extract_strided_slice %351 {offsets = [6, 0], sizes = [3, 256], strides = [1, 1]} : vector<10x256xbf16> to vector<3x256xbf16>
    %c60_311 = arith.constant 60 : index
    %c1536_312 = arith.constant 1536 : index
    %365 = vector.load %arg6[%c60_311, %c1536_312] : memref<108x2048xbf16, #tpu.memory_space<vmem>>, vector<3x256xbf16>
    tpu.vector_store %arg6[%c60_311, %c1536_312], %364 {strides = array<i32>} : memref<108x2048xbf16, #tpu.memory_space<vmem>>, vector<3x256xbf16>,
    %366 = vector.extract_strided_slice %351 {offsets = [7, 0], sizes = [3, 256], strides = [1, 1]} : vector<10x256xbf16> to vector<3x256xbf16>
    %c60_313 = arith.constant 60 : index
    %c1792_314 = arith.constant 1792 : index
    %367 = vector.load %arg6[%c60_313, %c1792_314] : memref<108x2048xbf16, #tpu.memory_space<vmem>>, vector<3x256xbf16>
    tpu.vector_store %arg6[%c60_313, %c1792_314], %366 {strides = array<i32>} : memref<108x2048xbf16, #tpu.memory_space<vmem>>, vector<3x256xbf16>,
    %368 = vector.extract_strided_slice %316 {offsets = [0, 17], sizes = [10, 256], strides = [1, 1]} : vector<10x384xbf16> to vector<10x256xbf16>
    %369 = vector.extract_strided_slice %368 {offsets = [0, 0], sizes = [3, 256], strides = [1, 1]} : vector<10x256xbf16> to vector<3x256xbf16>
    %c63 = arith.constant 63 : index
    %c0_315 = arith.constant 0 : index
    %370 = vector.load %arg6[%c63, %c0_315] : memref<108x2048xbf16, #tpu.memory_space<vmem>>, vector<3x256xbf16>
    tpu.vector_store %arg6[%c63, %c0_315], %369 {strides = array<i32>} : memref<108x2048xbf16, #tpu.memory_space<vmem>>, vector<3x256xbf16>,
    %371 = vector.extract_strided_slice %368 {offsets = [1, 0], sizes = [3, 256], strides = [1, 1]} : vector<10x256xbf16> to vector<3x256xbf16>
    %c63_316 = arith.constant 63 : index
    %c256_317 = arith.constant 256 : index
    %372 = vector.load %arg6[%c63_316, %c256_317] : memref<108x2048xbf16, #tpu.memory_space<vmem>>, vector<3x256xbf16>
    tpu.vector_store %arg6[%c63_316, %c256_317], %371 {strides = array<i32>} : memref<108x2048xbf16, #tpu.memory_space<vmem>>, vector<3x256xbf16>,
    %373 = vector.extract_strided_slice %368 {offsets = [2, 0], sizes = [3, 256], strides = [1, 1]} : vector<10x256xbf16> to vector<3x256xbf16>
    %c63_318 = arith.constant 63 : index
    %c512_319 = arith.constant 512 : index
    %374 = vector.load %arg6[%c63_318, %c512_319] : memref<108x2048xbf16, #tpu.memory_space<vmem>>, vector<3x256xbf16>
    tpu.vector_store %arg6[%c63_318, %c512_319], %373 {strides = array<i32>} : memref<108x2048xbf16, #tpu.memory_space<vmem>>, vector<3x256xbf16>,
    %375 = vector.extract_strided_slice %368 {offsets = [3, 0], sizes = [3, 256], strides = [1, 1]} : vector<10x256xbf16> to vector<3x256xbf16>
    %c63_320 = arith.constant 63 : index
    %c768_321 = arith.constant 768 : index
    %376 = vector.load %arg6[%c63_320, %c768_321] : memref<108x2048xbf16, #tpu.memory_space<vmem>>, vector<3x256xbf16>
    tpu.vector_store %arg6[%c63_320, %c768_321], %375 {strides = array<i32>} : memref<108x2048xbf16, #tpu.memory_space<vmem>>, vector<3x256xbf16>,
    %377 = vector.extract_strided_slice %368 {offsets = [4, 0], sizes = [3, 256], strides = [1, 1]} : vector<10x256xbf16> to vector<3x256xbf16>
    %c63_322 = arith.constant 63 : index
    %c1024_323 = arith.constant 1024 : index
    %378 = vector.load %arg6[%c63_322, %c1024_323] : memref<108x2048xbf16, #tpu.memory_space<vmem>>, vector<3x256xbf16>
    tpu.vector_store %arg6[%c63_322, %c1024_323], %377 {strides = array<i32>} : memref<108x2048xbf16, #tpu.memory_space<vmem>>, vector<3x256xbf16>,
    %379 = vector.extract_strided_slice %368 {offsets = [5, 0], sizes = [3, 256], strides = [1, 1]} : vector<10x256xbf16> to vector<3x256xbf16>
    %c63_324 = arith.constant 63 : index
    %c1280_325 = arith.constant 1280 : index
    %380 = vector.load %arg6[%c63_324, %c1280_325] : memref<108x2048xbf16, #tpu.memory_space<vmem>>, vector<3x256xbf16>
    tpu.vector_store %arg6[%c63_324, %c1280_325], %379 {strides = array<i32>} : memref<108x2048xbf16, #tpu.memory_space<vmem>>, vector<3x256xbf16>,
    %381 = vector.extract_strided_slice %368 {offsets = [6, 0], sizes = [3, 256], strides = [1, 1]} : vector<10x256xbf16> to vector<3x256xbf16>
    %c63_326 = arith.constant 63 : index
    %c1536_327 = arith.constant 1536 : index
    %382 = vector.load %arg6[%c63_326, %c1536_327] : memref<108x2048xbf16, #tpu.memory_space<vmem>>, vector<3x256xbf16>
    tpu.vector_store %arg6[%c63_326, %c1536_327], %381 {strides = array<i32>} : memref<108x2048xbf16, #tpu.memory_space<vmem>>, vector<3x256xbf16>,
    %383 = vector.extract_strided_slice %368 {offsets = [7, 0], sizes = [3, 256], strides = [1, 1]} : vector<10x256xbf16> to vector<3x256xbf16>
    %c63_328 = arith.constant 63 : index
    %c1792_329 = arith.constant 1792 : index
    %384 = vector.load %arg6[%c63_328, %c1792_329] : memref<108x2048xbf16, #tpu.memory_space<vmem>>, vector<3x256xbf16>
    tpu.vector_store %arg6[%c63_328, %c1792_329], %383 {strides = array<i32>} : memref<108x2048xbf16, #tpu.memory_space<vmem>>, vector<3x256xbf16>,
    %385 = vector.extract_strided_slice %316 {offsets = [0, 18], sizes = [10, 256], strides = [1, 1]} : vector<10x384xbf16> to vector<10x256xbf16>
    %386 = vector.extract_strided_slice %385 {offsets = [0, 0], sizes = [3, 256], strides = [1, 1]} : vector<10x256xbf16> to vector<3x256xbf16>
    %c66 = arith.constant 66 : index
    %c0_330 = arith.constant 0 : index
    %387 = vector.load %arg6[%c66, %c0_330] : memref<108x2048xbf16, #tpu.memory_space<vmem>>, vector<3x256xbf16>
    tpu.vector_store %arg6[%c66, %c0_330], %386 {strides = array<i32>} : memref<108x2048xbf16, #tpu.memory_space<vmem>>, vector<3x256xbf16>,
    %388 = vector.extract_strided_slice %385 {offsets = [1, 0], sizes = [3, 256], strides = [1, 1]} : vector<10x256xbf16> to vector<3x256xbf16>
    %c66_331 = arith.constant 66 : index
    %c256_332 = arith.constant 256 : index
    %389 = vector.load %arg6[%c66_331, %c256_332] : memref<108x2048xbf16, #tpu.memory_space<vmem>>, vector<3x256xbf16>
    tpu.vector_store %arg6[%c66_331, %c256_332], %388 {strides = array<i32>} : memref<108x2048xbf16, #tpu.memory_space<vmem>>, vector<3x256xbf16>,
    %390 = vector.extract_strided_slice %385 {offsets = [2, 0], sizes = [3, 256], strides = [1, 1]} : vector<10x256xbf16> to vector<3x256xbf16>
    %c66_333 = arith.constant 66 : index
    %c512_334 = arith.constant 512 : index
    %391 = vector.load %arg6[%c66_333, %c512_334] : memref<108x2048xbf16, #tpu.memory_space<vmem>>, vector<3x256xbf16>
    tpu.vector_store %arg6[%c66_333, %c512_334], %390 {strides = array<i32>} : memref<108x2048xbf16, #tpu.memory_space<vmem>>, vector<3x256xbf16>,
    %392 = vector.extract_strided_slice %385 {offsets = [3, 0], sizes = [3, 256], strides = [1, 1]} : vector<10x256xbf16> to vector<3x256xbf16>
    %c66_335 = arith.constant 66 : index
    %c768_336 = arith.constant 768 : index
    %393 = vector.load %arg6[%c66_335, %c768_336] : memref<108x2048xbf16, #tpu.memory_space<vmem>>, vector<3x256xbf16>
    tpu.vector_store %arg6[%c66_335, %c768_336], %392 {strides = array<i32>} : memref<108x2048xbf16, #tpu.memory_space<vmem>>, vector<3x256xbf16>,
    %394 = vector.extract_strided_slice %385 {offsets = [4, 0], sizes = [3, 256], strides = [1, 1]} : vector<10x256xbf16> to vector<3x256xbf16>
    %c66_337 = arith.constant 66 : index
    %c1024_338 = arith.constant 1024 : index
    %395 = vector.load %arg6[%c66_337, %c1024_338] : memref<108x2048xbf16, #tpu.memory_space<vmem>>, vector<3x256xbf16>
    tpu.vector_store %arg6[%c66_337, %c1024_338], %394 {strides = array<i32>} : memref<108x2048xbf16, #tpu.memory_space<vmem>>, vector<3x256xbf16>,
    %396 = vector.extract_strided_slice %385 {offsets = [5, 0], sizes = [3, 256], strides = [1, 1]} : vector<10x256xbf16> to vector<3x256xbf16>
    %c66_339 = arith.constant 66 : index
    %c1280_340 = arith.constant 1280 : index
    %397 = vector.load %arg6[%c66_339, %c1280_340] : memref<108x2048xbf16, #tpu.memory_space<vmem>>, vector<3x256xbf16>
    tpu.vector_store %arg6[%c66_339, %c1280_340], %396 {strides = array<i32>} : memref<108x2048xbf16, #tpu.memory_space<vmem>>, vector<3x256xbf16>,
    %398 = vector.extract_strided_slice %385 {offsets = [6, 0], sizes = [3, 256], strides = [1, 1]} : vector<10x256xbf16> to vector<3x256xbf16>
    %c66_341 = arith.constant 66 : index
    %c1536_342 = arith.constant 1536 : index
    %399 = vector.load %arg6[%c66_341, %c1536_342] : memref<108x2048xbf16, #tpu.memory_space<vmem>>, vector<3x256xbf16>
    tpu.vector_store %arg6[%c66_341, %c1536_342], %398 {strides = array<i32>} : memref<108x2048xbf16, #tpu.memory_space<vmem>>, vector<3x256xbf16>,
    %400 = vector.extract_strided_slice %385 {offsets = [7, 0], sizes = [3, 256], strides = [1, 1]} : vector<10x256xbf16> to vector<3x256xbf16>
    %c66_343 = arith.constant 66 : index
    %c1792_344 = arith.constant 1792 : index
    %401 = vector.load %arg6[%c66_343, %c1792_344] : memref<108x2048xbf16, #tpu.memory_space<vmem>>, vector<3x256xbf16>
    tpu.vector_store %arg6[%c66_343, %c1792_344], %400 {strides = array<i32>} : memref<108x2048xbf16, #tpu.memory_space<vmem>>, vector<3x256xbf16>,
    %402 = vector.extract_strided_slice %316 {offsets = [0, 19], sizes = [10, 256], strides = [1, 1]} : vector<10x384xbf16> to vector<10x256xbf16>
    %403 = vector.extract_strided_slice %402 {offsets = [0, 0], sizes = [3, 256], strides = [1, 1]} : vector<10x256xbf16> to vector<3x256xbf16>
    %c69 = arith.constant 69 : index
    %c0_345 = arith.constant 0 : index
    %404 = vector.load %arg6[%c69, %c0_345] : memref<108x2048xbf16, #tpu.memory_space<vmem>>, vector<3x256xbf16>
    tpu.vector_store %arg6[%c69, %c0_345], %403 {strides = array<i32>} : memref<108x2048xbf16, #tpu.memory_space<vmem>>, vector<3x256xbf16>,
    %405 = vector.extract_strided_slice %402 {offsets = [1, 0], sizes = [3, 256], strides = [1, 1]} : vector<10x256xbf16> to vector<3x256xbf16>
    %c69_346 = arith.constant 69 : index
    %c256_347 = arith.constant 256 : index
    %406 = vector.load %arg6[%c69_346, %c256_347] : memref<108x2048xbf16, #tpu.memory_space<vmem>>, vector<3x256xbf16>
    tpu.vector_store %arg6[%c69_346, %c256_347], %405 {strides = array<i32>} : memref<108x2048xbf16, #tpu.memory_space<vmem>>, vector<3x256xbf16>,
    %407 = vector.extract_strided_slice %402 {offsets = [2, 0], sizes = [3, 256], strides = [1, 1]} : vector<10x256xbf16> to vector<3x256xbf16>
    %c69_348 = arith.constant 69 : index
    %c512_349 = arith.constant 512 : index
    %408 = vector.load %arg6[%c69_348, %c512_349] : memref<108x2048xbf16, #tpu.memory_space<vmem>>, vector<3x256xbf16>
    tpu.vector_store %arg6[%c69_348, %c512_349], %407 {strides = array<i32>} : memref<108x2048xbf16, #tpu.memory_space<vmem>>, vector<3x256xbf16>,
    %409 = vector.extract_strided_slice %402 {offsets = [3, 0], sizes = [3, 256], strides = [1, 1]} : vector<10x256xbf16> to vector<3x256xbf16>
    %c69_350 = arith.constant 69 : index
    %c768_351 = arith.constant 768 : index
    %410 = vector.load %arg6[%c69_350, %c768_351] : memref<108x2048xbf16, #tpu.memory_space<vmem>>, vector<3x256xbf16>
    tpu.vector_store %arg6[%c69_350, %c768_351], %409 {strides = array<i32>} : memref<108x2048xbf16, #tpu.memory_space<vmem>>, vector<3x256xbf16>,
    %411 = vector.extract_strided_slice %402 {offsets = [4, 0], sizes = [3, 256], strides = [1, 1]} : vector<10x256xbf16> to vector<3x256xbf16>
    %c69_352 = arith.constant 69 : index
    %c1024_353 = arith.constant 1024 : index
    %412 = vector.load %arg6[%c69_352, %c1024_353] : memref<108x2048xbf16, #tpu.memory_space<vmem>>, vector<3x256xbf16>
    tpu.vector_store %arg6[%c69_352, %c1024_353], %411 {strides = array<i32>} : memref<108x2048xbf16, #tpu.memory_space<vmem>>, vector<3x256xbf16>,
    %413 = vector.extract_strided_slice %402 {offsets = [5, 0], sizes = [3, 256], strides = [1, 1]} : vector<10x256xbf16> to vector<3x256xbf16>
    %c69_354 = arith.constant 69 : index
    %c1280_355 = arith.constant 1280 : index
    %414 = vector.load %arg6[%c69_354, %c1280_355] : memref<108x2048xbf16, #tpu.memory_space<vmem>>, vector<3x256xbf16>
    tpu.vector_store %arg6[%c69_354, %c1280_355], %413 {strides = array<i32>} : memref<108x2048xbf16, #tpu.memory_space<vmem>>, vector<3x256xbf16>,
    %415 = vector.extract_strided_slice %402 {offsets = [6, 0], sizes = [3, 256], strides = [1, 1]} : vector<10x256xbf16> to vector<3x256xbf16>
    %c69_356 = arith.constant 69 : index
    %c1536_357 = arith.constant 1536 : index
    %416 = vector.load %arg6[%c69_356, %c1536_357] : memref<108x2048xbf16, #tpu.memory_space<vmem>>, vector<3x256xbf16>
    tpu.vector_store %arg6[%c69_356, %c1536_357], %415 {strides = array<i32>} : memref<108x2048xbf16, #tpu.memory_space<vmem>>, vector<3x256xbf16>,
    %417 = vector.extract_strided_slice %402 {offsets = [7, 0], sizes = [3, 256], strides = [1, 1]} : vector<10x256xbf16> to vector<3x256xbf16>
    %c69_358 = arith.constant 69 : index
    %c1792_359 = arith.constant 1792 : index
    %418 = vector.load %arg6[%c69_358, %c1792_359] : memref<108x2048xbf16, #tpu.memory_space<vmem>>, vector<3x256xbf16>
    tpu.vector_store %arg6[%c69_358, %c1792_359], %417 {strides = array<i32>} : memref<108x2048xbf16, #tpu.memory_space<vmem>>, vector<3x256xbf16>,
    %419 = vector.extract_strided_slice %316 {offsets = [0, 34], sizes = [10, 256], strides = [1, 1]} : vector<10x384xbf16> to vector<10x256xbf16>
    %420 = vector.extract_strided_slice %419 {offsets = [0, 0], sizes = [3, 256], strides = [1, 1]} : vector<10x256xbf16> to vector<3x256xbf16>
    %c72 = arith.constant 72 : index
    %c0_360 = arith.constant 0 : index
    %421 = vector.load %arg6[%c72, %c0_360] : memref<108x2048xbf16, #tpu.memory_space<vmem>>, vector<3x256xbf16>
    tpu.vector_store %arg6[%c72, %c0_360], %420 {strides = array<i32>} : memref<108x2048xbf16, #tpu.memory_space<vmem>>, vector<3x256xbf16>,
    %422 = vector.extract_strided_slice %419 {offsets = [1, 0], sizes = [3, 256], strides = [1, 1]} : vector<10x256xbf16> to vector<3x256xbf16>
    %c72_361 = arith.constant 72 : index
    %c256_362 = arith.constant 256 : index
    %423 = vector.load %arg6[%c72_361, %c256_362] : memref<108x2048xbf16, #tpu.memory_space<vmem>>, vector<3x256xbf16>
    tpu.vector_store %arg6[%c72_361, %c256_362], %422 {strides = array<i32>} : memref<108x2048xbf16, #tpu.memory_space<vmem>>, vector<3x256xbf16>,
    %424 = vector.extract_strided_slice %419 {offsets = [2, 0], sizes = [3, 256], strides = [1, 1]} : vector<10x256xbf16> to vector<3x256xbf16>
    %c72_363 = arith.constant 72 : index
    %c512_364 = arith.constant 512 : index
    %425 = vector.load %arg6[%c72_363, %c512_364] : memref<108x2048xbf16, #tpu.memory_space<vmem>>, vector<3x256xbf16>
    tpu.vector_store %arg6[%c72_363, %c512_364], %424 {strides = array<i32>} : memref<108x2048xbf16, #tpu.memory_space<vmem>>, vector<3x256xbf16>,
    %426 = vector.extract_strided_slice %419 {offsets = [3, 0], sizes = [3, 256], strides = [1, 1]} : vector<10x256xbf16> to vector<3x256xbf16>
    %c72_365 = arith.constant 72 : index
    %c768_366 = arith.constant 768 : index
    %427 = vector.load %arg6[%c72_365, %c768_366] : memref<108x2048xbf16, #tpu.memory_space<vmem>>, vector<3x256xbf16>
    tpu.vector_store %arg6[%c72_365, %c768_366], %426 {strides = array<i32>} : memref<108x2048xbf16, #tpu.memory_space<vmem>>, vector<3x256xbf16>,
    %428 = vector.extract_strided_slice %419 {offsets = [4, 0], sizes = [3, 256], strides = [1, 1]} : vector<10x256xbf16> to vector<3x256xbf16>
    %c72_367 = arith.constant 72 : index
    %c1024_368 = arith.constant 1024 : index
    %429 = vector.load %arg6[%c72_367, %c1024_368] : memref<108x2048xbf16, #tpu.memory_space<vmem>>, vector<3x256xbf16>
    tpu.vector_store %arg6[%c72_367, %c1024_368], %428 {strides = array<i32>} : memref<108x2048xbf16, #tpu.memory_space<vmem>>, vector<3x256xbf16>,
    %430 = vector.extract_strided_slice %419 {offsets = [5, 0], sizes = [3, 256], strides = [1, 1]} : vector<10x256xbf16> to vector<3x256xbf16>
    %c72_369 = arith.constant 72 : index
    %c1280_370 = arith.constant 1280 : index
    %431 = vector.load %arg6[%c72_369, %c1280_370] : memref<108x2048xbf16, #tpu.memory_space<vmem>>, vector<3x256xbf16>
    tpu.vector_store %arg6[%c72_369, %c1280_370], %430 {strides = array<i32>} : memref<108x2048xbf16, #tpu.memory_space<vmem>>, vector<3x256xbf16>,
    %432 = vector.extract_strided_slice %419 {offsets = [6, 0], sizes = [3, 256], strides = [1, 1]} : vector<10x256xbf16> to vector<3x256xbf16>
    %c72_371 = arith.constant 72 : index
    %c1536_372 = arith.constant 1536 : index
    %433 = vector.load %arg6[%c72_371, %c1536_372] : memref<108x2048xbf16, #tpu.memory_space<vmem>>, vector<3x256xbf16>
    tpu.vector_store %arg6[%c72_371, %c1536_372], %432 {strides = array<i32>} : memref<108x2048xbf16, #tpu.memory_space<vmem>>, vector<3x256xbf16>,
    %434 = vector.extract_strided_slice %419 {offsets = [7, 0], sizes = [3, 256], strides = [1, 1]} : vector<10x256xbf16> to vector<3x256xbf16>
    %c72_373 = arith.constant 72 : index
    %c1792_374 = arith.constant 1792 : index
    %435 = vector.load %arg6[%c72_373, %c1792_374] : memref<108x2048xbf16, #tpu.memory_space<vmem>>, vector<3x256xbf16>
    tpu.vector_store %arg6[%c72_373, %c1792_374], %434 {strides = array<i32>} : memref<108x2048xbf16, #tpu.memory_space<vmem>>, vector<3x256xbf16>,
    %436 = vector.extract_strided_slice %316 {offsets = [0, 35], sizes = [10, 256], strides = [1, 1]} : vector<10x384xbf16> to vector<10x256xbf16>
    %437 = vector.extract_strided_slice %436 {offsets = [0, 0], sizes = [3, 256], strides = [1, 1]} : vector<10x256xbf16> to vector<3x256xbf16>
    %c75 = arith.constant 75 : index
    %c0_375 = arith.constant 0 : index
    %438 = vector.load %arg6[%c75, %c0_375] : memref<108x2048xbf16, #tpu.memory_space<vmem>>, vector<3x256xbf16>
    tpu.vector_store %arg6[%c75, %c0_375], %437 {strides = array<i32>} : memref<108x2048xbf16, #tpu.memory_space<vmem>>, vector<3x256xbf16>,
    %439 = vector.extract_strided_slice %436 {offsets = [1, 0], sizes = [3, 256], strides = [1, 1]} : vector<10x256xbf16> to vector<3x256xbf16>
    %c75_376 = arith.constant 75 : index
    %c256_377 = arith.constant 256 : index
    %440 = vector.load %arg6[%c75_376, %c256_377] : memref<108x2048xbf16, #tpu.memory_space<vmem>>, vector<3x256xbf16>
    tpu.vector_store %arg6[%c75_376, %c256_377], %439 {strides = array<i32>} : memref<108x2048xbf16, #tpu.memory_space<vmem>>, vector<3x256xbf16>,
    %441 = vector.extract_strided_slice %436 {offsets = [2, 0], sizes = [3, 256], strides = [1, 1]} : vector<10x256xbf16> to vector<3x256xbf16>
    %c75_378 = arith.constant 75 : index
    %c512_379 = arith.constant 512 : index
    %442 = vector.load %arg6[%c75_378, %c512_379] : memref<108x2048xbf16, #tpu.memory_space<vmem>>, vector<3x256xbf16>
    tpu.vector_store %arg6[%c75_378, %c512_379], %441 {strides = array<i32>} : memref<108x2048xbf16, #tpu.memory_space<vmem>>, vector<3x256xbf16>,
    %443 = vector.extract_strided_slice %436 {offsets = [3, 0], sizes = [3, 256], strides = [1, 1]} : vector<10x256xbf16> to vector<3x256xbf16>
    %c75_380 = arith.constant 75 : index
    %c768_381 = arith.constant 768 : index
    %444 = vector.load %arg6[%c75_380, %c768_381] : memref<108x2048xbf16, #tpu.memory_space<vmem>>, vector<3x256xbf16>
    tpu.vector_store %arg6[%c75_380, %c768_381], %443 {strides = array<i32>} : memref<108x2048xbf16, #tpu.memory_space<vmem>>, vector<3x256xbf16>,
    %445 = vector.extract_strided_slice %436 {offsets = [4, 0], sizes = [3, 256], strides = [1, 1]} : vector<10x256xbf16> to vector<3x256xbf16>
    %c75_382 = arith.constant 75 : index
    %c1024_383 = arith.constant 1024 : index
    %446 = vector.load %arg6[%c75_382, %c1024_383] : memref<108x2048xbf16, #tpu.memory_space<vmem>>, vector<3x256xbf16>
    tpu.vector_store %arg6[%c75_382, %c1024_383], %445 {strides = array<i32>} : memref<108x2048xbf16, #tpu.memory_space<vmem>>, vector<3x256xbf16>,
    %447 = vector.extract_strided_slice %436 {offsets = [5, 0], sizes = [3, 256], strides = [1, 1]} : vector<10x256xbf16> to vector<3x256xbf16>
    %c75_384 = arith.constant 75 : index
    %c1280_385 = arith.constant 1280 : index
    %448 = vector.load %arg6[%c75_384, %c1280_385] : memref<108x2048xbf16, #tpu.memory_space<vmem>>, vector<3x256xbf16>
    tpu.vector_store %arg6[%c75_384, %c1280_385], %447 {strides = array<i32>} : memref<108x2048xbf16, #tpu.memory_space<vmem>>, vector<3x256xbf16>,
    %449 = vector.extract_strided_slice %436 {offsets = [6, 0], sizes = [3, 256], strides = [1, 1]} : vector<10x256xbf16> to vector<3x256xbf16>
    %c75_386 = arith.constant 75 : index
    %c1536_387 = arith.constant 1536 : index
    %450 = vector.load %arg6[%c75_386, %c1536_387] : memref<108x2048xbf16, #tpu.memory_space<vmem>>, vector<3x256xbf16>
    tpu.vector_store %arg6[%c75_386, %c1536_387], %449 {strides = array<i32>} : memref<108x2048xbf16, #tpu.memory_space<vmem>>, vector<3x256xbf16>,
    %451 = vector.extract_strided_slice %436 {offsets = [7, 0], sizes = [3, 256], strides = [1, 1]} : vector<10x256xbf16> to vector<3x256xbf16>
    %c75_388 = arith.constant 75 : index
    %c1792_389 = arith.constant 1792 : index
    %452 = vector.load %arg6[%c75_388, %c1792_389] : memref<108x2048xbf16, #tpu.memory_space<vmem>>, vector<3x256xbf16>
    tpu.vector_store %arg6[%c75_388, %c1792_389], %451 {strides = array<i32>} : memref<108x2048xbf16, #tpu.memory_space<vmem>>, vector<3x256xbf16>,
    %453 = vector.extract_strided_slice %316 {offsets = [0, 36], sizes = [10, 256], strides = [1, 1]} : vector<10x384xbf16> to vector<10x256xbf16>
    %454 = vector.extract_strided_slice %453 {offsets = [0, 0], sizes = [3, 256], strides = [1, 1]} : vector<10x256xbf16> to vector<3x256xbf16>
    %c78 = arith.constant 78 : index
    %c0_390 = arith.constant 0 : index
    %455 = vector.load %arg6[%c78, %c0_390] : memref<108x2048xbf16, #tpu.memory_space<vmem>>, vector<3x256xbf16>
    tpu.vector_store %arg6[%c78, %c0_390], %454 {strides = array<i32>} : memref<108x2048xbf16, #tpu.memory_space<vmem>>, vector<3x256xbf16>,
    %456 = vector.extract_strided_slice %453 {offsets = [1, 0], sizes = [3, 256], strides = [1, 1]} : vector<10x256xbf16> to vector<3x256xbf16>
    %c78_391 = arith.constant 78 : index
    %c256_392 = arith.constant 256 : index
    %457 = vector.load %arg6[%c78_391, %c256_392] : memref<108x2048xbf16, #tpu.memory_space<vmem>>, vector<3x256xbf16>
    tpu.vector_store %arg6[%c78_391, %c256_392], %456 {strides = array<i32>} : memref<108x2048xbf16, #tpu.memory_space<vmem>>, vector<3x256xbf16>,
    %458 = vector.extract_strided_slice %453 {offsets = [2, 0], sizes = [3, 256], strides = [1, 1]} : vector<10x256xbf16> to vector<3x256xbf16>
    %c78_393 = arith.constant 78 : index
    %c512_394 = arith.constant 512 : index
    %459 = vector.load %arg6[%c78_393, %c512_394] : memref<108x2048xbf16, #tpu.memory_space<vmem>>, vector<3x256xbf16>
    tpu.vector_store %arg6[%c78_393, %c512_394], %458 {strides = array<i32>} : memref<108x2048xbf16, #tpu.memory_space<vmem>>, vector<3x256xbf16>,
    %460 = vector.extract_strided_slice %453 {offsets = [3, 0], sizes = [3, 256], strides = [1, 1]} : vector<10x256xbf16> to vector<3x256xbf16>
    %c78_395 = arith.constant 78 : index
    %c768_396 = arith.constant 768 : index
    %461 = vector.load %arg6[%c78_395, %c768_396] : memref<108x2048xbf16, #tpu.memory_space<vmem>>, vector<3x256xbf16>
    tpu.vector_store %arg6[%c78_395, %c768_396], %460 {strides = array<i32>} : memref<108x2048xbf16, #tpu.memory_space<vmem>>, vector<3x256xbf16>,
    %462 = vector.extract_strided_slice %453 {offsets = [4, 0], sizes = [3, 256], strides = [1, 1]} : vector<10x256xbf16> to vector<3x256xbf16>
    %c78_397 = arith.constant 78 : index
    %c1024_398 = arith.constant 1024 : index
    %463 = vector.load %arg6[%c78_397, %c1024_398] : memref<108x2048xbf16, #tpu.memory_space<vmem>>, vector<3x256xbf16>
    tpu.vector_store %arg6[%c78_397, %c1024_398], %462 {strides = array<i32>} : memref<108x2048xbf16, #tpu.memory_space<vmem>>, vector<3x256xbf16>,
    %464 = vector.extract_strided_slice %453 {offsets = [5, 0], sizes = [3, 256], strides = [1, 1]} : vector<10x256xbf16> to vector<3x256xbf16>
    %c78_399 = arith.constant 78 : index
    %c1280_400 = arith.constant 1280 : index
    %465 = vector.load %arg6[%c78_399, %c1280_400] : memref<108x2048xbf16, #tpu.memory_space<vmem>>, vector<3x256xbf16>
    tpu.vector_store %arg6[%c78_399, %c1280_400], %464 {strides = array<i32>} : memref<108x2048xbf16, #tpu.memory_space<vmem>>, vector<3x256xbf16>,
    %466 = vector.extract_strided_slice %453 {offsets = [6, 0], sizes = [3, 256], strides = [1, 1]} : vector<10x256xbf16> to vector<3x256xbf16>
    %c78_401 = arith.constant 78 : index
    %c1536_402 = arith.constant 1536 : index
    %467 = vector.load %arg6[%c78_401, %c1536_402] : memref<108x2048xbf16, #tpu.memory_space<vmem>>, vector<3x256xbf16>
    tpu.vector_store %arg6[%c78_401, %c1536_402], %466 {strides = array<i32>} : memref<108x2048xbf16, #tpu.memory_space<vmem>>, vector<3x256xbf16>,
    %468 = vector.extract_strided_slice %453 {offsets = [7, 0], sizes = [3, 256], strides = [1, 1]} : vector<10x256xbf16> to vector<3x256xbf16>
    %c78_403 = arith.constant 78 : index
    %c1792_404 = arith.constant 1792 : index
    %469 = vector.load %arg6[%c78_403, %c1792_404] : memref<108x2048xbf16, #tpu.memory_space<vmem>>, vector<3x256xbf16>
    tpu.vector_store %arg6[%c78_403, %c1792_404], %468 {strides = array<i32>} : memref<108x2048xbf16, #tpu.memory_space<vmem>>, vector<3x256xbf16>,
    %c0_405 = arith.constant 0 : index
    %c3_406 = arith.constant 3 : index
    %470 = arith.index_cast %1 : i32 to index
    %c0_407 = arith.constant 0 : index
    %471 = vector.load %arg2[%c0_405, %c3_406, %470, %c0_407] : memref<1x4x18x384xbf16, #tpu.memory_space<vmem>>, vector<1x1x10x384xbf16>
    %472 = vector.shape_cast %471 : vector<1x1x10x384xbf16> to vector<10x384xbf16>
    %473 = vector.extract_strided_slice %472 {offsets = [0, 0], sizes = [10, 256], strides = [1, 1]} : vector<10x384xbf16> to vector<10x256xbf16>
    %474 = vector.extract_strided_slice %473 {offsets = [0, 0], sizes = [3, 256], strides = [1, 1]} : vector<10x256xbf16> to vector<3x256xbf16>
    %c81 = arith.constant 81 : index
    %c0_408 = arith.constant 0 : index
    %475 = vector.load %arg6[%c81, %c0_408] : memref<108x2048xbf16, #tpu.memory_space<vmem>>, vector<3x256xbf16>
    tpu.vector_store %arg6[%c81, %c0_408], %474 {strides = array<i32>} : memref<108x2048xbf16, #tpu.memory_space<vmem>>, vector<3x256xbf16>,
    %476 = vector.extract_strided_slice %473 {offsets = [1, 0], sizes = [3, 256], strides = [1, 1]} : vector<10x256xbf16> to vector<3x256xbf16>
    %c81_409 = arith.constant 81 : index
    %c256_410 = arith.constant 256 : index
    %477 = vector.load %arg6[%c81_409, %c256_410] : memref<108x2048xbf16, #tpu.memory_space<vmem>>, vector<3x256xbf16>
    tpu.vector_store %arg6[%c81_409, %c256_410], %476 {strides = array<i32>} : memref<108x2048xbf16, #tpu.memory_space<vmem>>, vector<3x256xbf16>,
    %478 = vector.extract_strided_slice %473 {offsets = [2, 0], sizes = [3, 256], strides = [1, 1]} : vector<10x256xbf16> to vector<3x256xbf16>
    %c81_411 = arith.constant 81 : index
    %c512_412 = arith.constant 512 : index
    %479 = vector.load %arg6[%c81_411, %c512_412] : memref<108x2048xbf16, #tpu.memory_space<vmem>>, vector<3x256xbf16>
    tpu.vector_store %arg6[%c81_411, %c512_412], %478 {strides = array<i32>} : memref<108x2048xbf16, #tpu.memory_space<vmem>>, vector<3x256xbf16>,
    %480 = vector.extract_strided_slice %473 {offsets = [3, 0], sizes = [3, 256], strides = [1, 1]} : vector<10x256xbf16> to vector<3x256xbf16>
    %c81_413 = arith.constant 81 : index
    %c768_414 = arith.constant 768 : index
    %481 = vector.load %arg6[%c81_413, %c768_414] : memref<108x2048xbf16, #tpu.memory_space<vmem>>, vector<3x256xbf16>
    tpu.vector_store %arg6[%c81_413, %c768_414], %480 {strides = array<i32>} : memref<108x2048xbf16, #tpu.memory_space<vmem>>, vector<3x256xbf16>,
    %482 = vector.extract_strided_slice %473 {offsets = [4, 0], sizes = [3, 256], strides = [1, 1]} : vector<10x256xbf16> to vector<3x256xbf16>
    %c81_415 = arith.constant 81 : index
    %c1024_416 = arith.constant 1024 : index
    %483 = vector.load %arg6[%c81_415, %c1024_416] : memref<108x2048xbf16, #tpu.memory_space<vmem>>, vector<3x256xbf16>
    tpu.vector_store %arg6[%c81_415, %c1024_416], %482 {strides = array<i32>} : memref<108x2048xbf16, #tpu.memory_space<vmem>>, vector<3x256xbf16>,
    %484 = vector.extract_strided_slice %473 {offsets = [5, 0], sizes = [3, 256], strides = [1, 1]} : vector<10x256xbf16> to vector<3x256xbf16>
    %c81_417 = arith.constant 81 : index
    %c1280_418 = arith.constant 1280 : index
    %485 = vector.load %arg6[%c81_417, %c1280_418] : memref<108x2048xbf16, #tpu.memory_space<vmem>>, vector<3x256xbf16>
    tpu.vector_store %arg6[%c81_417, %c1280_418], %484 {strides = array<i32>} : memref<108x2048xbf16, #tpu.memory_space<vmem>>, vector<3x256xbf16>,
    %486 = vector.extract_strided_slice %473 {offsets = [6, 0], sizes = [3, 256], strides = [1, 1]} : vector<10x256xbf16> to vector<3x256xbf16>
    %c81_419 = arith.constant 81 : index
    %c1536_420 = arith.constant 1536 : index
    %487 = vector.load %arg6[%c81_419, %c1536_420] : memref<108x2048xbf16, #tpu.memory_space<vmem>>, vector<3x256xbf16>
    tpu.vector_store %arg6[%c81_419, %c1536_420], %486 {strides = array<i32>} : memref<108x2048xbf16, #tpu.memory_space<vmem>>, vector<3x256xbf16>,
    %488 = vector.extract_strided_slice %473 {offsets = [7, 0], sizes = [3, 256], strides = [1, 1]} : vector<10x256xbf16> to vector<3x256xbf16>
    %c81_421 = arith.constant 81 : index
    %c1792_422 = arith.constant 1792 : index
    %489 = vector.load %arg6[%c81_421, %c1792_422] : memref<108x2048xbf16, #tpu.memory_space<vmem>>, vector<3x256xbf16>
    tpu.vector_store %arg6[%c81_421, %c1792_422], %488 {strides = array<i32>} : memref<108x2048xbf16, #tpu.memory_space<vmem>>, vector<3x256xbf16>,
    %490 = vector.extract_strided_slice %472 {offsets = [0, 1], sizes = [10, 256], strides = [1, 1]} : vector<10x384xbf16> to vector<10x256xbf16>
    %491 = vector.extract_strided_slice %490 {offsets = [0, 0], sizes = [3, 256], strides = [1, 1]} : vector<10x256xbf16> to vector<3x256xbf16>
    %c84 = arith.constant 84 : index
    %c0_423 = arith.constant 0 : index
    %492 = vector.load %arg6[%c84, %c0_423] : memref<108x2048xbf16, #tpu.memory_space<vmem>>, vector<3x256xbf16>
    tpu.vector_store %arg6[%c84, %c0_423], %491 {strides = array<i32>} : memref<108x2048xbf16, #tpu.memory_space<vmem>>, vector<3x256xbf16>,
    %493 = vector.extract_strided_slice %490 {offsets = [1, 0], sizes = [3, 256], strides = [1, 1]} : vector<10x256xbf16> to vector<3x256xbf16>
    %c84_424 = arith.constant 84 : index
    %c256_425 = arith.constant 256 : index
    %494 = vector.load %arg6[%c84_424, %c256_425] : memref<108x2048xbf16, #tpu.memory_space<vmem>>, vector<3x256xbf16>
    tpu.vector_store %arg6[%c84_424, %c256_425], %493 {strides = array<i32>} : memref<108x2048xbf16, #tpu.memory_space<vmem>>, vector<3x256xbf16>,
    %495 = vector.extract_strided_slice %490 {offsets = [2, 0], sizes = [3, 256], strides = [1, 1]} : vector<10x256xbf16> to vector<3x256xbf16>
    %c84_426 = arith.constant 84 : index
    %c512_427 = arith.constant 512 : index
    %496 = vector.load %arg6[%c84_426, %c512_427] : memref<108x2048xbf16, #tpu.memory_space<vmem>>, vector<3x256xbf16>
    tpu.vector_store %arg6[%c84_426, %c512_427], %495 {strides = array<i32>} : memref<108x2048xbf16, #tpu.memory_space<vmem>>, vector<3x256xbf16>,
    %497 = vector.extract_strided_slice %490 {offsets = [3, 0], sizes = [3, 256], strides = [1, 1]} : vector<10x256xbf16> to vector<3x256xbf16>
    %c84_428 = arith.constant 84 : index
    %c768_429 = arith.constant 768 : index
    %498 = vector.load %arg6[%c84_428, %c768_429] : memref<108x2048xbf16, #tpu.memory_space<vmem>>, vector<3x256xbf16>
    tpu.vector_store %arg6[%c84_428, %c768_429], %497 {strides = array<i32>} : memref<108x2048xbf16, #tpu.memory_space<vmem>>, vector<3x256xbf16>,
    %499 = vector.extract_strided_slice %490 {offsets = [4, 0], sizes = [3, 256], strides = [1, 1]} : vector<10x256xbf16> to vector<3x256xbf16>
    %c84_430 = arith.constant 84 : index
    %c1024_431 = arith.constant 1024 : index
    %500 = vector.load %arg6[%c84_430, %c1024_431] : memref<108x2048xbf16, #tpu.memory_space<vmem>>, vector<3x256xbf16>
    tpu.vector_store %arg6[%c84_430, %c1024_431], %499 {strides = array<i32>} : memref<108x2048xbf16, #tpu.memory_space<vmem>>, vector<3x256xbf16>,
    %501 = vector.extract_strided_slice %490 {offsets = [5, 0], sizes = [3, 256], strides = [1, 1]} : vector<10x256xbf16> to vector<3x256xbf16>
    %c84_432 = arith.constant 84 : index
    %c1280_433 = arith.constant 1280 : index
    %502 = vector.load %arg6[%c84_432, %c1280_433] : memref<108x2048xbf16, #tpu.memory_space<vmem>>, vector<3x256xbf16>
    tpu.vector_store %arg6[%c84_432, %c1280_433], %501 {strides = array<i32>} : memref<108x2048xbf16, #tpu.memory_space<vmem>>, vector<3x256xbf16>,
    %503 = vector.extract_strided_slice %490 {offsets = [6, 0], sizes = [3, 256], strides = [1, 1]} : vector<10x256xbf16> to vector<3x256xbf16>
    %c84_434 = arith.constant 84 : index
    %c1536_435 = arith.constant 1536 : index
    %504 = vector.load %arg6[%c84_434, %c1536_435] : memref<108x2048xbf16, #tpu.memory_space<vmem>>, vector<3x256xbf16>
    tpu.vector_store %arg6[%c84_434, %c1536_435], %503 {strides = array<i32>} : memref<108x2048xbf16, #tpu.memory_space<vmem>>, vector<3x256xbf16>,
    %505 = vector.extract_strided_slice %490 {offsets = [7, 0], sizes = [3, 256], strides = [1, 1]} : vector<10x256xbf16> to vector<3x256xbf16>
    %c84_436 = arith.constant 84 : index
    %c1792_437 = arith.constant 1792 : index
    %506 = vector.load %arg6[%c84_436, %c1792_437] : memref<108x2048xbf16, #tpu.memory_space<vmem>>, vector<3x256xbf16>
    tpu.vector_store %arg6[%c84_436, %c1792_437], %505 {strides = array<i32>} : memref<108x2048xbf16, #tpu.memory_space<vmem>>, vector<3x256xbf16>,
    %507 = vector.extract_strided_slice %472 {offsets = [0, 2], sizes = [10, 256], strides = [1, 1]} : vector<10x384xbf16> to vector<10x256xbf16>
    %508 = vector.extract_strided_slice %507 {offsets = [0, 0], sizes = [3, 256], strides = [1, 1]} : vector<10x256xbf16> to vector<3x256xbf16>
    %c87 = arith.constant 87 : index
    %c0_438 = arith.constant 0 : index
    %509 = vector.load %arg6[%c87, %c0_438] : memref<108x2048xbf16, #tpu.memory_space<vmem>>, vector<3x256xbf16>
    tpu.vector_store %arg6[%c87, %c0_438], %508 {strides = array<i32>} : memref<108x2048xbf16, #tpu.memory_space<vmem>>, vector<3x256xbf16>,
    %510 = vector.extract_strided_slice %507 {offsets = [1, 0], sizes = [3, 256], strides = [1, 1]} : vector<10x256xbf16> to vector<3x256xbf16>
    %c87_439 = arith.constant 87 : index
    %c256_440 = arith.constant 256 : index
    %511 = vector.load %arg6[%c87_439, %c256_440] : memref<108x2048xbf16, #tpu.memory_space<vmem>>, vector<3x256xbf16>
    tpu.vector_store %arg6[%c87_439, %c256_440], %510 {strides = array<i32>} : memref<108x2048xbf16, #tpu.memory_space<vmem>>, vector<3x256xbf16>,
    %512 = vector.extract_strided_slice %507 {offsets = [2, 0], sizes = [3, 256], strides = [1, 1]} : vector<10x256xbf16> to vector<3x256xbf16>
    %c87_441 = arith.constant 87 : index
    %c512_442 = arith.constant 512 : index
    %513 = vector.load %arg6[%c87_441, %c512_442] : memref<108x2048xbf16, #tpu.memory_space<vmem>>, vector<3x256xbf16>
    tpu.vector_store %arg6[%c87_441, %c512_442], %512 {strides = array<i32>} : memref<108x2048xbf16, #tpu.memory_space<vmem>>, vector<3x256xbf16>,
    %514 = vector.extract_strided_slice %507 {offsets = [3, 0], sizes = [3, 256], strides = [1, 1]} : vector<10x256xbf16> to vector<3x256xbf16>
    %c87_443 = arith.constant 87 : index
    %c768_444 = arith.constant 768 : index
    %515 = vector.load %arg6[%c87_443, %c768_444] : memref<108x2048xbf16, #tpu.memory_space<vmem>>, vector<3x256xbf16>
    tpu.vector_store %arg6[%c87_443, %c768_444], %514 {strides = array<i32>} : memref<108x2048xbf16, #tpu.memory_space<vmem>>, vector<3x256xbf16>,
    %516 = vector.extract_strided_slice %507 {offsets = [4, 0], sizes = [3, 256], strides = [1, 1]} : vector<10x256xbf16> to vector<3x256xbf16>
    %c87_445 = arith.constant 87 : index
    %c1024_446 = arith.constant 1024 : index
    %517 = vector.load %arg6[%c87_445, %c1024_446] : memref<108x2048xbf16, #tpu.memory_space<vmem>>, vector<3x256xbf16>
    tpu.vector_store %arg6[%c87_445, %c1024_446], %516 {strides = array<i32>} : memref<108x2048xbf16, #tpu.memory_space<vmem>>, vector<3x256xbf16>,
    %518 = vector.extract_strided_slice %507 {offsets = [5, 0], sizes = [3, 256], strides = [1, 1]} : vector<10x256xbf16> to vector<3x256xbf16>
    %c87_447 = arith.constant 87 : index
    %c1280_448 = arith.constant 1280 : index
    %519 = vector.load %arg6[%c87_447, %c1280_448] : memref<108x2048xbf16, #tpu.memory_space<vmem>>, vector<3x256xbf16>
    tpu.vector_store %arg6[%c87_447, %c1280_448], %518 {strides = array<i32>} : memref<108x2048xbf16, #tpu.memory_space<vmem>>, vector<3x256xbf16>,
    %520 = vector.extract_strided_slice %507 {offsets = [6, 0], sizes = [3, 256], strides = [1, 1]} : vector<10x256xbf16> to vector<3x256xbf16>
    %c87_449 = arith.constant 87 : index
    %c1536_450 = arith.constant 1536 : index
    %521 = vector.load %arg6[%c87_449, %c1536_450] : memref<108x2048xbf16, #tpu.memory_space<vmem>>, vector<3x256xbf16>
    tpu.vector_store %arg6[%c87_449, %c1536_450], %520 {strides = array<i32>} : memref<108x2048xbf16, #tpu.memory_space<vmem>>, vector<3x256xbf16>,
    %522 = vector.extract_strided_slice %507 {offsets = [7, 0], sizes = [3, 256], strides = [1, 1]} : vector<10x256xbf16> to vector<3x256xbf16>
    %c87_451 = arith.constant 87 : index
    %c1792_452 = arith.constant 1792 : index
    %523 = vector.load %arg6[%c87_451, %c1792_452] : memref<108x2048xbf16, #tpu.memory_space<vmem>>, vector<3x256xbf16>
    tpu.vector_store %arg6[%c87_451, %c1792_452], %522 {strides = array<i32>} : memref<108x2048xbf16, #tpu.memory_space<vmem>>, vector<3x256xbf16>,
    %524 = vector.extract_strided_slice %472 {offsets = [0, 17], sizes = [10, 256], strides = [1, 1]} : vector<10x384xbf16> to vector<10x256xbf16>
    %525 = vector.extract_strided_slice %524 {offsets = [0, 0], sizes = [3, 256], strides = [1, 1]} : vector<10x256xbf16> to vector<3x256xbf16>
    %c90 = arith.constant 90 : index
    %c0_453 = arith.constant 0 : index
    %526 = vector.load %arg6[%c90, %c0_453] : memref<108x2048xbf16, #tpu.memory_space<vmem>>, vector<3x256xbf16>
    tpu.vector_store %arg6[%c90, %c0_453], %525 {strides = array<i32>} : memref<108x2048xbf16, #tpu.memory_space<vmem>>, vector<3x256xbf16>,
    %527 = vector.extract_strided_slice %524 {offsets = [1, 0], sizes = [3, 256], strides = [1, 1]} : vector<10x256xbf16> to vector<3x256xbf16>
    %c90_454 = arith.constant 90 : index
    %c256_455 = arith.constant 256 : index
    %528 = vector.load %arg6[%c90_454, %c256_455] : memref<108x2048xbf16, #tpu.memory_space<vmem>>, vector<3x256xbf16>
    tpu.vector_store %arg6[%c90_454, %c256_455], %527 {strides = array<i32>} : memref<108x2048xbf16, #tpu.memory_space<vmem>>, vector<3x256xbf16>,
    %529 = vector.extract_strided_slice %524 {offsets = [2, 0], sizes = [3, 256], strides = [1, 1]} : vector<10x256xbf16> to vector<3x256xbf16>
    %c90_456 = arith.constant 90 : index
    %c512_457 = arith.constant 512 : index
    %530 = vector.load %arg6[%c90_456, %c512_457] : memref<108x2048xbf16, #tpu.memory_space<vmem>>, vector<3x256xbf16>
    tpu.vector_store %arg6[%c90_456, %c512_457], %529 {strides = array<i32>} : memref<108x2048xbf16, #tpu.memory_space<vmem>>, vector<3x256xbf16>,
    %531 = vector.extract_strided_slice %524 {offsets = [3, 0], sizes = [3, 256], strides = [1, 1]} : vector<10x256xbf16> to vector<3x256xbf16>
    %c90_458 = arith.constant 90 : index
    %c768_459 = arith.constant 768 : index
    %532 = vector.load %arg6[%c90_458, %c768_459] : memref<108x2048xbf16, #tpu.memory_space<vmem>>, vector<3x256xbf16>
    tpu.vector_store %arg6[%c90_458, %c768_459], %531 {strides = array<i32>} : memref<108x2048xbf16, #tpu.memory_space<vmem>>, vector<3x256xbf16>,
    %533 = vector.extract_strided_slice %524 {offsets = [4, 0], sizes = [3, 256], strides = [1, 1]} : vector<10x256xbf16> to vector<3x256xbf16>
    %c90_460 = arith.constant 90 : index
    %c1024_461 = arith.constant 1024 : index
    %534 = vector.load %arg6[%c90_460, %c1024_461] : memref<108x2048xbf16, #tpu.memory_space<vmem>>, vector<3x256xbf16>
    tpu.vector_store %arg6[%c90_460, %c1024_461], %533 {strides = array<i32>} : memref<108x2048xbf16, #tpu.memory_space<vmem>>, vector<3x256xbf16>,
    %535 = vector.extract_strided_slice %524 {offsets = [5, 0], sizes = [3, 256], strides = [1, 1]} : vector<10x256xbf16> to vector<3x256xbf16>
    %c90_462 = arith.constant 90 : index
    %c1280_463 = arith.constant 1280 : index
    %536 = vector.load %arg6[%c90_462, %c1280_463] : memref<108x2048xbf16, #tpu.memory_space<vmem>>, vector<3x256xbf16>
    tpu.vector_store %arg6[%c90_462, %c1280_463], %535 {strides = array<i32>} : memref<108x2048xbf16, #tpu.memory_space<vmem>>, vector<3x256xbf16>,
    %537 = vector.extract_strided_slice %524 {offsets = [6, 0], sizes = [3, 256], strides = [1, 1]} : vector<10x256xbf16> to vector<3x256xbf16>
    %c90_464 = arith.constant 90 : index
    %c1536_465 = arith.constant 1536 : index
    %538 = vector.load %arg6[%c90_464, %c1536_465] : memref<108x2048xbf16, #tpu.memory_space<vmem>>, vector<3x256xbf16>
    tpu.vector_store %arg6[%c90_464, %c1536_465], %537 {strides = array<i32>} : memref<108x2048xbf16, #tpu.memory_space<vmem>>, vector<3x256xbf16>,
    %539 = vector.extract_strided_slice %524 {offsets = [7, 0], sizes = [3, 256], strides = [1, 1]} : vector<10x256xbf16> to vector<3x256xbf16>
    %c90_466 = arith.constant 90 : index
    %c1792_467 = arith.constant 1792 : index
    %540 = vector.load %arg6[%c90_466, %c1792_467] : memref<108x2048xbf16, #tpu.memory_space<vmem>>, vector<3x256xbf16>
    tpu.vector_store %arg6[%c90_466, %c1792_467], %539 {strides = array<i32>} : memref<108x2048xbf16, #tpu.memory_space<vmem>>, vector<3x256xbf16>,
    %541 = vector.extract_strided_slice %472 {offsets = [0, 18], sizes = [10, 256], strides = [1, 1]} : vector<10x384xbf16> to vector<10x256xbf16>
    %542 = vector.extract_strided_slice %541 {offsets = [0, 0], sizes = [3, 256], strides = [1, 1]} : vector<10x256xbf16> to vector<3x256xbf16>
    %c93 = arith.constant 93 : index
    %c0_468 = arith.constant 0 : index
    %543 = vector.load %arg6[%c93, %c0_468] : memref<108x2048xbf16, #tpu.memory_space<vmem>>, vector<3x256xbf16>
    tpu.vector_store %arg6[%c93, %c0_468], %542 {strides = array<i32>} : memref<108x2048xbf16, #tpu.memory_space<vmem>>, vector<3x256xbf16>,
    %544 = vector.extract_strided_slice %541 {offsets = [1, 0], sizes = [3, 256], strides = [1, 1]} : vector<10x256xbf16> to vector<3x256xbf16>
    %c93_469 = arith.constant 93 : index
    %c256_470 = arith.constant 256 : index
    %545 = vector.load %arg6[%c93_469, %c256_470] : memref<108x2048xbf16, #tpu.memory_space<vmem>>, vector<3x256xbf16>
    tpu.vector_store %arg6[%c93_469, %c256_470], %544 {strides = array<i32>} : memref<108x2048xbf16, #tpu.memory_space<vmem>>, vector<3x256xbf16>,
    %546 = vector.extract_strided_slice %541 {offsets = [2, 0], sizes = [3, 256], strides = [1, 1]} : vector<10x256xbf16> to vector<3x256xbf16>
    %c93_471 = arith.constant 93 : index
    %c512_472 = arith.constant 512 : index
    %547 = vector.load %arg6[%c93_471, %c512_472] : memref<108x2048xbf16, #tpu.memory_space<vmem>>, vector<3x256xbf16>
    tpu.vector_store %arg6[%c93_471, %c512_472], %546 {strides = array<i32>} : memref<108x2048xbf16, #tpu.memory_space<vmem>>, vector<3x256xbf16>,
    %548 = vector.extract_strided_slice %541 {offsets = [3, 0], sizes = [3, 256], strides = [1, 1]} : vector<10x256xbf16> to vector<3x256xbf16>
    %c93_473 = arith.constant 93 : index
    %c768_474 = arith.constant 768 : index
    %549 = vector.load %arg6[%c93_473, %c768_474] : memref<108x2048xbf16, #tpu.memory_space<vmem>>, vector<3x256xbf16>
    tpu.vector_store %arg6[%c93_473, %c768_474], %548 {strides = array<i32>} : memref<108x2048xbf16, #tpu.memory_space<vmem>>, vector<3x256xbf16>,
    %550 = vector.extract_strided_slice %541 {offsets = [4, 0], sizes = [3, 256], strides = [1, 1]} : vector<10x256xbf16> to vector<3x256xbf16>
    %c93_475 = arith.constant 93 : index
    %c1024_476 = arith.constant 1024 : index
    %551 = vector.load %arg6[%c93_475, %c1024_476] : memref<108x2048xbf16, #tpu.memory_space<vmem>>, vector<3x256xbf16>
    tpu.vector_store %arg6[%c93_475, %c1024_476], %550 {strides = array<i32>} : memref<108x2048xbf16, #tpu.memory_space<vmem>>, vector<3x256xbf16>,
    %552 = vector.extract_strided_slice %541 {offsets = [5, 0], sizes = [3, 256], strides = [1, 1]} : vector<10x256xbf16> to vector<3x256xbf16>
    %c93_477 = arith.constant 93 : index
    %c1280_478 = arith.constant 1280 : index
    %553 = vector.load %arg6[%c93_477, %c1280_478] : memref<108x2048xbf16, #tpu.memory_space<vmem>>, vector<3x256xbf16>
    tpu.vector_store %arg6[%c93_477, %c1280_478], %552 {strides = array<i32>} : memref<108x2048xbf16, #tpu.memory_space<vmem>>, vector<3x256xbf16>,
    %554 = vector.extract_strided_slice %541 {offsets = [6, 0], sizes = [3, 256], strides = [1, 1]} : vector<10x256xbf16> to vector<3x256xbf16>
    %c93_479 = arith.constant 93 : index
    %c1536_480 = arith.constant 1536 : index
    %555 = vector.load %arg6[%c93_479, %c1536_480] : memref<108x2048xbf16, #tpu.memory_space<vmem>>, vector<3x256xbf16>
    tpu.vector_store %arg6[%c93_479, %c1536_480], %554 {strides = array<i32>} : memref<108x2048xbf16, #tpu.memory_space<vmem>>, vector<3x256xbf16>,
    %556 = vector.extract_strided_slice %541 {offsets = [7, 0], sizes = [3, 256], strides = [1, 1]} : vector<10x256xbf16> to vector<3x256xbf16>
    %c93_481 = arith.constant 93 : index
    %c1792_482 = arith.constant 1792 : index
    %557 = vector.load %arg6[%c93_481, %c1792_482] : memref<108x2048xbf16, #tpu.memory_space<vmem>>, vector<3x256xbf16>
    tpu.vector_store %arg6[%c93_481, %c1792_482], %556 {strides = array<i32>} : memref<108x2048xbf16, #tpu.memory_space<vmem>>, vector<3x256xbf16>,
    %558 = vector.extract_strided_slice %472 {offsets = [0, 19], sizes = [10, 256], strides = [1, 1]} : vector<10x384xbf16> to vector<10x256xbf16>
    %559 = vector.extract_strided_slice %558 {offsets = [0, 0], sizes = [3, 256], strides = [1, 1]} : vector<10x256xbf16> to vector<3x256xbf16>
    %c96 = arith.constant 96 : index
    %c0_483 = arith.constant 0 : index
    %560 = vector.load %arg6[%c96, %c0_483] : memref<108x2048xbf16, #tpu.memory_space<vmem>>, vector<3x256xbf16>
    tpu.vector_store %arg6[%c96, %c0_483], %559 {strides = array<i32>} : memref<108x2048xbf16, #tpu.memory_space<vmem>>, vector<3x256xbf16>,
    %561 = vector.extract_strided_slice %558 {offsets = [1, 0], sizes = [3, 256], strides = [1, 1]} : vector<10x256xbf16> to vector<3x256xbf16>
    %c96_484 = arith.constant 96 : index
    %c256_485 = arith.constant 256 : index
    %562 = vector.load %arg6[%c96_484, %c256_485] : memref<108x2048xbf16, #tpu.memory_space<vmem>>, vector<3x256xbf16>
    tpu.vector_store %arg6[%c96_484, %c256_485], %561 {strides = array<i32>} : memref<108x2048xbf16, #tpu.memory_space<vmem>>, vector<3x256xbf16>,
    %563 = vector.extract_strided_slice %558 {offsets = [2, 0], sizes = [3, 256], strides = [1, 1]} : vector<10x256xbf16> to vector<3x256xbf16>
    %c96_486 = arith.constant 96 : index
    %c512_487 = arith.constant 512 : index
    %564 = vector.load %arg6[%c96_486, %c512_487] : memref<108x2048xbf16, #tpu.memory_space<vmem>>, vector<3x256xbf16>
    tpu.vector_store %arg6[%c96_486, %c512_487], %563 {strides = array<i32>} : memref<108x2048xbf16, #tpu.memory_space<vmem>>, vector<3x256xbf16>,
    %565 = vector.extract_strided_slice %558 {offsets = [3, 0], sizes = [3, 256], strides = [1, 1]} : vector<10x256xbf16> to vector<3x256xbf16>
    %c96_488 = arith.constant 96 : index
    %c768_489 = arith.constant 768 : index
    %566 = vector.load %arg6[%c96_488, %c768_489] : memref<108x2048xbf16, #tpu.memory_space<vmem>>, vector<3x256xbf16>
    tpu.vector_store %arg6[%c96_488, %c768_489], %565 {strides = array<i32>} : memref<108x2048xbf16, #tpu.memory_space<vmem>>, vector<3x256xbf16>,
    %567 = vector.extract_strided_slice %558 {offsets = [4, 0], sizes = [3, 256], strides = [1, 1]} : vector<10x256xbf16> to vector<3x256xbf16>
    %c96_490 = arith.constant 96 : index
    %c1024_491 = arith.constant 1024 : index
    %568 = vector.load %arg6[%c96_490, %c1024_491] : memref<108x2048xbf16, #tpu.memory_space<vmem>>, vector<3x256xbf16>
    tpu.vector_store %arg6[%c96_490, %c1024_491], %567 {strides = array<i32>} : memref<108x2048xbf16, #tpu.memory_space<vmem>>, vector<3x256xbf16>,
    %569 = vector.extract_strided_slice %558 {offsets = [5, 0], sizes = [3, 256], strides = [1, 1]} : vector<10x256xbf16> to vector<3x256xbf16>
    %c96_492 = arith.constant 96 : index
    %c1280_493 = arith.constant 1280 : index
    %570 = vector.load %arg6[%c96_492, %c1280_493] : memref<108x2048xbf16, #tpu.memory_space<vmem>>, vector<3x256xbf16>
    tpu.vector_store %arg6[%c96_492, %c1280_493], %569 {strides = array<i32>} : memref<108x2048xbf16, #tpu.memory_space<vmem>>, vector<3x256xbf16>,
    %571 = vector.extract_strided_slice %558 {offsets = [6, 0], sizes = [3, 256], strides = [1, 1]} : vector<10x256xbf16> to vector<3x256xbf16>
    %c96_494 = arith.constant 96 : index
    %c1536_495 = arith.constant 1536 : index
    %572 = vector.load %arg6[%c96_494, %c1536_495] : memref<108x2048xbf16, #tpu.memory_space<vmem>>, vector<3x256xbf16>
    tpu.vector_store %arg6[%c96_494, %c1536_495], %571 {strides = array<i32>} : memref<108x2048xbf16, #tpu.memory_space<vmem>>, vector<3x256xbf16>,
    %573 = vector.extract_strided_slice %558 {offsets = [7, 0], sizes = [3, 256], strides = [1, 1]} : vector<10x256xbf16> to vector<3x256xbf16>
    %c96_496 = arith.constant 96 : index
    %c1792_497 = arith.constant 1792 : index
    %574 = vector.load %arg6[%c96_496, %c1792_497] : memref<108x2048xbf16, #tpu.memory_space<vmem>>, vector<3x256xbf16>
    tpu.vector_store %arg6[%c96_496, %c1792_497], %573 {strides = array<i32>} : memref<108x2048xbf16, #tpu.memory_space<vmem>>, vector<3x256xbf16>,
    %575 = vector.extract_strided_slice %472 {offsets = [0, 34], sizes = [10, 256], strides = [1, 1]} : vector<10x384xbf16> to vector<10x256xbf16>
    %576 = vector.extract_strided_slice %575 {offsets = [0, 0], sizes = [3, 256], strides = [1, 1]} : vector<10x256xbf16> to vector<3x256xbf16>
    %c99 = arith.constant 99 : index
    %c0_498 = arith.constant 0 : index
    %577 = vector.load %arg6[%c99, %c0_498] : memref<108x2048xbf16, #tpu.memory_space<vmem>>, vector<3x256xbf16>
    tpu.vector_store %arg6[%c99, %c0_498], %576 {strides = array<i32>} : memref<108x2048xbf16, #tpu.memory_space<vmem>>, vector<3x256xbf16>,
    %578 = vector.extract_strided_slice %575 {offsets = [1, 0], sizes = [3, 256], strides = [1, 1]} : vector<10x256xbf16> to vector<3x256xbf16>
    %c99_499 = arith.constant 99 : index
    %c256_500 = arith.constant 256 : index
    %579 = vector.load %arg6[%c99_499, %c256_500] : memref<108x2048xbf16, #tpu.memory_space<vmem>>, vector<3x256xbf16>
    tpu.vector_store %arg6[%c99_499, %c256_500], %578 {strides = array<i32>} : memref<108x2048xbf16, #tpu.memory_space<vmem>>, vector<3x256xbf16>,
    %580 = vector.extract_strided_slice %575 {offsets = [2, 0], sizes = [3, 256], strides = [1, 1]} : vector<10x256xbf16> to vector<3x256xbf16>
    %c99_501 = arith.constant 99 : index
    %c512_502 = arith.constant 512 : index
    %581 = vector.load %arg6[%c99_501, %c512_502] : memref<108x2048xbf16, #tpu.memory_space<vmem>>, vector<3x256xbf16>
    tpu.vector_store %arg6[%c99_501, %c512_502], %580 {strides = array<i32>} : memref<108x2048xbf16, #tpu.memory_space<vmem>>, vector<3x256xbf16>,
    %582 = vector.extract_strided_slice %575 {offsets = [3, 0], sizes = [3, 256], strides = [1, 1]} : vector<10x256xbf16> to vector<3x256xbf16>
    %c99_503 = arith.constant 99 : index
    %c768_504 = arith.constant 768 : index
    %583 = vector.load %arg6[%c99_503, %c768_504] : memref<108x2048xbf16, #tpu.memory_space<vmem>>, vector<3x256xbf16>
    tpu.vector_store %arg6[%c99_503, %c768_504], %582 {strides = array<i32>} : memref<108x2048xbf16, #tpu.memory_space<vmem>>, vector<3x256xbf16>,
    %584 = vector.extract_strided_slice %575 {offsets = [4, 0], sizes = [3, 256], strides = [1, 1]} : vector<10x256xbf16> to vector<3x256xbf16>
    %c99_505 = arith.constant 99 : index
    %c1024_506 = arith.constant 1024 : index
    %585 = vector.load %arg6[%c99_505, %c1024_506] : memref<108x2048xbf16, #tpu.memory_space<vmem>>, vector<3x256xbf16>
    tpu.vector_store %arg6[%c99_505, %c1024_506], %584 {strides = array<i32>} : memref<108x2048xbf16, #tpu.memory_space<vmem>>, vector<3x256xbf16>,
    %586 = vector.extract_strided_slice %575 {offsets = [5, 0], sizes = [3, 256], strides = [1, 1]} : vector<10x256xbf16> to vector<3x256xbf16>
    %c99_507 = arith.constant 99 : index
    %c1280_508 = arith.constant 1280 : index
    %587 = vector.load %arg6[%c99_507, %c1280_508] : memref<108x2048xbf16, #tpu.memory_space<vmem>>, vector<3x256xbf16>
    tpu.vector_store %arg6[%c99_507, %c1280_508], %586 {strides = array<i32>} : memref<108x2048xbf16, #tpu.memory_space<vmem>>, vector<3x256xbf16>,
    %588 = vector.extract_strided_slice %575 {offsets = [6, 0], sizes = [3, 256], strides = [1, 1]} : vector<10x256xbf16> to vector<3x256xbf16>
    %c99_509 = arith.constant 99 : index
    %c1536_510 = arith.constant 1536 : index
    %589 = vector.load %arg6[%c99_509, %c1536_510] : memref<108x2048xbf16, #tpu.memory_space<vmem>>, vector<3x256xbf16>
    tpu.vector_store %arg6[%c99_509, %c1536_510], %588 {strides = array<i32>} : memref<108x2048xbf16, #tpu.memory_space<vmem>>, vector<3x256xbf16>,
    %590 = vector.extract_strided_slice %575 {offsets = [7, 0], sizes = [3, 256], strides = [1, 1]} : vector<10x256xbf16> to vector<3x256xbf16>
    %c99_511 = arith.constant 99 : index
    %c1792_512 = arith.constant 1792 : index
    %591 = vector.load %arg6[%c99_511, %c1792_512] : memref<108x2048xbf16, #tpu.memory_space<vmem>>, vector<3x256xbf16>
    tpu.vector_store %arg6[%c99_511, %c1792_512], %590 {strides = array<i32>} : memref<108x2048xbf16, #tpu.memory_space<vmem>>, vector<3x256xbf16>,
    %592 = vector.extract_strided_slice %472 {offsets = [0, 35], sizes = [10, 256], strides = [1, 1]} : vector<10x384xbf16> to vector<10x256xbf16>
    %593 = vector.extract_strided_slice %592 {offsets = [0, 0], sizes = [3, 256], strides = [1, 1]} : vector<10x256xbf16> to vector<3x256xbf16>
    %c102 = arith.constant 102 : index
    %c0_513 = arith.constant 0 : index
    %594 = vector.load %arg6[%c102, %c0_513] : memref<108x2048xbf16, #tpu.memory_space<vmem>>, vector<3x256xbf16>
    tpu.vector_store %arg6[%c102, %c0_513], %593 {strides = array<i32>} : memref<108x2048xbf16, #tpu.memory_space<vmem>>, vector<3x256xbf16>,
    %595 = vector.extract_strided_slice %592 {offsets = [1, 0], sizes = [3, 256], strides = [1, 1]} : vector<10x256xbf16> to vector<3x256xbf16>
    %c102_514 = arith.constant 102 : index
    %c256_515 = arith.constant 256 : index
    %596 = vector.load %arg6[%c102_514, %c256_515] : memref<108x2048xbf16, #tpu.memory_space<vmem>>, vector<3x256xbf16>
    tpu.vector_store %arg6[%c102_514, %c256_515], %595 {strides = array<i32>} : memref<108x2048xbf16, #tpu.memory_space<vmem>>, vector<3x256xbf16>,
    %597 = vector.extract_strided_slice %592 {offsets = [2, 0], sizes = [3, 256], strides = [1, 1]} : vector<10x256xbf16> to vector<3x256xbf16>
    %c102_516 = arith.constant 102 : index
    %c512_517 = arith.constant 512 : index
    %598 = vector.load %arg6[%c102_516, %c512_517] : memref<108x2048xbf16, #tpu.memory_space<vmem>>, vector<3x256xbf16>
    tpu.vector_store %arg6[%c102_516, %c512_517], %597 {strides = array<i32>} : memref<108x2048xbf16, #tpu.memory_space<vmem>>, vector<3x256xbf16>,
    %599 = vector.extract_strided_slice %592 {offsets = [3, 0], sizes = [3, 256], strides = [1, 1]} : vector<10x256xbf16> to vector<3x256xbf16>
    %c102_518 = arith.constant 102 : index
    %c768_519 = arith.constant 768 : index
    %600 = vector.load %arg6[%c102_518, %c768_519] : memref<108x2048xbf16, #tpu.memory_space<vmem>>, vector<3x256xbf16>
    tpu.vector_store %arg6[%c102_518, %c768_519], %599 {strides = array<i32>} : memref<108x2048xbf16, #tpu.memory_space<vmem>>, vector<3x256xbf16>,
    %601 = vector.extract_strided_slice %592 {offsets = [4, 0], sizes = [3, 256], strides = [1, 1]} : vector<10x256xbf16> to vector<3x256xbf16>
    %c102_520 = arith.constant 102 : index
    %c1024_521 = arith.constant 1024 : index
    %602 = vector.load %arg6[%c102_520, %c1024_521] : memref<108x2048xbf16, #tpu.memory_space<vmem>>, vector<3x256xbf16>
    tpu.vector_store %arg6[%c102_520, %c1024_521], %601 {strides = array<i32>} : memref<108x2048xbf16, #tpu.memory_space<vmem>>, vector<3x256xbf16>,
    %603 = vector.extract_strided_slice %592 {offsets = [5, 0], sizes = [3, 256], strides = [1, 1]} : vector<10x256xbf16> to vector<3x256xbf16>
    %c102_522 = arith.constant 102 : index
    %c1280_523 = arith.constant 1280 : index
    %604 = vector.load %arg6[%c102_522, %c1280_523] : memref<108x2048xbf16, #tpu.memory_space<vmem>>, vector<3x256xbf16>
    tpu.vector_store %arg6[%c102_522, %c1280_523], %603 {strides = array<i32>} : memref<108x2048xbf16, #tpu.memory_space<vmem>>, vector<3x256xbf16>,
    %605 = vector.extract_strided_slice %592 {offsets = [6, 0], sizes = [3, 256], strides = [1, 1]} : vector<10x256xbf16> to vector<3x256xbf16>
    %c102_524 = arith.constant 102 : index
    %c1536_525 = arith.constant 1536 : index
    %606 = vector.load %arg6[%c102_524, %c1536_525] : memref<108x2048xbf16, #tpu.memory_space<vmem>>, vector<3x256xbf16>
    tpu.vector_store %arg6[%c102_524, %c1536_525], %605 {strides = array<i32>} : memref<108x2048xbf16, #tpu.memory_space<vmem>>, vector<3x256xbf16>,
    %607 = vector.extract_strided_slice %592 {offsets = [7, 0], sizes = [3, 256], strides = [1, 1]} : vector<10x256xbf16> to vector<3x256xbf16>
    %c102_526 = arith.constant 102 : index
    %c1792_527 = arith.constant 1792 : index
    %608 = vector.load %arg6[%c102_526, %c1792_527] : memref<108x2048xbf16, #tpu.memory_space<vmem>>, vector<3x256xbf16>
    tpu.vector_store %arg6[%c102_526, %c1792_527], %607 {strides = array<i32>} : memref<108x2048xbf16, #tpu.memory_space<vmem>>, vector<3x256xbf16>,
    %609 = vector.extract_strided_slice %472 {offsets = [0, 36], sizes = [10, 256], strides = [1, 1]} : vector<10x384xbf16> to vector<10x256xbf16>
    %610 = vector.extract_strided_slice %609 {offsets = [0, 0], sizes = [3, 256], strides = [1, 1]} : vector<10x256xbf16> to vector<3x256xbf16>
    %c105 = arith.constant 105 : index
    %c0_528 = arith.constant 0 : index
    %611 = vector.load %arg6[%c105, %c0_528] : memref<108x2048xbf16, #tpu.memory_space<vmem>>, vector<3x256xbf16>
    tpu.vector_store %arg6[%c105, %c0_528], %610 {strides = array<i32>} : memref<108x2048xbf16, #tpu.memory_space<vmem>>, vector<3x256xbf16>,
    %612 = vector.extract_strided_slice %609 {offsets = [1, 0], sizes = [3, 256], strides = [1, 1]} : vector<10x256xbf16> to vector<3x256xbf16>
    %c105_529 = arith.constant 105 : index
    %c256_530 = arith.constant 256 : index
    %613 = vector.load %arg6[%c105_529, %c256_530] : memref<108x2048xbf16, #tpu.memory_space<vmem>>, vector<3x256xbf16>
    tpu.vector_store %arg6[%c105_529, %c256_530], %612 {strides = array<i32>} : memref<108x2048xbf16, #tpu.memory_space<vmem>>, vector<3x256xbf16>,
    %614 = vector.extract_strided_slice %609 {offsets = [2, 0], sizes = [3, 256], strides = [1, 1]} : vector<10x256xbf16> to vector<3x256xbf16>
    %c105_531 = arith.constant 105 : index
    %c512_532 = arith.constant 512 : index
    %615 = vector.load %arg6[%c105_531, %c512_532] : memref<108x2048xbf16, #tpu.memory_space<vmem>>, vector<3x256xbf16>
    tpu.vector_store %arg6[%c105_531, %c512_532], %614 {strides = array<i32>} : memref<108x2048xbf16, #tpu.memory_space<vmem>>, vector<3x256xbf16>,
    %616 = vector.extract_strided_slice %609 {offsets = [3, 0], sizes = [3, 256], strides = [1, 1]} : vector<10x256xbf16> to vector<3x256xbf16>
    %c105_533 = arith.constant 105 : index
    %c768_534 = arith.constant 768 : index
    %617 = vector.load %arg6[%c105_533, %c768_534] : memref<108x2048xbf16, #tpu.memory_space<vmem>>, vector<3x256xbf16>
    tpu.vector_store %arg6[%c105_533, %c768_534], %616 {strides = array<i32>} : memref<108x2048xbf16, #tpu.memory_space<vmem>>, vector<3x256xbf16>,
    %618 = vector.extract_strided_slice %609 {offsets = [4, 0], sizes = [3, 256], strides = [1, 1]} : vector<10x256xbf16> to vector<3x256xbf16>
    %c105_535 = arith.constant 105 : index
    %c1024_536 = arith.constant 1024 : index
    %619 = vector.load %arg6[%c105_535, %c1024_536] : memref<108x2048xbf16, #tpu.memory_space<vmem>>, vector<3x256xbf16>
    tpu.vector_store %arg6[%c105_535, %c1024_536], %618 {strides = array<i32>} : memref<108x2048xbf16, #tpu.memory_space<vmem>>, vector<3x256xbf16>,
    %620 = vector.extract_strided_slice %609 {offsets = [5, 0], sizes = [3, 256], strides = [1, 1]} : vector<10x256xbf16> to vector<3x256xbf16>
    %c105_537 = arith.constant 105 : index
    %c1280_538 = arith.constant 1280 : index
    %621 = vector.load %arg6[%c105_537, %c1280_538] : memref<108x2048xbf16, #tpu.memory_space<vmem>>, vector<3x256xbf16>
    tpu.vector_store %arg6[%c105_537, %c1280_538], %620 {strides = array<i32>} : memref<108x2048xbf16, #tpu.memory_space<vmem>>, vector<3x256xbf16>,
    %622 = vector.extract_strided_slice %609 {offsets = [6, 0], sizes = [3, 256], strides = [1, 1]} : vector<10x256xbf16> to vector<3x256xbf16>
    %c105_539 = arith.constant 105 : index
    %c1536_540 = arith.constant 1536 : index
    %623 = vector.load %arg6[%c105_539, %c1536_540] : memref<108x2048xbf16, #tpu.memory_space<vmem>>, vector<3x256xbf16>
    tpu.vector_store %arg6[%c105_539, %c1536_540], %622 {strides = array<i32>} : memref<108x2048xbf16, #tpu.memory_space<vmem>>, vector<3x256xbf16>,
    %624 = vector.extract_strided_slice %609 {offsets = [7, 0], sizes = [3, 256], strides = [1, 1]} : vector<10x256xbf16> to vector<3x256xbf16>
    %c105_541 = arith.constant 105 : index
    %c1792_542 = arith.constant 1792 : index
    %625 = vector.load %arg6[%c105_541, %c1792_542] : memref<108x2048xbf16, #tpu.memory_space<vmem>>, vector<3x256xbf16>
    tpu.vector_store %arg6[%c105_541, %c1792_542], %624 {strides = array<i32>} : memref<108x2048xbf16, #tpu.memory_space<vmem>>, vector<3x256xbf16>,
    %c0_543 = arith.constant 0 : index
    %c0_544 = arith.constant 0 : index
    %626 = vector.load %arg3[%c0_543, %c0_544] : memref<8x108xbf16, #tpu.memory_space<vmem>>, vector<8x108xbf16>
    %c0_545 = arith.constant 0 : index
    %c0_546 = arith.constant 0 : index
    %627 = vector.load %arg6[%c0_545, %c0_546] : memref<108x2048xbf16, #tpu.memory_space<vmem>>, vector<108x2048xbf16>
    %cst = arith.constant dense<0.000000e+00> : vector<8x2048xf32>
    %628 = tpu.matmul %626, %627, %cst {dimension_numbers = #tpu.dot_dimension_numbers<[1], [0], [0], [1], [0, 0, 1, 1], [], []>} : vector<8x108xbf16>, vector<108x2048xbf16>, vector<8x2048xf32> -> vector<8x2048xf32>
    %c0_547 = arith.constant 0 : index
    %c0_548 = arith.constant 0 : index
    %629 = vector.load %arg4[%c0_547, %c0_548] : memref<8x1xf32, #tpu.memory_space<vmem>>, vector<8x1xf32>
    %630 = vector.broadcast %629 : vector<8x1xf32> to vector<8x2048xf32>
    %631 = arith.addf %628, %630 : vector<8x2048xf32>
    %cst_549 = arith.constant -1.000000e+00 : f32
    %632 = vector.broadcast %cst_549 : f32 to vector<8x2048xf32>
    %633 = arith.maximumf %631, %632 : vector<8x2048xf32>
    %cst_550 = arith.constant 5.000000e-01 : f32
    %634 = vector.broadcast %cst_550 : f32 to vector<8x2048xf32>
    %635 = arith.mulf %633, %634 : vector<8x2048xf32>
    %c0_551 = arith.constant 0 : index
    %c0_552 = arith.constant 0 : index
    %c0_553 = arith.constant 0 : index
    %636 = vector.load %arg5[%c0_551, %c0_552, %c0_553] : memref<1x8x2048xf32, #tpu.memory_space<vmem>>, vector<1x8x2048xf32>
    %637 = vector.shape_cast %636 : vector<1x8x2048xf32> to vector<8x2048xf32>
    %638 = vector.shape_cast %635 : vector<8x2048xf32> to vector<1x8x2048xf32>
    tpu.vector_store %arg5[%c0_551, %c0_552, %c0_553], %638 {strides = array<i32>} : memref<1x8x2048xf32, #tpu.memory_space<vmem>>, vector<1x8x2048xf32>,
    return
  }
  func.func @transform_0(%arg0: i32, %arg1: i32) -> (i32, i32, i32, i32) {
    %c0_i32 = arith.constant 0 : i32
    %c0_i32_0 = arith.constant 0 : i32
    %c0_i32_1 = arith.constant 0 : i32
    %c0_i32_2 = arith.constant 0 : i32
    return %arg0, %c0_i32, %c0_i32_0, %c0_i32_1 : i32, i32, i32, i32
  }
  func.func @transform_1(%arg0: i32, %arg1: i32) -> (i32, i32) {
    %c0_i32 = arith.constant 0 : i32
    %c0_i32_0 = arith.constant 0 : i32
    %c0_i32_1 = arith.constant 0 : i32
    return %c0_i32, %c0_i32_0 : i32, i32
  }
  func.func @transform_2(%arg0: i32, %arg1: i32) -> (i32, i32) {
    %c0_i32 = arith.constant 0 : i32
    %c0_i32_0 = arith.constant 0 : i32
    %c0_i32_1 = arith.constant 0 : i32
    return %c0_i32, %c0_i32_0 : i32, i32
  }
  func.func @transform_3(%arg0: i32, %arg1: i32) -> (i32, i32, i32) {
    %c0_i32 = arith.constant 0 : i32
    %c0_i32_0 = arith.constant 0 : i32
    return %arg0, %c0_i32, %arg1 : i32, i32, i32
  }
}

</mosaic_0001>

<llo_original>
// kernel: _convt3d_clamp_div_forward.1
$region0: #{_convt3d_clamp_div_forward.1}
  #allocation0 [shape = 'u32[]', space=smem, size = 0x4, offset = 0x4, fixed_abs, tag = 'smem constant byte address 0x4 - core index']
  #allocation1 [shape = 'u32[144,128]{1,0:T(1,128)}', space=vmem, size = 0x12000, scoped, tag = 'internal scratch']
  #allocation2 [shape = 'bf16[108,2048]{1,0:T(8,128)(2,1)}', space=vmem, size = 0x70000, scoped, tag = 'scratch operand']
  %s0 = inlined_call_operand.vmem [shape: bf16[2,4,18,384], index: 0, kind: input, shape index: {}]
  %s1 = inlined_call_operand.vmem [shape: bf16[8,108], index: 1, kind: input, shape index: {}]
  %s2 = inlined_call_operand.vmem [shape: f32[8,1], index: 2, kind: input, shape index: {}]
  %s3 = inlined_call_operand.vmem [shape: f32[2,8,4096], index: 3, kind: output, shape index: {}]
  %s4 = sld [smem:[#allocation0]]
  $region45: #{_convt3d_clamp_div_forward.1} parent=0
    _
  %s6 = ssub.s32 1, %s4
  %s7 = scalar_select 0, %s6, %s4
  loop: start=0, step=1, limit=6
  $region2: #{_convt3d_clamp_div_forward.1} parent=0 // loop_pre_header
    _
  $region3: #{_convt3d_clamp_div_forward.1} parent=0 // loop_header
    %s9 = sphi 0, %s13
    %p10 = scmp.ge.s32.totalorder %s9, 6
    %s16 = sphi 0, %s28
    %s17 = sphi 0, %s24
    %s18 = sphi 0, %s16
    %s19 = sphi 0, %s17
    %s20 = sphi 0, %s18
    %s21 = sphi 0, %s19
    %s31 = sphi 0, %s33
    %s34 = sphi 0, %s31
    %s35 = sphi 0, %s34
    %s51 = sphi 0, %s35
    %s55 = sphi 0, %s55
    %s57 = sphi 0, %s55
    %s58 = sphi 0, %s57
    %s72 = sphi 0, %s58
    %s76 = sphi 0, %s76
    %s78 = sphi 0, %s76
    %s79 = sphi 0, %s78
    %s93 = sphi 0, %s79
    %s101 = sphi 0, %s103
    %s104 = sphi 0, %s101
    %s105 = sphi 0, %s104
    %s121 = sphi 0, %s105
  $region4: #{_convt3d_clamp_div_forward.1} parent=0 // loop_header_branch
    %12 = sbr.rel (%p10) target = $region8
  $region5: #{_convt3d_clamp_div_forward.1} parent=0 // loop_body
    %s14 = ssub.s32 %s9, 1
    %s15 = ssub.s32 %s9, 2
    %s22 = sadd.s32 1, %s17
    %p23 = scmp.ge.s32.totalorder %s22, 2
    %s24 = scalar_select %p23, 0, %s22
    %s25 = sadd.s32 1, %s16
    %s26 = scalar_select %p23, %s25, %s16
    %p27 = scmp.ge.s32.totalorder %s26, 2
    %s28 = scalar_select %p27, 0, %s26
    %s29 = ssub.s32 %s16, %s28
    %p30 = scmp.eq.s32.totalorder %s29, 0
    %s32 = sadd.s32 %s31, 1
    %s33 = scalar_select %p30, %s31, %s32
    %p36 = pneg %p30
    %p37 = scmp.eq.s32.totalorder %s9, 3
    %p38 = por %p36, %p37
    %p39 = scmp.ne.s32.totalorder %s31, %s34
    %p40 = scmp.eq.s32.totalorder %s9, 0
    %p41 = por %p39, %p40
    %p42 = scmp.ne.s32.totalorder %s31, %s34
    %p43 = scmp.eq.s32.totalorder %s14, 3
    %p44 = por %p42, %p43
    %p45 = scmp.ne.s32.totalorder %s34, %s35
    %p46 = scmp.eq.s32.totalorder %s14, 0
    %p47 = por %p45, %p46
    %p48 = scmp.ne.s32.totalorder %s34, %s35
    %p49 = scmp.eq.s32.totalorder %s15, 3
    %p50 = por %p48, %p49
    %p52 = scmp.ne.s32.totalorder %s35, %s51
    %p53 = scmp.eq.s32.totalorder %s15, 0
    %p54 = por %p52, %p53
    %s56 = sadd.s32 %s55, 1
    %p59 = scmp.eq.s32.totalorder %s9, 3
    %p60 = scmp.ne.s32.totalorder %s55, %s57
    %p61 = scmp.eq.s32.totalorder %s9, 0
    %p62 = por %p60, %p61
    %p63 = scmp.ne.s32.totalorder %s55, %s57
    %p64 = scmp.eq.s32.totalorder %s14, 3
    %p65 = por %p63, %p64
    %p66 = scmp.ne.s32.totalorder %s57, %s58
    %p67 = scmp.eq.s32.totalorder %s14, 0
    %p68 = por %p66, %p67
    %p69 = scmp.ne.s32.totalorder %s57, %s58
    %p70 = scmp.eq.s32.totalorder %s15, 3
    %p71 = por %p69, %p70
    %p73 = scmp.ne.s32.totalorder %s58, %s72
    %p74 = scmp.eq.s32.totalorder %s15, 0
    %p75 = por %p73, %p74
    %s77 = sadd.s32 %s76, 1
    %p80 = scmp.eq.s32.totalorder %s9, 3
    %p81 = scmp.ne.s32.totalorder %s76, %s78
    %p82 = scmp.eq.s32.totalorder %s9, 0
    %p83 = por %p81, %p82
    %p84 = scmp.ne.s32.totalorder %s76, %s78
    %p85 = scmp.eq.s32.totalorder %s14, 3
    %p86 = por %p84, %p85
    %p87 = scmp.ne.s32.totalorder %s78, %s79
    %p88 = scmp.eq.s32.totalorder %s14, 0
    %p89 = por %p87, %p88
    %p90 = scmp.ne.s32.totalorder %s78, %s79
    %p91 = scmp.eq.s32.totalorder %s15, 3
    %p92 = por %p90, %p91
    %p94 = scmp.ne.s32.totalorder %s79, %s93
    %p95 = scmp.eq.s32.totalorder %s15, 0
    %p96 = por %p94, %p95
    %s97 = ssub.s32 %s16, %s28
    %s98 = ssub.s32 %s17, %s24
    %s99 = sor.u32 %s97, %s98
    %p100 = scmp.eq.s32.totalorder %s99, 0
    %s102 = sadd.s32 %s101, 1
    %s103 = scalar_select %p100, %s101, %s102
    %p106 = pneg %p100
    %p107 = scmp.eq.s32.totalorder %s9, 3
    %p108 = por %p106, %p107
    %p109 = scmp.ne.s32.totalorder %s101, %s104
    %p110 = scmp.eq.s32.totalorder %s9, 0
    %p111 = por %p109, %p110
    %p112 = scmp.ne.s32.totalorder %s101, %s104
    %p113 = scmp.eq.s32.totalorder %s14, 3
    %p114 = por %p112, %p113
    %p115 = scmp.ne.s32.totalorder %s104, %s105
    %p116 = scmp.eq.s32.totalorder %s14, 0
    %p117 = por %p115, %p116
    %p118 = scmp.ne.s32.totalorder %s104, %s105
    %p119 = scmp.eq.s32.totalorder %s15, 3
    %p120 = por %p118, %p119
    %p122 = scmp.ne.s32.totalorder %s105, %s121
    %p123 = scmp.eq.s32.totalorder %s15, 0
    %p124 = por %p122, %p123
    %p125 = scmp.le.s32.totalorder 1, %s9
    %p126 = scmp.lt.s32.totalorder %s9, 5
    %p127 = pnand %p125, %p126
    %p128 = pneg %p127
    // Predicated region
    $region9: #{_convt3d_clamp_div_forward.1} parent=5 // pred_check
      _
    $region10: #{_convt3d_clamp_div_forward.1} parent=5 // pred_check_branch
      %130 = sbr.rel (%p127) target = $region12
    $region11: #{_convt3d_clamp_div_forward.1} parent=5 // pred_region
      %s131 = ssub.s32 %s9, 1
      // Predicated region
      $region13: #{_convt3d_clamp_div_forward.1} parent=11 // pred_check
        %p132 = pneg %p68
      $region14: #{_convt3d_clamp_div_forward.1} parent=11 // pred_check_branch
        %134 = sbr.rel (%p132) target = $region16
      $region15: #{_convt3d_clamp_div_forward.1} parent=11 // pred_region
        _
      $region16: #{_convt3d_clamp_div_forward.1} parent=11 // pred_fallthru
        _
      // Predicated region
      $region17: #{_convt3d_clamp_div_forward.1} parent=11 // pred_check
        %p135 = pneg %p89
      $region18: #{_convt3d_clamp_div_forward.1} parent=11 // pred_check_branch
        %137 = sbr.rel (%p135) target = $region20
      $region19: #{_convt3d_clamp_div_forward.1} parent=11 // pred_region
        _
      $region20: #{_convt3d_clamp_div_forward.1} parent=11 // pred_fallthru
        _
    $region12: #{_convt3d_clamp_div_forward.1} parent=5 // pred_fallthru
      _
    %p138 = scmp.lt.s32.totalorder %s9, 4
    // Predicated region
    $region21: #{_convt3d_clamp_div_forward.1} parent=5 // pred_check
      %p139 = pneg %p138
    $region22: #{_convt3d_clamp_div_forward.1} parent=5 // pred_check_branch
      %141 = sbr.rel (%p139) target = $region24
    $region23: #{_convt3d_clamp_div_forward.1} parent=5 // pred_region
      // Predicated region
      $region25: #{_convt3d_clamp_div_forward.1} parent=23 // pred_check
        %p142 = pneg %p41
      $region26: #{_convt3d_clamp_div_forward.1} parent=23 // pred_check_branch
        %144 = sbr.rel (%p142) target = $region28
      $region27: #{_convt3d_clamp_div_forward.1} parent=23 // pred_region
        %p145 = scmp.lt.s32.totalorder %s16, 1
        %s146 = scalar_select %p145, %s16, 1
        %s147 = smul.addr %s146, 36
        %s148 = smul.addr %s147, 4
        %s149 = scalar_lea.vmem %s0, %s148
      $region28: #{_convt3d_clamp_div_forward.1} parent=23 // pred_fallthru
        _
    $region24: #{_convt3d_clamp_div_forward.1} parent=5 // pred_fallthru
      _
    %p150 = scmp.le.s32.totalorder 1, %s9
    %p151 = scmp.lt.s32.totalorder %s9, 5
    %p152 = pnand %p150, %p151
    %p153 = pneg %p152
    // Predicated region
    $region29: #{_convt3d_clamp_div_forward.1} parent=5 // pred_check
      _
    $region30: #{_convt3d_clamp_div_forward.1} parent=5 // pred_check_branch
      %155 = sbr.rel (%p152) target = $region32
    $region31: #{_convt3d_clamp_div_forward.1} parent=5 // pred_region
      %s156 = ssub.s32 %s9, 1
      %p157 = scmp.lt.s32.totalorder %s18, 1
      %s158 = scalar_select %p157, %s18, 1
      %s159 = smul.addr %s158, 36
      %s160 = smul.addr %s159, 4
      %s161 = scalar_lea.vmem %s0, %s160
      %p162 = pneg %p47
      %p163 = pneg %p44
      %p164 = pneg %p68
      %p165 = pneg %p65
      %p166 = pneg %p89
      %p167 = pneg %p86
      %p168 = pneg %p117
      %p169 = pneg %p114
      %s170 = smul.u32 16, %s19
      %p171 = scmp.lt.s32.totalorder %s18, 1
      %s172 = scalar_select %p171, %s18, 1
      %p173 = scmp.lt.s32.totalorder %s170, 31
      %s174 = scalar_select %p173, %s170, 31
      %s175 = smul.addr %s172, 32
      %s176 = sadd.s32 %s174, %s175
      %s177 = smul.addr %s176, 8
      %s178 = scalar_lea.vmem %s3, %s177
      %p179 = scmp.lt.s32.totalorder %s18, 1
      %s180 = scalar_select %p179, %s18, 1
      %s181 = smul.addr %s180, 36
      %s182 = smul.addr %s181, 4
      %s183 = scalar_lea.vmem %s0, %s182
      %s184 = smul.u32 16, %s19
      %p185 = scmp.lt.s32.totalorder %s18, 1
      %s186 = scalar_select %p185, %s18, 1
      %p187 = scmp.lt.s32.totalorder %s184, 31
      %s188 = scalar_select %p187, %s184, 31
      %s189 = smul.addr %s186, 32
      %s190 = sadd.s32 %s188, %s189
      %s191 = smul.addr %s190, 8
      %s192 = scalar_lea.vmem %s3, %s191
      %s193 = smul.u32 16, %s19
      %s195 = smul.u32 %s19, 8
      %s196 = sshra.s32 %s195, 3
      %s197 = sand.u32 %s195, 7
      %s198 = smul.u32 %s196, 3
      %s199 = smul.addr %s198, 4
      %s200 = scalar_lea.vmem %s183, %s199
      %v201 = vld [vmem:[%s200] sm:$0xff]
      %v202 = vld [vmem:[%s200 + $0x8] sm:$0xf]
      %v203 = vld [vmem:[%s200 + $0xc] sm:$0x11]
      %v204 = vld [vmem:[%s200 + $0x14] sm:$0x1]
      %vm205 = vcmask 1041408
      %vm206 = vsmask.f32 1280
      %vm207 = vmand %vm205, %vm206
      %vm208 = vcmask 1045508
      %vm209 = vsmask.f32 5376
      %vm210 = vmand %vm208, %vm209
      %vm211 = vmor %vm210, %vm207
      %v212 = vld [vmem:[#allocation2] sm:$0x33]
      %v213 = vsel %vm211, %v201, %v212
      %214 = vst [vmem:[#allocation2] sm:$0x33] %v213
      %v216 = vshrl.u32 %v201, 16
      %v218 = vrot.slane %v216, 4
      %v219 = vshll.u32 %v201, 16
      %v221 = vrot.slane %v219, 5
      %v222 = vor.u32 %v218, %v221
      %v223 = vrot.slane %v222, 4
      %v225 = vld [vmem:[#allocation2 + $0x8] sm:$0x33]
      %v226 = vsel %vm211, %v223, %v225
      %227 = vst [vmem:[#allocation2 + $0x8] sm:$0x33] %v226
      %v229 = vrot.slane %v201, 5
      %v230 = vrot.slane %v229, 4
      %v232 = vld [vmem:[#allocation2 + $0x10] sm:$0x33]
      %v233 = vsel %vm211, %v230, %v232
      %234 = vst [vmem:[#allocation2 + $0x10] sm:$0x33] %v233
      %v235 = vrot.slane %v216, 5
      %v236 = vrot.slane %v219, 6
      %v237 = vor.u32 %v235, %v236
      %v238 = vrot.slane %v237, 4
      %v240 = vld [vmem:[#allocation2 + $0x18] sm:$0x33]
      %v241 = vsel %vm211, %v238, %v240
      %242 = vst [vmem:[#allocation2 + $0x18] sm:$0x33] %v241
      %v243 = vrot.slane %v201, 6
      %v244 = vrot.slane %v243, 4
      %v246 = vld [vmem:[#allocation2 + $0x20] sm:$0x33]
      %v247 = vsel %vm211, %v244, %v246
      %248 = vst [vmem:[#allocation2 + $0x20] sm:$0x33] %v247
      %v249 = vrot.slane %v216, 6
      %v250 = vrot.slane %v219, 7
      %v251 = vor.u32 %v249, %v250
      %v252 = vrot.slane %v251, 4
      %v254 = vld [vmem:[#allocation2 + $0x28] sm:$0x33]
      %v255 = vsel %vm211, %v252, %v254
      %256 = vst [vmem:[#allocation2 + $0x28] sm:$0x33] %v255
      %vm258 = vcmask 1040384
      %vm259 = vcmask 1044484
      %vm260 = vmor %vm258, %vm259
      %v261 = vrot.slane %v201, 7
      %v262 = vrot.slane %v261, 4
      %v263 = vrot.slane %v203, 7
      %v264 = vsel %vm260, %v262, %v263
      %v266 = vld [vmem:[#allocation2 + $0x30] sm:$0x33]
      %v267 = vsel %vm211, %v264, %v266
      %268 = vst [vmem:[#allocation2 + $0x30] sm:$0x33] %v267
      %vm269 = vsmask.f32 256
      %vm270 = vsmask.f32 4368
      %vm271 = vmor %vm269, %vm270
      %v272 = vrot.slane %v216, 7
      %v273 = vrot.slane %v272, 4
      %v275 = vshrl.u32 %v203, 16
      %v277 = vrot.slane %v275, 7
      %v278 = vshll.u32 %v203, 16
      %v280 = vor.u32 %v277, %v278
      %v281 = vsel %vm271, %v273, %v280
      %v283 = vld [vmem:[#allocation2 + $0x38] sm:$0x33]
      %v284 = vsel %vm211, %v281, %v283
      %285 = vst [vmem:[#allocation2 + $0x38] sm:$0x33] %v284
      %v287 = vshrl.u32 %v202, 16
      %v289 = vrot.slane %v287, 6
      %v290 = vshll.u32 %v202, 16
      %v292 = vrot.slane %v290, 7
      %v293 = vor.u32 %v289, %v292
      %294 = vrot.lane.b32.xlu0 %v251, 127
      %v295 = vpop.permute.xlu0 %294
      %296 = vrot.lane.b32.xlu0 %v293, 127
      %v297 = vpop.permute.xlu0 %296
      %v298 = vrot.slane %v295, 4
      %v299 = vrot.slane %v297, 4
      %vm300 = vcmask 1043456
      %v301 = vsel %vm300, %v298, %v299
      %vm302 = vcmask 1039360
      %v303 = vsel %vm302, %v295, %v301
      %vm305 = vcmask 1042433
      %vm306 = vsmask.f32 7942
      %vm307 = vmand %vm305, %vm306
      %vm308 = vcmask 1046533
      %vm309 = vsmask.f32 7958
      %vm310 = vmand %vm308, %vm309
      %vm311 = vmor %vm310, %vm307
      %v312 = vld [vmem:[#allocation2] sm:$0x66]
      %v313 = vsel %vm311, %v303, %v312
      %314 = vst [vmem:[#allocation2] sm:$0x66] %v313
      %v316 = vrot.slane %v202, 7
      %317 = vrot.lane.b32.xlu0 %v261, 127
      %v318 = vpop.permute.xlu0 %317
      %319 = vrot.lane.b32.xlu0 %v316, 127
      %v320 = vpop.permute.xlu0 %319
      %v321 = vrot.slane %v318, 4
      %v322 = vrot.slane %v320, 4
      %v323 = vsel %vm300, %v321, %v322
      %v324 = vsel %vm302, %v318, %v323
      %v326 = vld [vmem:[#allocation2 + $0x8] sm:$0x66]
      %v327 = vsel %vm311, %v324, %v326
      %328 = vst [vmem:[#allocation2 + $0x8] sm:$0x66] %v327
      %v329 = vor.u32 %v272, %v219
      %v330 = vrot.slane %v287, 7
      %v331 = vor.u32 %v330, %v290
      %332 = vrot.lane.b32.xlu0 %v329, 127
      %v333 = vpop.permute.xlu0 %332
      %334 = vrot.lane.b32.xlu0 %v331, 127
      %v335 = vpop.permute.xlu0 %334
      %v336 = vrot.slane %v333, 4
      %v337 = vrot.slane %v335, 4
      %v338 = vsel %vm300, %v336, %v337
      %v339 = vsel %vm302, %v333, %v338
      %v341 = vld [vmem:[#allocation2 + $0x10] sm:$0x66]
      %v342 = vsel %vm311, %v339, %v341
      %343 = vst [vmem:[#allocation2 + $0x10] sm:$0x66] %v342
      %344 = vrot.lane.b32.xlu0 %v201, 127
      %v345 = vpop.permute.xlu0 %344
      %346 = vrot.lane.b32.xlu0 %v202, 127
      %v347 = vpop.permute.xlu0 %346
      %v348 = vrot.slane %v345, 4
      %v349 = vrot.slane %v347, 4
      %v350 = vsel %vm300, %v348, %v349
      %v351 = vsel %vm302, %v345, %v350
      %v353 = vld [vmem:[#allocation2 + $0x18] sm:$0x66]
      %v354 = vsel %vm311, %v351, %v353
      %355 = vst [vmem:[#allocation2 + $0x18] sm:$0x66] %v354
      %v356 = vrot.slane %v287, 4
      %v357 = vrot.slane %v290, 5
      %v358 = vor.u32 %v356, %v357
      %v359 = vrot.slane %v358, 4
      %360 = vrot.lane.b32.xlu0 %v223, 127
      %v361 = vpop.permute.xlu0 %360
      %362 = vrot.lane.b32.xlu0 %v359, 127
      %v363 = vpop.permute.xlu0 %362
      %v364 = vrot.slane %v361, 4
      %v365 = vrot.slane %v363, 4
      %v366 = vsel %vm300, %v364, %v365
      %v367 = vsel %vm302, %v361, %v366
      %v369 = vld [vmem:[#allocation2 + $0x20] sm:$0x66]
      %v370 = vsel %vm311, %v367, %v369
      %371 = vst [vmem:[#allocation2 + $0x20] sm:$0x66] %v370
      %v372 = vrot.slane %v202, 5
      %v373 = vrot.slane %v372, 4
      %374 = vrot.lane.b32.xlu0 %v230, 127
      %v375 = vpop.permute.xlu0 %374
      %376 = vrot.lane.b32.xlu0 %v373, 127
      %v377 = vpop.permute.xlu0 %376
      %v378 = vrot.slane %v375, 4
      %v379 = vrot.slane %v377, 4
      %v380 = vsel %vm300, %v378, %v379
      %v381 = vsel %vm302, %v375, %v380
      %v383 = vld [vmem:[#allocation2 + $0x28] sm:$0x66]
      %v384 = vsel %vm311, %v381, %v383
      %385 = vst [vmem:[#allocation2 + $0x28] sm:$0x66] %v384
      %vm386 = vsmask.f32 2304
      %vm387 = vsmask.f32 6416
      %vm388 = vmor %vm386, %vm387
      %v389 = vrot.slane %v278, 6
      %v390 = vsel %vm388, %v238, %v389
      %v391 = vrot.slane %v287, 5
      %v392 = vrot.slane %v290, 6
      %v393 = vor.u32 %v391, %v392
      %v394 = vrot.slane %v393, 4
      %v396 = vshll.u32 %v204, 16
      %v398 = vrot.slane %v396, 6
      %v399 = vsel %vm388, %v394, %v398
      %400 = vrot.lane.b32.xlu0 %v390, 127
      %v401 = vpop.permute.xlu0 %400
      %402 = vrot.lane.b32.xlu0 %v399, 127
      %v403 = vpop.permute.xlu0 %402
      %v404 = vrot.slane %v401, 4
      %v405 = vrot.slane %v403, 4
      %v406 = vsel %vm300, %v404, %v405
      %v407 = vsel %vm302, %v401, %v406
      %v409 = vld [vmem:[#allocation2 + $0x30] sm:$0x66]
      %v410 = vsel %vm311, %v407, %v409
      %411 = vst [vmem:[#allocation2 + $0x30] sm:$0x66] %v410
      %vm413 = vmor %vm205, %vm208
      %v414 = vrot.slane %v203, 6
      %v415 = vsel %vm413, %v244, %v414
      %v416 = vrot.slane %v202, 6
      %v417 = vrot.slane %v416, 4
      %v418 = vrot.slane %v204, 6
      %v419 = vsel %vm413, %v417, %v418
      %420 = vrot.lane.b32.xlu0 %v415, 127
      %v421 = vpop.permute.xlu0 %420
      %422 = vrot.lane.b32.xlu0 %v419, 127
      %v423 = vpop.permute.xlu0 %422
      %v424 = vrot.slane %v421, 4
      %v425 = vrot.slane %v423, 4
      %v426 = vsel %vm300, %v424, %v425
      %v427 = vsel %vm302, %v421, %v426
      %v429 = vld [vmem:[#allocation2 + $0x38] sm:$0x66]
      %v430 = vsel %vm311, %v427, %v429
      %431 = vst [vmem:[#allocation2 + $0x38] sm:$0x66] %v430
      %432 = vrot.lane.b32.xlu0 %v229, 126
      %v433 = vpop.permute.xlu0 %432
      %434 = vrot.lane.b32.xlu0 %v372, 126
      %v435 = vpop.permute.xlu0 %434
      %436 = vrot.lane.b32.xlu0 %v230, 126
      %v437 = vpop.permute.xlu0 %436
      %438 = vrot.lane.b32.xlu0 %v373, 126
      %v439 = vpop.permute.xlu0 %438
      %v440 = vrot.slane %v433, 4
      %v441 = vrot.slane %v435, 4
      %v442 = vrot.slane %v437, 4
      %v443 = vrot.slane %v439, 4
      %v444 = vsel %vm300, %v440, %v441
      %vm445 = vcmask 1031168
      %v446 = vsel %vm445, %v433, %v444
      %v447 = vsel %vm300, %v442, %v443
      %v448 = vsel %vm445, %v437, %v447
      %451 = vst [vmem:[#allocation2] sm:$0x88] %v446
      %vm452 = vmand %vm258, %vm269
      %vm453 = vsmask.f32 4352
      %vm454 = vmand %vm259, %vm453
      %vm455 = vmor %vm454, %vm452
      %v456 = vld [vmem:[#allocation2 + $0x40] sm:$0x11]
      %v457 = vsel %vm455, %v448, %v456
      %458 = vst [vmem:[#allocation2 + $0x40] sm:$0x11] %v457
      %v459 = vrot.slane %v235, 4
      %v460 = vrot.slane %v391, 4
      %461 = vrot.lane.b32.xlu0 %v237, 126
      %v462 = vpop.permute.xlu0 %461
      %463 = vrot.lane.b32.xlu0 %v393, 126
      %v464 = vpop.permute.xlu0 %463
      %465 = vrot.lane.b32.xlu0 %v459, 126
      %v466 = vpop.permute.xlu0 %465
      %467 = vrot.lane.b32.xlu0 %v460, 126
      %v468 = vpop.permute.xlu0 %467
      %v469 = vrot.slane %v462, 4
      %v470 = vrot.slane %v464, 4
      %v471 = vrot.slane %v466, 4
      %v472 = vrot.slane %v468, 4
      %v473 = vsel %vm300, %v469, %v470
      %v474 = vsel %vm445, %v462, %v473
      %v475 = vsel %vm300, %v471, %v472
      %v476 = vsel %vm445, %v466, %v475
      %479 = vst [vmem:[#allocation2 + $0x8] sm:$0x88] %v474
      %v480 = vld [vmem:[#allocation2 + $0x48] sm:$0x11]
      %v481 = vsel %vm455, %v476, %v480
      %482 = vst [vmem:[#allocation2 + $0x48] sm:$0x11] %v481
      %483 = vrot.lane.b32.xlu0 %v243, 126
      %v484 = vpop.permute.xlu0 %483
      %485 = vrot.lane.b32.xlu0 %v416, 126
      %v486 = vpop.permute.xlu0 %485
      %487 = vrot.lane.b32.xlu0 %v244, 126
      %v488 = vpop.permute.xlu0 %487
      %489 = vrot.lane.b32.xlu0 %v417, 126
      %v490 = vpop.permute.xlu0 %489
      %v491 = vrot.slane %v484, 4
      %v492 = vrot.slane %v486, 4
      %v493 = vrot.slane %v488, 4
      %v494 = vrot.slane %v490, 4
      %v495 = vsel %vm300, %v491, %v492
      %v496 = vsel %vm445, %v484, %v495
      %v497 = vsel %vm300, %v493, %v494
      %v498 = vsel %vm445, %v488, %v497
      %501 = vst [vmem:[#allocation2 + $0x10] sm:$0x88] %v496
      %v502 = vld [vmem:[#allocation2 + $0x50] sm:$0x11]
      %v503 = vsel %vm455, %v498, %v502
      %504 = vst [vmem:[#allocation2 + $0x50] sm:$0x11] %v503
      %v505 = vrot.slane %v249, 4
      %v506 = vrot.slane %v289, 4
      %507 = vrot.lane.b32.xlu0 %v251, 126
      %v508 = vpop.permute.xlu0 %507
      %509 = vrot.lane.b32.xlu0 %v293, 126
      %v510 = vpop.permute.xlu0 %509
      %511 = vrot.lane.b32.xlu0 %v505, 126
      %v512 = vpop.permute.xlu0 %511
      %513 = vrot.lane.b32.xlu0 %v506, 126
      %v514 = vpop.permute.xlu0 %513
      %v515 = vrot.slane %v508, 4
      %v516 = vrot.slane %v510, 4
      %v517 = vrot.slane %v512, 4
      %v518 = vrot.slane %v514, 4
      %v519 = vsel %vm300, %v515, %v516
      %v520 = vsel %vm445, %v508, %v519
      %v521 = vsel %vm300, %v517, %v518
      %v522 = vsel %vm445, %v512, %v521
      %525 = vst [vmem:[#allocation2 + $0x18] sm:$0x88] %v520
      %v526 = vld [vmem:[#allocation2 + $0x58] sm:$0x11]
      %v527 = vsel %vm455, %v522, %v526
      %528 = vst [vmem:[#allocation2 + $0x58] sm:$0x11] %v527
      %v529 = vrot.slane %v316, 4
      %530 = vrot.lane.b32.xlu0 %v261, 126
      %v531 = vpop.permute.xlu0 %530
      %532 = vrot.lane.b32.xlu0 %v316, 126
      %v533 = vpop.permute.xlu0 %532
      %534 = vrot.lane.b32.xlu0 %v262, 126
      %v535 = vpop.permute.xlu0 %534
      %536 = vrot.lane.b32.xlu0 %v529, 126
      %v537 = vpop.permute.xlu0 %536
      %v538 = vrot.slane %v531, 4
      %v539 = vrot.slane %v533, 4
      %v540 = vrot.slane %v535, 4
      %v541 = vrot.slane %v537, 4
      %v542 = vsel %vm300, %v538, %v539
      %v543 = vsel %vm445, %v531, %v542
      %v544 = vsel %vm300, %v540, %v541
      %v545 = vsel %vm445, %v535, %v544
      %548 = vst [vmem:[#allocation2 + $0x20] sm:$0x88] %v543
      %v549 = vld [vmem:[#allocation2 + $0x60] sm:$0x11]
      %v550 = vsel %vm455, %v545, %v549
      %551 = vst [vmem:[#allocation2 + $0x60] sm:$0x11] %v550
      %v552 = vrot.slane %v330, 4
      %553 = vrot.lane.b32.xlu0 %v329, 126
      %v554 = vpop.permute.xlu0 %553
      %555 = vrot.lane.b32.xlu0 %v331, 126
      %v556 = vpop.permute.xlu0 %555
      %557 = vrot.lane.b32.xlu0 %v273, 126
      %v558 = vpop.permute.xlu0 %557
      %559 = vrot.lane.b32.xlu0 %v552, 126
      %v560 = vpop.permute.xlu0 %559
      %v561 = vrot.slane %v554, 4
      %v562 = vrot.slane %v556, 4
      %v563 = vrot.slane %v558, 4
      %v564 = vrot.slane %v560, 4
      %v565 = vsel %vm300, %v561, %v562
      %v566 = vsel %vm445, %v554, %v565
      %v567 = vsel %vm300, %v563, %v564
      %v568 = vsel %vm445, %v558, %v567
      %571 = vst [vmem:[#allocation2 + $0x28] sm:$0x88] %v566
      %v572 = vld [vmem:[#allocation2 + $0x68] sm:$0x11]
      %v573 = vsel %vm455, %v568, %v572
      %574 = vst [vmem:[#allocation2 + $0x68] sm:$0x11] %v573
      %575 = vrot.lane.b32.xlu0 %v201, 126
      %v576 = vpop.permute.xlu0 %575
      %577 = vrot.lane.b32.xlu0 %v202, 126
      %v578 = vpop.permute.xlu0 %577
      %579 = vrot.lane.b32.xlu0 %v203, 126
      %v580 = vpop.permute.xlu0 %579
      %581 = vrot.lane.b32.xlu0 %v204, 126
      %v582 = vpop.permute.xlu0 %581
      %v583 = vrot.slane %v576, 4
      %v584 = vrot.slane %v578, 4
      %v585 = vrot.slane %v580, 4
      %v586 = vrot.slane %v582, 4
      %v587 = vsel %vm300, %v583, %v584
      %v588 = vsel %vm445, %v576, %v587
      %v589 = vsel %vm300, %v585, %v586
      %v590 = vsel %vm445, %v580, %v589
      %593 = vst [vmem:[#allocation2 + $0x30] sm:$0x88] %v588
      %v594 = vld [vmem:[#allocation2 + $0x70] sm:$0x11]
      %v595 = vsel %vm455, %v590, %v594
      %596 = vst [vmem:[#allocation2 + $0x70] sm:$0x11] %v595
      %vm597 = vsmask.f32 3328
      %vm598 = vsmask.f32 7440
      %vm599 = vmor %vm597, %vm598
      %v600 = vrot.slane %v218, 4
      %v601 = vrot.slane %v278, 5
      %v602 = vsel %vm599, %v600, %v601
      %v603 = vrot.slane %v356, 4
      %v604 = vrot.slane %v396, 5
      %v605 = vsel %vm599, %v603, %v604
      %v606 = vrot.slane %v275, 4
      %v607 = vrot.slane %v606, 4
      %v608 = vshrl.u32 %v204, 16
      %v610 = vrot.slane %v608, 4
      %v611 = vrot.slane %v610, 4
      %612 = vrot.lane.b32.xlu0 %v602, 126
      %v613 = vpop.permute.xlu0 %612
      %614 = vrot.lane.b32.xlu0 %v605, 126
      %v615 = vpop.permute.xlu0 %614
      %616 = vrot.lane.b32.xlu0 %v607, 126
      %v617 = vpop.permute.xlu0 %616
      %618 = vrot.lane.b32.xlu0 %v611, 126
      %v619 = vpop.permute.xlu0 %618
      %v620 = vrot.slane %v613, 4
      %v621 = vrot.slane %v615, 4
      %v622 = vrot.slane %v617, 4
      %v623 = vrot.slane %v619, 4
      %v624 = vsel %vm300, %v620, %v621
      %v625 = vsel %vm445, %v613, %v624
      %v626 = vsel %vm300, %v622, %v623
      %v627 = vsel %vm445, %v617, %v626
      %630 = vst [vmem:[#allocation2 + $0x38] sm:$0x88] %v625
      %v631 = vld [vmem:[#allocation2 + $0x78] sm:$0x11]
      %v632 = vsel %vm455, %v627, %v631
      %633 = vst [vmem:[#allocation2 + $0x78] sm:$0x11] %v632
      %634 = vrot.lane.b32.xlu0 %v329, 111
      %v635 = vpop.permute.xlu0 %634
      %636 = vrot.lane.b32.xlu0 %v331, 111
      %v637 = vpop.permute.xlu0 %636
      %v638 = vrot.slane %v635, 4
      %v639 = vrot.slane %v637, 4
      %v640 = vsel %vm300, %v638, %v639
      %vm641 = vcmask 908288
      %v642 = vsel %vm641, %v635, %v640
      %vm644 = vsmask.f32 7938
      %vm645 = vmand %vm205, %vm644
      %vm646 = vsmask.f32 7954
      %vm647 = vmand %vm208, %vm646
      %vm648 = vmor %vm647, %vm645
      %v649 = vld [vmem:[#allocation2 + $0x40] sm:$0x33]
      %v650 = vsel %vm648, %v642, %v649
      %651 = vst [vmem:[#allocation2 + $0x40] sm:$0x33] %v650
      %652 = vrot.lane.b32.xlu0 %v201, 111
      %v653 = vpop.permute.xlu0 %652
      %654 = vrot.lane.b32.xlu0 %v202, 111
      %v655 = vpop.permute.xlu0 %654
      %v656 = vrot.slane %v653, 4
      %v657 = vrot.slane %v655, 4
      %v658 = vsel %vm300, %v656, %v657
      %v659 = vsel %vm641, %v653, %v658
      %v661 = vld [vmem:[#allocation2 + $0x48] sm:$0x33]
      %v662 = vsel %vm648, %v659, %v661
      %663 = vst [vmem:[#allocation2 + $0x48] sm:$0x33] %v662
      %664 = vrot.lane.b32.xlu0 %v223, 111
      %v665 = vpop.permute.xlu0 %664
      %666 = vrot.lane.b32.xlu0 %v359, 111
      %v667 = vpop.permute.xlu0 %666
      %v668 = vrot.slane %v665, 4
      %v669 = vrot.slane %v667, 4
      %v670 = vsel %vm300, %v668, %v669
      %v671 = vsel %vm641, %v665, %v670
      %v673 = vld [vmem:[#allocation2 + $0x50] sm:$0x33]
      %v674 = vsel %vm648, %v671, %v673
      %675 = vst [vmem:[#allocation2 + $0x50] sm:$0x33] %v674
      %676 = vrot.lane.b32.xlu0 %v230, 111
      %v677 = vpop.permute.xlu0 %676
      %678 = vrot.lane.b32.xlu0 %v373, 111
      %v679 = vpop.permute.xlu0 %678
      %v680 = vrot.slane %v677, 4
      %v681 = vrot.slane %v679, 4
      %v682 = vsel %vm300, %v680, %v681
      %v683 = vsel %vm641, %v677, %v682
      %v685 = vld [vmem:[#allocation2 + $0x58] sm:$0x33]
      %v686 = vsel %vm648, %v683, %v685
      %687 = vst [vmem:[#allocation2 + $0x58] sm:$0x33] %v686
      %688 = vrot.lane.b32.xlu0 %v238, 111
      %v689 = vpop.permute.xlu0 %688
      %690 = vrot.lane.b32.xlu0 %v394, 111
      %v691 = vpop.permute.xlu0 %690
      %v692 = vrot.slane %v689, 4
      %v693 = vrot.slane %v691, 4
      %v694 = vsel %vm300, %v692, %v693
      %v695 = vsel %vm641, %v689, %v694
      %v697 = vld [vmem:[#allocation2 + $0x60] sm:$0x33]
      %v698 = vsel %vm648, %v695, %v697
      %699 = vst [vmem:[#allocation2 + $0x60] sm:$0x33] %v698
      %700 = vrot.lane.b32.xlu0 %v244, 111
      %v701 = vpop.permute.xlu0 %700
      %702 = vrot.lane.b32.xlu0 %v417, 111
      %v703 = vpop.permute.xlu0 %702
      %v704 = vrot.slane %v701, 4
      %v705 = vrot.slane %v703, 4
      %v706 = vsel %vm300, %v704, %v705
      %v707 = vsel %vm641, %v701, %v706
      %v709 = vld [vmem:[#allocation2 + $0x68] sm:$0x33]
      %v710 = vsel %vm648, %v707, %v709
      %711 = vst [vmem:[#allocation2 + $0x68] sm:$0x33] %v710
      %vm712 = vsmask.f32 5392
      %vm713 = vmor %vm206, %vm712
      %v714 = vrot.slane %v278, 7
      %v715 = vsel %vm713, %v252, %v714
      %v716 = vrot.slane %v293, 4
      %v717 = vrot.slane %v396, 7
      %v718 = vsel %vm713, %v716, %v717
      %719 = vrot.lane.b32.xlu0 %v715, 111
      %v720 = vpop.permute.xlu0 %719
      %721 = vrot.lane.b32.xlu0 %v718, 111
      %v722 = vpop.permute.xlu0 %721
      %v723 = vrot.slane %v720, 4
      %v724 = vrot.slane %v722, 4
      %v725 = vsel %vm300, %v723, %v724
      %v726 = vsel %vm641, %v720, %v725
      %v728 = vld [vmem:[#allocation2 + $0x70] sm:$0x33]
      %v729 = vsel %vm648, %v726, %v728
      %730 = vst [vmem:[#allocation2 + $0x70] sm:$0x33] %v729
      %v731 = vrot.slane %v204, 7
      %v732 = vsel %vm260, %v529, %v731
      %733 = vrot.lane.b32.xlu0 %v264, 111
      %v734 = vpop.permute.xlu0 %733
      %735 = vrot.lane.b32.xlu0 %v732, 111
      %v736 = vpop.permute.xlu0 %735
      %v737 = vrot.slane %v734, 4
      %v738 = vrot.slane %v736, 4
      %v739 = vsel %vm300, %v737, %v738
      %v740 = vsel %vm641, %v734, %v739
      %v742 = vld [vmem:[#allocation2 + $0x78] sm:$0x33]
      %v743 = vsel %vm648, %v740, %v742
      %744 = vst [vmem:[#allocation2 + $0x78] sm:$0x33] %v743
      %745 = vrot.lane.b32.xlu0 %v243, 110
      %v746 = vpop.permute.xlu0 %745
      %747 = vrot.lane.b32.xlu0 %v416, 110
      %v748 = vpop.permute.xlu0 %747
      %v749 = vrot.slane %v746, 4
      %v750 = vrot.slane %v748, 4
      %v751 = vsel %vm300, %v749, %v750
      %vm752 = vcmask 900096
      %v753 = vsel %vm752, %v746, %v751
      %vm755 = vcmask 1043458
      %vm756 = vmand %vm755, %vm597
      %vm757 = vcmask 1047558
      %vm758 = vsmask.f32 7424
      %vm759 = vmand %vm757, %vm758
      %vm760 = vmor %vm759, %vm756
      %v761 = vld [vmem:[#allocation2 + $0x40] sm:$0xcc]
      %v762 = vsel %vm760, %v753, %v761
      %763 = vst [vmem:[#allocation2 + $0x40] sm:$0xcc] %v762
      %764 = vrot.lane.b32.xlu0 %v251, 110
      %v765 = vpop.permute.xlu0 %764
      %766 = vrot.lane.b32.xlu0 %v293, 110
      %v767 = vpop.permute.xlu0 %766
      %v768 = vrot.slane %v765, 4
      %v769 = vrot.slane %v767, 4
      %v770 = vsel %vm300, %v768, %v769
      %v771 = vsel %vm752, %v765, %v770
      %v773 = vld [vmem:[#allocation2 + $0x48] sm:$0xcc]
      %v774 = vsel %vm760, %v771, %v773
      %775 = vst [vmem:[#allocation2 + $0x48] sm:$0xcc] %v774
      %776 = vrot.lane.b32.xlu0 %v261, 110
      %v777 = vpop.permute.xlu0 %776
      %778 = vrot.lane.b32.xlu0 %v316, 110
      %v779 = vpop.permute.xlu0 %778
      %v780 = vrot.slane %v777, 4
      %v781 = vrot.slane %v779, 4
      %v782 = vsel %vm300, %v780, %v781
      %v783 = vsel %vm752, %v777, %v782
      %v785 = vld [vmem:[#allocation2 + $0x50] sm:$0xcc]
      %v786 = vsel %vm760, %v783, %v785
      %787 = vst [vmem:[#allocation2 + $0x50] sm:$0xcc] %v786
      %788 = vrot.lane.b32.xlu0 %v329, 110
      %v789 = vpop.permute.xlu0 %788
      %790 = vrot.lane.b32.xlu0 %v331, 110
      %v791 = vpop.permute.xlu0 %790
      %v792 = vrot.slane %v789, 4
      %v793 = vrot.slane %v791, 4
      %v794 = vsel %vm300, %v792, %v793
      %v795 = vsel %vm752, %v789, %v794
      %v797 = vld [vmem:[#allocation2 + $0x58] sm:$0xcc]
      %v798 = vsel %vm760, %v795, %v797
      %799 = vst [vmem:[#allocation2 + $0x58] sm:$0xcc] %v798
      %800 = vrot.lane.b32.xlu0 %v201, 110
      %v801 = vpop.permute.xlu0 %800
      %802 = vrot.lane.b32.xlu0 %v202, 110
      %v803 = vpop.permute.xlu0 %802
      %v804 = vrot.slane %v801, 4
      %v805 = vrot.slane %v803, 4
      %v806 = vsel %vm300, %v804, %v805
      %v807 = vsel %vm752, %v801, %v806
      %v809 = vld [vmem:[#allocation2 + $0x60] sm:$0xcc]
      %v810 = vsel %vm760, %v807, %v809
      %811 = vst [vmem:[#allocation2 + $0x60] sm:$0xcc] %v810
      %812 = vrot.lane.b32.xlu0 %v223, 110
      %v813 = vpop.permute.xlu0 %812
      %814 = vrot.lane.b32.xlu0 %v359, 110
      %v815 = vpop.permute.xlu0 %814
      %v816 = vrot.slane %v813, 4
      %v817 = vrot.slane %v815, 4
      %v818 = vsel %vm300, %v816, %v817
      %v819 = vsel %vm752, %v813, %v818
      %v821 = vld [vmem:[#allocation2 + $0x68] sm:$0xcc]
      %v822 = vsel %vm760, %v819, %v821
      %823 = vst [vmem:[#allocation2 + $0x68] sm:$0xcc] %v822
      %vm824 = vcmask 1042432
      %vm825 = vcmask 1046532
      %vm826 = vmor %vm824, %vm825
      %v827 = vrot.slane %v203, 5
      %v828 = vsel %vm826, %v230, %v827
      %v829 = vrot.slane %v204, 5
      %v830 = vsel %vm826, %v373, %v829
      %831 = vrot.lane.b32.xlu0 %v828, 110
      %v832 = vpop.permute.xlu0 %831
      %833 = vrot.lane.b32.xlu0 %v830, 110
      %v834 = vpop.permute.xlu0 %833
      %v835 = vrot.slane %v832, 4
      %v836 = vrot.slane %v834, 4
      %v837 = vsel %vm300, %v835, %v836
      %v838 = vsel %vm752, %v832, %v837
      %v840 = vld [vmem:[#allocation2 + $0x70] sm:$0xcc]
      %v841 = vsel %vm760, %v838, %v840
      %842 = vst [vmem:[#allocation2 + $0x70] sm:$0xcc] %v841
      %v843 = vrot.slane %v275, 5
      %v844 = vor.u32 %v843, %v389
      %v845 = vsel %vm388, %v459, %v844
      %v846 = vrot.slane %v608, 5
      %v847 = vor.u32 %v846, %v398
      %v848 = vsel %vm388, %v460, %v847
      %849 = vrot.lane.b32.xlu0 %v845, 110
      %v850 = vpop.permute.xlu0 %849
      %851 = vrot.lane.b32.xlu0 %v848, 110
      %v852 = vpop.permute.xlu0 %851
      %v853 = vrot.slane %v850, 4
      %v854 = vrot.slane %v852, 4
      %v855 = vsel %vm300, %v853, %v854
      %v856 = vsel %vm752, %v850, %v855
      %v858 = vld [vmem:[#allocation2 + $0x78] sm:$0xcc]
      %v859 = vsel %vm760, %v856, %v858
      %860 = vst [vmem:[#allocation2 + $0x78] sm:$0xcc] %v859
      %861 = vrot.lane.b32.xlu0 %v221, 109
      %v862 = vpop.permute.xlu0 %861
      %863 = vrot.lane.b32.xlu0 %v357, 109
      %v864 = vpop.permute.xlu0 %863
      %865 = vrot.lane.b32.xlu0 %v223, 109
      %v866 = vpop.permute.xlu0 %865
      %867 = vrot.lane.b32.xlu0 %v359, 109
      %v868 = vpop.permute.xlu0 %867
      %v869 = vrot.slane %v862, 4
      %v870 = vrot.slane %v864, 4
      %v871 = vrot.slane %v866, 4
      %v872 = vrot.slane %v868, 4
      %v873 = vsel %vm300, %v869, %v870
      %vm874 = vcmask 891904
      %v875 = vsel %vm874, %v862, %v873
      %v876 = vsel %vm300, %v871, %v872
      %v877 = vsel %vm874, %v866, %v876
      %vm880 = vcmask 1043459
      %vm881 = vsmask.f32 7950
      %vm882 = vmand %vm880, %vm881
      %vm883 = vcmask 1047559
      %vm884 = vsmask.f32 7966
      %vm885 = vmand %vm883, %vm884
      %vm886 = vmor %vm885, %vm882
      %v887 = vld [vmem:[#allocation2 + $0x40] sm:$0x88]
      %v888 = vsel %vm886, %v875, %v887
      %889 = vst [vmem:[#allocation2 + $0x40] sm:$0x88] %v888
      %890 = vst [vmem:[#allocation2 + $0x80] sm:$0x11] %v877
      %891 = vrot.lane.b32.xlu0 %v229, 109
      %v892 = vpop.permute.xlu0 %891
      %893 = vrot.lane.b32.xlu0 %v372, 109
      %v894 = vpop.permute.xlu0 %893
      %895 = vrot.lane.b32.xlu0 %v230, 109
      %v896 = vpop.permute.xlu0 %895
      %897 = vrot.lane.b32.xlu0 %v373, 109
      %v898 = vpop.permute.xlu0 %897
      %v899 = vrot.slane %v892, 4
      %v900 = vrot.slane %v894, 4
      %v901 = vrot.slane %v896, 4
      %v902 = vrot.slane %v898, 4
      %v903 = vsel %vm300, %v899, %v900
      %v904 = vsel %vm874, %v892, %v903
      %v905 = vsel %vm300, %v901, %v902
      %v906 = vsel %vm874, %v896, %v905
      %v909 = vld [vmem:[#allocation2 + $0x48] sm:$0x88]
      %v910 = vsel %vm886, %v904, %v909
      %911 = vst [vmem:[#allocation2 + $0x48] sm:$0x88] %v910
      %912 = vst [vmem:[#allocation2 + $0x88] sm:$0x11] %v906
      %913 = vrot.lane.b32.xlu0 %v236, 109
      %v914 = vpop.permute.xlu0 %913
      %915 = vrot.lane.b32.xlu0 %v392, 109
      %v916 = vpop.permute.xlu0 %915
      %917 = vrot.lane.b32.xlu0 %v238, 109
      %v918 = vpop.permute.xlu0 %917
      %919 = vrot.lane.b32.xlu0 %v394, 109
      %v920 = vpop.permute.xlu0 %919
      %v921 = vrot.slane %v914, 4
      %v922 = vrot.slane %v916, 4
      %v923 = vrot.slane %v918, 4
      %v924 = vrot.slane %v920, 4
      %v925 = vsel %vm300, %v921, %v922
      %v926 = vsel %vm874, %v914, %v925
      %v927 = vsel %vm300, %v923, %v924
      %v928 = vsel %vm874, %v918, %v927
      %v931 = vld [vmem:[#allocation2 + $0x50] sm:$0x88]
      %v932 = vsel %vm886, %v926, %v931
      %933 = vst [vmem:[#allocation2 + $0x50] sm:$0x88] %v932
      %934 = vst [vmem:[#allocation2 + $0x90] sm:$0x11] %v928
      %935 = vrot.lane.b32.xlu0 %v243, 109
      %v936 = vpop.permute.xlu0 %935
      %937 = vrot.lane.b32.xlu0 %v416, 109
      %v938 = vpop.permute.xlu0 %937
      %939 = vrot.lane.b32.xlu0 %v244, 109
      %v940 = vpop.permute.xlu0 %939
      %941 = vrot.lane.b32.xlu0 %v417, 109
      %v942 = vpop.permute.xlu0 %941
      %v943 = vrot.slane %v936, 4
      %v944 = vrot.slane %v938, 4
      %v945 = vrot.slane %v940, 4
      %v946 = vrot.slane %v942, 4
      %v947 = vsel %vm300, %v943, %v944
      %v948 = vsel %vm874, %v936, %v947
      %v949 = vsel %vm300, %v945, %v946
      %v950 = vsel %vm874, %v940, %v949
      %v953 = vld [vmem:[#allocation2 + $0x58] sm:$0x88]
      %v954 = vsel %vm886, %v948, %v953
      %955 = vst [vmem:[#allocation2 + $0x58] sm:$0x88] %v954
      %956 = vst [vmem:[#allocation2 + $0x98] sm:$0x11] %v950
      %957 = vrot.lane.b32.xlu0 %v250, 109
      %v958 = vpop.permute.xlu0 %957
      %959 = vrot.lane.b32.xlu0 %v292, 109
      %v960 = vpop.permute.xlu0 %959
      %961 = vrot.lane.b32.xlu0 %v252, 109
      %v962 = vpop.permute.xlu0 %961
      %963 = vrot.lane.b32.xlu0 %v716, 109
      %v964 = vpop.permute.xlu0 %963
      %v965 = vrot.slane %v958, 4
      %v966 = vrot.slane %v960, 4
      %v967 = vrot.slane %v962, 4
      %v968 = vrot.slane %v964, 4
      %v969 = vsel %vm300, %v965, %v966
      %v970 = vsel %vm874, %v958, %v969
      %v971 = vsel %vm300, %v967, %v968
      %v972 = vsel %vm874, %v962, %v971
      %v975 = vld [vmem:[#allocation2 + $0x60] sm:$0x88]
      %v976 = vsel %vm886, %v970, %v975
      %977 = vst [vmem:[#allocation2 + $0x60] sm:$0x88] %v976
      %978 = vst [vmem:[#allocation2 + $0xa0] sm:$0x11] %v972
      %979 = vrot.lane.b32.xlu0 %v261, 109
      %v980 = vpop.permute.xlu0 %979
      %981 = vrot.lane.b32.xlu0 %v316, 109
      %v982 = vpop.permute.xlu0 %981
      %983 = vrot.lane.b32.xlu0 %v262, 109
      %v984 = vpop.permute.xlu0 %983
      %985 = vrot.lane.b32.xlu0 %v529, 109
      %v986 = vpop.permute.xlu0 %985
      %v987 = vrot.slane %v980, 4
      %v988 = vrot.slane %v982, 4
      %v989 = vrot.slane %v984, 4
      %v990 = vrot.slane %v986, 4
      %v991 = vsel %vm300, %v987, %v988
      %v992 = vsel %vm874, %v980, %v991
      %v993 = vsel %vm300, %v989, %v990
      %v994 = vsel %vm874, %v984, %v993
      %v997 = vld [vmem:[#allocation2 + $0x68] sm:$0x88]
      %v998 = vsel %vm886, %v992, %v997
      %999 = vst [vmem:[#allocation2 + $0x68] sm:$0x88] %v998
      %1000 = vst [vmem:[#allocation2 + $0xa8] sm:$0x11] %v994
      %v1001 = vsel %vm271, %v273, %v278
      %v1002 = vsel %vm271, %v552, %v396
      %1003 = vrot.lane.b32.xlu0 %v219, 109
      %v1004 = vpop.permute.xlu0 %1003
      %1005 = vrot.lane.b32.xlu0 %v290, 109
      %v1006 = vpop.permute.xlu0 %1005
      %1007 = vrot.lane.b32.xlu0 %v1001, 109
      %v1008 = vpop.permute.xlu0 %1007
      %1009 = vrot.lane.b32.xlu0 %v1002, 109
      %v1010 = vpop.permute.xlu0 %1009
      %v1011 = vrot.slane %v1004, 4
      %v1012 = vrot.slane %v1006, 4
      %v1013 = vrot.slane %v1008, 4
      %v1014 = vrot.slane %v1010, 4
      %v1015 = vsel %vm300, %v1011, %v1012
      %v1016 = vsel %vm874, %v1004, %v1015
      %v1017 = vsel %vm300, %v1013, %v1014
      %v1018 = vsel %vm874, %v1008, %v1017
      %v1021 = vld [vmem:[#allocation2 + $0x70] sm:$0x88]
      %v1022 = vsel %vm886, %v1016, %v1021
      %1023 = vst [vmem:[#allocation2 + $0x70] sm:$0x88] %v1022
      %1024 = vst [vmem:[#allocation2 + $0xb0] sm:$0x11] %v1018
      %1025 = vrot.lane.b32.xlu0 %v201, 109
      %v1026 = vpop.permute.xlu0 %1025
      %1027 = vrot.lane.b32.xlu0 %v202, 109
      %v1028 = vpop.permute.xlu0 %1027
      %1029 = vrot.lane.b32.xlu0 %v203, 109
      %v1030 = vpop.permute.xlu0 %1029
      %1031 = vrot.lane.b32.xlu0 %v204, 109
      %v1032 = vpop.permute.xlu0 %1031
      %v1033 = vrot.slane %v1026, 4
      %v1034 = vrot.slane %v1028, 4
      %v1035 = vrot.slane %v1030, 4
      %v1036 = vrot.slane %v1032, 4
      %v1037 = vsel %vm300, %v1033, %v1034
      %v1038 = vsel %vm874, %v1026, %v1037
      %v1039 = vsel %vm300, %v1035, %v1036
      %v1040 = vsel %vm874, %v1030, %v1039
      %v1043 = vld [vmem:[#allocation2 + $0x78] sm:$0x88]
      %v1044 = vsel %vm886, %v1038, %v1043
      %1045 = vst [vmem:[#allocation2 + $0x78] sm:$0x88] %v1044
      %1046 = vst [vmem:[#allocation2 + $0xb8] sm:$0x11] %v1040
      %1047 = vrot.lane.b32.xlu0 %v261, 94
      %v1048 = vpop.permute.xlu0 %1047
      %1049 = vrot.lane.b32.xlu0 %v316, 94
      %v1050 = vpop.permute.xlu0 %1049
      %v1051 = vrot.slane %v1048, 4
      %v1052 = vrot.slane %v1050, 4
      %v1053 = vsel %vm300, %v1051, %v1052
      %vm1054 = vcmask 769024
      %v1055 = vsel %vm1054, %v1048, %v1053
      %vm1057 = vmand %vm305, %vm386
      %vm1058 = vsmask.f32 6400
      %vm1059 = vmand %vm308, %vm1058
      %vm1060 = vmor %vm1059, %vm1057
      %v1061 = vld [vmem:[#allocation2 + $0x80] sm:$0x66]
      %v1062 = vsel %vm1060, %v1055, %v1061
      %1063 = vst [vmem:[#allocation2 + $0x80] sm:$0x66] %v1062
      %1064 = vrot.lane.b32.xlu0 %v329, 94
      %v1065 = vpop.permute.xlu0 %1064
      %1066 = vrot.lane.b32.xlu0 %v331, 94
      %v1067 = vpop.permute.xlu0 %1066
      %v1068 = vrot.slane %v1065, 4
      %v1069 = vrot.slane %v1067, 4
      %v1070 = vsel %vm300, %v1068, %v1069
      %v1071 = vsel %vm1054, %v1065, %v1070
      %v1073 = vld [vmem:[#allocation2 + $0x88] sm:$0x66]
      %v1074 = vsel %vm1060, %v1071, %v1073
      %1075 = vst [vmem:[#allocation2 + $0x88] sm:$0x66] %v1074
      %1076 = vrot.lane.b32.xlu0 %v201, 94
      %v1077 = vpop.permute.xlu0 %1076
      %1078 = vrot.lane.b32.xlu0 %v202, 94
      %v1079 = vpop.permute.xlu0 %1078
      %v1080 = vrot.slane %v1077, 4
      %v1081 = vrot.slane %v1079, 4
      %v1082 = vsel %vm300, %v1080, %v1081
      %v1083 = vsel %vm1054, %v1077, %v1082
      %v1085 = vld [vmem:[#allocation2 + $0x90] sm:$0x66]
      %v1086 = vsel %vm1060, %v1083, %v1085
      %1087 = vst [vmem:[#allocation2 + $0x90] sm:$0x66] %v1086
      %1088 = vrot.lane.b32.xlu0 %v223, 94
      %v1089 = vpop.permute.xlu0 %1088
      %1090 = vrot.lane.b32.xlu0 %v359, 94
      %v1091 = vpop.permute.xlu0 %1090
      %v1092 = vrot.slane %v1089, 4
      %v1093 = vrot.slane %v1091, 4
      %v1094 = vsel %vm300, %v1092, %v1093
      %v1095 = vsel %vm1054, %v1089, %v1094
      %v1097 = vld [vmem:[#allocation2 + $0x98] sm:$0x66]
      %v1098 = vsel %vm1060, %v1095, %v1097
      %1099 = vst [vmem:[#allocation2 + $0x98] sm:$0x66] %v1098
      %1100 = vrot.lane.b32.xlu0 %v230, 94
      %v1101 = vpop.permute.xlu0 %1100
      %1102 = vrot.lane.b32.xlu0 %v373, 94
      %v1103 = vpop.permute.xlu0 %1102
      %v1104 = vrot.slane %v1101, 4
      %v1105 = vrot.slane %v1103, 4
      %v1106 = vsel %vm300, %v1104, %v1105
      %v1107 = vsel %vm1054, %v1101, %v1106
      %v1109 = vld [vmem:[#allocation2 + $0xa0] sm:$0x66]
      %v1110 = vsel %vm1060, %v1107, %v1109
      %1111 = vst [vmem:[#allocation2 + $0xa0] sm:$0x66] %v1110
      %1112 = vrot.lane.b32.xlu0 %v238, 94
      %v1113 = vpop.permute.xlu0 %1112
      %1114 = vrot.lane.b32.xlu0 %v394, 94
      %v1115 = vpop.permute.xlu0 %1114
      %v1116 = vrot.slane %v1113, 4
      %v1117 = vrot.slane %v1115, 4
      %v1118 = vsel %vm300, %v1116, %v1117
      %v1119 = vsel %vm1054, %v1113, %v1118
      %v1121 = vld [vmem:[#allocation2 + $0xa8] sm:$0x66]
      %v1122 = vsel %vm1060, %v1119, %v1121
      %1123 = vst [vmem:[#allocation2 + $0xa8] sm:$0x66] %v1122
      %1124 = vrot.lane.b32.xlu0 %v415, 94
      %v1125 = vpop.permute.xlu0 %1124
      %1126 = vrot.lane.b32.xlu0 %v419, 94
      %v1127 = vpop.permute.xlu0 %1126
      %v1128 = vrot.slane %v1125, 4
      %v1129 = vrot.slane %v1127, 4
      %v1130 = vsel %vm300, %v1128, %v1129
      %v1131 = vsel %vm1054, %v1125, %v1130
      %v1133 = vld [vmem:[#allocation2 + $0xb0] sm:$0x66]
      %v1134 = vsel %vm1060, %v1131, %v1133
      %1135 = vst [vmem:[#allocation2 + $0xb0] sm:$0x66] %v1134
      %v1136 = vrot.slane %v275, 6
      %v1137 = vor.u32 %v1136, %v714
      %v1138 = vsel %vm713, %v505, %v1137
      %v1139 = vrot.slane %v608, 6
      %v1140 = vor.u32 %v1139, %v717
      %v1141 = vsel %vm713, %v506, %v1140
      %1142 = vrot.lane.b32.xlu0 %v1138, 94
      %v1143 = vpop.permute.xlu0 %1142
      %1144 = vrot.lane.b32.xlu0 %v1141, 94
      %v1145 = vpop.permute.xlu0 %1144
      %v1146 = vrot.slane %v1143, 4
      %v1147 = vrot.slane %v1145, 4
      %v1148 = vsel %vm300, %v1146, %v1147
      %v1149 = vsel %vm1054, %v1143, %v1148
      %v1151 = vld [vmem:[#allocation2 + $0xb8] sm:$0x66]
      %v1152 = vsel %vm1060, %v1149, %v1151
      %1153 = vst [vmem:[#allocation2 + $0xb8] sm:$0x66] %v1152
      %1154 = vrot.lane.b32.xlu0 %v237, 93
      %v1155 = vpop.permute.xlu0 %1154
      %1156 = vrot.lane.b32.xlu0 %v393, 93
      %v1157 = vpop.permute.xlu0 %1156
      %v1158 = vrot.slane %v1155, 4
      %v1159 = vrot.slane %v1157, 4
      %v1160 = vsel %vm300, %v1158, %v1159
      %vm1161 = vcmask 760832
      %v1162 = vsel %vm1161, %v1155, %v1160
      %vm1164 = vsmask.f32 7946
      %vm1165 = vmand %vm755, %vm1164
      %vm1166 = vsmask.f32 7962
      %vm1167 = vmand %vm757, %vm1166
      %vm1168 = vmor %vm1167, %vm1165
      %v1169 = vld [vmem:[#allocation2 + $0x80] sm:$0xcc]
      %v1170 = vsel %vm1168, %v1162, %v1169
      %1171 = vst [vmem:[#allocation2 + $0x80] sm:$0xcc] %v1170
      %1172 = vrot.lane.b32.xlu0 %v243, 93
      %v1173 = vpop.permute.xlu0 %1172
      %1174 = vrot.lane.b32.xlu0 %v416, 93
      %v1175 = vpop.permute.xlu0 %1174
      %v1176 = vrot.slane %v1173, 4
      %v1177 = vrot.slane %v1175, 4
      %v1178 = vsel %vm300, %v1176, %v1177
      %v1179 = vsel %vm1161, %v1173, %v1178
      %v1181 = vld [vmem:[#allocation2 + $0x88] sm:$0xcc]
      %v1182 = vsel %vm1168, %v1179, %v1181
      %1183 = vst [vmem:[#allocation2 + $0x88] sm:$0xcc] %v1182
      %1184 = vrot.lane.b32.xlu0 %v251, 93
      %v1185 = vpop.permute.xlu0 %1184
      %1186 = vrot.lane.b32.xlu0 %v293, 93
      %v1187 = vpop.permute.xlu0 %1186
      %v1188 = vrot.slane %v1185, 4
      %v1189 = vrot.slane %v1187, 4
      %v1190 = vsel %vm300, %v1188, %v1189
      %v1191 = vsel %vm1161, %v1185, %v1190
      %v1193 = vld [vmem:[#allocation2 + $0x90] sm:$0xcc]
      %v1194 = vsel %vm1168, %v1191, %v1193
      %1195 = vst [vmem:[#allocation2 + $0x90] sm:$0xcc] %v1194
      %1196 = vrot.lane.b32.xlu0 %v261, 93
      %v1197 = vpop.permute.xlu0 %1196
      %1198 = vrot.lane.b32.xlu0 %v316, 93
      %v1199 = vpop.permute.xlu0 %1198
      %v1200 = vrot.slane %v1197, 4
      %v1201 = vrot.slane %v1199, 4
      %v1202 = vsel %vm300, %v1200, %v1201
      %v1203 = vsel %vm1161, %v1197, %v1202
      %v1205 = vld [vmem:[#allocation2 + $0x98] sm:$0xcc]
      %v1206 = vsel %vm1168, %v1203, %v1205
      %1207 = vst [vmem:[#allocation2 + $0x98] sm:$0xcc] %v1206
      %1208 = vrot.lane.b32.xlu0 %v329, 93
      %v1209 = vpop.permute.xlu0 %1208
      %1210 = vrot.lane.b32.xlu0 %v331, 93
      %v1211 = vpop.permute.xlu0 %1210
      %v1212 = vrot.slane %v1209, 4
      %v1213 = vrot.slane %v1211, 4
      %v1214 = vsel %vm300, %v1212, %v1213
      %v1215 = vsel %vm1161, %v1209, %v1214
      %v1217 = vld [vmem:[#allocation2 + $0xa0] sm:$0xcc]
      %v1218 = vsel %vm1168, %v1215, %v1217
      %1219 = vst [vmem:[#allocation2 + $0xa0] sm:$0xcc] %v1218
      %1220 = vrot.lane.b32.xlu0 %v201, 93
      %v1221 = vpop.permute.xlu0 %1220
      %1222 = vrot.lane.b32.xlu0 %v202, 93
      %v1223 = vpop.permute.xlu0 %1222
      %v1224 = vrot.slane %v1221, 4
      %v1225 = vrot.slane %v1223, 4
      %v1226 = vsel %vm300, %v1224, %v1225
      %v1227 = vsel %vm1161, %v1221, %v1226
      %v1229 = vld [vmem:[#allocation2 + $0xa8] sm:$0xcc]
      %v1230 = vsel %vm1168, %v1227, %v1229
      %1231 = vst [vmem:[#allocation2 + $0xa8] sm:$0xcc] %v1230
      %v1232 = vsel %vm599, %v223, %v601
      %v1233 = vsel %vm599, %v359, %v604
      %1234 = vrot.lane.b32.xlu0 %v1232, 93
      %v1235 = vpop.permute.xlu0 %1234
      %1236 = vrot.lane.b32.xlu0 %v1233, 93
      %v1237 = vpop.permute.xlu0 %1236
      %v1238 = vrot.slane %v1235, 4
      %v1239 = vrot.slane %v1237, 4
      %v1240 = vsel %vm300, %v1238, %v1239
      %v1241 = vsel %vm1161, %v1235, %v1240
      %v1243 = vld [vmem:[#allocation2 + $0xb0] sm:$0xcc]
      %v1244 = vsel %vm1168, %v1241, %v1243
      %1245 = vst [vmem:[#allocation2 + $0xb0] sm:$0xcc] %v1244
      %1246 = vrot.lane.b32.xlu0 %v828, 93
      %v1247 = vpop.permute.xlu0 %1246
      %1248 = vrot.lane.b32.xlu0 %v830, 93
      %v1249 = vpop.permute.xlu0 %1248
      %v1250 = vrot.slane %v1247, 4
      %v1251 = vrot.slane %v1249, 4
      %v1252 = vsel %vm300, %v1250, %v1251
      %v1253 = vsel %vm1161, %v1247, %v1252
      %v1255 = vld [vmem:[#allocation2 + $0xb8] sm:$0xcc]
      %v1256 = vsel %vm1168, %v1253, %v1255
      %1257 = vst [vmem:[#allocation2 + $0xb8] sm:$0xcc] %v1256
      %1258 = vrot.lane.b32.xlu0 %v201, 92
      %v1259 = vpop.permute.xlu0 %1258
      %1260 = vrot.lane.b32.xlu0 %v202, 92
      %v1261 = vpop.permute.xlu0 %1260
      %v1262 = vrot.slane %v1259, 4
      %v1263 = vrot.slane %v1261, 4
      %v1264 = vsel %vm300, %v1262, %v1263
      %vm1265 = vcmask 752640
      %v1266 = vsel %vm1265, %v1259, %v1264
      %v1268 = vld [vmem:[#allocation2 + $0xc0] sm:$0x33]
      %v1269 = vsel %vm211, %v1266, %v1268
      %1270 = vst [vmem:[#allocation2 + $0xc0] sm:$0x33] %v1269
      %1271 = vrot.lane.b32.xlu0 %v223, 92
      %v1272 = vpop.permute.xlu0 %1271
      %1273 = vrot.lane.b32.xlu0 %v359, 92
      %v1274 = vpop.permute.xlu0 %1273
      %v1275 = vrot.slane %v1272, 4
      %v1276 = vrot.slane %v1274, 4
      %v1277 = vsel %vm300, %v1275, %v1276
      %v1278 = vsel %vm1265, %v1272, %v1277
      %v1280 = vld [vmem:[#allocation2 + $0xc8] sm:$0x33]
      %v1281 = vsel %vm211, %v1278, %v1280
      %1282 = vst [vmem:[#allocation2 + $0xc8] sm:$0x33] %v1281
      %1283 = vrot.lane.b32.xlu0 %v230, 92
      %v1284 = vpop.permute.xlu0 %1283
      %1285 = vrot.lane.b32.xlu0 %v373, 92
      %v1286 = vpop.permute.xlu0 %1285
      %v1287 = vrot.slane %v1284, 4
      %v1288 = vrot.slane %v1286, 4
      %v1289 = vsel %vm300, %v1287, %v1288
      %v1290 = vsel %vm1265, %v1284, %v1289
      %v1292 = vld [vmem:[#allocation2 + $0xd0] sm:$0x33]
      %v1293 = vsel %vm211, %v1290, %v1292
      %1294 = vst [vmem:[#allocation2 + $0xd0] sm:$0x33] %v1293
      %1295 = vrot.lane.b32.xlu0 %v238, 92
      %v1296 = vpop.permute.xlu0 %1295
      %1297 = vrot.lane.b32.xlu0 %v394, 92
      %v1298 = vpop.permute.xlu0 %1297
      %v1299 = vrot.slane %v1296, 4
      %v1300 = vrot.slane %v1298, 4
      %v1301 = vsel %vm300, %v1299, %v1300
      %v1302 = vsel %vm1265, %v1296, %v1301
      %v1304 = vld [vmem:[#allocation2 + $0xd8] sm:$0x33]
      %v1305 = vsel %vm211, %v1302, %v1304
      %1306 = vst [vmem:[#allocation2 + $0xd8] sm:$0x33] %v1305
      %1307 = vrot.lane.b32.xlu0 %v244, 92
      %v1308 = vpop.permute.xlu0 %1307
      %1309 = vrot.lane.b32.xlu0 %v417, 92
      %v1310 = vpop.permute.xlu0 %1309
      %v1311 = vrot.slane %v1308, 4
      %v1312 = vrot.slane %v1310, 4
      %v1313 = vsel %vm300, %v1311, %v1312
      %v1314 = vsel %vm1265, %v1308, %v1313
      %v1316 = vld [vmem:[#allocation2 + $0xe0] sm:$0x33]
      %v1317 = vsel %vm211, %v1314, %v1316
      %1318 = vst [vmem:[#allocation2 + $0xe0] sm:$0x33] %v1317
      %1319 = vrot.lane.b32.xlu0 %v252, 92
      %v1320 = vpop.permute.xlu0 %1319
      %1321 = vrot.lane.b32.xlu0 %v716, 92
      %v1322 = vpop.permute.xlu0 %1321
      %v1323 = vrot.slane %v1320, 4
      %v1324 = vrot.slane %v1322, 4
      %v1325 = vsel %vm300, %v1323, %v1324
      %v1326 = vsel %vm1265, %v1320, %v1325
      %v1328 = vld [vmem:[#allocation2 + $0xe8] sm:$0x33]
      %v1329 = vsel %vm211, %v1326, %v1328
      %1330 = vst [vmem:[#allocation2 + $0xe8] sm:$0x33] %v1329
      %1331 = vrot.lane.b32.xlu0 %v264, 92
      %v1332 = vpop.permute.xlu0 %1331
      %1333 = vrot.lane.b32.xlu0 %v732, 92
      %v1334 = vpop.permute.xlu0 %1333
      %v1335 = vrot.slane %v1332, 4
      %v1336 = vrot.slane %v1334, 4
      %v1337 = vsel %vm300, %v1335, %v1336
      %v1338 = vsel %vm1265, %v1332, %v1337
      %v1340 = vld [vmem:[#allocation2 + $0xf0] sm:$0x33]
      %v1341 = vsel %vm211, %v1338, %v1340
      %1342 = vst [vmem:[#allocation2 + $0xf0] sm:$0x33] %v1341
      %v1343 = vrot.slane %v608, 7
      %v1344 = vor.u32 %v1343, %v396
      %v1345 = vsel %vm271, %v552, %v1344
      %1346 = vrot.lane.b32.xlu0 %v281, 92
      %v1347 = vpop.permute.xlu0 %1346
      %1348 = vrot.lane.b32.xlu0 %v1345, 92
      %v1349 = vpop.permute.xlu0 %1348
      %v1350 = vrot.slane %v1347, 4
      %v1351 = vrot.slane %v1349, 4
      %v1352 = vsel %vm300, %v1350, %v1351
      %v1353 = vsel %vm1265, %v1347, %v1352
      %v1355 = vld [vmem:[#allocation2 + $0xf8] sm:$0x33]
      %v1356 = vsel %vm211, %v1353, %v1355
      %1357 = vst [vmem:[#allocation2 + $0xf8] sm:$0x33] %v1356
      %s1358 = sadd.s32 %s198, 9
      %s1359 = smul.addr %s1358, 4
      %s1360 = scalar_lea.vmem %s183, %s1359
      %v1361 = vld [vmem:[%s1360] sm:$0xff]
      %v1362 = vld [vmem:[%s1360 + $0x8] sm:$0xf]
      %v1363 = vld [vmem:[%s1360 + $0xc] sm:$0x11]
      %v1364 = vld [vmem:[%s1360 + $0x14] sm:$0x1]
      %v1366 = vshrl.u32 %v1361, 16
      %v1368 = vrot.slane %v1366, 6
      %v1369 = vshll.u32 %v1361, 16
      %v1371 = vrot.slane %v1369, 7
      %v1372 = vor.u32 %v1368, %v1371
      %v1374 = vld [vmem:[#allocation2 + $0xc0] sm:$0x66]
      %v1375 = vsel %vm311, %v1372, %v1374
      %1376 = vst [vmem:[#allocation2 + $0xc0] sm:$0x66] %v1375
      %v1378 = vrot.slane %v1361, 7
      %v1380 = vld [vmem:[#allocation2 + $0xc8] sm:$0x66]
      %v1381 = vsel %vm311, %v1378, %v1380
      %1382 = vst [vmem:[#allocation2 + $0xc8] sm:$0x66] %v1381
      %v1383 = vrot.slane %v1366, 7
      %v1384 = vor.u32 %v1383, %v1369
      %v1386 = vld [vmem:[#allocation2 + $0xd0] sm:$0x66]
      %v1387 = vsel %vm311, %v1384, %v1386
      %1388 = vst [vmem:[#allocation2 + $0xd0] sm:$0x66] %v1387
      %v1389 = vld [vmem:[#allocation2 + $0xd8] sm:$0x66]
      %v1390 = vsel %vm311, %v1361, %v1389
      %1391 = vst [vmem:[#allocation2 + $0xd8] sm:$0x66] %v1390
      %v1392 = vrot.slane %v1366, 4
      %v1393 = vrot.slane %v1369, 5
      %v1394 = vor.u32 %v1392, %v1393
      %v1395 = vrot.slane %v1394, 4
      %v1397 = vld [vmem:[#allocation2 + $0xe0] sm:$0x66]
      %v1398 = vsel %vm311, %v1395, %v1397
      %1399 = vst [vmem:[#allocation2 + $0xe0] sm:$0x66] %v1398
      %v1400 = vrot.slane %v1361, 5
      %v1401 = vrot.slane %v1400, 4
      %v1403 = vld [vmem:[#allocation2 + $0xe8] sm:$0x66]
      %v1404 = vsel %vm311, %v1401, %v1403
      %1405 = vst [vmem:[#allocation2 + $0xe8] sm:$0x66] %v1404
      %v1406 = vrot.slane %v1366, 5
      %v1407 = vrot.slane %v1369, 6
      %v1408 = vor.u32 %v1406, %v1407
      %v1409 = vrot.slane %v1408, 4
      %v1411 = vshll.u32 %v1363, 16
      %v1413 = vrot.slane %v1411, 6
      %v1414 = vsel %vm388, %v1409, %v1413
      %v1416 = vld [vmem:[#allocation2 + $0xf0] sm:$0x66]
      %v1417 = vsel %vm311, %v1414, %v1416
      %1418 = vst [vmem:[#allocation2 + $0xf0] sm:$0x66] %v1417
      %v1420 = vrot.slane %v1361, 6
      %v1421 = vrot.slane %v1420, 4
      %v1422 = vrot.slane %v1363, 6
      %v1423 = vsel %vm413, %v1421, %v1422
      %v1425 = vld [vmem:[#allocation2 + $0xf8] sm:$0x66]
      %v1426 = vsel %vm311, %v1423, %v1425
      %1427 = vst [vmem:[#allocation2 + $0xf8] sm:$0x66] %v1426
      %v1429 = vrot.slane %v1362, 5
      %v1430 = vrot.slane %v1429, 4
      %1431 = vrot.lane.b32.xlu0 %v1400, 127
      %v1432 = vpop.permute.xlu0 %1431
      %1433 = vrot.lane.b32.xlu0 %v1429, 127
      %v1434 = vpop.permute.xlu0 %1433
      %1435 = vrot.lane.b32.xlu0 %v1401, 127
      %v1436 = vpop.permute.xlu0 %1435
      %1437 = vrot.lane.b32.xlu0 %v1430, 127
      %v1438 = vpop.permute.xlu0 %1437
      %v1439 = vrot.slane %v1432, 4
      %v1440 = vrot.slane %v1434, 4
      %v1441 = vrot.slane %v1436, 4
      %v1442 = vrot.slane %v1438, 4
      %v1443 = vsel %vm300, %v1439, %v1440
      %v1444 = vsel %vm302, %v1432, %v1443
      %v1445 = vsel %vm300, %v1441, %v1442
      %v1446 = vsel %vm302, %v1436, %v1445
      %1449 = vst [vmem:[#allocation2 + $0xc0] sm:$0x88] %v1444
      %v1450 = vld [vmem:[#allocation2 + $0x100] sm:$0x11]
      %v1451 = vsel %vm455, %v1446, %v1450
      %1452 = vst [vmem:[#allocation2 + $0x100] sm:$0x11] %v1451
      %v1454 = vshrl.u32 %v1362, 16
      %v1456 = vrot.slane %v1454, 5
      %v1457 = vshll.u32 %v1362, 16
      %v1459 = vrot.slane %v1457, 6
      %v1460 = vor.u32 %v1456, %v1459
      %v1461 = vrot.slane %v1406, 4
      %v1462 = vrot.slane %v1456, 4
      %1463 = vrot.lane.b32.xlu0 %v1408, 127
      %v1464 = vpop.permute.xlu0 %1463
      %1465 = vrot.lane.b32.xlu0 %v1460, 127
      %v1466 = vpop.permute.xlu0 %1465
      %1467 = vrot.lane.b32.xlu0 %v1461, 127
      %v1468 = vpop.permute.xlu0 %1467
      %1469 = vrot.lane.b32.xlu0 %v1462, 127
      %v1470 = vpop.permute.xlu0 %1469
      %v1471 = vrot.slane %v1464, 4
      %v1472 = vrot.slane %v1466, 4
      %v1473 = vrot.slane %v1468, 4
      %v1474 = vrot.slane %v1470, 4
      %v1475 = vsel %vm300, %v1471, %v1472
      %v1476 = vsel %vm302, %v1464, %v1475
      %v1477 = vsel %vm300, %v1473, %v1474
      %v1478 = vsel %vm302, %v1468, %v1477
      %1481 = vst [vmem:[#allocation2 + $0xc8] sm:$0x88] %v1476
      %v1482 = vld [vmem:[#allocation2 + $0x108] sm:$0x11]
      %v1483 = vsel %vm455, %v1478, %v1482
      %1484 = vst [vmem:[#allocation2 + $0x108] sm:$0x11] %v1483
      %v1485 = vrot.slane %v1362, 6
      %v1486 = vrot.slane %v1485, 4
      %1487 = vrot.lane.b32.xlu0 %v1420, 127
      %v1488 = vpop.permute.xlu0 %1487
      %1489 = vrot.lane.b32.xlu0 %v1485, 127
      %v1490 = vpop.permute.xlu0 %1489
      %1491 = vrot.lane.b32.xlu0 %v1421, 127
      %v1492 = vpop.permute.xlu0 %1491
      %1493 = vrot.lane.b32.xlu0 %v1486, 127
      %v1494 = vpop.permute.xlu0 %1493
      %v1495 = vrot.slane %v1488, 4
      %v1496 = vrot.slane %v1490, 4
      %v1497 = vrot.slane %v1492, 4
      %v1498 = vrot.slane %v1494, 4
      %v1499 = vsel %vm300, %v1495, %v1496
      %v1500 = vsel %vm302, %v1488, %v1499
      %v1501 = vsel %vm300, %v1497, %v1498
      %v1502 = vsel %vm302, %v1492, %v1501
      %1505 = vst [vmem:[#allocation2 + $0xd0] sm:$0x88] %v1500
      %v1506 = vld [vmem:[#allocation2 + $0x110] sm:$0x11]
      %v1507 = vsel %vm455, %v1502, %v1506
      %1508 = vst [vmem:[#allocation2 + $0x110] sm:$0x11] %v1507
      %v1509 = vrot.slane %v1454, 6
      %v1510 = vrot.slane %v1457, 7
      %v1511 = vor.u32 %v1509, %v1510
      %v1512 = vrot.slane %v1368, 4
      %v1513 = vrot.slane %v1509, 4
      %1514 = vrot.lane.b32.xlu0 %v1372, 127
      %v1515 = vpop.permute.xlu0 %1514
      %1516 = vrot.lane.b32.xlu0 %v1511, 127
      %v1517 = vpop.permute.xlu0 %1516
      %1518 = vrot.lane.b32.xlu0 %v1512, 127
      %v1519 = vpop.permute.xlu0 %1518
      %1520 = vrot.lane.b32.xlu0 %v1513, 127
      %v1521 = vpop.permute.xlu0 %1520
      %v1522 = vrot.slane %v1515, 4
      %v1523 = vrot.slane %v1517, 4
      %v1524 = vrot.slane %v1519, 4
      %v1525 = vrot.slane %v1521, 4
      %v1526 = vsel %vm300, %v1522, %v1523
      %v1527 = vsel %vm302, %v1515, %v1526
      %v1528 = vsel %vm300, %v1524, %v1525
      %v1529 = vsel %vm302, %v1519, %v1528
      %1532 = vst [vmem:[#allocation2 + $0xd8] sm:$0x88] %v1527
      %v1533 = vld [vmem:[#allocation2 + $0x118] sm:$0x11]
      %v1534 = vsel %vm455, %v1529, %v1533
      %1535 = vst [vmem:[#allocation2 + $0x118] sm:$0x11] %v1534
      %v1536 = vrot.slane %v1362, 7
      %v1537 = vrot.slane %v1378, 4
      %v1538 = vrot.slane %v1536, 4
      %1539 = vrot.lane.b32.xlu0 %v1378, 127
      %v1540 = vpop.permute.xlu0 %1539
      %1541 = vrot.lane.b32.xlu0 %v1536, 127
      %v1542 = vpop.permute.xlu0 %1541
      %1543 = vrot.lane.b32.xlu0 %v1537, 127
      %v1544 = vpop.permute.xlu0 %1543
      %1545 = vrot.lane.b32.xlu0 %v1538, 127
      %v1546 = vpop.permute.xlu0 %1545
      %v1547 = vrot.slane %v1540, 4
      %v1548 = vrot.slane %v1542, 4
      %v1549 = vrot.slane %v1544, 4
      %v1550 = vrot.slane %v1546, 4
      %v1551 = vsel %vm300, %v1547, %v1548
      %v1552 = vsel %vm302, %v1540, %v1551
      %v1553 = vsel %vm300, %v1549, %v1550
      %v1554 = vsel %vm302, %v1544, %v1553
      %1557 = vst [vmem:[#allocation2 + $0xe0] sm:$0x88] %v1552
      %v1558 = vld [vmem:[#allocation2 + $0x120] sm:$0x11]
      %v1559 = vsel %vm455, %v1554, %v1558
      %1560 = vst [vmem:[#allocation2 + $0x120] sm:$0x11] %v1559
      %v1561 = vrot.slane %v1454, 7
      %v1562 = vor.u32 %v1561, %v1457
      %v1563 = vrot.slane %v1383, 4
      %v1564 = vrot.slane %v1561, 4
      %1565 = vrot.lane.b32.xlu0 %v1384, 127
      %v1566 = vpop.permute.xlu0 %1565
      %1567 = vrot.lane.b32.xlu0 %v1562, 127
      %v1568 = vpop.permute.xlu0 %1567
      %1569 = vrot.lane.b32.xlu0 %v1563, 127
      %v1570 = vpop.permute.xlu0 %1569
      %1571 = vrot.lane.b32.xlu0 %v1564, 127
      %v1572 = vpop.permute.xlu0 %1571
      %v1573 = vrot.slane %v1566, 4
      %v1574 = vrot.slane %v1568, 4
      %v1575 = vrot.slane %v1570, 4
      %v1576 = vrot.slane %v1572, 4
      %v1577 = vsel %vm300, %v1573, %v1574
      %v1578 = vsel %vm302, %v1566, %v1577
      %v1579 = vsel %vm300, %v1575, %v1576
      %v1580 = vsel %vm302, %v1570, %v1579
      %1583 = vst [vmem:[#allocation2 + $0xe8] sm:$0x88] %v1578
      %v1584 = vld [vmem:[#allocation2 + $0x128] sm:$0x11]
      %v1585 = vsel %vm455, %v1580, %v1584
      %1586 = vst [vmem:[#allocation2 + $0x128] sm:$0x11] %v1585
      %1588 = vrot.lane.b32.xlu0 %v1361, 127
      %v1589 = vpop.permute.xlu0 %1588
      %1590 = vrot.lane.b32.xlu0 %v1362, 127
      %v1591 = vpop.permute.xlu0 %1590
      %1592 = vrot.lane.b32.xlu0 %v1363, 127
      %v1593 = vpop.permute.xlu0 %1592
      %1594 = vrot.lane.b32.xlu0 %v1364, 127
      %v1595 = vpop.permute.xlu0 %1594
      %v1596 = vrot.slane %v1589, 4
      %v1597 = vrot.slane %v1591, 4
      %v1598 = vrot.slane %v1593, 4
      %v1599 = vrot.slane %v1595, 4
      %v1600 = vsel %vm300, %v1596, %v1597
      %v1601 = vsel %vm302, %v1589, %v1600
      %v1602 = vsel %vm300, %v1598, %v1599
      %v1603 = vsel %vm302, %v1593, %v1602
      %1606 = vst [vmem:[#allocation2 + $0xf0] sm:$0x88] %v1601
      %v1607 = vld [vmem:[#allocation2 + $0x130] sm:$0x11]
      %v1608 = vsel %vm455, %v1603, %v1607
      %1609 = vst [vmem:[#allocation2 + $0x130] sm:$0x11] %v1608
      %v1610 = vrot.slane %v1392, 4
      %v1611 = vrot.slane %v1411, 5
      %v1612 = vsel %vm599, %v1610, %v1611
      %v1613 = vrot.slane %v1454, 4
      %v1614 = vrot.slane %v1613, 4
      %v1616 = vshll.u32 %v1364, 16
      %v1618 = vrot.slane %v1616, 5
      %v1619 = vsel %vm599, %v1614, %v1618
      %v1620 = vshrl.u32 %v1363, 16
      %v1622 = vrot.slane %v1620, 4
      %v1623 = vrot.slane %v1622, 4
      %v1624 = vshrl.u32 %v1364, 16
      %v1626 = vrot.slane %v1624, 4
      %v1627 = vrot.slane %v1626, 4
      %1628 = vrot.lane.b32.xlu0 %v1612, 127
      %v1629 = vpop.permute.xlu0 %1628
      %1630 = vrot.lane.b32.xlu0 %v1619, 127
      %v1631 = vpop.permute.xlu0 %1630
      %1632 = vrot.lane.b32.xlu0 %v1623, 127
      %v1633 = vpop.permute.xlu0 %1632
      %1634 = vrot.lane.b32.xlu0 %v1627, 127
      %v1635 = vpop.permute.xlu0 %1634
      %v1636 = vrot.slane %v1629, 4
      %v1637 = vrot.slane %v1631, 4
      %v1638 = vrot.slane %v1633, 4
      %v1639 = vrot.slane %v1635, 4
      %v1640 = vsel %vm300, %v1636, %v1637
      %v1641 = vsel %vm302, %v1629, %v1640
      %v1642 = vsel %vm300, %v1638, %v1639
      %v1643 = vsel %vm302, %v1633, %v1642
      %1646 = vst [vmem:[#allocation2 + $0xf8] sm:$0x88] %v1641
      %v1647 = vld [vmem:[#allocation2 + $0x138] sm:$0x11]
      %v1648 = vsel %vm455, %v1643, %v1647
      %1649 = vst [vmem:[#allocation2 + $0x138] sm:$0x11] %v1648
      %1650 = vrot.lane.b32.xlu0 %v1384, 126
      %v1651 = vpop.permute.xlu0 %1650
      %1652 = vrot.lane.b32.xlu0 %v1562, 126
      %v1653 = vpop.permute.xlu0 %1652
      %v1654 = vrot.slane %v1651, 4
      %v1655 = vrot.slane %v1653, 4
      %v1656 = vsel %vm300, %v1654, %v1655
      %v1657 = vsel %vm445, %v1651, %v1656
      %v1659 = vld [vmem:[#allocation2 + $0x100] sm:$0x33]
      %v1660 = vsel %vm648, %v1657, %v1659
      %1661 = vst [vmem:[#allocation2 + $0x100] sm:$0x33] %v1660
      %1662 = vrot.lane.b32.xlu0 %v1361, 126
      %v1663 = vpop.permute.xlu0 %1662
      %1664 = vrot.lane.b32.xlu0 %v1362, 126
      %v1665 = vpop.permute.xlu0 %1664
      %v1666 = vrot.slane %v1663, 4
      %v1667 = vrot.slane %v1665, 4
      %v1668 = vsel %vm300, %v1666, %v1667
      %v1669 = vsel %vm445, %v1663, %v1668
      %v1671 = vld [vmem:[#allocation2 + $0x108] sm:$0x33]
      %v1672 = vsel %vm648, %v1669, %v1671
      %1673 = vst [vmem:[#allocation2 + $0x108] sm:$0x33] %v1672
      %v1674 = vrot.slane %v1457, 5
      %v1675 = vor.u32 %v1613, %v1674
      %v1676 = vrot.slane %v1675, 4
      %1677 = vrot.lane.b32.xlu0 %v1395, 126
      %v1678 = vpop.permute.xlu0 %1677
      %1679 = vrot.lane.b32.xlu0 %v1676, 126
      %v1680 = vpop.permute.xlu0 %1679
      %v1681 = vrot.slane %v1678, 4
      %v1682 = vrot.slane %v1680, 4
      %v1683 = vsel %vm300, %v1681, %v1682
      %v1684 = vsel %vm445, %v1678, %v1683
      %v1686 = vld [vmem:[#allocation2 + $0x110] sm:$0x33]
      %v1687 = vsel %vm648, %v1684, %v1686
      %1688 = vst [vmem:[#allocation2 + $0x110] sm:$0x33] %v1687
      %1689 = vrot.lane.b32.xlu0 %v1401, 126
      %v1690 = vpop.permute.xlu0 %1689
      %1691 = vrot.lane.b32.xlu0 %v1430, 126
      %v1692 = vpop.permute.xlu0 %1691
      %v1693 = vrot.slane %v1690, 4
      %v1694 = vrot.slane %v1692, 4
      %v1695 = vsel %vm300, %v1693, %v1694
      %v1696 = vsel %vm445, %v1690, %v1695
      %v1698 = vld [vmem:[#allocation2 + $0x118] sm:$0x33]
      %v1699 = vsel %vm648, %v1696, %v1698
      %1700 = vst [vmem:[#allocation2 + $0x118] sm:$0x33] %v1699
      %v1701 = vrot.slane %v1460, 4
      %1702 = vrot.lane.b32.xlu0 %v1409, 126
      %v1703 = vpop.permute.xlu0 %1702
      %1704 = vrot.lane.b32.xlu0 %v1701, 126
      %v1705 = vpop.permute.xlu0 %1704
      %v1706 = vrot.slane %v1703, 4
      %v1707 = vrot.slane %v1705, 4
      %v1708 = vsel %vm300, %v1706, %v1707
      %v1709 = vsel %vm445, %v1703, %v1708
      %v1711 = vld [vmem:[#allocation2 + $0x120] sm:$0x33]
      %v1712 = vsel %vm648, %v1709, %v1711
      %1713 = vst [vmem:[#allocation2 + $0x120] sm:$0x33] %v1712
      %1714 = vrot.lane.b32.xlu0 %v1421, 126
      %v1715 = vpop.permute.xlu0 %1714
      %1716 = vrot.lane.b32.xlu0 %v1486, 126
      %v1717 = vpop.permute.xlu0 %1716
      %v1718 = vrot.slane %v1715, 4
      %v1719 = vrot.slane %v1717, 4
      %v1720 = vsel %vm300, %v1718, %v1719
      %v1721 = vsel %vm445, %v1715, %v1720
      %v1723 = vld [vmem:[#allocation2 + $0x128] sm:$0x33]
      %v1724 = vsel %vm648, %v1721, %v1723
      %1725 = vst [vmem:[#allocation2 + $0x128] sm:$0x33] %v1724
      %v1726 = vrot.slane %v1372, 4
      %v1727 = vrot.slane %v1411, 7
      %v1728 = vsel %vm713, %v1726, %v1727
      %v1729 = vrot.slane %v1511, 4
      %v1730 = vrot.slane %v1616, 7
      %v1731 = vsel %vm713, %v1729, %v1730
      %1732 = vrot.lane.b32.xlu0 %v1728, 126
      %v1733 = vpop.permute.xlu0 %1732
      %1734 = vrot.lane.b32.xlu0 %v1731, 126
      %v1735 = vpop.permute.xlu0 %1734
      %v1736 = vrot.slane %v1733, 4
      %v1737 = vrot.slane %v1735, 4
      %v1738 = vsel %vm300, %v1736, %v1737
      %v1739 = vsel %vm445, %v1733, %v1738
      %v1741 = vld [vmem:[#allocation2 + $0x130] sm:$0x33]
      %v1742 = vsel %vm648, %v1739, %v1741
      %1743 = vst [vmem:[#allocation2 + $0x130] sm:$0x33] %v1742
      %v1744 = vrot.slane %v1363, 7
      %v1745 = vsel %vm260, %v1537, %v1744
      %v1746 = vrot.slane %v1364, 7
      %v1747 = vsel %vm260, %v1538, %v1746
      %1748 = vrot.lane.b32.xlu0 %v1745, 126
      %v1749 = vpop.permute.xlu0 %1748
      %1750 = vrot.lane.b32.xlu0 %v1747, 126
      %v1751 = vpop.permute.xlu0 %1750
      %v1752 = vrot.slane %v1749, 4
      %v1753 = vrot.slane %v1751, 4
      %v1754 = vsel %vm300, %v1752, %v1753
      %v1755 = vsel %vm445, %v1749, %v1754
      %v1757 = vld [vmem:[#allocation2 + $0x138] sm:$0x33]
      %v1758 = vsel %vm648, %v1755, %v1757
      %1759 = vst [vmem:[#allocation2 + $0x138] sm:$0x33] %v1758
      %1760 = vrot.lane.b32.xlu0 %v1420, 111
      %v1761 = vpop.permute.xlu0 %1760
      %1762 = vrot.lane.b32.xlu0 %v1485, 111
      %v1763 = vpop.permute.xlu0 %1762
      %v1764 = vrot.slane %v1761, 4
      %v1765 = vrot.slane %v1763, 4
      %v1766 = vsel %vm300, %v1764, %v1765
      %v1767 = vsel %vm641, %v1761, %v1766
      %v1769 = vld [vmem:[#allocation2 + $0x100] sm:$0xcc]
      %v1770 = vsel %vm760, %v1767, %v1769
      %1771 = vst [vmem:[#allocation2 + $0x100] sm:$0xcc] %v1770
      %1772 = vrot.lane.b32.xlu0 %v1372, 111
      %v1773 = vpop.permute.xlu0 %1772
      %1774 = vrot.lane.b32.xlu0 %v1511, 111
      %v1775 = vpop.permute.xlu0 %1774
      %v1776 = vrot.slane %v1773, 4
      %v1777 = vrot.slane %v1775, 4
      %v1778 = vsel %vm300, %v1776, %v1777
      %v1779 = vsel %vm641, %v1773, %v1778
      %v1781 = vld [vmem:[#allocation2 + $0x108] sm:$0xcc]
      %v1782 = vsel %vm760, %v1779, %v1781
      %1783 = vst [vmem:[#allocation2 + $0x108] sm:$0xcc] %v1782
      %1784 = vrot.lane.b32.xlu0 %v1378, 111
      %v1785 = vpop.permute.xlu0 %1784
      %1786 = vrot.lane.b32.xlu0 %v1536, 111
      %v1787 = vpop.permute.xlu0 %1786
      %v1788 = vrot.slane %v1785, 4
      %v1789 = vrot.slane %v1787, 4
      %v1790 = vsel %vm300, %v1788, %v1789
      %v1791 = vsel %vm641, %v1785, %v1790
      %v1793 = vld [vmem:[#allocation2 + $0x110] sm:$0xcc]
      %v1794 = vsel %vm760, %v1791, %v1793
      %1795 = vst [vmem:[#allocation2 + $0x110] sm:$0xcc] %v1794
      %1796 = vrot.lane.b32.xlu0 %v1384, 111
      %v1797 = vpop.permute.xlu0 %1796
      %1798 = vrot.lane.b32.xlu0 %v1562, 111
      %v1799 = vpop.permute.xlu0 %1798
      %v1800 = vrot.slane %v1797, 4
      %v1801 = vrot.slane %v1799, 4
      %v1802 = vsel %vm300, %v1800, %v1801
      %v1803 = vsel %vm641, %v1797, %v1802
      %v1805 = vld [vmem:[#allocation2 + $0x118] sm:$0xcc]
      %v1806 = vsel %vm760, %v1803, %v1805
      %1807 = vst [vmem:[#allocation2 + $0x118] sm:$0xcc] %v1806
      %1808 = vrot.lane.b32.xlu0 %v1361, 111
      %v1809 = vpop.permute.xlu0 %1808
      %1810 = vrot.lane.b32.xlu0 %v1362, 111
      %v1811 = vpop.permute.xlu0 %1810
      %v1812 = vrot.slane %v1809, 4
      %v1813 = vrot.slane %v1811, 4
      %v1814 = vsel %vm300, %v1812, %v1813
      %v1815 = vsel %vm641, %v1809, %v1814
      %v1817 = vld [vmem:[#allocation2 + $0x120] sm:$0xcc]
      %v1818 = vsel %vm760, %v1815, %v1817
      %1819 = vst [vmem:[#allocation2 + $0x120] sm:$0xcc] %v1818
      %1820 = vrot.lane.b32.xlu0 %v1395, 111
      %v1821 = vpop.permute.xlu0 %1820
      %1822 = vrot.lane.b32.xlu0 %v1676, 111
      %v1823 = vpop.permute.xlu0 %1822
      %v1824 = vrot.slane %v1821, 4
      %v1825 = vrot.slane %v1823, 4
      %v1826 = vsel %vm300, %v1824, %v1825
      %v1827 = vsel %vm641, %v1821, %v1826
      %v1829 = vld [vmem:[#allocation2 + $0x128] sm:$0xcc]
      %v1830 = vsel %vm760, %v1827, %v1829
      %1831 = vst [vmem:[#allocation2 + $0x128] sm:$0xcc] %v1830
      %v1832 = vrot.slane %v1363, 5
      %v1833 = vsel %vm826, %v1401, %v1832
      %v1834 = vrot.slane %v1364, 5
      %v1835 = vsel %vm826, %v1430, %v1834
      %1836 = vrot.lane.b32.xlu0 %v1833, 111
      %v1837 = vpop.permute.xlu0 %1836
      %1838 = vrot.lane.b32.xlu0 %v1835, 111
      %v1839 = vpop.permute.xlu0 %1838
      %v1840 = vrot.slane %v1837, 4
      %v1841 = vrot.slane %v1839, 4
      %v1842 = vsel %vm300, %v1840, %v1841
      %v1843 = vsel %vm641, %v1837, %v1842
      %v1845 = vld [vmem:[#allocation2 + $0x130] sm:$0xcc]
      %v1846 = vsel %vm760, %v1843, %v1845
      %1847 = vst [vmem:[#allocation2 + $0x130] sm:$0xcc] %v1846
      %v1848 = vrot.slane %v1620, 5
      %v1849 = vor.u32 %v1848, %v1413
      %v1850 = vsel %vm388, %v1461, %v1849
      %v1851 = vrot.slane %v1624, 5
      %v1852 = vrot.slane %v1616, 6
      %v1853 = vor.u32 %v1851, %v1852
      %v1854 = vsel %vm388, %v1462, %v1853
      %1855 = vrot.lane.b32.xlu0 %v1850, 111
      %v1856 = vpop.permute.xlu0 %1855
      %1857 = vrot.lane.b32.xlu0 %v1854, 111
      %v1858 = vpop.permute.xlu0 %1857
      %v1859 = vrot.slane %v1856, 4
      %v1860 = vrot.slane %v1858, 4
      %v1861 = vsel %vm300, %v1859, %v1860
      %v1862 = vsel %vm641, %v1856, %v1861
      %v1864 = vld [vmem:[#allocation2 + $0x138] sm:$0xcc]
      %v1865 = vsel %vm760, %v1862, %v1864
      %1866 = vst [vmem:[#allocation2 + $0x138] sm:$0xcc] %v1865
      %1867 = vrot.lane.b32.xlu0 %v1393, 110
      %v1868 = vpop.permute.xlu0 %1867
      %1869 = vrot.lane.b32.xlu0 %v1674, 110
      %v1870 = vpop.permute.xlu0 %1869
      %1871 = vrot.lane.b32.xlu0 %v1395, 110
      %v1872 = vpop.permute.xlu0 %1871
      %1873 = vrot.lane.b32.xlu0 %v1676, 110
      %v1874 = vpop.permute.xlu0 %1873
      %v1875 = vrot.slane %v1868, 4
      %v1876 = vrot.slane %v1870, 4
      %v1877 = vrot.slane %v1872, 4
      %v1878 = vrot.slane %v1874, 4
      %v1879 = vsel %vm300, %v1875, %v1876
      %v1880 = vsel %vm752, %v1868, %v1879
      %v1881 = vsel %vm300, %v1877, %v1878
      %v1882 = vsel %vm752, %v1872, %v1881
      %v1885 = vld [vmem:[#allocation2 + $0x100] sm:$0x88]
      %v1886 = vsel %vm886, %v1880, %v1885
      %1887 = vst [vmem:[#allocation2 + $0x100] sm:$0x88] %v1886
      %1888 = vst [vmem:[#allocation2 + $0x140] sm:$0x11] %v1882
      %1889 = vrot.lane.b32.xlu0 %v1400, 110
      %v1890 = vpop.permute.xlu0 %1889
      %1891 = vrot.lane.b32.xlu0 %v1429, 110
      %v1892 = vpop.permute.xlu0 %1891
      %1893 = vrot.lane.b32.xlu0 %v1401, 110
      %v1894 = vpop.permute.xlu0 %1893
      %1895 = vrot.lane.b32.xlu0 %v1430, 110
      %v1896 = vpop.permute.xlu0 %1895
      %v1897 = vrot.slane %v1890, 4
      %v1898 = vrot.slane %v1892, 4
      %v1899 = vrot.slane %v1894, 4
      %v1900 = vrot.slane %v1896, 4
      %v1901 = vsel %vm300, %v1897, %v1898
      %v1902 = vsel %vm752, %v1890, %v1901
      %v1903 = vsel %vm300, %v1899, %v1900
      %v1904 = vsel %vm752, %v1894, %v1903
      %v1907 = vld [vmem:[#allocation2 + $0x108] sm:$0x88]
      %v1908 = vsel %vm886, %v1902, %v1907
      %1909 = vst [vmem:[#allocation2 + $0x108] sm:$0x88] %v1908
      %1910 = vst [vmem:[#allocation2 + $0x148] sm:$0x11] %v1904
      %1911 = vrot.lane.b32.xlu0 %v1407, 110
      %v1912 = vpop.permute.xlu0 %1911
      %1913 = vrot.lane.b32.xlu0 %v1459, 110
      %v1914 = vpop.permute.xlu0 %1913
      %1915 = vrot.lane.b32.xlu0 %v1409, 110
      %v1916 = vpop.permute.xlu0 %1915
      %1917 = vrot.lane.b32.xlu0 %v1701, 110
      %v1918 = vpop.permute.xlu0 %1917
      %v1919 = vrot.slane %v1912, 4
      %v1920 = vrot.slane %v1914, 4
      %v1921 = vrot.slane %v1916, 4
      %v1922 = vrot.slane %v1918, 4
      %v1923 = vsel %vm300, %v1919, %v1920
      %v1924 = vsel %vm752, %v1912, %v1923
      %v1925 = vsel %vm300, %v1921, %v1922
      %v1926 = vsel %vm752, %v1916, %v1925
      %v1929 = vld [vmem:[#allocation2 + $0x110] sm:$0x88]
      %v1930 = vsel %vm886, %v1924, %v1929
      %1931 = vst [vmem:[#allocation2 + $0x110] sm:$0x88] %v1930
      %1932 = vst [vmem:[#allocation2 + $0x150] sm:$0x11] %v1926
      %1933 = vrot.lane.b32.xlu0 %v1420, 110
      %v1934 = vpop.permute.xlu0 %1933
      %1935 = vrot.lane.b32.xlu0 %v1485, 110
      %v1936 = vpop.permute.xlu0 %1935
      %1937 = vrot.lane.b32.xlu0 %v1421, 110
      %v1938 = vpop.permute.xlu0 %1937
      %1939 = vrot.lane.b32.xlu0 %v1486, 110
      %v1940 = vpop.permute.xlu0 %1939
      %v1941 = vrot.slane %v1934, 4
      %v1942 = vrot.slane %v1936, 4
      %v1943 = vrot.slane %v1938, 4
      %v1944 = vrot.slane %v1940, 4
      %v1945 = vsel %vm300, %v1941, %v1942
      %v1946 = vsel %vm752, %v1934, %v1945
      %v1947 = vsel %vm300, %v1943, %v1944
      %v1948 = vsel %vm752, %v1938, %v1947
      %v1951 = vld [vmem:[#allocation2 + $0x118] sm:$0x88]
      %v1952 = vsel %vm886, %v1946, %v1951
      %1953 = vst [vmem:[#allocation2 + $0x118] sm:$0x88] %v1952
      %1954 = vst [vmem:[#allocation2 + $0x158] sm:$0x11] %v1948
      %1955 = vrot.lane.b32.xlu0 %v1371, 110
      %v1956 = vpop.permute.xlu0 %1955
      %1957 = vrot.lane.b32.xlu0 %v1510, 110
      %v1958 = vpop.permute.xlu0 %1957
      %1959 = vrot.lane.b32.xlu0 %v1726, 110
      %v1960 = vpop.permute.xlu0 %1959
      %1961 = vrot.lane.b32.xlu0 %v1729, 110
      %v1962 = vpop.permute.xlu0 %1961
      %v1963 = vrot.slane %v1956, 4
      %v1964 = vrot.slane %v1958, 4
      %v1965 = vrot.slane %v1960, 4
      %v1966 = vrot.slane %v1962, 4
      %v1967 = vsel %vm300, %v1963, %v1964
      %v1968 = vsel %vm752, %v1956, %v1967
      %v1969 = vsel %vm300, %v1965, %v1966
      %v1970 = vsel %vm752, %v1960, %v1969
      %v1973 = vld [vmem:[#allocation2 + $0x120] sm:$0x88]
      %v1974 = vsel %vm886, %v1968, %v1973
      %1975 = vst [vmem:[#allocation2 + $0x120] sm:$0x88] %v1974
      %1976 = vst [vmem:[#allocation2 + $0x160] sm:$0x11] %v1970
      %1977 = vrot.lane.b32.xlu0 %v1378, 110
      %v1978 = vpop.permute.xlu0 %1977
      %1979 = vrot.lane.b32.xlu0 %v1536, 110
      %v1980 = vpop.permute.xlu0 %1979
      %1981 = vrot.lane.b32.xlu0 %v1537, 110
      %v1982 = vpop.permute.xlu0 %1981
      %1983 = vrot.lane.b32.xlu0 %v1538, 110
      %v1984 = vpop.permute.xlu0 %1983
      %v1985 = vrot.slane %v1978, 4
      %v1986 = vrot.slane %v1980, 4
      %v1987 = vrot.slane %v1982, 4
      %v1988 = vrot.slane %v1984, 4
      %v1989 = vsel %vm300, %v1985, %v1986
      %v1990 = vsel %vm752, %v1978, %v1989
      %v1991 = vsel %vm300, %v1987, %v1988
      %v1992 = vsel %vm752, %v1982, %v1991
      %v1995 = vld [vmem:[#allocation2 + $0x128] sm:$0x88]
      %v1996 = vsel %vm886, %v1990, %v1995
      %1997 = vst [vmem:[#allocation2 + $0x128] sm:$0x88] %v1996
      %1998 = vst [vmem:[#allocation2 + $0x168] sm:$0x11] %v1992
      %v1999 = vsel %vm271, %v1563, %v1411
      %v2000 = vsel %vm271, %v1564, %v1616
      %2001 = vrot.lane.b32.xlu0 %v1369, 110
      %v2002 = vpop.permute.xlu0 %2001
      %2003 = vrot.lane.b32.xlu0 %v1457, 110
      %v2004 = vpop.permute.xlu0 %2003
      %2005 = vrot.lane.b32.xlu0 %v1999, 110
      %v2006 = vpop.permute.xlu0 %2005
      %2007 = vrot.lane.b32.xlu0 %v2000, 110
      %v2008 = vpop.permute.xlu0 %2007
      %v2009 = vrot.slane %v2002, 4
      %v2010 = vrot.slane %v2004, 4
      %v2011 = vrot.slane %v2006, 4
      %v2012 = vrot.slane %v2008, 4
      %v2013 = vsel %vm300, %v2009, %v2010
      %v2014 = vsel %vm752, %v2002, %v2013
      %v2015 = vsel %vm300, %v2011, %v2012
      %v2016 = vsel %vm752, %v2006, %v2015
      %v2019 = vld [vmem:[#allocation2 + $0x130] sm:$0x88]
      %v2020 = vsel %vm886, %v2014, %v2019
      %2021 = vst [vmem:[#allocation2 + $0x130] sm:$0x88] %v2020
      %2022 = vst [vmem:[#allocation2 + $0x170] sm:$0x11] %v2016
      %2023 = vrot.lane.b32.xlu0 %v1361, 110
      %v2024 = vpop.permute.xlu0 %2023
      %2025 = vrot.lane.b32.xlu0 %v1362, 110
      %v2026 = vpop.permute.xlu0 %2025
      %2027 = vrot.lane.b32.xlu0 %v1363, 110
      %v2028 = vpop.permute.xlu0 %2027
      %2029 = vrot.lane.b32.xlu0 %v1364, 110
      %v2030 = vpop.permute.xlu0 %2029
      %v2031 = vrot.slane %v2024, 4
      %v2032 = vrot.slane %v2026, 4
      %v2033 = vrot.slane %v2028, 4
      %v2034 = vrot.slane %v2030, 4
      %v2035 = vsel %vm300, %v2031, %v2032
      %v2036 = vsel %vm752, %v2024, %v2035
      %v2037 = vsel %vm300, %v2033, %v2034
      %v2038 = vsel %vm752, %v2028, %v2037
      %v2041 = vld [vmem:[#allocation2 + $0x138] sm:$0x88]
      %v2042 = vsel %vm886, %v2036, %v2041
      %2043 = vst [vmem:[#allocation2 + $0x138] sm:$0x88] %v2042
      %2044 = vst [vmem:[#allocation2 + $0x178] sm:$0x11] %v2038
      %2045 = vrot.lane.b32.xlu0 %v1378, 109
      %v2046 = vpop.permute.xlu0 %2045
      %2047 = vrot.lane.b32.xlu0 %v1536, 109
      %v2048 = vpop.permute.xlu0 %2047
      %v2049 = vrot.slane %v2046, 4
      %v2050 = vrot.slane %v2048, 4
      %v2051 = vsel %vm300, %v2049, %v2050
      %v2052 = vsel %vm874, %v2046, %v2051
      %v2054 = vld [vmem:[#allocation2 + $0x140] sm:$0x66]
      %v2055 = vsel %vm1060, %v2052, %v2054
      %2056 = vst [vmem:[#allocation2 + $0x140] sm:$0x66] %v2055
      %2057 = vrot.lane.b32.xlu0 %v1384, 109
      %v2058 = vpop.permute.xlu0 %2057
      %2059 = vrot.lane.b32.xlu0 %v1562, 109
      %v2060 = vpop.permute.xlu0 %2059
      %v2061 = vrot.slane %v2058, 4
      %v2062 = vrot.slane %v2060, 4
      %v2063 = vsel %vm300, %v2061, %v2062
      %v2064 = vsel %vm874, %v2058, %v2063
      %v2066 = vld [vmem:[#allocation2 + $0x148] sm:$0x66]
      %v2067 = vsel %vm1060, %v2064, %v2066
      %2068 = vst [vmem:[#allocation2 + $0x148] sm:$0x66] %v2067
      %2069 = vrot.lane.b32.xlu0 %v1361, 109
      %v2070 = vpop.permute.xlu0 %2069
      %2071 = vrot.lane.b32.xlu0 %v1362, 109
      %v2072 = vpop.permute.xlu0 %2071
      %v2073 = vrot.slane %v2070, 4
      %v2074 = vrot.slane %v2072, 4
      %v2075 = vsel %vm300, %v2073, %v2074
      %v2076 = vsel %vm874, %v2070, %v2075
      %v2078 = vld [vmem:[#allocation2 + $0x150] sm:$0x66]
      %v2079 = vsel %vm1060, %v2076, %v2078
      %2080 = vst [vmem:[#allocation2 + $0x150] sm:$0x66] %v2079
      %2081 = vrot.lane.b32.xlu0 %v1395, 109
      %v2082 = vpop.permute.xlu0 %2081
      %2083 = vrot.lane.b32.xlu0 %v1676, 109
      %v2084 = vpop.permute.xlu0 %2083
      %v2085 = vrot.slane %v2082, 4
      %v2086 = vrot.slane %v2084, 4
      %v2087 = vsel %vm300, %v2085, %v2086
      %v2088 = vsel %vm874, %v2082, %v2087
      %v2090 = vld [vmem:[#allocation2 + $0x158] sm:$0x66]
      %v2091 = vsel %vm1060, %v2088, %v2090
      %2092 = vst [vmem:[#allocation2 + $0x158] sm:$0x66] %v2091
      %2093 = vrot.lane.b32.xlu0 %v1401, 109
      %v2094 = vpop.permute.xlu0 %2093
      %2095 = vrot.lane.b32.xlu0 %v1430, 109
      %v2096 = vpop.permute.xlu0 %2095
      %v2097 = vrot.slane %v2094, 4
      %v2098 = vrot.slane %v2096, 4
      %v2099 = vsel %vm300, %v2097, %v2098
      %v2100 = vsel %vm874, %v2094, %v2099
      %v2102 = vld [vmem:[#allocation2 + $0x160] sm:$0x66]
      %v2103 = vsel %vm1060, %v2100, %v2102
      %2104 = vst [vmem:[#allocation2 + $0x160] sm:$0x66] %v2103
      %2105 = vrot.lane.b32.xlu0 %v1409, 109
      %v2106 = vpop.permute.xlu0 %2105
      %2107 = vrot.lane.b32.xlu0 %v1701, 109
      %v2108 = vpop.permute.xlu0 %2107
      %v2109 = vrot.slane %v2106, 4
      %v2110 = vrot.slane %v2108, 4
      %v2111 = vsel %vm300, %v2109, %v2110
      %v2112 = vsel %vm874, %v2106, %v2111
      %v2114 = vld [vmem:[#allocation2 + $0x168] sm:$0x66]
      %v2115 = vsel %vm1060, %v2112, %v2114
      %2116 = vst [vmem:[#allocation2 + $0x168] sm:$0x66] %v2115
      %v2117 = vrot.slane %v1364, 6
      %v2118 = vsel %vm413, %v1486, %v2117
      %2119 = vrot.lane.b32.xlu0 %v1423, 109
      %v2120 = vpop.permute.xlu0 %2119
      %2121 = vrot.lane.b32.xlu0 %v2118, 109
      %v2122 = vpop.permute.xlu0 %2121
      %v2123 = vrot.slane %v2120, 4
      %v2124 = vrot.slane %v2122, 4
      %v2125 = vsel %vm300, %v2123, %v2124
      %v2126 = vsel %vm874, %v2120, %v2125
      %v2128 = vld [vmem:[#allocation2 + $0x170] sm:$0x66]
      %v2129 = vsel %vm1060, %v2126, %v2128
      %2130 = vst [vmem:[#allocation2 + $0x170] sm:$0x66] %v2129
      %v2131 = vrot.slane %v1620, 6
      %v2132 = vor.u32 %v2131, %v1727
      %v2133 = vsel %vm713, %v1512, %v2132
      %v2134 = vrot.slane %v1624, 6
      %v2135 = vor.u32 %v2134, %v1730
      %v2136 = vsel %vm713, %v1513, %v2135
      %2137 = vrot.lane.b32.xlu0 %v2133, 109
      %v2138 = vpop.permute.xlu0 %2137
      %2139 = vrot.lane.b32.xlu0 %v2136, 109
      %v2140 = vpop.permute.xlu0 %2139
      %v2141 = vrot.slane %v2138, 4
      %v2142 = vrot.slane %v2140, 4
      %v2143 = vsel %vm300, %v2141, %v2142
      %v2144 = vsel %vm874, %v2138, %v2143
      %v2146 = vld [vmem:[#allocation2 + $0x178] sm:$0x66]
      %v2147 = vsel %vm1060, %v2144, %v2146
      %2148 = vst [vmem:[#allocation2 + $0x178] sm:$0x66] %v2147
      %2149 = vrot.lane.b32.xlu0 %v1408, 94
      %v2150 = vpop.permute.xlu0 %2149
      %2151 = vrot.lane.b32.xlu0 %v1460, 94
      %v2152 = vpop.permute.xlu0 %2151
      %v2153 = vrot.slane %v2150, 4
      %v2154 = vrot.slane %v2152, 4
      %v2155 = vsel %vm300, %v2153, %v2154
      %v2156 = vsel %vm1054, %v2150, %v2155
      %v2158 = vld [vmem:[#allocation2 + $0x140] sm:$0xcc]
      %v2159 = vsel %vm1168, %v2156, %v2158
      %2160 = vst [vmem:[#allocation2 + $0x140] sm:$0xcc] %v2159
      %2161 = vrot.lane.b32.xlu0 %v1420, 94
      %v2162 = vpop.permute.xlu0 %2161
      %2163 = vrot.lane.b32.xlu0 %v1485, 94
      %v2164 = vpop.permute.xlu0 %2163
      %v2165 = vrot.slane %v2162, 4
      %v2166 = vrot.slane %v2164, 4
      %v2167 = vsel %vm300, %v2165, %v2166
      %v2168 = vsel %vm1054, %v2162, %v2167
      %v2170 = vld [vmem:[#allocation2 + $0x148] sm:$0xcc]
      %v2171 = vsel %vm1168, %v2168, %v2170
      %2172 = vst [vmem:[#allocation2 + $0x148] sm:$0xcc] %v2171
      %2173 = vrot.lane.b32.xlu0 %v1372, 94
      %v2174 = vpop.permute.xlu0 %2173
      %2175 = vrot.lane.b32.xlu0 %v1511, 94
      %v2176 = vpop.permute.xlu0 %2175
      %v2177 = vrot.slane %v2174, 4
      %v2178 = vrot.slane %v2176, 4
      %v2179 = vsel %vm300, %v2177, %v2178
      %v2180 = vsel %vm1054, %v2174, %v2179
      %v2182 = vld [vmem:[#allocation2 + $0x150] sm:$0xcc]
      %v2183 = vsel %vm1168, %v2180, %v2182
      %2184 = vst [vmem:[#allocation2 + $0x150] sm:$0xcc] %v2183
      %2185 = vrot.lane.b32.xlu0 %v1378, 94
      %v2186 = vpop.permute.xlu0 %2185
      %2187 = vrot.lane.b32.xlu0 %v1536, 94
      %v2188 = vpop.permute.xlu0 %2187
      %v2189 = vrot.slane %v2186, 4
      %v2190 = vrot.slane %v2188, 4
      %v2191 = vsel %vm300, %v2189, %v2190
      %v2192 = vsel %vm1054, %v2186, %v2191
      %v2194 = vld [vmem:[#allocation2 + $0x158] sm:$0xcc]
      %v2195 = vsel %vm1168, %v2192, %v2194
      %2196 = vst [vmem:[#allocation2 + $0x158] sm:$0xcc] %v2195
      %2197 = vrot.lane.b32.xlu0 %v1384, 94
      %v2198 = vpop.permute.xlu0 %2197
      %2199 = vrot.lane.b32.xlu0 %v1562, 94
      %v2200 = vpop.permute.xlu0 %2199
      %v2201 = vrot.slane %v2198, 4
      %v2202 = vrot.slane %v2200, 4
      %v2203 = vsel %vm300, %v2201, %v2202
      %v2204 = vsel %vm1054, %v2198, %v2203
      %v2206 = vld [vmem:[#allocation2 + $0x160] sm:$0xcc]
      %v2207 = vsel %vm1168, %v2204, %v2206
      %2208 = vst [vmem:[#allocation2 + $0x160] sm:$0xcc] %v2207
      %2209 = vrot.lane.b32.xlu0 %v1361, 94
      %v2210 = vpop.permute.xlu0 %2209
      %2211 = vrot.lane.b32.xlu0 %v1362, 94
      %v2212 = vpop.permute.xlu0 %2211
      %v2213 = vrot.slane %v2210, 4
      %v2214 = vrot.slane %v2212, 4
      %v2215 = vsel %vm300, %v2213, %v2214
      %v2216 = vsel %vm1054, %v2210, %v2215
      %v2218 = vld [vmem:[#allocation2 + $0x168] sm:$0xcc]
      %v2219 = vsel %vm1168, %v2216, %v2218
      %2220 = vst [vmem:[#allocation2 + $0x168] sm:$0xcc] %v2219
      %v2221 = vsel %vm599, %v1395, %v1611
      %v2222 = vsel %vm599, %v1676, %v1618
      %2223 = vrot.lane.b32.xlu0 %v2221, 94
      %v2224 = vpop.permute.xlu0 %2223
      %2225 = vrot.lane.b32.xlu0 %v2222, 94
      %v2226 = vpop.permute.xlu0 %2225
      %v2227 = vrot.slane %v2224, 4
      %v2228 = vrot.slane %v2226, 4
      %v2229 = vsel %vm300, %v2227, %v2228
      %v2230 = vsel %vm1054, %v2224, %v2229
      %v2232 = vld [vmem:[#allocation2 + $0x170] sm:$0xcc]
      %v2233 = vsel %vm1168, %v2230, %v2232
      %2234 = vst [vmem:[#allocation2 + $0x170] sm:$0xcc] %v2233
      %2235 = vrot.lane.b32.xlu0 %v1833, 94
      %v2236 = vpop.permute.xlu0 %2235
      %2237 = vrot.lane.b32.xlu0 %v1835, 94
      %v2238 = vpop.permute.xlu0 %2237
      %v2239 = vrot.slane %v2236, 4
      %v2240 = vrot.slane %v2238, 4
      %v2241 = vsel %vm300, %v2239, %v2240
      %v2242 = vsel %vm1054, %v2236, %v2241
      %v2244 = vld [vmem:[#allocation2 + $0x178] sm:$0xcc]
      %v2245 = vsel %vm1168, %v2242, %v2244
      %2246 = vst [vmem:[#allocation2 + $0x178] sm:$0xcc] %v2245
      %2247 = vrot.lane.b32.xlu0 %v1361, 93
      %v2248 = vpop.permute.xlu0 %2247
      %2249 = vrot.lane.b32.xlu0 %v1362, 93
      %v2250 = vpop.permute.xlu0 %2249
      %v2251 = vrot.slane %v2248, 4
      %v2252 = vrot.slane %v2250, 4
      %v2253 = vsel %vm300, %v2251, %v2252
      %v2254 = vsel %vm1161, %v2248, %v2253
      %v2256 = vld [vmem:[#allocation2 + $0x180] sm:$0x33]
      %v2257 = vsel %vm211, %v2254, %v2256
      %2258 = vst [vmem:[#allocation2 + $0x180] sm:$0x33] %v2257
      %2259 = vrot.lane.b32.xlu0 %v1395, 93
      %v2260 = vpop.permute.xlu0 %2259
      %2261 = vrot.lane.b32.xlu0 %v1676, 93
      %v2262 = vpop.permute.xlu0 %2261
      %v2263 = vrot.slane %v2260, 4
      %v2264 = vrot.slane %v2262, 4
      %v2265 = vsel %vm300, %v2263, %v2264
      %v2266 = vsel %vm1161, %v2260, %v2265
      %v2268 = vld [vmem:[#allocation2 + $0x188] sm:$0x33]
      %v2269 = vsel %vm211, %v2266, %v2268
      %2270 = vst [vmem:[#allocation2 + $0x188] sm:$0x33] %v2269
      %2271 = vrot.lane.b32.xlu0 %v1401, 93
      %v2272 = vpop.permute.xlu0 %2271
      %2273 = vrot.lane.b32.xlu0 %v1430, 93
      %v2274 = vpop.permute.xlu0 %2273
      %v2275 = vrot.slane %v2272, 4
      %v2276 = vrot.slane %v2274, 4
      %v2277 = vsel %vm300, %v2275, %v2276
      %v2278 = vsel %vm1161, %v2272, %v2277
      %v2280 = vld [vmem:[#allocation2 + $0x190] sm:$0x33]
      %v2281 = vsel %vm211, %v2278, %v2280
      %2282 = vst [vmem:[#allocation2 + $0x190] sm:$0x33] %v2281
      %2283 = vrot.lane.b32.xlu0 %v1409, 93
      %v2284 = vpop.permute.xlu0 %2283
      %2285 = vrot.lane.b32.xlu0 %v1701, 93
      %v2286 = vpop.permute.xlu0 %2285
      %v2287 = vrot.slane %v2284, 4
      %v2288 = vrot.slane %v2286, 4
      %v2289 = vsel %vm300, %v2287, %v2288
      %v2290 = vsel %vm1161, %v2284, %v2289
      %v2292 = vld [vmem:[#allocation2 + $0x198] sm:$0x33]
      %v2293 = vsel %vm211, %v2290, %v2292
      %2294 = vst [vmem:[#allocation2 + $0x198] sm:$0x33] %v2293
      %2295 = vrot.lane.b32.xlu0 %v1421, 93
      %v2296 = vpop.permute.xlu0 %2295
      %2297 = vrot.lane.b32.xlu0 %v1486, 93
      %v2298 = vpop.permute.xlu0 %2297
      %v2299 = vrot.slane %v2296, 4
      %v2300 = vrot.slane %v2298, 4
      %v2301 = vsel %vm300, %v2299, %v2300
      %v2302 = vsel %vm1161, %v2296, %v2301
      %v2304 = vld [vmem:[#allocation2 + $0x1a0] sm:$0x33]
      %v2305 = vsel %vm211, %v2302, %v2304
      %2306 = vst [vmem:[#allocation2 + $0x1a0] sm:$0x33] %v2305
      %2307 = vrot.lane.b32.xlu0 %v1726, 93
      %v2308 = vpop.permute.xlu0 %2307
      %2309 = vrot.lane.b32.xlu0 %v1729, 93
      %v2310 = vpop.permute.xlu0 %2309
      %v2311 = vrot.slane %v2308, 4
      %v2312 = vrot.slane %v2310, 4
      %v2313 = vsel %vm300, %v2311, %v2312
      %v2314 = vsel %vm1161, %v2308, %v2313
      %v2316 = vld [vmem:[#allocation2 + $0x1a8] sm:$0x33]
      %v2317 = vsel %vm211, %v2314, %v2316
      %2318 = vst [vmem:[#allocation2 + $0x1a8] sm:$0x33] %v2317
      %2319 = vrot.lane.b32.xlu0 %v1745, 93
      %v2320 = vpop.permute.xlu0 %2319
      %2321 = vrot.lane.b32.xlu0 %v1747, 93
      %v2322 = vpop.permute.xlu0 %2321
      %v2323 = vrot.slane %v2320, 4
      %v2324 = vrot.slane %v2322, 4
      %v2325 = vsel %vm300, %v2323, %v2324
      %v2326 = vsel %vm1161, %v2320, %v2325
      %v2328 = vld [vmem:[#allocation2 + $0x1b0] sm:$0x33]
      %v2329 = vsel %vm211, %v2326, %v2328
      %2330 = vst [vmem:[#allocation2 + $0x1b0] sm:$0x33] %v2329
      %v2331 = vrot.slane %v1620, 7
      %v2332 = vor.u32 %v2331, %v1411
      %v2333 = vsel %vm271, %v1563, %v2332
      %v2334 = vrot.slane %v1624, 7
      %v2335 = vor.u32 %v2334, %v1616
      %v2336 = vsel %vm271, %v1564, %v2335
      %2337 = vrot.lane.b32.xlu0 %v2333, 93
      %v2338 = vpop.permute.xlu0 %2337
      %2339 = vrot.lane.b32.xlu0 %v2336, 93
      %v2340 = vpop.permute.xlu0 %2339
      %v2341 = vrot.slane %v2338, 4
      %v2342 = vrot.slane %v2340, 4
      %v2343 = vsel %vm300, %v2341, %v2342
      %v2344 = vsel %vm1161, %v2338, %v2343
      %v2346 = vld [vmem:[#allocation2 + $0x1b8] sm:$0x33]
      %v2347 = vsel %vm211, %v2344, %v2346
      %2348 = vst [vmem:[#allocation2 + $0x1b8] sm:$0x33] %v2347
      %2349 = vrot.lane.b32.xlu0 %v1372, 92
      %v2350 = vpop.permute.xlu0 %2349
      %2351 = vrot.lane.b32.xlu0 %v1511, 92
      %v2352 = vpop.permute.xlu0 %2351
      %v2353 = vrot.slane %v2350, 4
      %v2354 = vrot.slane %v2352, 4
      %v2355 = vsel %vm300, %v2353, %v2354
      %v2356 = vsel %vm1265, %v2350, %v2355
      %v2358 = vld [vmem:[#allocation2 + $0x180] sm:$0x66]
      %v2359 = vsel %vm311, %v2356, %v2358
      %2360 = vst [vmem:[#allocation2 + $0x180] sm:$0x66] %v2359
      %2361 = vrot.lane.b32.xlu0 %v1378, 92
      %v2362 = vpop.permute.xlu0 %2361
      %2363 = vrot.lane.b32.xlu0 %v1536, 92
      %v2364 = vpop.permute.xlu0 %2363
      %v2365 = vrot.slane %v2362, 4
      %v2366 = vrot.slane %v2364, 4
      %v2367 = vsel %vm300, %v2365, %v2366
      %v2368 = vsel %vm1265, %v2362, %v2367
      %v2370 = vld [vmem:[#allocation2 + $0x188] sm:$0x66]
      %v2371 = vsel %vm311, %v2368, %v2370
      %2372 = vst [vmem:[#allocation2 + $0x188] sm:$0x66] %v2371
      %2373 = vrot.lane.b32.xlu0 %v1384, 92
      %v2374 = vpop.permute.xlu0 %2373
      %2375 = vrot.lane.b32.xlu0 %v1562, 92
      %v2376 = vpop.permute.xlu0 %2375
      %v2377 = vrot.slane %v2374, 4
      %v2378 = vrot.slane %v2376, 4
      %v2379 = vsel %vm300, %v2377, %v2378
      %v2380 = vsel %vm1265, %v2374, %v2379
      %v2382 = vld [vmem:[#allocation2 + $0x190] sm:$0x66]
      %v2383 = vsel %vm311, %v2380, %v2382
      %2384 = vst [vmem:[#allocation2 + $0x190] sm:$0x66] %v2383
      %2385 = vrot.lane.b32.xlu0 %v1361, 92
      %v2386 = vpop.permute.xlu0 %2385
      %2387 = vrot.lane.b32.xlu0 %v1362, 92
      %v2388 = vpop.permute.xlu0 %2387
      %v2389 = vrot.slane %v2386, 4
      %v2390 = vrot.slane %v2388, 4
      %v2391 = vsel %vm300, %v2389, %v2390
      %v2392 = vsel %vm1265, %v2386, %v2391
      %v2394 = vld [vmem:[#allocation2 + $0x198] sm:$0x66]
      %v2395 = vsel %vm311, %v2392, %v2394
      %2396 = vst [vmem:[#allocation2 + $0x198] sm:$0x66] %v2395
      %2397 = vrot.lane.b32.xlu0 %v1395, 92
      %v2398 = vpop.permute.xlu0 %2397
      %2399 = vrot.lane.b32.xlu0 %v1676, 92
      %v2400 = vpop.permute.xlu0 %2399
      %v2401 = vrot.slane %v2398, 4
      %v2402 = vrot.slane %v2400, 4
      %v2403 = vsel %vm300, %v2401, %v2402
      %v2404 = vsel %vm1265, %v2398, %v2403
      %v2406 = vld [vmem:[#allocation2 + $0x1a0] sm:$0x66]
      %v2407 = vsel %vm311, %v2404, %v2406
      %2408 = vst [vmem:[#allocation2 + $0x1a0] sm:$0x66] %v2407
      %2409 = vrot.lane.b32.xlu0 %v1401, 92
      %v2410 = vpop.permute.xlu0 %2409
      %2411 = vrot.lane.b32.xlu0 %v1430, 92
      %v2412 = vpop.permute.xlu0 %2411
      %v2413 = vrot.slane %v2410, 4
      %v2414 = vrot.slane %v2412, 4
      %v2415 = vsel %vm300, %v2413, %v2414
      %v2416 = vsel %vm1265, %v2410, %v2415
      %v2418 = vld [vmem:[#allocation2 + $0x1a8] sm:$0x66]
      %v2419 = vsel %vm311, %v2416, %v2418
      %2420 = vst [vmem:[#allocation2 + $0x1a8] sm:$0x66] %v2419
      %v2421 = vsel %vm388, %v1701, %v1852
      %2422 = vrot.lane.b32.xlu0 %v1414, 92
      %v2423 = vpop.permute.xlu0 %2422
      %2424 = vrot.lane.b32.xlu0 %v2421, 92
      %v2425 = vpop.permute.xlu0 %2424
      %v2426 = vrot.slane %v2423, 4
      %v2427 = vrot.slane %v2425, 4
      %v2428 = vsel %vm300, %v2426, %v2427
      %v2429 = vsel %vm1265, %v2423, %v2428
      %v2431 = vld [vmem:[#allocation2 + $0x1b0] sm:$0x66]
      %v2432 = vsel %vm311, %v2429, %v2431
      %2433 = vst [vmem:[#allocation2 + $0x1b0] sm:$0x66] %v2432
      %2434 = vrot.lane.b32.xlu0 %v1423, 92
      %v2435 = vpop.permute.xlu0 %2434
      %2436 = vrot.lane.b32.xlu0 %v2118, 92
      %v2437 = vpop.permute.xlu0 %2436
      %v2438 = vrot.slane %v2435, 4
      %v2439 = vrot.slane %v2437, 4
      %v2440 = vsel %vm300, %v2438, %v2439
      %v2441 = vsel %vm1265, %v2435, %v2440
      %v2443 = vld [vmem:[#allocation2 + $0x1b8] sm:$0x66]
      %v2444 = vsel %vm311, %v2441, %v2443
      %2445 = vst [vmem:[#allocation2 + $0x1b8] sm:$0x66] %v2444
      %s2446 = sadd.s32 %s198, 18
      %s2447 = smul.addr %s2446, 4
      %s2448 = scalar_lea.vmem %s183, %s2447
      %v2449 = vld [vmem:[%s2448] sm:$0xff]
      %v2450 = vld [vmem:[%s2448 + $0x8] sm:$0xf]
      %v2451 = vld [vmem:[%s2448 + $0xc] sm:$0x11]
      %v2452 = vld [vmem:[%s2448 + $0x14] sm:$0x1]
      %v2454 = vrot.slane %v2449, 5
      %v2455 = vrot.slane %v2454, 4
      %2458 = vst [vmem:[#allocation2 + $0x180] sm:$0x88] %v2454
      %v2459 = vld [vmem:[#allocation2 + $0x1c0] sm:$0x11]
      %v2460 = vsel %vm455, %v2455, %v2459
      %2461 = vst [vmem:[#allocation2 + $0x1c0] sm:$0x11] %v2460
      %v2463 = vshrl.u32 %v2449, 16
      %v2465 = vrot.slane %v2463, 5
      %v2466 = vshll.u32 %v2449, 16
      %v2468 = vrot.slane %v2466, 6
      %v2469 = vor.u32 %v2465, %v2468
      %v2470 = vrot.slane %v2465, 4
      %2473 = vst [vmem:[#allocation2 + $0x188] sm:$0x88] %v2469
      %v2474 = vld [vmem:[#allocation2 + $0x1c8] sm:$0x11]
      %v2475 = vsel %vm455, %v2470, %v2474
      %2476 = vst [vmem:[#allocation2 + $0x1c8] sm:$0x11] %v2475
      %v2477 = vrot.slane %v2449, 6
      %v2478 = vrot.slane %v2477, 4
      %2481 = vst [vmem:[#allocation2 + $0x190] sm:$0x88] %v2477
      %v2482 = vld [vmem:[#allocation2 + $0x1d0] sm:$0x11]
      %v2483 = vsel %vm455, %v2478, %v2482
      %2484 = vst [vmem:[#allocation2 + $0x1d0] sm:$0x11] %v2483
      %v2485 = vrot.slane %v2463, 6
      %v2486 = vrot.slane %v2466, 7
      %v2487 = vor.u32 %v2485, %v2486
      %v2488 = vrot.slane %v2485, 4
      %2491 = vst [vmem:[#allocation2 + $0x198] sm:$0x88] %v2487
      %v2492 = vld [vmem:[#allocation2 + $0x1d8] sm:$0x11]
      %v2493 = vsel %vm455, %v2488, %v2492
      %2494 = vst [vmem:[#allocation2 + $0x1d8] sm:$0x11] %v2493
      %v2495 = vrot.slane %v2449, 7
      %v2496 = vrot.slane %v2495, 4
      %2499 = vst [vmem:[#allocation2 + $0x1a0] sm:$0x88] %v2495
      %v2500 = vld [vmem:[#allocation2 + $0x1e0] sm:$0x11]
      %v2501 = vsel %vm455, %v2496, %v2500
      %2502 = vst [vmem:[#allocation2 + $0x1e0] sm:$0x11] %v2501
      %v2503 = vrot.slane %v2463, 7
      %v2504 = vor.u32 %v2503, %v2466
      %v2505 = vrot.slane %v2503, 4
      %2508 = vst [vmem:[#allocation2 + $0x1a8] sm:$0x88] %v2504
      %v2509 = vld [vmem:[#allocation2 + $0x1e8] sm:$0x11]
      %v2510 = vsel %vm455, %v2505, %v2509
      %2511 = vst [vmem:[#allocation2 + $0x1e8] sm:$0x11] %v2510
      %2512 = vst [vmem:[#allocation2 + $0x1b0] sm:$0x88] %v2449
      %v2513 = vld [vmem:[#allocation2 + $0x1f0] sm:$0x11]
      %v2514 = vsel %vm455, %v2451, %v2513
      %2515 = vst [vmem:[#allocation2 + $0x1f0] sm:$0x11] %v2514
      %v2516 = vrot.slane %v2463, 4
      %v2517 = vrot.slane %v2516, 4
      %v2519 = vshll.u32 %v2451, 16
      %v2521 = vrot.slane %v2519, 5
      %v2522 = vsel %vm599, %v2517, %v2521
      %v2523 = vshrl.u32 %v2451, 16
      %v2525 = vrot.slane %v2523, 4
      %v2526 = vrot.slane %v2525, 4
      %2529 = vst [vmem:[#allocation2 + $0x1b8] sm:$0x88] %v2522
      %v2530 = vld [vmem:[#allocation2 + $0x1f8] sm:$0x11]
      %v2531 = vsel %vm455, %v2526, %v2530
      %2532 = vst [vmem:[#allocation2 + $0x1f8] sm:$0x11] %v2531
      %v2534 = vshrl.u32 %v2450, 16
      %v2536 = vrot.slane %v2534, 7
      %v2537 = vshll.u32 %v2450, 16
      %v2539 = vor.u32 %v2536, %v2537
      %2540 = vrot.lane.b32.xlu0 %v2504, 127
      %v2541 = vpop.permute.xlu0 %2540
      %2542 = vrot.lane.b32.xlu0 %v2539, 127
      %v2543 = vpop.permute.xlu0 %2542
      %v2544 = vrot.slane %v2541, 4
      %v2545 = vrot.slane %v2543, 4
      %v2546 = vsel %vm300, %v2544, %v2545
      %v2547 = vsel %vm302, %v2541, %v2546
      %v2549 = vld [vmem:[#allocation2 + $0x1c0] sm:$0x33]
      %v2550 = vsel %vm648, %v2547, %v2549
      %2551 = vst [vmem:[#allocation2 + $0x1c0] sm:$0x33] %v2550
      %2553 = vrot.lane.b32.xlu0 %v2449, 127
      %v2554 = vpop.permute.xlu0 %2553
      %2555 = vrot.lane.b32.xlu0 %v2450, 127
      %v2556 = vpop.permute.xlu0 %2555
      %v2557 = vrot.slane %v2554, 4
      %v2558 = vrot.slane %v2556, 4
      %v2559 = vsel %vm300, %v2557, %v2558
      %v2560 = vsel %vm302, %v2554, %v2559
      %v2562 = vld [vmem:[#allocation2 + $0x1c8] sm:$0x33]
      %v2563 = vsel %vm648, %v2560, %v2562
      %2564 = vst [vmem:[#allocation2 + $0x1c8] sm:$0x33] %v2563
      %v2565 = vrot.slane %v2466, 5
      %v2566 = vor.u32 %v2516, %v2565
      %v2567 = vrot.slane %v2566, 4
      %v2568 = vrot.slane %v2534, 4
      %v2569 = vrot.slane %v2537, 5
      %v2570 = vor.u32 %v2568, %v2569
      %v2571 = vrot.slane %v2570, 4
      %2572 = vrot.lane.b32.xlu0 %v2567, 127
      %v2573 = vpop.permute.xlu0 %2572
      %2574 = vrot.lane.b32.xlu0 %v2571, 127
      %v2575 = vpop.permute.xlu0 %2574
      %v2576 = vrot.slane %v2573, 4
      %v2577 = vrot.slane %v2575, 4
      %v2578 = vsel %vm300, %v2576, %v2577
      %v2579 = vsel %vm302, %v2573, %v2578
      %v2581 = vld [vmem:[#allocation2 + $0x1d0] sm:$0x33]
      %v2582 = vsel %vm648, %v2579, %v2581
      %2583 = vst [vmem:[#allocation2 + $0x1d0] sm:$0x33] %v2582
      %v2584 = vrot.slane %v2450, 5
      %v2585 = vrot.slane %v2584, 4
      %2586 = vrot.lane.b32.xlu0 %v2455, 127
      %v2587 = vpop.permute.xlu0 %2586
      %2588 = vrot.lane.b32.xlu0 %v2585, 127
      %v2589 = vpop.permute.xlu0 %2588
      %v2590 = vrot.slane %v2587, 4
      %v2591 = vrot.slane %v2589, 4
      %v2592 = vsel %vm300, %v2590, %v2591
      %v2593 = vsel %vm302, %v2587, %v2592
      %v2595 = vld [vmem:[#allocation2 + $0x1d8] sm:$0x33]
      %v2596 = vsel %vm648, %v2593, %v2595
      %2597 = vst [vmem:[#allocation2 + $0x1d8] sm:$0x33] %v2596
      %v2598 = vrot.slane %v2469, 4
      %v2599 = vrot.slane %v2534, 5
      %v2600 = vrot.slane %v2537, 6
      %v2601 = vor.u32 %v2599, %v2600
      %v2602 = vrot.slane %v2601, 4
      %2603 = vrot.lane.b32.xlu0 %v2598, 127
      %v2604 = vpop.permute.xlu0 %2603
      %2605 = vrot.lane.b32.xlu0 %v2602, 127
      %v2606 = vpop.permute.xlu0 %2605
      %v2607 = vrot.slane %v2604, 4
      %v2608 = vrot.slane %v2606, 4
      %v2609 = vsel %vm300, %v2607, %v2608
      %v2610 = vsel %vm302, %v2604, %v2609
      %v2612 = vld [vmem:[#allocation2 + $0x1e0] sm:$0x33]
      %v2613 = vsel %vm648, %v2610, %v2612
      %2614 = vst [vmem:[#allocation2 + $0x1e0] sm:$0x33] %v2613
      %v2615 = vrot.slane %v2450, 6
      %v2616 = vrot.slane %v2615, 4
      %2617 = vrot.lane.b32.xlu0 %v2478, 127
      %v2618 = vpop.permute.xlu0 %2617
      %2619 = vrot.lane.b32.xlu0 %v2616, 127
      %v2620 = vpop.permute.xlu0 %2619
      %v2621 = vrot.slane %v2618, 4
      %v2622 = vrot.slane %v2620, 4
      %v2623 = vsel %vm300, %v2621, %v2622
      %v2624 = vsel %vm302, %v2618, %v2623
      %v2626 = vld [vmem:[#allocation2 + $0x1e8] sm:$0x33]
      %v2627 = vsel %vm648, %v2624, %v2626
      %2628 = vst [vmem:[#allocation2 + $0x1e8] sm:$0x33] %v2627
      %v2629 = vrot.slane %v2487, 4
      %v2630 = vrot.slane %v2519, 7
      %v2631 = vsel %vm713, %v2629, %v2630
      %v2632 = vrot.slane %v2534, 6
      %v2633 = vrot.slane %v2537, 7
      %v2634 = vor.u32 %v2632, %v2633
      %v2635 = vrot.slane %v2634, 4
      %v2637 = vshll.u32 %v2452, 16
      %v2639 = vrot.slane %v2637, 7
      %v2640 = vsel %vm713, %v2635, %v2639
      %2641 = vrot.lane.b32.xlu0 %v2631, 127
      %v2642 = vpop.permute.xlu0 %2641
      %2643 = vrot.lane.b32.xlu0 %v2640, 127
      %v2644 = vpop.permute.xlu0 %2643
      %v2645 = vrot.slane %v2642, 4
      %v2646 = vrot.slane %v2644, 4
      %v2647 = vsel %vm300, %v2645, %v2646
      %v2648 = vsel %vm302, %v2642, %v2647
      %v2650 = vld [vmem:[#allocation2 + $0x1f0] sm:$0x33]
      %v2651 = vsel %vm648, %v2648, %v2650
      %2652 = vst [vmem:[#allocation2 + $0x1f0] sm:$0x33] %v2651
      %v2655 = vrot.slane %v2451, 7
      %v2656 = vsel %vm260, %v2496, %v2655
      %v2657 = vrot.slane %v2450, 7
      %v2658 = vrot.slane %v2657, 4
      %v2659 = vrot.slane %v2452, 7
      %v2660 = vsel %vm260, %v2658, %v2659
      %2661 = vrot.lane.b32.xlu0 %v2656, 127
      %v2662 = vpop.permute.xlu0 %2661
      %2663 = vrot.lane.b32.xlu0 %v2660, 127
      %v2664 = vpop.permute.xlu0 %2663
      %v2665 = vrot.slane %v2662, 4
      %v2666 = vrot.slane %v2664, 4
      %v2667 = vsel %vm300, %v2665, %v2666
      %v2668 = vsel %vm302, %v2662, %v2667
      %v2670 = vld [vmem:[#allocation2 + $0x1f8] sm:$0x33]
      %v2671 = vsel %vm648, %v2668, %v2670
      %2672 = vst [vmem:[#allocation2 + $0x1f8] sm:$0x33] %v2671
      %2673 = vrot.lane.b32.xlu0 %v2477, 126
      %v2674 = vpop.permute.xlu0 %2673
      %2675 = vrot.lane.b32.xlu0 %v2615, 126
      %v2676 = vpop.permute.xlu0 %2675
      %v2677 = vrot.slane %v2674, 4
      %v2678 = vrot.slane %v2676, 4
      %v2679 = vsel %vm300, %v2677, %v2678
      %v2680 = vsel %vm445, %v2674, %v2679
      %v2682 = vld [vmem:[#allocation2 + $0x1c0] sm:$0xcc]
      %v2683 = vsel %vm760, %v2680, %v2682
      %2684 = vst [vmem:[#allocation2 + $0x1c0] sm:$0xcc] %v2683
      %2685 = vrot.lane.b32.xlu0 %v2487, 126
      %v2686 = vpop.permute.xlu0 %2685
      %2687 = vrot.lane.b32.xlu0 %v2634, 126
      %v2688 = vpop.permute.xlu0 %2687
      %v2689 = vrot.slane %v2686, 4
      %v2690 = vrot.slane %v2688, 4
      %v2691 = vsel %vm300, %v2689, %v2690
      %v2692 = vsel %vm445, %v2686, %v2691
      %v2694 = vld [vmem:[#allocation2 + $0x1c8] sm:$0xcc]
      %v2695 = vsel %vm760, %v2692, %v2694
      %2696 = vst [vmem:[#allocation2 + $0x1c8] sm:$0xcc] %v2695
      %2697 = vrot.lane.b32.xlu0 %v2495, 126
      %v2698 = vpop.permute.xlu0 %2697
      %2699 = vrot.lane.b32.xlu0 %v2657, 126
      %v2700 = vpop.permute.xlu0 %2699
      %v2701 = vrot.slane %v2698, 4
      %v2702 = vrot.slane %v2700, 4
      %v2703 = vsel %vm300, %v2701, %v2702
      %v2704 = vsel %vm445, %v2698, %v2703
      %v2706 = vld [vmem:[#allocation2 + $0x1d0] sm:$0xcc]
      %v2707 = vsel %vm760, %v2704, %v2706
      %2708 = vst [vmem:[#allocation2 + $0x1d0] sm:$0xcc] %v2707
      %2709 = vrot.lane.b32.xlu0 %v2504, 126
      %v2710 = vpop.permute.xlu0 %2709
      %2711 = vrot.lane.b32.xlu0 %v2539, 126
      %v2712 = vpop.permute.xlu0 %2711
      %v2713 = vrot.slane %v2710, 4
      %v2714 = vrot.slane %v2712, 4
      %v2715 = vsel %vm300, %v2713, %v2714
      %v2716 = vsel %vm445, %v2710, %v2715
      %v2718 = vld [vmem:[#allocation2 + $0x1d8] sm:$0xcc]
      %v2719 = vsel %vm760, %v2716, %v2718
      %2720 = vst [vmem:[#allocation2 + $0x1d8] sm:$0xcc] %v2719
      %2721 = vrot.lane.b32.xlu0 %v2449, 126
      %v2722 = vpop.permute.xlu0 %2721
      %2723 = vrot.lane.b32.xlu0 %v2450, 126
      %v2724 = vpop.permute.xlu0 %2723
      %v2725 = vrot.slane %v2722, 4
      %v2726 = vrot.slane %v2724, 4
      %v2727 = vsel %vm300, %v2725, %v2726
      %v2728 = vsel %vm445, %v2722, %v2727
      %v2730 = vld [vmem:[#allocation2 + $0x1e0] sm:$0xcc]
      %v2731 = vsel %vm760, %v2728, %v2730
      %2732 = vst [vmem:[#allocation2 + $0x1e0] sm:$0xcc] %v2731
      %2733 = vrot.lane.b32.xlu0 %v2567, 126
      %v2734 = vpop.permute.xlu0 %2733
      %2735 = vrot.lane.b32.xlu0 %v2571, 126
      %v2736 = vpop.permute.xlu0 %2735
      %v2737 = vrot.slane %v2734, 4
      %v2738 = vrot.slane %v2736, 4
      %v2739 = vsel %vm300, %v2737, %v2738
      %v2740 = vsel %vm445, %v2734, %v2739
      %v2742 = vld [vmem:[#allocation2 + $0x1e8] sm:$0xcc]
      %v2743 = vsel %vm760, %v2740, %v2742
      %2744 = vst [vmem:[#allocation2 + $0x1e8] sm:$0xcc] %v2743
      %v2745 = vrot.slane %v2451, 5
      %v2746 = vsel %vm826, %v2455, %v2745
      %v2747 = vrot.slane %v2452, 5
      %v2748 = vsel %vm826, %v2585, %v2747
      %2749 = vrot.lane.b32.xlu0 %v2746, 126
      %v2750 = vpop.permute.xlu0 %2749
      %2751 = vrot.lane.b32.xlu0 %v2748, 126
      %v2752 = vpop.permute.xlu0 %2751
      %v2753 = vrot.slane %v2750, 4
      %v2754 = vrot.slane %v2752, 4
      %v2755 = vsel %vm300, %v2753, %v2754
      %v2756 = vsel %vm445, %v2750, %v2755
      %v2758 = vld [vmem:[#allocation2 + $0x1f0] sm:$0xcc]
      %v2759 = vsel %vm760, %v2756, %v2758
      %2760 = vst [vmem:[#allocation2 + $0x1f0] sm:$0xcc] %v2759
      %v2761 = vrot.slane %v2523, 5
      %v2762 = vrot.slane %v2519, 6
      %v2763 = vor.u32 %v2761, %v2762
      %v2764 = vsel %vm388, %v2470, %v2763
      %v2765 = vrot.slane %v2599, 4
      %v2766 = vshrl.u32 %v2452, 16
      %v2768 = vrot.slane %v2766, 5
      %v2769 = vrot.slane %v2637, 6
      %v2770 = vor.u32 %v2768, %v2769
      %v2771 = vsel %vm388, %v2765, %v2770
      %2772 = vrot.lane.b32.xlu0 %v2764, 126
      %v2773 = vpop.permute.xlu0 %2772
      %2774 = vrot.lane.b32.xlu0 %v2771, 126
      %v2775 = vpop.permute.xlu0 %2774
      %v2776 = vrot.slane %v2773, 4
      %v2777 = vrot.slane %v2775, 4
      %v2778 = vsel %vm300, %v2776, %v2777
      %v2779 = vsel %vm445, %v2773, %v2778
      %v2781 = vld [vmem:[#allocation2 + $0x1f8] sm:$0xcc]
      %v2782 = vsel %vm760, %v2779, %v2781
      %2783 = vst [vmem:[#allocation2 + $0x1f8] sm:$0xcc] %v2782
      %2784 = vrot.lane.b32.xlu0 %v2565, 111
      %v2785 = vpop.permute.xlu0 %2784
      %2786 = vrot.lane.b32.xlu0 %v2569, 111
      %v2787 = vpop.permute.xlu0 %2786
      %2788 = vrot.lane.b32.xlu0 %v2567, 111
      %v2789 = vpop.permute.xlu0 %2788
      %2790 = vrot.lane.b32.xlu0 %v2571, 111
      %v2791 = vpop.permute.xlu0 %2790
      %v2792 = vrot.slane %v2785, 4
      %v2793 = vrot.slane %v2787, 4
      %v2794 = vrot.slane %v2789, 4
      %v2795 = vrot.slane %v2791, 4
      %v2796 = vsel %vm300, %v2792, %v2793
      %v2797 = vsel %vm641, %v2785, %v2796
      %v2798 = vsel %vm300, %v2794, %v2795
      %v2799 = vsel %vm641, %v2789, %v2798
      %v2802 = vld [vmem:[#allocation2 + $0x1c0] sm:$0x88]
      %v2803 = vsel %vm886, %v2797, %v2802
      %2804 = vst [vmem:[#allocation2 + $0x1c0] sm:$0x88] %v2803
      %2805 = vst [vmem:[#allocation2 + $0x200] sm:$0x11] %v2799
      %2806 = vrot.lane.b32.xlu0 %v2454, 111
      %v2807 = vpop.permute.xlu0 %2806
      %2808 = vrot.lane.b32.xlu0 %v2584, 111
      %v2809 = vpop.permute.xlu0 %2808
      %2810 = vrot.lane.b32.xlu0 %v2455, 111
      %v2811 = vpop.permute.xlu0 %2810
      %2812 = vrot.lane.b32.xlu0 %v2585, 111
      %v2813 = vpop.permute.xlu0 %2812
      %v2814 = vrot.slane %v2807, 4
      %v2815 = vrot.slane %v2809, 4
      %v2816 = vrot.slane %v2811, 4
      %v2817 = vrot.slane %v2813, 4
      %v2818 = vsel %vm300, %v2814, %v2815
      %v2819 = vsel %vm641, %v2807, %v2818
      %v2820 = vsel %vm300, %v2816, %v2817
      %v2821 = vsel %vm641, %v2811, %v2820
      %v2824 = vld [vmem:[#allocation2 + $0x1c8] sm:$0x88]
      %v2825 = vsel %vm886, %v2819, %v2824
      %2826 = vst [vmem:[#allocation2 + $0x1c8] sm:$0x88] %v2825
      %2827 = vst [vmem:[#allocation2 + $0x208] sm:$0x11] %v2821
      %2828 = vrot.lane.b32.xlu0 %v2468, 111
      %v2829 = vpop.permute.xlu0 %2828
      %2830 = vrot.lane.b32.xlu0 %v2600, 111
      %v2831 = vpop.permute.xlu0 %2830
      %2832 = vrot.lane.b32.xlu0 %v2598, 111
      %v2833 = vpop.permute.xlu0 %2832
      %2834 = vrot.lane.b32.xlu0 %v2602, 111
      %v2835 = vpop.permute.xlu0 %2834
      %v2836 = vrot.slane %v2829, 4
      %v2837 = vrot.slane %v2831, 4
      %v2838 = vrot.slane %v2833, 4
      %v2839 = vrot.slane %v2835, 4
      %v2840 = vsel %vm300, %v2836, %v2837
      %v2841 = vsel %vm641, %v2829, %v2840
      %v2842 = vsel %vm300, %v2838, %v2839
      %v2843 = vsel %vm641, %v2833, %v2842
      %v2846 = vld [vmem:[#allocation2 + $0x1d0] sm:$0x88]
      %v2847 = vsel %vm886, %v2841, %v2846
      %2848 = vst [vmem:[#allocation2 + $0x1d0] sm:$0x88] %v2847
      %2849 = vst [vmem:[#allocation2 + $0x210] sm:$0x11] %v2843
      %2850 = vrot.lane.b32.xlu0 %v2477, 111
      %v2851 = vpop.permute.xlu0 %2850
      %2852 = vrot.lane.b32.xlu0 %v2615, 111
      %v2853 = vpop.permute.xlu0 %2852
      %2854 = vrot.lane.b32.xlu0 %v2478, 111
      %v2855 = vpop.permute.xlu0 %2854
      %2856 = vrot.lane.b32.xlu0 %v2616, 111
      %v2857 = vpop.permute.xlu0 %2856
      %v2858 = vrot.slane %v2851, 4
      %v2859 = vrot.slane %v2853, 4
      %v2860 = vrot.slane %v2855, 4
      %v2861 = vrot.slane %v2857, 4
      %v2862 = vsel %vm300, %v2858, %v2859
      %v2863 = vsel %vm641, %v2851, %v2862
      %v2864 = vsel %vm300, %v2860, %v2861
      %v2865 = vsel %vm641, %v2855, %v2864
      %v2868 = vld [vmem:[#allocation2 + $0x1d8] sm:$0x88]
      %v2869 = vsel %vm886, %v2863, %v2868
      %2870 = vst [vmem:[#allocation2 + $0x1d8] sm:$0x88] %v2869
      %2871 = vst [vmem:[#allocation2 + $0x218] sm:$0x11] %v2865
      %2872 = vrot.lane.b32.xlu0 %v2486, 111
      %v2873 = vpop.permute.xlu0 %2872
      %2874 = vrot.lane.b32.xlu0 %v2633, 111
      %v2875 = vpop.permute.xlu0 %2874
      %2876 = vrot.lane.b32.xlu0 %v2629, 111
      %v2877 = vpop.permute.xlu0 %2876
      %2878 = vrot.lane.b32.xlu0 %v2635, 111
      %v2879 = vpop.permute.xlu0 %2878
      %v2880 = vrot.slane %v2873, 4
      %v2881 = vrot.slane %v2875, 4
      %v2882 = vrot.slane %v2877, 4
      %v2883 = vrot.slane %v2879, 4
      %v2884 = vsel %vm300, %v2880, %v2881
      %v2885 = vsel %vm641, %v2873, %v2884
      %v2886 = vsel %vm300, %v2882, %v2883
      %v2887 = vsel %vm641, %v2877, %v2886
      %v2890 = vld [vmem:[#allocation2 + $0x1e0] sm:$0x88]
      %v2891 = vsel %vm886, %v2885, %v2890
      %2892 = vst [vmem:[#allocation2 + $0x1e0] sm:$0x88] %v2891
      %2893 = vst [vmem:[#allocation2 + $0x220] sm:$0x11] %v2887
      %2894 = vrot.lane.b32.xlu0 %v2495, 111
      %v2895 = vpop.permute.xlu0 %2894
      %2896 = vrot.lane.b32.xlu0 %v2657, 111
      %v2897 = vpop.permute.xlu0 %2896
      %2898 = vrot.lane.b32.xlu0 %v2496, 111
      %v2899 = vpop.permute.xlu0 %2898
      %2900 = vrot.lane.b32.xlu0 %v2658, 111
      %v2901 = vpop.permute.xlu0 %2900
      %v2902 = vrot.slane %v2895, 4
      %v2903 = vrot.slane %v2897, 4
      %v2904 = vrot.slane %v2899, 4
      %v2905 = vrot.slane %v2901, 4
      %v2906 = vsel %vm300, %v2902, %v2903
      %v2907 = vsel %vm641, %v2895, %v2906
      %v2908 = vsel %vm300, %v2904, %v2905
      %v2909 = vsel %vm641, %v2899, %v2908
      %v2912 = vld [vmem:[#allocation2 + $0x1e8] sm:$0x88]
      %v2913 = vsel %vm886, %v2907, %v2912
      %2914 = vst [vmem:[#allocation2 + $0x1e8] sm:$0x88] %v2913
      %2915 = vst [vmem:[#allocation2 + $0x228] sm:$0x11] %v2909
      %v2916 = vsel %vm271, %v2505, %v2519
      %v2917 = vrot.slane %v2536, 4
      %v2918 = vsel %vm271, %v2917, %v2637
      %2919 = vrot.lane.b32.xlu0 %v2466, 111
      %v2920 = vpop.permute.xlu0 %2919
      %2921 = vrot.lane.b32.xlu0 %v2537, 111
      %v2922 = vpop.permute.xlu0 %2921
      %2923 = vrot.lane.b32.xlu0 %v2916, 111
      %v2924 = vpop.permute.xlu0 %2923
      %2925 = vrot.lane.b32.xlu0 %v2918, 111
      %v2926 = vpop.permute.xlu0 %2925
      %v2927 = vrot.slane %v2920, 4
      %v2928 = vrot.slane %v2922, 4
      %v2929 = vrot.slane %v2924, 4
      %v2930 = vrot.slane %v2926, 4
      %v2931 = vsel %vm300, %v2927, %v2928
      %v2932 = vsel %vm641, %v2920, %v2931
      %v2933 = vsel %vm300, %v2929, %v2930
      %v2934 = vsel %vm641, %v2924, %v2933
      %v2937 = vld [vmem:[#allocation2 + $0x1f0] sm:$0x88]
      %v2938 = vsel %vm886, %v2932, %v2937
      %2939 = vst [vmem:[#allocation2 + $0x1f0] sm:$0x88] %v2938
      %2940 = vst [vmem:[#allocation2 + $0x230] sm:$0x11] %v2934
      %2941 = vrot.lane.b32.xlu0 %v2449, 111
      %v2942 = vpop.permute.xlu0 %2941
      %2943 = vrot.lane.b32.xlu0 %v2450, 111
      %v2944 = vpop.permute.xlu0 %2943
      %2945 = vrot.lane.b32.xlu0 %v2451, 111
      %v2946 = vpop.permute.xlu0 %2945
      %2947 = vrot.lane.b32.xlu0 %v2452, 111
      %v2948 = vpop.permute.xlu0 %2947
      %v2949 = vrot.slane %v2942, 4
      %v2950 = vrot.slane %v2944, 4
      %v2951 = vrot.slane %v2946, 4
      %v2952 = vrot.slane %v2948, 4
      %v2953 = vsel %vm300, %v2949, %v2950
      %v2954 = vsel %vm641, %v2942, %v2953
      %v2955 = vsel %vm300, %v2951, %v2952
      %v2956 = vsel %vm641, %v2946, %v2955
      %v2959 = vld [vmem:[#allocation2 + $0x1f8] sm:$0x88]
      %v2960 = vsel %vm886, %v2954, %v2959
      %2961 = vst [vmem:[#allocation2 + $0x1f8] sm:$0x88] %v2960
      %2962 = vst [vmem:[#allocation2 + $0x238] sm:$0x11] %v2956
      %2963 = vrot.lane.b32.xlu0 %v2495, 110
      %v2964 = vpop.permute.xlu0 %2963
      %2965 = vrot.lane.b32.xlu0 %v2657, 110
      %v2966 = vpop.permute.xlu0 %2965
      %v2967 = vrot.slane %v2964, 4
      %v2968 = vrot.slane %v2966, 4
      %v2969 = vsel %vm300, %v2967, %v2968
      %v2970 = vsel %vm752, %v2964, %v2969
      %v2972 = vld [vmem:[#allocation2 + $0x200] sm:$0x66]
      %v2973 = vsel %vm1060, %v2970, %v2972
      %2974 = vst [vmem:[#allocation2 + $0x200] sm:$0x66] %v2973
      %2975 = vrot.lane.b32.xlu0 %v2504, 110
      %v2976 = vpop.permute.xlu0 %2975
      %2977 = vrot.lane.b32.xlu0 %v2539, 110
      %v2978 = vpop.permute.xlu0 %2977
      %v2979 = vrot.slane %v2976, 4
      %v2980 = vrot.slane %v2978, 4
      %v2981 = vsel %vm300, %v2979, %v2980
      %v2982 = vsel %vm752, %v2976, %v2981
      %v2984 = vld [vmem:[#allocation2 + $0x208] sm:$0x66]
      %v2985 = vsel %vm1060, %v2982, %v2984
      %2986 = vst [vmem:[#allocation2 + $0x208] sm:$0x66] %v2985
      %2987 = vrot.lane.b32.xlu0 %v2449, 110
      %v2988 = vpop.permute.xlu0 %2987
      %2989 = vrot.lane.b32.xlu0 %v2450, 110
      %v2990 = vpop.permute.xlu0 %2989
      %v2991 = vrot.slane %v2988, 4
      %v2992 = vrot.slane %v2990, 4
      %v2993 = vsel %vm300, %v2991, %v2992
      %v2994 = vsel %vm752, %v2988, %v2993
      %v2996 = vld [vmem:[#allocation2 + $0x210] sm:$0x66]
      %v2997 = vsel %vm1060, %v2994, %v2996
      %2998 = vst [vmem:[#allocation2 + $0x210] sm:$0x66] %v2997
      %2999 = vrot.lane.b32.xlu0 %v2567, 110
      %v3000 = vpop.permute.xlu0 %2999
      %3001 = vrot.lane.b32.xlu0 %v2571, 110
      %v3002 = vpop.permute.xlu0 %3001
      %v3003 = vrot.slane %v3000, 4
      %v3004 = vrot.slane %v3002, 4
      %v3005 = vsel %vm300, %v3003, %v3004
      %v3006 = vsel %vm752, %v3000, %v3005
      %v3008 = vld [vmem:[#allocation2 + $0x218] sm:$0x66]
      %v3009 = vsel %vm1060, %v3006, %v3008
      %3010 = vst [vmem:[#allocation2 + $0x218] sm:$0x66] %v3009
      %3011 = vrot.lane.b32.xlu0 %v2455, 110
      %v3012 = vpop.permute.xlu0 %3011
      %3013 = vrot.lane.b32.xlu0 %v2585, 110
      %v3014 = vpop.permute.xlu0 %3013
      %v3015 = vrot.slane %v3012, 4
      %v3016 = vrot.slane %v3014, 4
      %v3017 = vsel %vm300, %v3015, %v3016
      %v3018 = vsel %vm752, %v3012, %v3017
      %v3020 = vld [vmem:[#allocation2 + $0x220] sm:$0x66]
      %v3021 = vsel %vm1060, %v3018, %v3020
      %3022 = vst [vmem:[#allocation2 + $0x220] sm:$0x66] %v3021
      %3023 = vrot.lane.b32.xlu0 %v2598, 110
      %v3024 = vpop.permute.xlu0 %3023
      %3025 = vrot.lane.b32.xlu0 %v2602, 110
      %v3026 = vpop.permute.xlu0 %3025
      %v3027 = vrot.slane %v3024, 4
      %v3028 = vrot.slane %v3026, 4
      %v3029 = vsel %vm300, %v3027, %v3028
      %v3030 = vsel %vm752, %v3024, %v3029
      %v3032 = vld [vmem:[#allocation2 + $0x228] sm:$0x66]
      %v3033 = vsel %vm1060, %v3030, %v3032
      %3034 = vst [vmem:[#allocation2 + $0x228] sm:$0x66] %v3033
      %v3035 = vrot.slane %v2451, 6
      %v3036 = vsel %vm413, %v2478, %v3035
      %v3037 = vrot.slane %v2452, 6
      %v3038 = vsel %vm413, %v2616, %v3037
      %3039 = vrot.lane.b32.xlu0 %v3036, 110
      %v3040 = vpop.permute.xlu0 %3039
      %3041 = vrot.lane.b32.xlu0 %v3038, 110
      %v3042 = vpop.permute.xlu0 %3041
      %v3043 = vrot.slane %v3040, 4
      %v3044 = vrot.slane %v3042, 4
      %v3045 = vsel %vm300, %v3043, %v3044
      %v3046 = vsel %vm752, %v3040, %v3045
      %v3048 = vld [vmem:[#allocation2 + $0x230] sm:$0x66]
      %v3049 = vsel %vm1060, %v3046, %v3048
      %3050 = vst [vmem:[#allocation2 + $0x230] sm:$0x66] %v3049
      %v3051 = vrot.slane %v2523, 6
      %v3052 = vor.u32 %v3051, %v2630
      %v3053 = vsel %vm713, %v2488, %v3052
      %v3054 = vrot.slane %v2632, 4
      %v3055 = vrot.slane %v2766, 6
      %v3056 = vor.u32 %v3055, %v2639
      %v3057 = vsel %vm713, %v3054, %v3056
      %3058 = vrot.lane.b32.xlu0 %v3053, 110
      %v3059 = vpop.permute.xlu0 %3058
      %3060 = vrot.lane.b32.xlu0 %v3057, 110
      %v3061 = vpop.permute.xlu0 %3060
      %v3062 = vrot.slane %v3059, 4
      %v3063 = vrot.slane %v3061, 4
      %v3064 = vsel %vm300, %v3062, %v3063
      %v3065 = vsel %vm752, %v3059, %v3064
      %v3067 = vld [vmem:[#allocation2 + $0x238] sm:$0x66]
      %v3068 = vsel %vm1060, %v3065, %v3067
      %3069 = vst [vmem:[#allocation2 + $0x238] sm:$0x66] %v3068
      %3070 = vrot.lane.b32.xlu0 %v2469, 109
      %v3071 = vpop.permute.xlu0 %3070
      %3072 = vrot.lane.b32.xlu0 %v2601, 109
      %v3073 = vpop.permute.xlu0 %3072
      %v3074 = vrot.slane %v3071, 4
      %v3075 = vrot.slane %v3073, 4
      %v3076 = vsel %vm300, %v3074, %v3075
      %v3077 = vsel %vm874, %v3071, %v3076
      %v3079 = vld [vmem:[#allocation2 + $0x200] sm:$0xcc]
      %v3080 = vsel %vm1168, %v3077, %v3079
      %3081 = vst [vmem:[#allocation2 + $0x200] sm:$0xcc] %v3080
      %3082 = vrot.lane.b32.xlu0 %v2477, 109
      %v3083 = vpop.permute.xlu0 %3082
      %3084 = vrot.lane.b32.xlu0 %v2615, 109
      %v3085 = vpop.permute.xlu0 %3084
      %v3086 = vrot.slane %v3083, 4
      %v3087 = vrot.slane %v3085, 4
      %v3088 = vsel %vm300, %v3086, %v3087
      %v3089 = vsel %vm874, %v3083, %v3088
      %v3091 = vld [vmem:[#allocation2 + $0x208] sm:$0xcc]
      %v3092 = vsel %vm1168, %v3089, %v3091
      %3093 = vst [vmem:[#allocation2 + $0x208] sm:$0xcc] %v3092
      %3094 = vrot.lane.b32.xlu0 %v2487, 109
      %v3095 = vpop.permute.xlu0 %3094
      %3096 = vrot.lane.b32.xlu0 %v2634, 109
      %v3097 = vpop.permute.xlu0 %3096
      %v3098 = vrot.slane %v3095, 4
      %v3099 = vrot.slane %v3097, 4
      %v3100 = vsel %vm300, %v3098, %v3099
      %v3101 = vsel %vm874, %v3095, %v3100
      %v3103 = vld [vmem:[#allocation2 + $0x210] sm:$0xcc]
      %v3104 = vsel %vm1168, %v3101, %v3103
      %3105 = vst [vmem:[#allocation2 + $0x210] sm:$0xcc] %v3104
      %3106 = vrot.lane.b32.xlu0 %v2495, 109
      %v3107 = vpop.permute.xlu0 %3106
      %3108 = vrot.lane.b32.xlu0 %v2657, 109
      %v3109 = vpop.permute.xlu0 %3108
      %v3110 = vrot.slane %v3107, 4
      %v3111 = vrot.slane %v3109, 4
      %v3112 = vsel %vm300, %v3110, %v3111
      %v3113 = vsel %vm874, %v3107, %v3112
      %v3115 = vld [vmem:[#allocation2 + $0x218] sm:$0xcc]
      %v3116 = vsel %vm1168, %v3113, %v3115
      %3117 = vst [vmem:[#allocation2 + $0x218] sm:$0xcc] %v3116
      %3118 = vrot.lane.b32.xlu0 %v2504, 109
      %v3119 = vpop.permute.xlu0 %3118
      %3120 = vrot.lane.b32.xlu0 %v2539, 109
      %v3121 = vpop.permute.xlu0 %3120
      %v3122 = vrot.slane %v3119, 4
      %v3123 = vrot.slane %v3121, 4
      %v3124 = vsel %vm300, %v3122, %v3123
      %v3125 = vsel %vm874, %v3119, %v3124
      %v3127 = vld [vmem:[#allocation2 + $0x220] sm:$0xcc]
      %v3128 = vsel %vm1168, %v3125, %v3127
      %3129 = vst [vmem:[#allocation2 + $0x220] sm:$0xcc] %v3128
      %3130 = vrot.lane.b32.xlu0 %v2449, 109
      %v3131 = vpop.permute.xlu0 %3130
      %3132 = vrot.lane.b32.xlu0 %v2450, 109
      %v3133 = vpop.permute.xlu0 %3132
      %v3134 = vrot.slane %v3131, 4
      %v3135 = vrot.slane %v3133, 4
      %v3136 = vsel %vm300, %v3134, %v3135
      %v3137 = vsel %vm874, %v3131, %v3136
      %v3139 = vld [vmem:[#allocation2 + $0x228] sm:$0xcc]
      %v3140 = vsel %vm1168, %v3137, %v3139
      %3141 = vst [vmem:[#allocation2 + $0x228] sm:$0xcc] %v3140
      %v3142 = vsel %vm599, %v2567, %v2521
      %v3143 = vrot.slane %v2637, 5
      %v3144 = vsel %vm599, %v2571, %v3143
      %3145 = vrot.lane.b32.xlu0 %v3142, 109
      %v3146 = vpop.permute.xlu0 %3145
      %3147 = vrot.lane.b32.xlu0 %v3144, 109
      %v3148 = vpop.permute.xlu0 %3147
      %v3149 = vrot.slane %v3146, 4
      %v3150 = vrot.slane %v3148, 4
      %v3151 = vsel %vm300, %v3149, %v3150
      %v3152 = vsel %vm874, %v3146, %v3151
      %v3154 = vld [vmem:[#allocation2 + $0x230] sm:$0xcc]
      %v3155 = vsel %vm1168, %v3152, %v3154
      %3156 = vst [vmem:[#allocation2 + $0x230] sm:$0xcc] %v3155
      %3157 = vrot.lane.b32.xlu0 %v2746, 109
      %v3158 = vpop.permute.xlu0 %3157
      %3159 = vrot.lane.b32.xlu0 %v2748, 109
      %v3160 = vpop.permute.xlu0 %3159
      %v3161 = vrot.slane %v3158, 4
      %v3162 = vrot.slane %v3160, 4
      %v3163 = vsel %vm300, %v3161, %v3162
      %v3164 = vsel %vm874, %v3158, %v3163
      %v3166 = vld [vmem:[#allocation2 + $0x238] sm:$0xcc]
      %v3167 = vsel %vm1168, %v3164, %v3166
      %3168 = vst [vmem:[#allocation2 + $0x238] sm:$0xcc] %v3167
      %3169 = vrot.lane.b32.xlu0 %v2449, 94
      %v3170 = vpop.permute.xlu0 %3169
      %3171 = vrot.lane.b32.xlu0 %v2450, 94
      %v3172 = vpop.permute.xlu0 %3171
      %v3173 = vrot.slane %v3170, 4
      %v3174 = vrot.slane %v3172, 4
      %v3175 = vsel %vm300, %v3173, %v3174
      %v3176 = vsel %vm1054, %v3170, %v3175
      %v3178 = vld [vmem:[#allocation2 + $0x240] sm:$0x33]
      %v3179 = vsel %vm211, %v3176, %v3178
      %3180 = vst [vmem:[#allocation2 + $0x240] sm:$0x33] %v3179
      %3181 = vrot.lane.b32.xlu0 %v2567, 94
      %v3182 = vpop.permute.xlu0 %3181
      %3183 = vrot.lane.b32.xlu0 %v2571, 94
      %v3184 = vpop.permute.xlu0 %3183
      %v3185 = vrot.slane %v3182, 4
      %v3186 = vrot.slane %v3184, 4
      %v3187 = vsel %vm300, %v3185, %v3186
      %v3188 = vsel %vm1054, %v3182, %v3187
      %v3190 = vld [vmem:[#allocation2 + $0x248] sm:$0x33]
      %v3191 = vsel %vm211, %v3188, %v3190
      %3192 = vst [vmem:[#allocation2 + $0x248] sm:$0x33] %v3191
      %3193 = vrot.lane.b32.xlu0 %v2455, 94
      %v3194 = vpop.permute.xlu0 %3193
      %3195 = vrot.lane.b32.xlu0 %v2585, 94
      %v3196 = vpop.permute.xlu0 %3195
      %v3197 = vrot.slane %v3194, 4
      %v3198 = vrot.slane %v3196, 4
      %v3199 = vsel %vm300, %v3197, %v3198
      %v3200 = vsel %vm1054, %v3194, %v3199
      %v3202 = vld [vmem:[#allocation2 + $0x250] sm:$0x33]
      %v3203 = vsel %vm211, %v3200, %v3202
      %3204 = vst [vmem:[#allocation2 + $0x250] sm:$0x33] %v3203
      %3205 = vrot.lane.b32.xlu0 %v2598, 94
      %v3206 = vpop.permute.xlu0 %3205
      %3207 = vrot.lane.b32.xlu0 %v2602, 94
      %v3208 = vpop.permute.xlu0 %3207
      %v3209 = vrot.slane %v3206, 4
      %v3210 = vrot.slane %v3208, 4
      %v3211 = vsel %vm300, %v3209, %v3210
      %v3212 = vsel %vm1054, %v3206, %v3211
      %v3214 = vld [vmem:[#allocation2 + $0x258] sm:$0x33]
      %v3215 = vsel %vm211, %v3212, %v3214
      %3216 = vst [vmem:[#allocation2 + $0x258] sm:$0x33] %v3215
      %3217 = vrot.lane.b32.xlu0 %v2478, 94
      %v3218 = vpop.permute.xlu0 %3217
      %3219 = vrot.lane.b32.xlu0 %v2616, 94
      %v3220 = vpop.permute.xlu0 %3219
      %v3221 = vrot.slane %v3218, 4
      %v3222 = vrot.slane %v3220, 4
      %v3223 = vsel %vm300, %v3221, %v3222
      %v3224 = vsel %vm1054, %v3218, %v3223
      %v3226 = vld [vmem:[#allocation2 + $0x260] sm:$0x33]
      %v3227 = vsel %vm211, %v3224, %v3226
      %3228 = vst [vmem:[#allocation2 + $0x260] sm:$0x33] %v3227
      %3229 = vrot.lane.b32.xlu0 %v2629, 94
      %v3230 = vpop.permute.xlu0 %3229
      %3231 = vrot.lane.b32.xlu0 %v2635, 94
      %v3232 = vpop.permute.xlu0 %3231
      %v3233 = vrot.slane %v3230, 4
      %v3234 = vrot.slane %v3232, 4
      %v3235 = vsel %vm300, %v3233, %v3234
      %v3236 = vsel %vm1054, %v3230, %v3235
      %v3238 = vld [vmem:[#allocation2 + $0x268] sm:$0x33]
      %v3239 = vsel %vm211, %v3236, %v3238
      %3240 = vst [vmem:[#allocation2 + $0x268] sm:$0x33] %v3239
      %3241 = vrot.lane.b32.xlu0 %v2656, 94
      %v3242 = vpop.permute.xlu0 %3241
      %3243 = vrot.lane.b32.xlu0 %v2660, 94
      %v3244 = vpop.permute.xlu0 %3243
      %v3245 = vrot.slane %v3242, 4
      %v3246 = vrot.slane %v3244, 4
      %v3247 = vsel %vm300, %v3245, %v3246
      %v3248 = vsel %vm1054, %v3242, %v3247
      %v3250 = vld [vmem:[#allocation2 + $0x270] sm:$0x33]
      %v3251 = vsel %vm211, %v3248, %v3250
      %3252 = vst [vmem:[#allocation2 + $0x270] sm:$0x33] %v3251
      %v3253 = vrot.slane %v2523, 7
      %v3254 = vor.u32 %v3253, %v2519
      %v3255 = vsel %vm271, %v2505, %v3254
      %v3256 = vrot.slane %v2766, 7
      %v3257 = vor.u32 %v3256, %v2637
      %v3258 = vsel %vm271, %v2917, %v3257
      %3259 = vrot.lane.b32.xlu0 %v3255, 94
      %v3260 = vpop.permute.xlu0 %3259
      %3261 = vrot.lane.b32.xlu0 %v3258, 94
      %v3262 = vpop.permute.xlu0 %3261
      %v3263 = vrot.slane %v3260, 4
      %v3264 = vrot.slane %v3262, 4
      %v3265 = vsel %vm300, %v3263, %v3264
      %v3266 = vsel %vm1054, %v3260, %v3265
      %v3268 = vld [vmem:[#allocation2 + $0x278] sm:$0x33]
      %v3269 = vsel %vm211, %v3266, %v3268
      %3270 = vst [vmem:[#allocation2 + $0x278] sm:$0x33] %v3269
      %3271 = vrot.lane.b32.xlu0 %v2487, 93
      %v3272 = vpop.permute.xlu0 %3271
      %3273 = vrot.lane.b32.xlu0 %v2634, 93
      %v3274 = vpop.permute.xlu0 %3273
      %v3275 = vrot.slane %v3272, 4
      %v3276 = vrot.slane %v3274, 4
      %v3277 = vsel %vm300, %v3275, %v3276
      %v3278 = vsel %vm1161, %v3272, %v3277
      %v3280 = vld [vmem:[#allocation2 + $0x240] sm:$0x66]
      %v3281 = vsel %vm311, %v3278, %v3280
      %3282 = vst [vmem:[#allocation2 + $0x240] sm:$0x66] %v3281
      %3283 = vrot.lane.b32.xlu0 %v2495, 93
      %v3284 = vpop.permute.xlu0 %3283
      %3285 = vrot.lane.b32.xlu0 %v2657, 93
      %v3286 = vpop.permute.xlu0 %3285
      %v3287 = vrot.slane %v3284, 4
      %v3288 = vrot.slane %v3286, 4
      %v3289 = vsel %vm300, %v3287, %v3288
      %v3290 = vsel %vm1161, %v3284, %v3289
      %v3292 = vld [vmem:[#allocation2 + $0x248] sm:$0x66]
      %v3293 = vsel %vm311, %v3290, %v3292
      %3294 = vst [vmem:[#allocation2 + $0x248] sm:$0x66] %v3293
      %3295 = vrot.lane.b32.xlu0 %v2504, 93
      %v3296 = vpop.permute.xlu0 %3295
      %3297 = vrot.lane.b32.xlu0 %v2539, 93
      %v3298 = vpop.permute.xlu0 %3297
      %v3299 = vrot.slane %v3296, 4
      %v3300 = vrot.slane %v3298, 4
      %v3301 = vsel %vm300, %v3299, %v3300
      %v3302 = vsel %vm1161, %v3296, %v3301
      %v3304 = vld [vmem:[#allocation2 + $0x250] sm:$0x66]
      %v3305 = vsel %vm311, %v3302, %v3304
      %3306 = vst [vmem:[#allocation2 + $0x250] sm:$0x66] %v3305
      %3307 = vrot.lane.b32.xlu0 %v2449, 93
      %v3308 = vpop.permute.xlu0 %3307
      %3309 = vrot.lane.b32.xlu0 %v2450, 93
      %v3310 = vpop.permute.xlu0 %3309
      %v3311 = vrot.slane %v3308, 4
      %v3312 = vrot.slane %v3310, 4
      %v3313 = vsel %vm300, %v3311, %v3312
      %v3314 = vsel %vm1161, %v3308, %v3313
      %v3316 = vld [vmem:[#allocation2 + $0x258] sm:$0x66]
      %v3317 = vsel %vm311, %v3314, %v3316
      %3318 = vst [vmem:[#allocation2 + $0x258] sm:$0x66] %v3317
      %3319 = vrot.lane.b32.xlu0 %v2567, 93
      %v3320 = vpop.permute.xlu0 %3319
      %3321 = vrot.lane.b32.xlu0 %v2571, 93
      %v3322 = vpop.permute.xlu0 %3321
      %v3323 = vrot.slane %v3320, 4
      %v3324 = vrot.slane %v3322, 4
      %v3325 = vsel %vm300, %v3323, %v3324
      %v3326 = vsel %vm1161, %v3320, %v3325
      %v3328 = vld [vmem:[#allocation2 + $0x260] sm:$0x66]
      %v3329 = vsel %vm311, %v3326, %v3328
      %3330 = vst [vmem:[#allocation2 + $0x260] sm:$0x66] %v3329
      %3331 = vrot.lane.b32.xlu0 %v2455, 93
      %v3332 = vpop.permute.xlu0 %3331
      %3333 = vrot.lane.b32.xlu0 %v2585, 93
      %v3334 = vpop.permute.xlu0 %3333
      %v3335 = vrot.slane %v3332, 4
      %v3336 = vrot.slane %v3334, 4
      %v3337 = vsel %vm300, %v3335, %v3336
      %v3338 = vsel %vm1161, %v3332, %v3337
      %v3340 = vld [vmem:[#allocation2 + $0x268] sm:$0x66]
      %v3341 = vsel %vm311, %v3338, %v3340
      %3342 = vst [vmem:[#allocation2 + $0x268] sm:$0x66] %v3341
      %v3343 = vsel %vm388, %v2598, %v2762
      %v3344 = vsel %vm388, %v2602, %v2769
      %3345 = vrot.lane.b32.xlu0 %v3343, 93
      %v3346 = vpop.permute.xlu0 %3345
      %3347 = vrot.lane.b32.xlu0 %v3344, 93
      %v3348 = vpop.permute.xlu0 %3347
      %v3349 = vrot.slane %v3346, 4
      %v3350 = vrot.slane %v3348, 4
      %v3351 = vsel %vm300, %v3349, %v3350
      %v3352 = vsel %vm1161, %v3346, %v3351
      %v3354 = vld [vmem:[#allocation2 + $0x270] sm:$0x66]
      %v3355 = vsel %vm311, %v3352, %v3354
      %3356 = vst [vmem:[#allocation2 + $0x270] sm:$0x66] %v3355
      %3357 = vrot.lane.b32.xlu0 %v3036, 93
      %v3358 = vpop.permute.xlu0 %3357
      %3359 = vrot.lane.b32.xlu0 %v3038, 93
      %v3360 = vpop.permute.xlu0 %3359
      %v3361 = vrot.slane %v3358, 4
      %v3362 = vrot.slane %v3360, 4
      %v3363 = vsel %vm300, %v3361, %v3362
      %v3364 = vsel %vm1161, %v3358, %v3363
      %v3366 = vld [vmem:[#allocation2 + $0x278] sm:$0x66]
      %v3367 = vsel %vm311, %v3364, %v3366
      %3368 = vst [vmem:[#allocation2 + $0x278] sm:$0x66] %v3367
      %3369 = vrot.lane.b32.xlu0 %v2454, 92
      %v3370 = vpop.permute.xlu0 %3369
      %3371 = vrot.lane.b32.xlu0 %v2584, 92
      %v3372 = vpop.permute.xlu0 %3371
      %3373 = vrot.lane.b32.xlu0 %v2455, 92
      %v3374 = vpop.permute.xlu0 %3373
      %3375 = vrot.lane.b32.xlu0 %v2585, 92
      %v3376 = vpop.permute.xlu0 %3375
      %v3377 = vrot.slane %v3370, 4
      %v3378 = vrot.slane %v3372, 4
      %v3379 = vrot.slane %v3374, 4
      %v3380 = vrot.slane %v3376, 4
      %v3381 = vsel %vm300, %v3377, %v3378
      %v3382 = vsel %vm1265, %v3370, %v3381
      %v3383 = vsel %vm300, %v3379, %v3380
      %v3384 = vsel %vm1265, %v3374, %v3383
      %3387 = vst [vmem:[#allocation2 + $0x240] sm:$0x88] %v3382
      %v3388 = vld [vmem:[#allocation2 + $0x280] sm:$0x11]
      %v3389 = vsel %vm455, %v3384, %v3388
      %3390 = vst [vmem:[#allocation2 + $0x280] sm:$0x11] %v3389
      %3391 = vrot.lane.b32.xlu0 %v2469, 92
      %v3392 = vpop.permute.xlu0 %3391
      %3393 = vrot.lane.b32.xlu0 %v2601, 92
      %v3394 = vpop.permute.xlu0 %3393
      %3395 = vrot.lane.b32.xlu0 %v2470, 92
      %v3396 = vpop.permute.xlu0 %3395
      %3397 = vrot.lane.b32.xlu0 %v2765, 92
      %v3398 = vpop.permute.xlu0 %3397
      %v3399 = vrot.slane %v3392, 4
      %v3400 = vrot.slane %v3394, 4
      %v3401 = vrot.slane %v3396, 4
      %v3402 = vrot.slane %v3398, 4
      %v3403 = vsel %vm300, %v3399, %v3400
      %v3404 = vsel %vm1265, %v3392, %v3403
      %v3405 = vsel %vm300, %v3401, %v3402
      %v3406 = vsel %vm1265, %v3396, %v3405
      %3409 = vst [vmem:[#allocation2 + $0x248] sm:$0x88] %v3404
      %v3410 = vld [vmem:[#allocation2 + $0x288] sm:$0x11]
      %v3411 = vsel %vm455, %v3406, %v3410
      %3412 = vst [vmem:[#allocation2 + $0x288] sm:$0x11] %v3411
      %3413 = vrot.lane.b32.xlu0 %v2477, 92
      %v3414 = vpop.permute.xlu0 %3413
      %3415 = vrot.lane.b32.xlu0 %v2615, 92
      %v3416 = vpop.permute.xlu0 %3415
      %3417 = vrot.lane.b32.xlu0 %v2478, 92
      %v3418 = vpop.permute.xlu0 %3417
      %3419 = vrot.lane.b32.xlu0 %v2616, 92
      %v3420 = vpop.permute.xlu0 %3419
      %v3421 = vrot.slane %v3414, 4
      %v3422 = vrot.slane %v3416, 4
      %v3423 = vrot.slane %v3418, 4
      %v3424 = vrot.slane %v3420, 4
      %v3425 = vsel %vm300, %v3421, %v3422
      %v3426 = vsel %vm1265, %v3414, %v3425
      %v3427 = vsel %vm300, %v3423, %v3424
      %v3428 = vsel %vm1265, %v3418, %v3427
      %3431 = vst [vmem:[#allocation2 + $0x250] sm:$0x88] %v3426
      %v3432 = vld [vmem:[#allocation2 + $0x290] sm:$0x11]
      %v3433 = vsel %vm455, %v3428, %v3432
      %3434 = vst [vmem:[#allocation2 + $0x290] sm:$0x11] %v3433
      %3435 = vrot.lane.b32.xlu0 %v2487, 92
      %v3436 = vpop.permute.xlu0 %3435
      %3437 = vrot.lane.b32.xlu0 %v2634, 92
      %v3438 = vpop.permute.xlu0 %3437
      %3439 = vrot.lane.b32.xlu0 %v2488, 92
      %v3440 = vpop.permute.xlu0 %3439
      %3441 = vrot.lane.b32.xlu0 %v3054, 92
      %v3442 = vpop.permute.xlu0 %3441
      %v3443 = vrot.slane %v3436, 4
      %v3444 = vrot.slane %v3438, 4
      %v3445 = vrot.slane %v3440, 4
      %v3446 = vrot.slane %v3442, 4
      %v3447 = vsel %vm300, %v3443, %v3444
      %v3448 = vsel %vm1265, %v3436, %v3447
      %v3449 = vsel %vm300, %v3445, %v3446
      %v3450 = vsel %vm1265, %v3440, %v3449
      %3453 = vst [vmem:[#allocation2 + $0x258] sm:$0x88] %v3448
      %v3454 = vld [vmem:[#allocation2 + $0x298] sm:$0x11]
      %v3455 = vsel %vm455, %v3450, %v3454
      %3456 = vst [vmem:[#allocation2 + $0x298] sm:$0x11] %v3455
      %3457 = vrot.lane.b32.xlu0 %v2495, 92
      %v3458 = vpop.permute.xlu0 %3457
      %3459 = vrot.lane.b32.xlu0 %v2657, 92
      %v3460 = vpop.permute.xlu0 %3459
      %3461 = vrot.lane.b32.xlu0 %v2496, 92
      %v3462 = vpop.permute.xlu0 %3461
      %3463 = vrot.lane.b32.xlu0 %v2658, 92
      %v3464 = vpop.permute.xlu0 %3463
      %v3465 = vrot.slane %v3458, 4
      %v3466 = vrot.slane %v3460, 4
      %v3467 = vrot.slane %v3462, 4
      %v3468 = vrot.slane %v3464, 4
      %v3469 = vsel %vm300, %v3465, %v3466
      %v3470 = vsel %vm1265, %v3458, %v3469
      %v3471 = vsel %vm300, %v3467, %v3468
      %v3472 = vsel %vm1265, %v3462, %v3471
      %3475 = vst [vmem:[#allocation2 + $0x260] sm:$0x88] %v3470
      %v3476 = vld [vmem:[#allocation2 + $0x2a0] sm:$0x11]
      %v3477 = vsel %vm455, %v3472, %v3476
      %3478 = vst [vmem:[#allocation2 + $0x2a0] sm:$0x11] %v3477
      %3479 = vrot.lane.b32.xlu0 %v2504, 92
      %v3480 = vpop.permute.xlu0 %3479
      %3481 = vrot.lane.b32.xlu0 %v2539, 92
      %v3482 = vpop.permute.xlu0 %3481
      %3483 = vrot.lane.b32.xlu0 %v2505, 92
      %v3484 = vpop.permute.xlu0 %3483
      %3485 = vrot.lane.b32.xlu0 %v2917, 92
      %v3486 = vpop.permute.xlu0 %3485
      %v3487 = vrot.slane %v3480, 4
      %v3488 = vrot.slane %v3482, 4
      %v3489 = vrot.slane %v3484, 4
      %v3490 = vrot.slane %v3486, 4
      %v3491 = vsel %vm300, %v3487, %v3488
      %v3492 = vsel %vm1265, %v3480, %v3491
      %v3493 = vsel %vm300, %v3489, %v3490
      %v3494 = vsel %vm1265, %v3484, %v3493
      %3497 = vst [vmem:[#allocation2 + $0x268] sm:$0x88] %v3492
      %v3498 = vld [vmem:[#allocation2 + $0x2a8] sm:$0x11]
      %v3499 = vsel %vm455, %v3494, %v3498
      %3500 = vst [vmem:[#allocation2 + $0x2a8] sm:$0x11] %v3499
      %3501 = vrot.lane.b32.xlu0 %v2449, 92
      %v3502 = vpop.permute.xlu0 %3501
      %3503 = vrot.lane.b32.xlu0 %v2450, 92
      %v3504 = vpop.permute.xlu0 %3503
      %3505 = vrot.lane.b32.xlu0 %v2451, 92
      %v3506 = vpop.permute.xlu0 %3505
      %3507 = vrot.lane.b32.xlu0 %v2452, 92
      %v3508 = vpop.permute.xlu0 %3507
      %v3509 = vrot.slane %v3502, 4
      %v3510 = vrot.slane %v3504, 4
      %v3511 = vrot.slane %v3506, 4
      %v3512 = vrot.slane %v3508, 4
      %v3513 = vsel %vm300, %v3509, %v3510
      %v3514 = vsel %vm1265, %v3502, %v3513
      %v3515 = vsel %vm300, %v3511, %v3512
      %v3516 = vsel %vm1265, %v3506, %v3515
      %3519 = vst [vmem:[#allocation2 + $0x270] sm:$0x88] %v3514
      %v3520 = vld [vmem:[#allocation2 + $0x2b0] sm:$0x11]
      %v3521 = vsel %vm455, %v3516, %v3520
      %3522 = vst [vmem:[#allocation2 + $0x2b0] sm:$0x11] %v3521
      %v3523 = vrot.slane %v2568, 4
      %v3524 = vsel %vm599, %v3523, %v3143
      %v3525 = vrot.slane %v2766, 4
      %v3526 = vrot.slane %v3525, 4
      %3527 = vrot.lane.b32.xlu0 %v2522, 92
      %v3528 = vpop.permute.xlu0 %3527
      %3529 = vrot.lane.b32.xlu0 %v3524, 92
      %v3530 = vpop.permute.xlu0 %3529
      %3531 = vrot.lane.b32.xlu0 %v2526, 92
      %v3532 = vpop.permute.xlu0 %3531
      %3533 = vrot.lane.b32.xlu0 %v3526, 92
      %v3534 = vpop.permute.xlu0 %3533
      %v3535 = vrot.slane %v3528, 4
      %v3536 = vrot.slane %v3530, 4
      %v3537 = vrot.slane %v3532, 4
      %v3538 = vrot.slane %v3534, 4
      %v3539 = vsel %vm300, %v3535, %v3536
      %v3540 = vsel %vm1265, %v3528, %v3539
      %v3541 = vsel %vm300, %v3537, %v3538
      %v3542 = vsel %vm1265, %v3532, %v3541
      %3545 = vst [vmem:[#allocation2 + $0x278] sm:$0x88] %v3540
      %v3546 = vld [vmem:[#allocation2 + $0x2b8] sm:$0x11]
      %v3547 = vsel %vm455, %v3542, %v3546
      %3548 = vst [vmem:[#allocation2 + $0x2b8] sm:$0x11] %v3547
      %s3549 = sadd.s32 %s198, 27
      %s3550 = smul.addr %s3549, 4
      %s3551 = scalar_lea.vmem %s183, %s3550
      %v3552 = vld [vmem:[%s3551] sm:$0xff]
      %v3553 = vld [vmem:[%s3551 + $0x8] sm:$0xf]
      %v3554 = vld [vmem:[%s3551 + $0xc] sm:$0x11]
      %v3555 = vld [vmem:[%s3551 + $0x14] sm:$0x1]
      %v3557 = vshrl.u32 %v3552, 16
      %v3559 = vrot.slane %v3557, 7
      %v3560 = vshll.u32 %v3552, 16
      %v3562 = vor.u32 %v3559, %v3560
      %v3564 = vld [vmem:[#allocation2 + $0x280] sm:$0x33]
      %v3565 = vsel %vm648, %v3562, %v3564
      %3566 = vst [vmem:[#allocation2 + $0x280] sm:$0x33] %v3565
      %v3567 = vld [vmem:[#allocation2 + $0x288] sm:$0x33]
      %v3568 = vsel %vm648, %v3552, %v3567
      %3569 = vst [vmem:[#allocation2 + $0x288] sm:$0x33] %v3568
      %v3570 = vrot.slane %v3557, 4
      %v3571 = vrot.slane %v3560, 5
      %v3572 = vor.u32 %v3570, %v3571
      %v3573 = vrot.slane %v3572, 4
      %v3575 = vld [vmem:[#allocation2 + $0x290] sm:$0x33]
      %v3576 = vsel %vm648, %v3573, %v3575
      %3577 = vst [vmem:[#allocation2 + $0x290] sm:$0x33] %v3576
      %v3579 = vrot.slane %v3552, 5
      %v3580 = vrot.slane %v3579, 4
      %v3582 = vld [vmem:[#allocation2 + $0x298] sm:$0x33]
      %v3583 = vsel %vm648, %v3580, %v3582
      %3584 = vst [vmem:[#allocation2 + $0x298] sm:$0x33] %v3583
      %v3585 = vrot.slane %v3557, 5
      %v3586 = vrot.slane %v3560, 6
      %v3587 = vor.u32 %v3585, %v3586
      %v3588 = vrot.slane %v3587, 4
      %v3590 = vld [vmem:[#allocation2 + $0x2a0] sm:$0x33]
      %v3591 = vsel %vm648, %v3588, %v3590
      %3592 = vst [vmem:[#allocation2 + $0x2a0] sm:$0x33] %v3591
      %v3593 = vrot.slane %v3552, 6
      %v3594 = vrot.slane %v3593, 4
      %v3596 = vld [vmem:[#allocation2 + $0x2a8] sm:$0x33]
      %v3597 = vsel %vm648, %v3594, %v3596
      %3598 = vst [vmem:[#allocation2 + $0x2a8] sm:$0x33] %v3597
      %v3599 = vrot.slane %v3557, 6
      %v3600 = vrot.slane %v3560, 7
      %v3601 = vor.u32 %v3599, %v3600
      %v3602 = vrot.slane %v3601, 4
      %v3604 = vshll.u32 %v3554, 16
      %v3606 = vrot.slane %v3604, 7
      %v3607 = vsel %vm713, %v3602, %v3606
      %v3609 = vld [vmem:[#allocation2 + $0x2b0] sm:$0x33]
      %v3610 = vsel %vm648, %v3607, %v3609
      %3611 = vst [vmem:[#allocation2 + $0x2b0] sm:$0x33] %v3610
      %v3613 = vrot.slane %v3552, 7
      %v3614 = vrot.slane %v3613, 4
      %v3615 = vrot.slane %v3554, 7
      %v3616 = vsel %vm260, %v3614, %v3615
      %v3618 = vld [vmem:[#allocation2 + $0x2b8] sm:$0x33]
      %v3619 = vsel %vm648, %v3616, %v3618
      %3620 = vst [vmem:[#allocation2 + $0x2b8] sm:$0x33] %v3619
      %v3622 = vrot.slane %v3553, 6
      %3623 = vrot.lane.b32.xlu0 %v3593, 127
      %v3624 = vpop.permute.xlu0 %3623
      %3625 = vrot.lane.b32.xlu0 %v3622, 127
      %v3626 = vpop.permute.xlu0 %3625
      %v3627 = vrot.slane %v3624, 4
      %v3628 = vrot.slane %v3626, 4
      %v3629 = vsel %vm300, %v3627, %v3628
      %v3630 = vsel %vm302, %v3624, %v3629
      %v3632 = vld [vmem:[#allocation2 + $0x280] sm:$0xcc]
      %v3633 = vsel %vm760, %v3630, %v3632
      %3634 = vst [vmem:[#allocation2 + $0x280] sm:$0xcc] %v3633
      %v3636 = vshrl.u32 %v3553, 16
      %v3638 = vrot.slane %v3636, 6
      %v3639 = vshll.u32 %v3553, 16
      %v3641 = vrot.slane %v3639, 7
      %v3642 = vor.u32 %v3638, %v3641
      %3643 = vrot.lane.b32.xlu0 %v3601, 127
      %v3644 = vpop.permute.xlu0 %3643
      %3645 = vrot.lane.b32.xlu0 %v3642, 127
      %v3646 = vpop.permute.xlu0 %3645
      %v3647 = vrot.slane %v3644, 4
      %v3648 = vrot.slane %v3646, 4
      %v3649 = vsel %vm300, %v3647, %v3648
      %v3650 = vsel %vm302, %v3644, %v3649
      %v3652 = vld [vmem:[#allocation2 + $0x288] sm:$0xcc]
      %v3653 = vsel %vm760, %v3650, %v3652
      %3654 = vst [vmem:[#allocation2 + $0x288] sm:$0xcc] %v3653
      %v3655 = vrot.slane %v3553, 7
      %3656 = vrot.lane.b32.xlu0 %v3613, 127
      %v3657 = vpop.permute.xlu0 %3656
      %3658 = vrot.lane.b32.xlu0 %v3655, 127
      %v3659 = vpop.permute.xlu0 %3658
      %v3660 = vrot.slane %v3657, 4
      %v3661 = vrot.slane %v3659, 4
      %v3662 = vsel %vm300, %v3660, %v3661
      %v3663 = vsel %vm302, %v3657, %v3662
      %v3665 = vld [vmem:[#allocation2 + $0x290] sm:$0xcc]
      %v3666 = vsel %vm760, %v3663, %v3665
      %3667 = vst [vmem:[#allocation2 + $0x290] sm:$0xcc] %v3666
      %v3668 = vrot.slane %v3636, 7
      %v3669 = vor.u32 %v3668, %v3639
      %3670 = vrot.lane.b32.xlu0 %v3562, 127
      %v3671 = vpop.permute.xlu0 %3670
      %3672 = vrot.lane.b32.xlu0 %v3669, 127
      %v3673 = vpop.permute.xlu0 %3672
      %v3674 = vrot.slane %v3671, 4
      %v3675 = vrot.slane %v3673, 4
      %v3676 = vsel %vm300, %v3674, %v3675
      %v3677 = vsel %vm302, %v3671, %v3676
      %v3679 = vld [vmem:[#allocation2 + $0x298] sm:$0xcc]
      %v3680 = vsel %vm760, %v3677, %v3679
      %3681 = vst [vmem:[#allocation2 + $0x298] sm:$0xcc] %v3680
      %3682 = vrot.lane.b32.xlu0 %v3552, 127
      %v3683 = vpop.permute.xlu0 %3682
      %3684 = vrot.lane.b32.xlu0 %v3553, 127
      %v3685 = vpop.permute.xlu0 %3684
      %v3686 = vrot.slane %v3683, 4
      %v3687 = vrot.slane %v3685, 4
      %v3688 = vsel %vm300, %v3686, %v3687
      %v3689 = vsel %vm302, %v3683, %v3688
      %v3691 = vld [vmem:[#allocation2 + $0x2a0] sm:$0xcc]
      %v3692 = vsel %vm760, %v3689, %v3691
      %3693 = vst [vmem:[#allocation2 + $0x2a0] sm:$0xcc] %v3692
      %v3694 = vrot.slane %v3636, 4
      %v3695 = vrot.slane %v3639, 5
      %v3696 = vor.u32 %v3694, %v3695
      %v3697 = vrot.slane %v3696, 4
      %3698 = vrot.lane.b32.xlu0 %v3573, 127
      %v3699 = vpop.permute.xlu0 %3698
      %3700 = vrot.lane.b32.xlu0 %v3697, 127
      %v3701 = vpop.permute.xlu0 %3700
      %v3702 = vrot.slane %v3699, 4
      %v3703 = vrot.slane %v3701, 4
      %v3704 = vsel %vm300, %v3702, %v3703
      %v3705 = vsel %vm302, %v3699, %v3704
      %v3707 = vld [vmem:[#allocation2 + $0x2a8] sm:$0xcc]
      %v3708 = vsel %vm760, %v3705, %v3707
      %3709 = vst [vmem:[#allocation2 + $0x2a8] sm:$0xcc] %v3708
      %v3711 = vrot.slane %v3554, 5
      %v3712 = vsel %vm826, %v3580, %v3711
      %v3713 = vrot.slane %v3553, 5
      %v3714 = vrot.slane %v3713, 4
      %v3715 = vrot.slane %v3555, 5
      %v3716 = vsel %vm826, %v3714, %v3715
      %3717 = vrot.lane.b32.xlu0 %v3712, 127
      %v3718 = vpop.permute.xlu0 %3717
      %3719 = vrot.lane.b32.xlu0 %v3716, 127
      %v3720 = vpop.permute.xlu0 %3719
      %v3721 = vrot.slane %v3718, 4
      %v3722 = vrot.slane %v3720, 4
      %v3723 = vsel %vm300, %v3721, %v3722
      %v3724 = vsel %vm302, %v3718, %v3723
      %v3726 = vld [vmem:[#allocation2 + $0x2b0] sm:$0xcc]
      %v3727 = vsel %vm760, %v3724, %v3726
      %3728 = vst [vmem:[#allocation2 + $0x2b0] sm:$0xcc] %v3727
      %v3729 = vrot.slane %v3585, 4
      %v3730 = vshrl.u32 %v3554, 16
      %v3732 = vrot.slane %v3730, 5
      %v3733 = vrot.slane %v3604, 6
      %v3734 = vor.u32 %v3732, %v3733
      %v3735 = vsel %vm388, %v3729, %v3734
      %v3736 = vrot.slane %v3636, 5
      %v3737 = vrot.slane %v3736, 4
      %v3739 = vshrl.u32 %v3555, 16
      %v3741 = vrot.slane %v3739, 5
      %v3742 = vshll.u32 %v3555, 16
      %v3744 = vrot.slane %v3742, 6
      %v3745 = vor.u32 %v3741, %v3744
      %v3746 = vsel %vm388, %v3737, %v3745
      %3747 = vrot.lane.b32.xlu0 %v3735, 127
      %v3748 = vpop.permute.xlu0 %3747
      %3749 = vrot.lane.b32.xlu0 %v3746, 127
      %v3750 = vpop.permute.xlu0 %3749
      %v3751 = vrot.slane %v3748, 4
      %v3752 = vrot.slane %v3750, 4
      %v3753 = vsel %vm300, %v3751, %v3752
      %v3754 = vsel %vm302, %v3748, %v3753
      %v3756 = vld [vmem:[#allocation2 + $0x2b8] sm:$0xcc]
      %v3757 = vsel %vm760, %v3754, %v3756
      %3758 = vst [vmem:[#allocation2 + $0x2b8] sm:$0xcc] %v3757
      %3759 = vrot.lane.b32.xlu0 %v3571, 126
      %v3760 = vpop.permute.xlu0 %3759
      %3761 = vrot.lane.b32.xlu0 %v3695, 126
      %v3762 = vpop.permute.xlu0 %3761
      %3763 = vrot.lane.b32.xlu0 %v3573, 126
      %v3764 = vpop.permute.xlu0 %3763
      %3765 = vrot.lane.b32.xlu0 %v3697, 126
      %v3766 = vpop.permute.xlu0 %3765
      %v3767 = vrot.slane %v3760, 4
      %v3768 = vrot.slane %v3762, 4
      %v3769 = vrot.slane %v3764, 4
      %v3770 = vrot.slane %v3766, 4
      %v3771 = vsel %vm300, %v3767, %v3768
      %v3772 = vsel %vm445, %v3760, %v3771
      %v3773 = vsel %vm300, %v3769, %v3770
      %v3774 = vsel %vm445, %v3764, %v3773
      %v3777 = vld [vmem:[#allocation2 + $0x280] sm:$0x88]
      %v3778 = vsel %vm886, %v3772, %v3777
      %3779 = vst [vmem:[#allocation2 + $0x280] sm:$0x88] %v3778
      %3780 = vst [vmem:[#allocation2 + $0x2c0] sm:$0x11] %v3774
      %3781 = vrot.lane.b32.xlu0 %v3579, 126
      %v3782 = vpop.permute.xlu0 %3781
      %3783 = vrot.lane.b32.xlu0 %v3713, 126
      %v3784 = vpop.permute.xlu0 %3783
      %3785 = vrot.lane.b32.xlu0 %v3580, 126
      %v3786 = vpop.permute.xlu0 %3785
      %3787 = vrot.lane.b32.xlu0 %v3714, 126
      %v3788 = vpop.permute.xlu0 %3787
      %v3789 = vrot.slane %v3782, 4
      %v3790 = vrot.slane %v3784, 4
      %v3791 = vrot.slane %v3786, 4
      %v3792 = vrot.slane %v3788, 4
      %v3793 = vsel %vm300, %v3789, %v3790
      %v3794 = vsel %vm445, %v3782, %v3793
      %v3795 = vsel %vm300, %v3791, %v3792
      %v3796 = vsel %vm445, %v3786, %v3795
      %v3799 = vld [vmem:[#allocation2 + $0x288] sm:$0x88]
      %v3800 = vsel %vm886, %v3794, %v3799
      %3801 = vst [vmem:[#allocation2 + $0x288] sm:$0x88] %v3800
      %3802 = vst [vmem:[#allocation2 + $0x2c8] sm:$0x11] %v3796
      %v3803 = vrot.slane %v3639, 6
      %v3804 = vor.u32 %v3736, %v3803
      %v3805 = vrot.slane %v3804, 4
      %3806 = vrot.lane.b32.xlu0 %v3586, 126
      %v3807 = vpop.permute.xlu0 %3806
      %3808 = vrot.lane.b32.xlu0 %v3803, 126
      %v3809 = vpop.permute.xlu0 %3808
      %3810 = vrot.lane.b32.xlu0 %v3588, 126
      %v3811 = vpop.permute.xlu0 %3810
      %3812 = vrot.lane.b32.xlu0 %v3805, 126
      %v3813 = vpop.permute.xlu0 %3812
      %v3814 = vrot.slane %v3807, 4
      %v3815 = vrot.slane %v3809, 4
      %v3816 = vrot.slane %v3811, 4
      %v3817 = vrot.slane %v3813, 4
      %v3818 = vsel %vm300, %v3814, %v3815
      %v3819 = vsel %vm445, %v3807, %v3818
      %v3820 = vsel %vm300, %v3816, %v3817
      %v3821 = vsel %vm445, %v3811, %v3820
      %v3824 = vld [vmem:[#allocation2 + $0x290] sm:$0x88]
      %v3825 = vsel %vm886, %v3819, %v3824
      %3826 = vst [vmem:[#allocation2 + $0x290] sm:$0x88] %v3825
      %3827 = vst [vmem:[#allocation2 + $0x2d0] sm:$0x11] %v3821
      %v3828 = vrot.slane %v3622, 4
      %3829 = vrot.lane.b32.xlu0 %v3593, 126
      %v3830 = vpop.permute.xlu0 %3829
      %3831 = vrot.lane.b32.xlu0 %v3622, 126
      %v3832 = vpop.permute.xlu0 %3831
      %3833 = vrot.lane.b32.xlu0 %v3594, 126
      %v3834 = vpop.permute.xlu0 %3833
      %3835 = vrot.lane.b32.xlu0 %v3828, 126
      %v3836 = vpop.permute.xlu0 %3835
      %v3837 = vrot.slane %v3830, 4
      %v3838 = vrot.slane %v3832, 4
      %v3839 = vrot.slane %v3834, 4
      %v3840 = vrot.slane %v3836, 4
      %v3841 = vsel %vm300, %v3837, %v3838
      %v3842 = vsel %vm445, %v3830, %v3841
      %v3843 = vsel %vm300, %v3839, %v3840
      %v3844 = vsel %vm445, %v3834, %v3843
      %v3847 = vld [vmem:[#allocation2 + $0x298] sm:$0x88]
      %v3848 = vsel %vm886, %v3842, %v3847
      %3849 = vst [vmem:[#allocation2 + $0x298] sm:$0x88] %v3848
      %3850 = vst [vmem:[#allocation2 + $0x2d8] sm:$0x11] %v3844
      %v3851 = vrot.slane %v3642, 4
      %3852 = vrot.lane.b32.xlu0 %v3600, 126
      %v3853 = vpop.permute.xlu0 %3852
      %3854 = vrot.lane.b32.xlu0 %v3641, 126
      %v3855 = vpop.permute.xlu0 %3854
      %3856 = vrot.lane.b32.xlu0 %v3602, 126
      %v3857 = vpop.permute.xlu0 %3856
      %3858 = vrot.lane.b32.xlu0 %v3851, 126
      %v3859 = vpop.permute.xlu0 %3858
      %v3860 = vrot.slane %v3853, 4
      %v3861 = vrot.slane %v3855, 4
      %v3862 = vrot.slane %v3857, 4
      %v3863 = vrot.slane %v3859, 4
      %v3864 = vsel %vm300, %v3860, %v3861
      %v3865 = vsel %vm445, %v3853, %v3864
      %v3866 = vsel %vm300, %v3862, %v3863
      %v3867 = vsel %vm445, %v3857, %v3866
      %v3870 = vld [vmem:[#allocation2 + $0x2a0] sm:$0x88]
      %v3871 = vsel %vm886, %v3865, %v3870
      %3872 = vst [vmem:[#allocation2 + $0x2a0] sm:$0x88] %v3871
      %3873 = vst [vmem:[#allocation2 + $0x2e0] sm:$0x11] %v3867
      %v3874 = vrot.slane %v3655, 4
      %3875 = vrot.lane.b32.xlu0 %v3613, 126
      %v3876 = vpop.permute.xlu0 %3875
      %3877 = vrot.lane.b32.xlu0 %v3655, 126
      %v3878 = vpop.permute.xlu0 %3877
      %3879 = vrot.lane.b32.xlu0 %v3614, 126
      %v3880 = vpop.permute.xlu0 %3879
      %3881 = vrot.lane.b32.xlu0 %v3874, 126
      %v3882 = vpop.permute.xlu0 %3881
      %v3883 = vrot.slane %v3876, 4
      %v3884 = vrot.slane %v3878, 4
      %v3885 = vrot.slane %v3880, 4
      %v3886 = vrot.slane %v3882, 4
      %v3887 = vsel %vm300, %v3883, %v3884
      %v3888 = vsel %vm445, %v3876, %v3887
      %v3889 = vsel %vm300, %v3885, %v3886
      %v3890 = vsel %vm445, %v3880, %v3889
      %v3893 = vld [vmem:[#allocation2 + $0x2a8] sm:$0x88]
      %v3894 = vsel %vm886, %v3888, %v3893
      %3895 = vst [vmem:[#allocation2 + $0x2a8] sm:$0x88] %v3894
      %3896 = vst [vmem:[#allocation2 + $0x2e8] sm:$0x11] %v3890
      %v3897 = vrot.slane %v3559, 4
      %v3898 = vsel %vm271, %v3897, %v3604
      %v3899 = vrot.slane %v3668, 4
      %v3900 = vsel %vm271, %v3899, %v3742
      %3901 = vrot.lane.b32.xlu0 %v3560, 126
      %v3902 = vpop.permute.xlu0 %3901
      %3903 = vrot.lane.b32.xlu0 %v3639, 126
      %v3904 = vpop.permute.xlu0 %3903
      %3905 = vrot.lane.b32.xlu0 %v3898, 126
      %v3906 = vpop.permute.xlu0 %3905
      %3907 = vrot.lane.b32.xlu0 %v3900, 126
      %v3908 = vpop.permute.xlu0 %3907
      %v3909 = vrot.slane %v3902, 4
      %v3910 = vrot.slane %v3904, 4
      %v3911 = vrot.slane %v3906, 4
      %v3912 = vrot.slane %v3908, 4
      %v3913 = vsel %vm300, %v3909, %v3910
      %v3914 = vsel %vm445, %v3902, %v3913
      %v3915 = vsel %vm300, %v3911, %v3912
      %v3916 = vsel %vm445, %v3906, %v3915
      %v3919 = vld [vmem:[#allocation2 + $0x2b0] sm:$0x88]
      %v3920 = vsel %vm886, %v3914, %v3919
      %3921 = vst [vmem:[#allocation2 + $0x2b0] sm:$0x88] %v3920
      %3922 = vst [vmem:[#allocation2 + $0x2f0] sm:$0x11] %v3916
      %3923 = vrot.lane.b32.xlu0 %v3552, 126
      %v3924 = vpop.permute.xlu0 %3923
      %3925 = vrot.lane.b32.xlu0 %v3553, 126
      %v3926 = vpop.permute.xlu0 %3925
      %3927 = vrot.lane.b32.xlu0 %v3554, 126
      %v3928 = vpop.permute.xlu0 %3927
      %3929 = vrot.lane.b32.xlu0 %v3555, 126
      %v3930 = vpop.permute.xlu0 %3929
      %v3931 = vrot.slane %v3924, 4
      %v3932 = vrot.slane %v3926, 4
      %v3933 = vrot.slane %v3928, 4
      %v3934 = vrot.slane %v3930, 4
      %v3935 = vsel %vm300, %v3931, %v3932
      %v3936 = vsel %vm445, %v3924, %v3935
      %v3937 = vsel %vm300, %v3933, %v3934
      %v3938 = vsel %vm445, %v3928, %v3937
      %v3941 = vld [vmem:[#allocation2 + $0x2b8] sm:$0x88]
      %v3942 = vsel %vm886, %v3936, %v3941
      %3943 = vst [vmem:[#allocation2 + $0x2b8] sm:$0x88] %v3942
      %3944 = vst [vmem:[#allocation2 + $0x2f8] sm:$0x11] %v3938
      %3945 = vrot.lane.b32.xlu0 %v3613, 111
      %v3946 = vpop.permute.xlu0 %3945
      %3947 = vrot.lane.b32.xlu0 %v3655, 111
      %v3948 = vpop.permute.xlu0 %3947
      %v3949 = vrot.slane %v3946, 4
      %v3950 = vrot.slane %v3948, 4
      %v3951 = vsel %vm300, %v3949, %v3950
      %v3952 = vsel %vm641, %v3946, %v3951
      %v3954 = vld [vmem:[#allocation2 + $0x2c0] sm:$0x66]
      %v3955 = vsel %vm1060, %v3952, %v3954
      %3956 = vst [vmem:[#allocation2 + $0x2c0] sm:$0x66] %v3955
      %3957 = vrot.lane.b32.xlu0 %v3562, 111
      %v3958 = vpop.permute.xlu0 %3957
      %3959 = vrot.lane.b32.xlu0 %v3669, 111
      %v3960 = vpop.permute.xlu0 %3959
      %v3961 = vrot.slane %v3958, 4
      %v3962 = vrot.slane %v3960, 4
      %v3963 = vsel %vm300, %v3961, %v3962
      %v3964 = vsel %vm641, %v3958, %v3963
      %v3966 = vld [vmem:[#allocation2 + $0x2c8] sm:$0x66]
      %v3967 = vsel %vm1060, %v3964, %v3966
      %3968 = vst [vmem:[#allocation2 + $0x2c8] sm:$0x66] %v3967
      %3969 = vrot.lane.b32.xlu0 %v3552, 111
      %v3970 = vpop.permute.xlu0 %3969
      %3971 = vrot.lane.b32.xlu0 %v3553, 111
      %v3972 = vpop.permute.xlu0 %3971
      %v3973 = vrot.slane %v3970, 4
      %v3974 = vrot.slane %v3972, 4
      %v3975 = vsel %vm300, %v3973, %v3974
      %v3976 = vsel %vm641, %v3970, %v3975
      %v3978 = vld [vmem:[#allocation2 + $0x2d0] sm:$0x66]
      %v3979 = vsel %vm1060, %v3976, %v3978
      %3980 = vst [vmem:[#allocation2 + $0x2d0] sm:$0x66] %v3979
      %3981 = vrot.lane.b32.xlu0 %v3573, 111
      %v3982 = vpop.permute.xlu0 %3981
      %3983 = vrot.lane.b32.xlu0 %v3697, 111
      %v3984 = vpop.permute.xlu0 %3983
      %v3985 = vrot.slane %v3982, 4
      %v3986 = vrot.slane %v3984, 4
      %v3987 = vsel %vm300, %v3985, %v3986
      %v3988 = vsel %vm641, %v3982, %v3987
      %v3990 = vld [vmem:[#allocation2 + $0x2d8] sm:$0x66]
      %v3991 = vsel %vm1060, %v3988, %v3990
      %3992 = vst [vmem:[#allocation2 + $0x2d8] sm:$0x66] %v3991
      %3993 = vrot.lane.b32.xlu0 %v3580, 111
      %v3994 = vpop.permute.xlu0 %3993
      %3995 = vrot.lane.b32.xlu0 %v3714, 111
      %v3996 = vpop.permute.xlu0 %3995
      %v3997 = vrot.slane %v3994, 4
      %v3998 = vrot.slane %v3996, 4
      %v3999 = vsel %vm300, %v3997, %v3998
      %v4000 = vsel %vm641, %v3994, %v3999
      %v4002 = vld [vmem:[#allocation2 + $0x2e0] sm:$0x66]
      %v4003 = vsel %vm1060, %v4000, %v4002
      %4004 = vst [vmem:[#allocation2 + $0x2e0] sm:$0x66] %v4003
      %4005 = vrot.lane.b32.xlu0 %v3588, 111
      %v4006 = vpop.permute.xlu0 %4005
      %4007 = vrot.lane.b32.xlu0 %v3805, 111
      %v4008 = vpop.permute.xlu0 %4007
      %v4009 = vrot.slane %v4006, 4
      %v4010 = vrot.slane %v4008, 4
      %v4011 = vsel %vm300, %v4009, %v4010
      %v4012 = vsel %vm641, %v4006, %v4011
      %v4014 = vld [vmem:[#allocation2 + $0x2e8] sm:$0x66]
      %v4015 = vsel %vm1060, %v4012, %v4014
      %4016 = vst [vmem:[#allocation2 + $0x2e8] sm:$0x66] %v4015
      %v4017 = vrot.slane %v3554, 6
      %v4018 = vsel %vm413, %v3594, %v4017
      %v4019 = vrot.slane %v3555, 6
      %v4020 = vsel %vm413, %v3828, %v4019
      %4021 = vrot.lane.b32.xlu0 %v4018, 111
      %v4022 = vpop.permute.xlu0 %4021
      %4023 = vrot.lane.b32.xlu0 %v4020, 111
      %v4024 = vpop.permute.xlu0 %4023
      %v4025 = vrot.slane %v4022, 4
      %v4026 = vrot.slane %v4024, 4
      %v4027 = vsel %vm300, %v4025, %v4026
      %v4028 = vsel %vm641, %v4022, %v4027
      %v4030 = vld [vmem:[#allocation2 + $0x2f0] sm:$0x66]
      %v4031 = vsel %vm1060, %v4028, %v4030
      %4032 = vst [vmem:[#allocation2 + $0x2f0] sm:$0x66] %v4031
      %v4033 = vrot.slane %v3599, 4
      %v4034 = vrot.slane %v3730, 6
      %v4035 = vor.u32 %v4034, %v3606
      %v4036 = vsel %vm713, %v4033, %v4035
      %v4037 = vrot.slane %v3638, 4
      %v4038 = vrot.slane %v3739, 6
      %v4039 = vrot.slane %v3742, 7
      %v4040 = vor.u32 %v4038, %v4039
      %v4041 = vsel %vm713, %v4037, %v4040
      %4042 = vrot.lane.b32.xlu0 %v4036, 111
      %v4043 = vpop.permute.xlu0 %4042
      %4044 = vrot.lane.b32.xlu0 %v4041, 111
      %v4045 = vpop.permute.xlu0 %4044
      %v4046 = vrot.slane %v4043, 4
      %v4047 = vrot.slane %v4045, 4
      %v4048 = vsel %vm300, %v4046, %v4047
      %v4049 = vsel %vm641, %v4043, %v4048
      %v4051 = vld [vmem:[#allocation2 + $0x2f8] sm:$0x66]
      %v4052 = vsel %vm1060, %v4049, %v4051
      %4053 = vst [vmem:[#allocation2 + $0x2f8] sm:$0x66] %v4052
      %4054 = vrot.lane.b32.xlu0 %v3587, 110
      %v4055 = vpop.permute.xlu0 %4054
      %4056 = vrot.lane.b32.xlu0 %v3804, 110
      %v4057 = vpop.permute.xlu0 %4056
      %v4058 = vrot.slane %v4055, 4
      %v4059 = vrot.slane %v4057, 4
      %v4060 = vsel %vm300, %v4058, %v4059
      %v4061 = vsel %vm752, %v4055, %v4060
      %v4063 = vld [vmem:[#allocation2 + $0x2c0] sm:$0xcc]
      %v4064 = vsel %vm1168, %v4061, %v4063
      %4065 = vst [vmem:[#allocation2 + $0x2c0] sm:$0xcc] %v4064
      %4066 = vrot.lane.b32.xlu0 %v3593, 110
      %v4067 = vpop.permute.xlu0 %4066
      %4068 = vrot.lane.b32.xlu0 %v3622, 110
      %v4069 = vpop.permute.xlu0 %4068
      %v4070 = vrot.slane %v4067, 4
      %v4071 = vrot.slane %v4069, 4
      %v4072 = vsel %vm300, %v4070, %v4071
      %v4073 = vsel %vm752, %v4067, %v4072
      %v4075 = vld [vmem:[#allocation2 + $0x2c8] sm:$0xcc]
      %v4076 = vsel %vm1168, %v4073, %v4075
      %4077 = vst [vmem:[#allocation2 + $0x2c8] sm:$0xcc] %v4076
      %4078 = vrot.lane.b32.xlu0 %v3601, 110
      %v4079 = vpop.permute.xlu0 %4078
      %4080 = vrot.lane.b32.xlu0 %v3642, 110
      %v4081 = vpop.permute.xlu0 %4080
      %v4082 = vrot.slane %v4079, 4
      %v4083 = vrot.slane %v4081, 4
      %v4084 = vsel %vm300, %v4082, %v4083
      %v4085 = vsel %vm752, %v4079, %v4084
      %v4087 = vld [vmem:[#allocation2 + $0x2d0] sm:$0xcc]
      %v4088 = vsel %vm1168, %v4085, %v4087
      %4089 = vst [vmem:[#allocation2 + $0x2d0] sm:$0xcc] %v4088
      %4090 = vrot.lane.b32.xlu0 %v3613, 110
      %v4091 = vpop.permute.xlu0 %4090
      %4092 = vrot.lane.b32.xlu0 %v3655, 110
      %v4093 = vpop.permute.xlu0 %4092
      %v4094 = vrot.slane %v4091, 4
      %v4095 = vrot.slane %v4093, 4
      %v4096 = vsel %vm300, %v4094, %v4095
      %v4097 = vsel %vm752, %v4091, %v4096
      %v4099 = vld [vmem:[#allocation2 + $0x2d8] sm:$0xcc]
      %v4100 = vsel %vm1168, %v4097, %v4099
      %4101 = vst [vmem:[#allocation2 + $0x2d8] sm:$0xcc] %v4100
      %4102 = vrot.lane.b32.xlu0 %v3562, 110
      %v4103 = vpop.permute.xlu0 %4102
      %4104 = vrot.lane.b32.xlu0 %v3669, 110
      %v4105 = vpop.permute.xlu0 %4104
      %v4106 = vrot.slane %v4103, 4
      %v4107 = vrot.slane %v4105, 4
      %v4108 = vsel %vm300, %v4106, %v4107
      %v4109 = vsel %vm752, %v4103, %v4108
      %v4111 = vld [vmem:[#allocation2 + $0x2e0] sm:$0xcc]
      %v4112 = vsel %vm1168, %v4109, %v4111
      %4113 = vst [vmem:[#allocation2 + $0x2e0] sm:$0xcc] %v4112
      %4114 = vrot.lane.b32.xlu0 %v3552, 110
      %v4115 = vpop.permute.xlu0 %4114
      %4116 = vrot.lane.b32.xlu0 %v3553, 110
      %v4117 = vpop.permute.xlu0 %4116
      %v4118 = vrot.slane %v4115, 4
      %v4119 = vrot.slane %v4117, 4
      %v4120 = vsel %vm300, %v4118, %v4119
      %v4121 = vsel %vm752, %v4115, %v4120
      %v4123 = vld [vmem:[#allocation2 + $0x2e8] sm:$0xcc]
      %v4124 = vsel %vm1168, %v4121, %v4123
      %4125 = vst [vmem:[#allocation2 + $0x2e8] sm:$0xcc] %v4124
      %v4126 = vrot.slane %v3604, 5
      %v4127 = vsel %vm599, %v3573, %v4126
      %v4128 = vrot.slane %v3742, 5
      %v4129 = vsel %vm599, %v3697, %v4128
      %4130 = vrot.lane.b32.xlu0 %v4127, 110
      %v4131 = vpop.permute.xlu0 %4130
      %4132 = vrot.lane.b32.xlu0 %v4129, 110
      %v4133 = vpop.permute.xlu0 %4132
      %v4134 = vrot.slane %v4131, 4
      %v4135 = vrot.slane %v4133, 4
      %v4136 = vsel %vm300, %v4134, %v4135
      %v4137 = vsel %vm752, %v4131, %v4136
      %v4139 = vld [vmem:[#allocation2 + $0x2f0] sm:$0xcc]
      %v4140 = vsel %vm1168, %v4137, %v4139
      %4141 = vst [vmem:[#allocation2 + $0x2f0] sm:$0xcc] %v4140
      %4142 = vrot.lane.b32.xlu0 %v3712, 110
      %v4143 = vpop.permute.xlu0 %4142
      %4144 = vrot.lane.b32.xlu0 %v3716, 110
      %v4145 = vpop.permute.xlu0 %4144
      %v4146 = vrot.slane %v4143, 4
      %v4147 = vrot.slane %v4145, 4
      %v4148 = vsel %vm300, %v4146, %v4147
      %v4149 = vsel %vm752, %v4143, %v4148
      %v4151 = vld [vmem:[#allocation2 + $0x2f8] sm:$0xcc]
      %v4152 = vsel %vm1168, %v4149, %v4151
      %4153 = vst [vmem:[#allocation2 + $0x2f8] sm:$0xcc] %v4152
      %4154 = vrot.lane.b32.xlu0 %v3552, 109
      %v4155 = vpop.permute.xlu0 %4154
      %4156 = vrot.lane.b32.xlu0 %v3553, 109
      %v4157 = vpop.permute.xlu0 %4156
      %v4158 = vrot.slane %v4155, 4
      %v4159 = vrot.slane %v4157, 4
      %v4160 = vsel %vm300, %v4158, %v4159
      %v4161 = vsel %vm874, %v4155, %v4160
      %v4163 = vld [vmem:[#allocation2 + $0x300] sm:$0x33]
      %v4164 = vsel %vm211, %v4161, %v4163
      %4165 = vst [vmem:[#allocation2 + $0x300] sm:$0x33] %v4164
      %4166 = vrot.lane.b32.xlu0 %v3573, 109
      %v4167 = vpop.permute.xlu0 %4166
      %4168 = vrot.lane.b32.xlu0 %v3697, 109
      %v4169 = vpop.permute.xlu0 %4168
      %v4170 = vrot.slane %v4167, 4
      %v4171 = vrot.slane %v4169, 4
      %v4172 = vsel %vm300, %v4170, %v4171
      %v4173 = vsel %vm874, %v4167, %v4172
      %v4175 = vld [vmem:[#allocation2 + $0x308] sm:$0x33]
      %v4176 = vsel %vm211, %v4173, %v4175
      %4177 = vst [vmem:[#allocation2 + $0x308] sm:$0x33] %v4176
      %4178 = vrot.lane.b32.xlu0 %v3580, 109
      %v4179 = vpop.permute.xlu0 %4178
      %4180 = vrot.lane.b32.xlu0 %v3714, 109
      %v4181 = vpop.permute.xlu0 %4180
      %v4182 = vrot.slane %v4179, 4
      %v4183 = vrot.slane %v4181, 4
      %v4184 = vsel %vm300, %v4182, %v4183
      %v4185 = vsel %vm874, %v4179, %v4184
      %v4187 = vld [vmem:[#allocation2 + $0x310] sm:$0x33]
      %v4188 = vsel %vm211, %v4185, %v4187
      %4189 = vst [vmem:[#allocation2 + $0x310] sm:$0x33] %v4188
      %4190 = vrot.lane.b32.xlu0 %v3588, 109
      %v4191 = vpop.permute.xlu0 %4190
      %4192 = vrot.lane.b32.xlu0 %v3805, 109
      %v4193 = vpop.permute.xlu0 %4192
      %v4194 = vrot.slane %v4191, 4
      %v4195 = vrot.slane %v4193, 4
      %v4196 = vsel %vm300, %v4194, %v4195
      %v4197 = vsel %vm874, %v4191, %v4196
      %v4199 = vld [vmem:[#allocation2 + $0x318] sm:$0x33]
      %v4200 = vsel %vm211, %v4197, %v4199
      %4201 = vst [vmem:[#allocation2 + $0x318] sm:$0x33] %v4200
      %4202 = vrot.lane.b32.xlu0 %v3594, 109
      %v4203 = vpop.permute.xlu0 %4202
      %4204 = vrot.lane.b32.xlu0 %v3828, 109
      %v4205 = vpop.permute.xlu0 %4204
      %v4206 = vrot.slane %v4203, 4
      %v4207 = vrot.slane %v4205, 4
      %v4208 = vsel %vm300, %v4206, %v4207
      %v4209 = vsel %vm874, %v4203, %v4208
      %v4211 = vld [vmem:[#allocation2 + $0x320] sm:$0x33]
      %v4212 = vsel %vm211, %v4209, %v4211
      %4213 = vst [vmem:[#allocation2 + $0x320] sm:$0x33] %v4212
      %4214 = vrot.lane.b32.xlu0 %v3602, 109
      %v4215 = vpop.permute.xlu0 %4214
      %4216 = vrot.lane.b32.xlu0 %v3851, 109
      %v4217 = vpop.permute.xlu0 %4216
      %v4218 = vrot.slane %v4215, 4
      %v4219 = vrot.slane %v4217, 4
      %v4220 = vsel %vm300, %v4218, %v4219
      %v4221 = vsel %vm874, %v4215, %v4220
      %v4223 = vld [vmem:[#allocation2 + $0x328] sm:$0x33]
      %v4224 = vsel %vm211, %v4221, %v4223
      %4225 = vst [vmem:[#allocation2 + $0x328] sm:$0x33] %v4224
      %v4226 = vrot.slane %v3555, 7
      %v4227 = vsel %vm260, %v3874, %v4226
      %4228 = vrot.lane.b32.xlu0 %v3616, 109
      %v4229 = vpop.permute.xlu0 %4228
      %4230 = vrot.lane.b32.xlu0 %v4227, 109
      %v4231 = vpop.permute.xlu0 %4230
      %v4232 = vrot.slane %v4229, 4
      %v4233 = vrot.slane %v4231, 4
      %v4234 = vsel %vm300, %v4232, %v4233
      %v4235 = vsel %vm874, %v4229, %v4234
      %v4237 = vld [vmem:[#allocation2 + $0x330] sm:$0x33]
      %v4238 = vsel %vm211, %v4235, %v4237
      %4239 = vst [vmem:[#allocation2 + $0x330] sm:$0x33] %v4238
      %v4240 = vrot.slane %v3730, 7
      %v4241 = vor.u32 %v4240, %v3604
      %v4242 = vsel %vm271, %v3897, %v4241
      %v4243 = vrot.slane %v3739, 7
      %v4244 = vor.u32 %v4243, %v3742
      %v4245 = vsel %vm271, %v3899, %v4244
      %4246 = vrot.lane.b32.xlu0 %v4242, 109
      %v4247 = vpop.permute.xlu0 %4246
      %4248 = vrot.lane.b32.xlu0 %v4245, 109
      %v4249 = vpop.permute.xlu0 %4248
      %v4250 = vrot.slane %v4247, 4
      %v4251 = vrot.slane %v4249, 4
      %v4252 = vsel %vm300, %v4250, %v4251
      %v4253 = vsel %vm874, %v4247, %v4252
      %v4255 = vld [vmem:[#allocation2 + $0x338] sm:$0x33]
      %v4256 = vsel %vm211, %v4253, %v4255
      %4257 = vst [vmem:[#allocation2 + $0x338] sm:$0x33] %v4256
      %4258 = vrot.lane.b32.xlu0 %v3601, 94
      %v4259 = vpop.permute.xlu0 %4258
      %4260 = vrot.lane.b32.xlu0 %v3642, 94
      %v4261 = vpop.permute.xlu0 %4260
      %v4262 = vrot.slane %v4259, 4
      %v4263 = vrot.slane %v4261, 4
      %v4264 = vsel %vm300, %v4262, %v4263
      %v4265 = vsel %vm1054, %v4259, %v4264
      %v4267 = vld [vmem:[#allocation2 + $0x300] sm:$0x66]
      %v4268 = vsel %vm311, %v4265, %v4267
      %4269 = vst [vmem:[#allocation2 + $0x300] sm:$0x66] %v4268
      %4270 = vrot.lane.b32.xlu0 %v3613, 94
      %v4271 = vpop.permute.xlu0 %4270
      %4272 = vrot.lane.b32.xlu0 %v3655, 94
      %v4273 = vpop.permute.xlu0 %4272
      %v4274 = vrot.slane %v4271, 4
      %v4275 = vrot.slane %v4273, 4
      %v4276 = vsel %vm300, %v4274, %v4275
      %v4277 = vsel %vm1054, %v4271, %v4276
      %v4279 = vld [vmem:[#allocation2 + $0x308] sm:$0x66]
      %v4280 = vsel %vm311, %v4277, %v4279
      %4281 = vst [vmem:[#allocation2 + $0x308] sm:$0x66] %v4280
      %4282 = vrot.lane.b32.xlu0 %v3562, 94
      %v4283 = vpop.permute.xlu0 %4282
      %4284 = vrot.lane.b32.xlu0 %v3669, 94
      %v4285 = vpop.permute.xlu0 %4284
      %v4286 = vrot.slane %v4283, 4
      %v4287 = vrot.slane %v4285, 4
      %v4288 = vsel %vm300, %v4286, %v4287
      %v4289 = vsel %vm1054, %v4283, %v4288
      %v4291 = vld [vmem:[#allocation2 + $0x310] sm:$0x66]
      %v4292 = vsel %vm311, %v4289, %v4291
      %4293 = vst [vmem:[#allocation2 + $0x310] sm:$0x66] %v4292
      %4294 = vrot.lane.b32.xlu0 %v3552, 94
      %v4295 = vpop.permute.xlu0 %4294
      %4296 = vrot.lane.b32.xlu0 %v3553, 94
      %v4297 = vpop.permute.xlu0 %4296
      %v4298 = vrot.slane %v4295, 4
      %v4299 = vrot.slane %v4297, 4
      %v4300 = vsel %vm300, %v4298, %v4299
      %v4301 = vsel %vm1054, %v4295, %v4300
      %v4303 = vld [vmem:[#allocation2 + $0x318] sm:$0x66]
      %v4304 = vsel %vm311, %v4301, %v4303
      %4305 = vst [vmem:[#allocation2 + $0x318] sm:$0x66] %v4304
      %4306 = vrot.lane.b32.xlu0 %v3573, 94
      %v4307 = vpop.permute.xlu0 %4306
      %4308 = vrot.lane.b32.xlu0 %v3697, 94
      %v4309 = vpop.permute.xlu0 %4308
      %v4310 = vrot.slane %v4307, 4
      %v4311 = vrot.slane %v4309, 4
      %v4312 = vsel %vm300, %v4310, %v4311
      %v4313 = vsel %vm1054, %v4307, %v4312
      %v4315 = vld [vmem:[#allocation2 + $0x320] sm:$0x66]
      %v4316 = vsel %vm311, %v4313, %v4315
      %4317 = vst [vmem:[#allocation2 + $0x320] sm:$0x66] %v4316
      %4318 = vrot.lane.b32.xlu0 %v3580, 94
      %v4319 = vpop.permute.xlu0 %4318
      %4320 = vrot.lane.b32.xlu0 %v3714, 94
      %v4321 = vpop.permute.xlu0 %4320
      %v4322 = vrot.slane %v4319, 4
      %v4323 = vrot.slane %v4321, 4
      %v4324 = vsel %vm300, %v4322, %v4323
      %v4325 = vsel %vm1054, %v4319, %v4324
      %v4327 = vld [vmem:[#allocation2 + $0x328] sm:$0x66]
      %v4328 = vsel %vm311, %v4325, %v4327
      %4329 = vst [vmem:[#allocation2 + $0x328] sm:$0x66] %v4328
      %v4330 = vsel %vm388, %v3588, %v3733
      %v4331 = vsel %vm388, %v3805, %v3744
      %4332 = vrot.lane.b32.xlu0 %v4330, 94
      %v4333 = vpop.permute.xlu0 %4332
      %4334 = vrot.lane.b32.xlu0 %v4331, 94
      %v4335 = vpop.permute.xlu0 %4334
      %v4336 = vrot.slane %v4333, 4
      %v4337 = vrot.slane %v4335, 4
      %v4338 = vsel %vm300, %v4336, %v4337
      %v4339 = vsel %vm1054, %v4333, %v4338
      %v4341 = vld [vmem:[#allocation2 + $0x330] sm:$0x66]
      %v4342 = vsel %vm311, %v4339, %v4341
      %4343 = vst [vmem:[#allocation2 + $0x330] sm:$0x66] %v4342
      %4344 = vrot.lane.b32.xlu0 %v4018, 94
      %v4345 = vpop.permute.xlu0 %4344
      %4346 = vrot.lane.b32.xlu0 %v4020, 94
      %v4347 = vpop.permute.xlu0 %4346
      %v4348 = vrot.slane %v4345, 4
      %v4349 = vrot.slane %v4347, 4
      %v4350 = vsel %vm300, %v4348, %v4349
      %v4351 = vsel %vm1054, %v4345, %v4350
      %v4353 = vld [vmem:[#allocation2 + $0x338] sm:$0x66]
      %v4354 = vsel %vm311, %v4351, %v4353
      %4355 = vst [vmem:[#allocation2 + $0x338] sm:$0x66] %v4354
      %4356 = vrot.lane.b32.xlu0 %v3579, 93
      %v4357 = vpop.permute.xlu0 %4356
      %4358 = vrot.lane.b32.xlu0 %v3713, 93
      %v4359 = vpop.permute.xlu0 %4358
      %4360 = vrot.lane.b32.xlu0 %v3580, 93
      %v4361 = vpop.permute.xlu0 %4360
      %4362 = vrot.lane.b32.xlu0 %v3714, 93
      %v4363 = vpop.permute.xlu0 %4362
      %v4364 = vrot.slane %v4357, 4
      %v4365 = vrot.slane %v4359, 4
      %v4366 = vrot.slane %v4361, 4
      %v4367 = vrot.slane %v4363, 4
      %v4368 = vsel %vm300, %v4364, %v4365
      %v4369 = vsel %vm1161, %v4357, %v4368
      %v4370 = vsel %vm300, %v4366, %v4367
      %v4371 = vsel %vm1161, %v4361, %v4370
      %4374 = vst [vmem:[#allocation2 + $0x300] sm:$0x88] %v4369
      %v4375 = vld [vmem:[#allocation2 + $0x340] sm:$0x11]
      %v4376 = vsel %vm455, %v4371, %v4375
      %4377 = vst [vmem:[#allocation2 + $0x340] sm:$0x11] %v4376
      %4378 = vrot.lane.b32.xlu0 %v3587, 93
      %v4379 = vpop.permute.xlu0 %4378
      %4380 = vrot.lane.b32.xlu0 %v3804, 93
      %v4381 = vpop.permute.xlu0 %4380
      %4382 = vrot.lane.b32.xlu0 %v3729, 93
      %v4383 = vpop.permute.xlu0 %4382
      %4384 = vrot.lane.b32.xlu0 %v3737, 93
      %v4385 = vpop.permute.xlu0 %4384
      %v4386 = vrot.slane %v4379, 4
      %v4387 = vrot.slane %v4381, 4
      %v4388 = vrot.slane %v4383, 4
      %v4389 = vrot.slane %v4385, 4
      %v4390 = vsel %vm300, %v4386, %v4387
      %v4391 = vsel %vm1161, %v4379, %v4390
      %v4392 = vsel %vm300, %v4388, %v4389
      %v4393 = vsel %vm1161, %v4383, %v4392
      %4396 = vst [vmem:[#allocation2 + $0x308] sm:$0x88] %v4391
      %v4397 = vld [vmem:[#allocation2 + $0x348] sm:$0x11]
      %v4398 = vsel %vm455, %v4393, %v4397
      %4399 = vst [vmem:[#allocation2 + $0x348] sm:$0x11] %v4398
      %4400 = vrot.lane.b32.xlu0 %v3593, 93
      %v4401 = vpop.permute.xlu0 %4400
      %4402 = vrot.lane.b32.xlu0 %v3622, 93
      %v4403 = vpop.permute.xlu0 %4402
      %4404 = vrot.lane.b32.xlu0 %v3594, 93
      %v4405 = vpop.permute.xlu0 %4404
      %4406 = vrot.lane.b32.xlu0 %v3828, 93
      %v4407 = vpop.permute.xlu0 %4406
      %v4408 = vrot.slane %v4401, 4
      %v4409 = vrot.slane %v4403, 4
      %v4410 = vrot.slane %v4405, 4
      %v4411 = vrot.slane %v4407, 4
      %v4412 = vsel %vm300, %v4408, %v4409
      %v4413 = vsel %vm1161, %v4401, %v4412
      %v4414 = vsel %vm300, %v4410, %v4411
      %v4415 = vsel %vm1161, %v4405, %v4414
      %4418 = vst [vmem:[#allocation2 + $0x310] sm:$0x88] %v4413
      %v4419 = vld [vmem:[#allocation2 + $0x350] sm:$0x11]
      %v4420 = vsel %vm455, %v4415, %v4419
      %4421 = vst [vmem:[#allocation2 + $0x350] sm:$0x11] %v4420
      %4422 = vrot.lane.b32.xlu0 %v3601, 93
      %v4423 = vpop.permute.xlu0 %4422
      %4424 = vrot.lane.b32.xlu0 %v3642, 93
      %v4425 = vpop.permute.xlu0 %4424
      %4426 = vrot.lane.b32.xlu0 %v4033, 93
      %v4427 = vpop.permute.xlu0 %4426
      %4428 = vrot.lane.b32.xlu0 %v4037, 93
      %v4429 = vpop.permute.xlu0 %4428
      %v4430 = vrot.slane %v4423, 4
      %v4431 = vrot.slane %v4425, 4
      %v4432 = vrot.slane %v4427, 4
      %v4433 = vrot.slane %v4429, 4
      %v4434 = vsel %vm300, %v4430, %v4431
      %v4435 = vsel %vm1161, %v4423, %v4434
      %v4436 = vsel %vm300, %v4432, %v4433
      %v4437 = vsel %vm1161, %v4427, %v4436
      %4440 = vst [vmem:[#allocation2 + $0x318] sm:$0x88] %v4435
      %v4441 = vld [vmem:[#allocation2 + $0x358] sm:$0x11]
      %v4442 = vsel %vm455, %v4437, %v4441
      %4443 = vst [vmem:[#allocation2 + $0x358] sm:$0x11] %v4442
      %4444 = vrot.lane.b32.xlu0 %v3613, 93
      %v4445 = vpop.permute.xlu0 %4444
      %4446 = vrot.lane.b32.xlu0 %v3655, 93
      %v4447 = vpop.permute.xlu0 %4446
      %4448 = vrot.lane.b32.xlu0 %v3614, 93
      %v4449 = vpop.permute.xlu0 %4448
      %4450 = vrot.lane.b32.xlu0 %v3874, 93
      %v4451 = vpop.permute.xlu0 %4450
      %v4452 = vrot.slane %v4445, 4
      %v4453 = vrot.slane %v4447, 4
      %v4454 = vrot.slane %v4449, 4
      %v4455 = vrot.slane %v4451, 4
      %v4456 = vsel %vm300, %v4452, %v4453
      %v4457 = vsel %vm1161, %v4445, %v4456
      %v4458 = vsel %vm300, %v4454, %v4455
      %v4459 = vsel %vm1161, %v4449, %v4458
      %4462 = vst [vmem:[#allocation2 + $0x320] sm:$0x88] %v4457
      %v4463 = vld [vmem:[#allocation2 + $0x360] sm:$0x11]
      %v4464 = vsel %vm455, %v4459, %v4463
      %4465 = vst [vmem:[#allocation2 + $0x360] sm:$0x11] %v4464
      %4466 = vrot.lane.b32.xlu0 %v3562, 93
      %v4467 = vpop.permute.xlu0 %4466
      %4468 = vrot.lane.b32.xlu0 %v3669, 93
      %v4469 = vpop.permute.xlu0 %4468
      %4470 = vrot.lane.b32.xlu0 %v3897, 93
      %v4471 = vpop.permute.xlu0 %4470
      %4472 = vrot.lane.b32.xlu0 %v3899, 93
      %v4473 = vpop.permute.xlu0 %4472
      %v4474 = vrot.slane %v4467, 4
      %v4475 = vrot.slane %v4469, 4
      %v4476 = vrot.slane %v4471, 4
      %v4477 = vrot.slane %v4473, 4
      %v4478 = vsel %vm300, %v4474, %v4475
      %v4479 = vsel %vm1161, %v4467, %v4478
      %v4480 = vsel %vm300, %v4476, %v4477
      %v4481 = vsel %vm1161, %v4471, %v4480
      %4484 = vst [vmem:[#allocation2 + $0x328] sm:$0x88] %v4479
      %v4485 = vld [vmem:[#allocation2 + $0x368] sm:$0x11]
      %v4486 = vsel %vm455, %v4481, %v4485
      %4487 = vst [vmem:[#allocation2 + $0x368] sm:$0x11] %v4486
      %4488 = vrot.lane.b32.xlu0 %v3552, 93
      %v4489 = vpop.permute.xlu0 %4488
      %4490 = vrot.lane.b32.xlu0 %v3553, 93
      %v4491 = vpop.permute.xlu0 %4490
      %4492 = vrot.lane.b32.xlu0 %v3554, 93
      %v4493 = vpop.permute.xlu0 %4492
      %4494 = vrot.lane.b32.xlu0 %v3555, 93
      %v4495 = vpop.permute.xlu0 %4494
      %v4496 = vrot.slane %v4489, 4
      %v4497 = vrot.slane %v4491, 4
      %v4498 = vrot.slane %v4493, 4
      %v4499 = vrot.slane %v4495, 4
      %v4500 = vsel %vm300, %v4496, %v4497
      %v4501 = vsel %vm1161, %v4489, %v4500
      %v4502 = vsel %vm300, %v4498, %v4499
      %v4503 = vsel %vm1161, %v4493, %v4502
      %4506 = vst [vmem:[#allocation2 + $0x330] sm:$0x88] %v4501
      %v4507 = vld [vmem:[#allocation2 + $0x370] sm:$0x11]
      %v4508 = vsel %vm455, %v4503, %v4507
      %4509 = vst [vmem:[#allocation2 + $0x370] sm:$0x11] %v4508
      %v4510 = vrot.slane %v3570, 4
      %v4511 = vsel %vm599, %v4510, %v4126
      %v4512 = vrot.slane %v3694, 4
      %v4513 = vsel %vm599, %v4512, %v4128
      %v4514 = vrot.slane %v3730, 4
      %v4515 = vrot.slane %v4514, 4
      %v4516 = vrot.slane %v3739, 4
      %v4517 = vrot.slane %v4516, 4
      %4518 = vrot.lane.b32.xlu0 %v4511, 93
      %v4519 = vpop.permute.xlu0 %4518
      %4520 = vrot.lane.b32.xlu0 %v4513, 93
      %v4521 = vpop.permute.xlu0 %4520
      %4522 = vrot.lane.b32.xlu0 %v4515, 93
      %v4523 = vpop.permute.xlu0 %4522
      %4524 = vrot.lane.b32.xlu0 %v4517, 93
      %v4525 = vpop.permute.xlu0 %4524
      %v4526 = vrot.slane %v4519, 4
      %v4527 = vrot.slane %v4521, 4
      %v4528 = vrot.slane %v4523, 4
      %v4529 = vrot.slane %v4525, 4
      %v4530 = vsel %vm300, %v4526, %v4527
      %v4531 = vsel %vm1161, %v4519, %v4530
      %v4532 = vsel %vm300, %v4528, %v4529
      %v4533 = vsel %vm1161, %v4523, %v4532
      %4536 = vst [vmem:[#allocation2 + $0x338] sm:$0x88] %v4531
      %v4537 = vld [vmem:[#allocation2 + $0x378] sm:$0x11]
      %v4538 = vsel %vm455, %v4533, %v4537
      %4539 = vst [vmem:[#allocation2 + $0x378] sm:$0x11] %v4538
      %4540 = vrot.lane.b32.xlu0 %v3562, 92
      %v4541 = vpop.permute.xlu0 %4540
      %4542 = vrot.lane.b32.xlu0 %v3669, 92
      %v4543 = vpop.permute.xlu0 %4542
      %v4544 = vrot.slane %v4541, 4
      %v4545 = vrot.slane %v4543, 4
      %v4546 = vsel %vm300, %v4544, %v4545
      %v4547 = vsel %vm1265, %v4541, %v4546
      %v4549 = vld [vmem:[#allocation2 + $0x340] sm:$0x33]
      %v4550 = vsel %vm648, %v4547, %v4549
      %4551 = vst [vmem:[#allocation2 + $0x340] sm:$0x33] %v4550
      %4552 = vrot.lane.b32.xlu0 %v3552, 92
      %v4553 = vpop.permute.xlu0 %4552
      %4554 = vrot.lane.b32.xlu0 %v3553, 92
      %v4555 = vpop.permute.xlu0 %4554
      %v4556 = vrot.slane %v4553, 4
      %v4557 = vrot.slane %v4555, 4
      %v4558 = vsel %vm300, %v4556, %v4557
      %v4559 = vsel %vm1265, %v4553, %v4558
      %v4561 = vld [vmem:[#allocation2 + $0x348] sm:$0x33]
      %v4562 = vsel %vm648, %v4559, %v4561
      %4563 = vst [vmem:[#allocation2 + $0x348] sm:$0x33] %v4562
      %4564 = vrot.lane.b32.xlu0 %v3573, 92
      %v4565 = vpop.permute.xlu0 %4564
      %4566 = vrot.lane.b32.xlu0 %v3697, 92
      %v4567 = vpop.permute.xlu0 %4566
      %v4568 = vrot.slane %v4565, 4
      %v4569 = vrot.slane %v4567, 4
      %v4570 = vsel %vm300, %v4568, %v4569
      %v4571 = vsel %vm1265, %v4565, %v4570
      %v4573 = vld [vmem:[#allocation2 + $0x350] sm:$0x33]
      %v4574 = vsel %vm648, %v4571, %v4573
      %4575 = vst [vmem:[#allocation2 + $0x350] sm:$0x33] %v4574
      %4576 = vrot.lane.b32.xlu0 %v3580, 92
      %v4577 = vpop.permute.xlu0 %4576
      %4578 = vrot.lane.b32.xlu0 %v3714, 92
      %v4579 = vpop.permute.xlu0 %4578
      %v4580 = vrot.slane %v4577, 4
      %v4581 = vrot.slane %v4579, 4
      %v4582 = vsel %vm300, %v4580, %v4581
      %v4583 = vsel %vm1265, %v4577, %v4582
      %v4585 = vld [vmem:[#allocation2 + $0x358] sm:$0x33]
      %v4586 = vsel %vm648, %v4583, %v4585
      %4587 = vst [vmem:[#allocation2 + $0x358] sm:$0x33] %v4586
      %4588 = vrot.lane.b32.xlu0 %v3588, 92
      %v4589 = vpop.permute.xlu0 %4588
      %4590 = vrot.lane.b32.xlu0 %v3805, 92
      %v4591 = vpop.permute.xlu0 %4590
      %v4592 = vrot.slane %v4589, 4
      %v4593 = vrot.slane %v4591, 4
      %v4594 = vsel %vm300, %v4592, %v4593
      %v4595 = vsel %vm1265, %v4589, %v4594
      %v4597 = vld [vmem:[#allocation2 + $0x360] sm:$0x33]
      %v4598 = vsel %vm648, %v4595, %v4597
      %4599 = vst [vmem:[#allocation2 + $0x360] sm:$0x33] %v4598
      %4600 = vrot.lane.b32.xlu0 %v3594, 92
      %v4601 = vpop.permute.xlu0 %4600
      %4602 = vrot.lane.b32.xlu0 %v3828, 92
      %v4603 = vpop.permute.xlu0 %4602
      %v4604 = vrot.slane %v4601, 4
      %v4605 = vrot.slane %v4603, 4
      %v4606 = vsel %vm300, %v4604, %v4605
      %v4607 = vsel %vm1265, %v4601, %v4606
      %v4609 = vld [vmem:[#allocation2 + $0x368] sm:$0x33]
      %v4610 = vsel %vm648, %v4607, %v4609
      %4611 = vst [vmem:[#allocation2 + $0x368] sm:$0x33] %v4610
      %v4612 = vsel %vm713, %v3851, %v4039
      %4613 = vrot.lane.b32.xlu0 %v3607, 92
      %v4614 = vpop.permute.xlu0 %4613
      %4615 = vrot.lane.b32.xlu0 %v4612, 92
      %v4616 = vpop.permute.xlu0 %4615
      %v4617 = vrot.slane %v4614, 4
      %v4618 = vrot.slane %v4616, 4
      %v4619 = vsel %vm300, %v4617, %v4618
      %v4620 = vsel %vm1265, %v4614, %v4619
      %v4622 = vld [vmem:[#allocation2 + $0x370] sm:$0x33]
      %v4623 = vsel %vm648, %v4620, %v4622
      %4624 = vst [vmem:[#allocation2 + $0x370] sm:$0x33] %v4623
      %4625 = vrot.lane.b32.xlu0 %v3616, 92
      %v4626 = vpop.permute.xlu0 %4625
      %4627 = vrot.lane.b32.xlu0 %v4227, 92
      %v4628 = vpop.permute.xlu0 %4627
      %v4629 = vrot.slane %v4626, 4
      %v4630 = vrot.slane %v4628, 4
      %v4631 = vsel %vm300, %v4629, %v4630
      %v4632 = vsel %vm1265, %v4626, %v4631
      %v4634 = vld [vmem:[#allocation2 + $0x378] sm:$0x33]
      %v4635 = vsel %vm648, %v4632, %v4634
      %4636 = vst [vmem:[#allocation2 + $0x378] sm:$0x33] %v4635
      %v4637 = vld [vmem:[%s1] sm:$0xf]
      %v4638 = vld [vmem:[#allocation2] sm:$0xff]
      %v4639 = vld [vmem:[#allocation2 + $0x8] sm:$0xff]
      %v4640 = vld [vmem:[#allocation2 + $0x10] sm:$0xff]
      %v4641 = vld [vmem:[#allocation2 + $0x18] sm:$0xff]
      %v4642 = vld [vmem:[#allocation2 + $0x20] sm:$0xff]
      %v4643 = vld [vmem:[#allocation2 + $0x28] sm:$0xff]
      %v4644 = vld [vmem:[#allocation2 + $0x30] sm:$0xff]
      %v4645 = vld [vmem:[#allocation2 + $0x38] sm:$0xff]
      %v4646 = vld [vmem:[#allocation2 + $0x40] sm:$0xff]
      %v4647 = vld [vmem:[#allocation2 + $0x48] sm:$0xff]
      %v4648 = vld [vmem:[#allocation2 + $0x50] sm:$0xff]
      %v4649 = vld [vmem:[#allocation2 + $0x58] sm:$0xff]
      %v4650 = vld [vmem:[#allocation2 + $0x60] sm:$0xff]
      %v4651 = vld [vmem:[#allocation2 + $0x68] sm:$0xff]
      %v4652 = vld [vmem:[#allocation2 + $0x70] sm:$0xff]
      %v4653 = vld [vmem:[#allocation2 + $0x78] sm:$0xff]
      %v4654 = vld [vmem:[#allocation2 + $0x80] sm:$0xff]
      %v4655 = vld [vmem:[#allocation2 + $0x88] sm:$0xff]
      %v4656 = vld [vmem:[#allocation2 + $0x90] sm:$0xff]
      %v4657 = vld [vmem:[#allocation2 + $0x98] sm:$0xff]
      %v4658 = vld [vmem:[#allocation2 + $0xa0] sm:$0xff]
      %v4659 = vld [vmem:[#allocation2 + $0xa8] sm:$0xff]
      %v4660 = vld [vmem:[#allocation2 + $0xb0] sm:$0xff]
      %v4661 = vld [vmem:[#allocation2 + $0xb8] sm:$0xff]
      %v4662 = vld [vmem:[#allocation2 + $0xc0] sm:$0xff]
      %v4663 = vld [vmem:[#allocation2 + $0xc8] sm:$0xff]
      %v4664 = vld [vmem:[#allocation2 + $0xd0] sm:$0xff]
      %v4665 = vld [vmem:[#allocation2 + $0xd8] sm:$0xff]
      %v4666 = vld [vmem:[#allocation2 + $0xe0] sm:$0xff]
      %v4667 = vld [vmem:[#allocation2 + $0xe8] sm:$0xff]
      %v4668 = vld [vmem:[#allocation2 + $0xf0] sm:$0xff]
      %v4669 = vld [vmem:[#allocation2 + $0xf8] sm:$0xff]
      %v4670 = vld [vmem:[#allocation2 + $0x100] sm:$0xff]
      %v4671 = vld [vmem:[#allocation2 + $0x108] sm:$0xff]
      %v4672 = vld [vmem:[#allocation2 + $0x110] sm:$0xff]
      %v4673 = vld [vmem:[#allocation2 + $0x118] sm:$0xff]
      %v4674 = vld [vmem:[#allocation2 + $0x120] sm:$0xff]
      %v4675 = vld [vmem:[#allocation2 + $0x128] sm:$0xff]
      %v4676 = vld [vmem:[#allocation2 + $0x130] sm:$0xff]
      %v4677 = vld [vmem:[#allocation2 + $0x138] sm:$0xff]
      %v4678 = vld [vmem:[#allocation2 + $0x140] sm:$0xff]
      %v4679 = vld [vmem:[#allocation2 + $0x148] sm:$0xff]
      %v4680 = vld [vmem:[#allocation2 + $0x150] sm:$0xff]
      %v4681 = vld [vmem:[#allocation2 + $0x158] sm:$0xff]
      %v4682 = vld [vmem:[#allocation2 + $0x160] sm:$0xff]
      %v4683 = vld [vmem:[#allocation2 + $0x168] sm:$0xff]
      %v4684 = vld [vmem:[#allocation2 + $0x170] sm:$0xff]
      %v4685 = vld [vmem:[#allocation2 + $0x178] sm:$0xff]
      %v4686 = vld [vmem:[#allocation2 + $0x180] sm:$0xff]
      %v4687 = vld [vmem:[#allocation2 + $0x188] sm:$0xff]
      %v4688 = vld [vmem:[#allocation2 + $0x190] sm:$0xff]
      %v4689 = vld [vmem:[#allocation2 + $0x198] sm:$0xff]
      %v4690 = vld [vmem:[#allocation2 + $0x1a0] sm:$0xff]
      %v4691 = vld [vmem:[#allocation2 + $0x1a8] sm:$0xff]
      %v4692 = vld [vmem:[#allocation2 + $0x1b0] sm:$0xff]
      %v4693 = vld [vmem:[#allocation2 + $0x1b8] sm:$0xff]
      %v4694 = vld [vmem:[#allocation2 + $0x1c0] sm:$0xff]
      %v4695 = vld [vmem:[#allocation2 + $0x1c8] sm:$0xff]
      %v4696 = vld [vmem:[#allocation2 + $0x1d0] sm:$0xff]
      %v4697 = vld [vmem:[#allocation2 + $0x1d8] sm:$0xff]
      %v4698 = vld [vmem:[#allocation2 + $0x1e0] sm:$0xff]
      %v4699 = vld [vmem:[#allocation2 + $0x1e8] sm:$0xff]
      %v4700 = vld [vmem:[#allocation2 + $0x1f0] sm:$0xff]
      %v4701 = vld [vmem:[#allocation2 + $0x1f8] sm:$0xff]
      %v4702 = vld [vmem:[#allocation2 + $0x200] sm:$0xff]
      %v4703 = vld [vmem:[#allocation2 + $0x208] sm:$0xff]
      %v4704 = vld [vmem:[#allocation2 + $0x210] sm:$0xff]
      %v4705 = vld [vmem:[#allocation2 + $0x218] sm:$0xff]
      %v4706 = vld [vmem:[#allocation2 + $0x220] sm:$0xff]
      %v4707 = vld [vmem:[#allocation2 + $0x228] sm:$0xff]
      %v4708 = vld [vmem:[#allocation2 + $0x230] sm:$0xff]
      %v4709 = vld [vmem:[#allocation2 + $0x238] sm:$0xff]
      %v4710 = vld [vmem:[#allocation2 + $0x240] sm:$0xff]
      %v4711 = vld [vmem:[#allocation2 + $0x248] sm:$0xff]
      %v4712 = vld [vmem:[#allocation2 + $0x250] sm:$0xff]
      %v4713 = vld [vmem:[#allocation2 + $0x258] sm:$0xff]
      %v4714 = vld [vmem:[#allocation2 + $0x260] sm:$0xff]
      %v4715 = vld [vmem:[#allocation2 + $0x268] sm:$0xff]
      %v4716 = vld [vmem:[#allocation2 + $0x270] sm:$0xff]
      %v4717 = vld [vmem:[#allocation2 + $0x278] sm:$0xff]
      %v4718 = vld [vmem:[#allocation2 + $0x280] sm:$0xff]
      %v4719 = vld [vmem:[#allocation2 + $0x288] sm:$0xff]
      %v4720 = vld [vmem:[#allocation2 + $0x290] sm:$0xff]
      %v4721 = vld [vmem:[#allocation2 + $0x298] sm:$0xff]
      %v4722 = vld [vmem:[#allocation2 + $0x2a0] sm:$0xff]
      %v4723 = vld [vmem:[#allocation2 + $0x2a8] sm:$0xff]
      %v4724 = vld [vmem:[#allocation2 + $0x2b0] sm:$0xff]
      %v4725 = vld [vmem:[#allocation2 + $0x2b8] sm:$0xff]
      %v4726 = vld [vmem:[#allocation2 + $0x2c0] sm:$0xff]
      %v4727 = vld [vmem:[#allocation2 + $0x2c8] sm:$0xff]
      %v4728 = vld [vmem:[#allocation2 + $0x2d0] sm:$0xff]
      %v4729 = vld [vmem:[#allocation2 + $0x2d8] sm:$0xff]
      %v4730 = vld [vmem:[#allocation2 + $0x2e0] sm:$0xff]
      %v4731 = vld [vmem:[#allocation2 + $0x2e8] sm:$0xff]
      %v4732 = vld [vmem:[#allocation2 + $0x2f0] sm:$0xff]
      %v4733 = vld [vmem:[#allocation2 + $0x2f8] sm:$0xff]
      %v4734 = vld [vmem:[#allocation2 + $0x300] sm:$0xff]
      %v4735 = vld [vmem:[#allocation2 + $0x308] sm:$0xff]
      %v4736 = vld [vmem:[#allocation2 + $0x310] sm:$0xff]
      %v4737 = vld [vmem:[#allocation2 + $0x318] sm:$0xff]
      %v4738 = vld [vmem:[#allocation2 + $0x320] sm:$0xff]
      %v4739 = vld [vmem:[#allocation2 + $0x328] sm:$0xff]
      %v4740 = vld [vmem:[#allocation2 + $0x330] sm:$0xff]
      %v4741 = vld [vmem:[#allocation2 + $0x338] sm:$0xff]
      %v4742 = vld [vmem:[#allocation2 + $0x340] sm:$0x33]
      %v4743 = vld [vmem:[#allocation2 + $0x348] sm:$0x33]
      %v4744 = vld [vmem:[#allocation2 + $0x350] sm:$0x33]
      %v4745 = vld [vmem:[#allocation2 + $0x358] sm:$0x33]
      %v4746 = vld [vmem:[#allocation2 + $0x360] sm:$0x33]
      %v4747 = vld [vmem:[#allocation2 + $0x368] sm:$0x33]
      %v4748 = vld [vmem:[#allocation2 + $0x370] sm:$0x33]
      %v4749 = vld [vmem:[#allocation2 + $0x378] sm:$0x33]
      %v4750 = vld [vmem:[%s2] sm:$0xff]
      %4752 = vset.pattern.permute.xlu0 0
      %4753 = vperm.xlu0 %4752, %v4750
      %v4754 = vpop.permute.xlu0 %4753
      %v4868 = vunpack.c.l.b16 %v4638
      %v4869 = vunpack.c.h.b16 %v4638
      %v4870 = vunpack.c.l.b16 %v4639
      %v4871 = vunpack.c.h.b16 %v4639
      %v4872 = vunpack.c.l.b16 %v4640
      %v4873 = vunpack.c.h.b16 %v4640
      %v4874 = vunpack.c.l.b16 %v4641
      %v4875 = vunpack.c.h.b16 %v4641
      %v4876 = vunpack.c.l.b16 %v4642
      %v4877 = vunpack.c.h.b16 %v4642
      %v4878 = vunpack.c.l.b16 %v4643
      %v4879 = vunpack.c.h.b16 %v4643
      %v4880 = vunpack.c.l.b16 %v4644
      %v4881 = vunpack.c.h.b16 %v4644
      %v4882 = vunpack.c.l.b16 %v4645
      %v4883 = vunpack.c.h.b16 %v4645
      %v4884 = vunpack.c.l.b16 %v4646
      %v4885 = vunpack.c.h.b16 %v4646
      %v4886 = vunpack.c.l.b16 %v4647
      %v4887 = vunpack.c.h.b16 %v4647
      %v4888 = vunpack.c.l.b16 %v4648
      %v4889 = vunpack.c.h.b16 %v4648
      %v4890 = vunpack.c.l.b16 %v4649
      %v4891 = vunpack.c.h.b16 %v4649
      %v4892 = vunpack.c.l.b16 %v4650
      %v4893 = vunpack.c.h.b16 %v4650
      %v4894 = vunpack.c.l.b16 %v4651
      %v4895 = vunpack.c.h.b16 %v4651
      %v4896 = vunpack.c.l.b16 %v4652
      %v4897 = vunpack.c.h.b16 %v4652
      %v4898 = vunpack.c.l.b16 %v4653
      %v4899 = vunpack.c.h.b16 %v4653
      %v4900 = vunpack.c.l.b16 %v4654
      %v4901 = vunpack.c.h.b16 %v4654
      %v4902 = vunpack.c.l.b16 %v4655
      %v4903 = vunpack.c.h.b16 %v4655
      %v4904 = vunpack.c.l.b16 %v4656
      %v4905 = vunpack.c.h.b16 %v4656
      %v4906 = vunpack.c.l.b16 %v4657
      %v4907 = vunpack.c.h.b16 %v4657
      %v4908 = vunpack.c.l.b16 %v4658
      %v4909 = vunpack.c.h.b16 %v4658
      %v4910 = vunpack.c.l.b16 %v4659
      %v4911 = vunpack.c.h.b16 %v4659
      %v4912 = vunpack.c.l.b16 %v4660
      %v4913 = vunpack.c.h.b16 %v4660
      %v4914 = vunpack.c.l.b16 %v4661
      %v4915 = vunpack.c.h.b16 %v4661
      %v4916 = vunpack.c.l.b16 %v4662
      %v4917 = vunpack.c.h.b16 %v4662
      %v4918 = vunpack.c.l.b16 %v4663
      %v4919 = vunpack.c.h.b16 %v4663
      %v4920 = vunpack.c.l.b16 %v4664
      %v4921 = vunpack.c.h.b16 %v4664
      %v4922 = vunpack.c.l.b16 %v4665
      %v4923 = vunpack.c.h.b16 %v4665
      %v4924 = vunpack.c.l.b16 %v4666
      %v4925 = vunpack.c.h.b16 %v4666
      %v4926 = vunpack.c.l.b16 %v4667
      %v4927 = vunpack.c.h.b16 %v4667
      %v4928 = vunpack.c.l.b16 %v4668
      %v4929 = vunpack.c.h.b16 %v4668
      %v4930 = vunpack.c.l.b16 %v4669
      %v4931 = vunpack.c.h.b16 %v4669
      %v4932 = vunpack.c.l.b16 %v4670
      %v4933 = vunpack.c.h.b16 %v4670
      %v4934 = vunpack.c.l.b16 %v4671
      %v4935 = vunpack.c.h.b16 %v4671
      %v4936 = vunpack.c.l.b16 %v4672
      %v4937 = vunpack.c.h.b16 %v4672
      %v4938 = vunpack.c.l.b16 %v4673
      %v4939 = vunpack.c.h.b16 %v4673
      %v4940 = vunpack.c.l.b16 %v4674
      %v4941 = vunpack.c.h.b16 %v4674
      %v4942 = vunpack.c.l.b16 %v4675
      %v4943 = vunpack.c.h.b16 %v4675
      %v4944 = vunpack.c.l.b16 %v4676
      %v4945 = vunpack.c.h.b16 %v4676
      %v4946 = vunpack.c.l.b16 %v4677
      %v4947 = vunpack.c.h.b16 %v4677
      %v4948 = vunpack.c.l.b16 %v4678
      %v4949 = vunpack.c.h.b16 %v4678
      %v4950 = vunpack.c.l.b16 %v4679
      %v4951 = vunpack.c.h.b16 %v4679
      %v4952 = vunpack.c.l.b16 %v4680
      %v4953 = vunpack.c.h.b16 %v4680
      %v4954 = vunpack.c.l.b16 %v4681
      %v4955 = vunpack.c.h.b16 %v4681
      %v4956 = vunpack.c.l.b16 %v4682
      %v4957 = vunpack.c.h.b16 %v4682
      %v4958 = vunpack.c.l.b16 %v4683
      %v4959 = vunpack.c.h.b16 %v4683
      %v4960 = vunpack.c.l.b16 %v4684
      %v4961 = vunpack.c.h.b16 %v4684
      %v4962 = vunpack.c.l.b16 %v4685
      %v4963 = vunpack.c.h.b16 %v4685
      %v4964 = vunpack.c.l.b16 %v4686
      %v4965 = vunpack.c.h.b16 %v4686
      %v4966 = vunpack.c.l.b16 %v4687
      %v4967 = vunpack.c.h.b16 %v4687
      %v4968 = vunpack.c.l.b16 %v4688
      %v4969 = vunpack.c.h.b16 %v4688
      %v4970 = vunpack.c.l.b16 %v4689
      %v4971 = vunpack.c.h.b16 %v4689
      %v4972 = vunpack.c.l.b16 %v4690
      %v4973 = vunpack.c.h.b16 %v4690
      %v4974 = vunpack.c.l.b16 %v4691
      %v4975 = vunpack.c.h.b16 %v4691
      %v4976 = vunpack.c.l.b16 %v4692
      %v4977 = vunpack.c.h.b16 %v4692
      %v4978 = vunpack.c.l.b16 %v4693
      %v4979 = vunpack.c.h.b16 %v4693
      %v4980 = vunpack.c.l.b16 %v4694
      %v4981 = vunpack.c.h.b16 %v4694
      %v4982 = vunpack.c.l.b16 %v4695
      %v4983 = vunpack.c.h.b16 %v4695
      %v4984 = vunpack.c.l.b16 %v4696
      %v4985 = vunpack.c.h.b16 %v4696
      %v4986 = vunpack.c.l.b16 %v4697
      %v4987 = vunpack.c.h.b16 %v4697
      %v4988 = vunpack.c.l.b16 %v4698
      %v4989 = vunpack.c.h.b16 %v4698
      %v4990 = vunpack.c.l.b16 %v4699
      %v4991 = vunpack.c.h.b16 %v4699
      %v4992 = vunpack.c.l.b16 %v4700
      %v4993 = vunpack.c.h.b16 %v4700
      %v4994 = vunpack.c.l.b16 %v4701
      %v4995 = vunpack.c.h.b16 %v4701
      %v4996 = vunpack.c.l.b16 %v4702
      %v4997 = vunpack.c.h.b16 %v4702
      %v4998 = vunpack.c.l.b16 %v4703
      %v4999 = vunpack.c.h.b16 %v4703
      %v5000 = vunpack.c.l.b16 %v4704
      %v5001 = vunpack.c.h.b16 %v4704
      %v5002 = vunpack.c.l.b16 %v4705
      %v5003 = vunpack.c.h.b16 %v4705
      %v5004 = vunpack.c.l.b16 %v4706
      %v5005 = vunpack.c.h.b16 %v4706
      %v5006 = vunpack.c.l.b16 %v4707
      %v5007 = vunpack.c.h.b16 %v4707
      %v5008 = vunpack.c.l.b16 %v4708
      %v5009 = vunpack.c.h.b16 %v4708
      %v5010 = vunpack.c.l.b16 %v4709
      %v5011 = vunpack.c.h.b16 %v4709
      %v5012 = vunpack.c.l.b16 %v4710
      %v5013 = vunpack.c.h.b16 %v4710
      %v5014 = vunpack.c.l.b16 %v4711
      %v5015 = vunpack.c.h.b16 %v4711
      %v5016 = vunpack.c.l.b16 %v4712
      %v5017 = vunpack.c.h.b16 %v4712
      %v5018 = vunpack.c.l.b16 %v4713
      %v5019 = vunpack.c.h.b16 %v4713
      %v5020 = vunpack.c.l.b16 %v4714
      %v5021 = vunpack.c.h.b16 %v4714
      %v5022 = vunpack.c.l.b16 %v4715
      %v5023 = vunpack.c.h.b16 %v4715
      %v5024 = vunpack.c.l.b16 %v4716
      %v5025 = vunpack.c.h.b16 %v4716
      %v5026 = vunpack.c.l.b16 %v4717
      %v5027 = vunpack.c.h.b16 %v4717
      %v5028 = vunpack.c.l.b16 %v4718
      %v5029 = vunpack.c.h.b16 %v4718
      %v5030 = vunpack.c.l.b16 %v4719
      %v5031 = vunpack.c.h.b16 %v4719
      %v5032 = vunpack.c.l.b16 %v4720
      %v5033 = vunpack.c.h.b16 %v4720
      %v5034 = vunpack.c.l.b16 %v4721
      %v5035 = vunpack.c.h.b16 %v4721
      %v5036 = vunpack.c.l.b16 %v4722
      %v5037 = vunpack.c.h.b16 %v4722
      %v5038 = vunpack.c.l.b16 %v4723
      %v5039 = vunpack.c.h.b16 %v4723
      %v5040 = vunpack.c.l.b16 %v4724
      %v5041 = vunpack.c.h.b16 %v4724
      %v5042 = vunpack.c.l.b16 %v4725
      %v5043 = vunpack.c.h.b16 %v4725
      %v5044 = vunpack.c.l.b16 %v4726
      %v5045 = vunpack.c.h.b16 %v4726
      %v5046 = vunpack.c.l.b16 %v4727
      %v5047 = vunpack.c.h.b16 %v4727
      %v5048 = vunpack.c.l.b16 %v4728
      %v5049 = vunpack.c.h.b16 %v4728
      %v5050 = vunpack.c.l.b16 %v4729
      %v5051 = vunpack.c.h.b16 %v4729
      %v5052 = vunpack.c.l.b16 %v4730
      %v5053 = vunpack.c.h.b16 %v4730
      %v5054 = vunpack.c.l.b16 %v4731
      %v5055 = vunpack.c.h.b16 %v4731
      %v5056 = vunpack.c.l.b16 %v4732
      %v5057 = vunpack.c.h.b16 %v4732
      %v5058 = vunpack.c.l.b16 %v4733
      %v5059 = vunpack.c.h.b16 %v4733
      %v5060 = vunpack.c.l.b16 %v4734
      %v5061 = vunpack.c.h.b16 %v4734
      %v5062 = vunpack.c.l.b16 %v4735
      %v5063 = vunpack.c.h.b16 %v4735
      %v5064 = vunpack.c.l.b16 %v4736
      %v5065 = vunpack.c.h.b16 %v4736
      %v5066 = vunpack.c.l.b16 %v4737
      %v5067 = vunpack.c.h.b16 %v4737
      %v5068 = vunpack.c.l.b16 %v4738
      %v5069 = vunpack.c.h.b16 %v4738
      %v5070 = vunpack.c.l.b16 %v4739
      %v5071 = vunpack.c.h.b16 %v4739
      %v5072 = vunpack.c.l.b16 %v4740
      %v5073 = vunpack.c.h.b16 %v4740
      %v5074 = vunpack.c.l.b16 %v4741
      %v5075 = vunpack.c.h.b16 %v4741
      %v5076 = vunpack.c.l.b16 %v4742
      %v5077 = vunpack.c.h.b16 %v4742
      %v5078 = vunpack.c.l.b16 %v4743
      %v5079 = vunpack.c.h.b16 %v4743
      %v5080 = vunpack.c.l.b16 %v4744
      %v5081 = vunpack.c.h.b16 %v4744
      %v5082 = vunpack.c.l.b16 %v4745
      %v5083 = vunpack.c.h.b16 %v4745
      %v5084 = vunpack.c.l.b16 %v4746
      %v5085 = vunpack.c.h.b16 %v4746
      %v5086 = vunpack.c.l.b16 %v4747
      %v5087 = vunpack.c.h.b16 %v4747
      %v5088 = vunpack.c.l.b16 %v4748
      %v5089 = vunpack.c.h.b16 %v4748
      %v5090 = vunpack.c.l.b16 %v4749
      %v5091 = vunpack.c.h.b16 %v4749
      %v5092 = vpack.c.b16 %v4884, %v4868
      %v5093 = vpack.c.b16 %v4885, %v4869
      %v5094 = vpack.c.b16 %v4886, %v4870
      %v5095 = vpack.c.b16 %v4887, %v4871
      %v5096 = vpack.c.b16 %v4888, %v4872
      %v5097 = vpack.c.b16 %v4889, %v4873
      %v5098 = vpack.c.b16 %v4890, %v4874
      %v5099 = vpack.c.b16 %v4891, %v4875
      %v5100 = vpack.c.b16 %v4892, %v4876
      %v5101 = vpack.c.b16 %v4893, %v4877
      %v5102 = vpack.c.b16 %v4894, %v4878
      %v5103 = vpack.c.b16 %v4895, %v4879
      %v5104 = vpack.c.b16 %v4896, %v4880
      %v5105 = vpack.c.b16 %v4897, %v4881
      %v5106 = vpack.c.b16 %v4898, %v4882
      %v5107 = vpack.c.b16 %v4899, %v4883
      %v5108 = vpack.c.b16 %v4916, %v4900
      %v5109 = vpack.c.b16 %v4917, %v4901
      %v5110 = vpack.c.b16 %v4918, %v4902
      %v5111 = vpack.c.b16 %v4919, %v4903
      %v5112 = vpack.c.b16 %v4920, %v4904
      %v5113 = vpack.c.b16 %v4921, %v4905
      %v5114 = vpack.c.b16 %v4922, %v4906
      %v5115 = vpack.c.b16 %v4923, %v4907
      %v5116 = vpack.c.b16 %v4924, %v4908
      %v5117 = vpack.c.b16 %v4925, %v4909
      %v5118 = vpack.c.b16 %v4926, %v4910
      %v5119 = vpack.c.b16 %v4927, %v4911
      %v5120 = vpack.c.b16 %v4928, %v4912
      %v5121 = vpack.c.b16 %v4929, %v4913
      %v5122 = vpack.c.b16 %v4930, %v4914
      %v5123 = vpack.c.b16 %v4931, %v4915
      %v5124 = vpack.c.b16 %v4948, %v4932
      %v5125 = vpack.c.b16 %v4949, %v4933
      %v5126 = vpack.c.b16 %v4950, %v4934
      %v5127 = vpack.c.b16 %v4951, %v4935
      %v5128 = vpack.c.b16 %v4952, %v4936
      %v5129 = vpack.c.b16 %v4953, %v4937
      %v5130 = vpack.c.b16 %v4954, %v4938
      %v5131 = vpack.c.b16 %v4955, %v4939
      %v5132 = vpack.c.b16 %v4956, %v4940
      %v5133 = vpack.c.b16 %v4957, %v4941
      %v5134 = vpack.c.b16 %v4958, %v4942
      %v5135 = vpack.c.b16 %v4959, %v4943
      %v5136 = vpack.c.b16 %v4960, %v4944
      %v5137 = vpack.c.b16 %v4961, %v4945
      %v5138 = vpack.c.b16 %v4962, %v4946
      %v5139 = vpack.c.b16 %v4963, %v4947
      %v5140 = vpack.c.b16 %v4980, %v4964
      %v5141 = vpack.c.b16 %v4981, %v4965
      %v5142 = vpack.c.b16 %v4982, %v4966
      %v5143 = vpack.c.b16 %v4983, %v4967
      %v5144 = vpack.c.b16 %v4984, %v4968
      %v5145 = vpack.c.b16 %v4985, %v4969
      %v5146 = vpack.c.b16 %v4986, %v4970
      %v5147 = vpack.c.b16 %v4987, %v4971
      %v5148 = vpack.c.b16 %v4988, %v4972
      %v5149 = vpack.c.b16 %v4989, %v4973
      %v5150 = vpack.c.b16 %v4990, %v4974
      %v5151 = vpack.c.b16 %v4991, %v4975
      %v5152 = vpack.c.b16 %v4992, %v4976
      %v5153 = vpack.c.b16 %v4993, %v4977
      %v5154 = vpack.c.b16 %v4994, %v4978
      %v5155 = vpack.c.b16 %v4995, %v4979
      %v5156 = vpack.c.b16 %v5012, %v4996
      %v5157 = vpack.c.b16 %v5013, %v4997
      %v5158 = vpack.c.b16 %v5014, %v4998
      %v5159 = vpack.c.b16 %v5015, %v4999
      %v5160 = vpack.c.b16 %v5016, %v5000
      %v5161 = vpack.c.b16 %v5017, %v5001
      %v5162 = vpack.c.b16 %v5018, %v5002
      %v5163 = vpack.c.b16 %v5019, %v5003
      %v5164 = vpack.c.b16 %v5020, %v5004
      %v5165 = vpack.c.b16 %v5021, %v5005
      %v5166 = vpack.c.b16 %v5022, %v5006
      %v5167 = vpack.c.b16 %v5023, %v5007
      %v5168 = vpack.c.b16 %v5024, %v5008
      %v5169 = vpack.c.b16 %v5025, %v5009
      %v5170 = vpack.c.b16 %v5026, %v5010
      %v5171 = vpack.c.b16 %v5027, %v5011
      %v5172 = vpack.c.b16 %v5044, %v5028
      %v5173 = vpack.c.b16 %v5045, %v5029
      %v5174 = vpack.c.b16 %v5046, %v5030
      %v5175 = vpack.c.b16 %v5047, %v5031
      %v5176 = vpack.c.b16 %v5048, %v5032
      %v5177 = vpack.c.b16 %v5049, %v5033
      %v5178 = vpack.c.b16 %v5050, %v5034
      %v5179 = vpack.c.b16 %v5051, %v5035
      %v5180 = vpack.c.b16 %v5052, %v5036
      %v5181 = vpack.c.b16 %v5053, %v5037
      %v5182 = vpack.c.b16 %v5054, %v5038
      %v5183 = vpack.c.b16 %v5055, %v5039
      %v5184 = vpack.c.b16 %v5056, %v5040
      %v5185 = vpack.c.b16 %v5057, %v5041
      %v5186 = vpack.c.b16 %v5058, %v5042
      %v5187 = vpack.c.b16 %v5059, %v5043
      %v5188 = vpack.c.b16 %v5076, %v5060
      %v5189 = vpack.c.b16 %v5077, %v5061
      %v5190 = vpack.c.b16 %v5078, %v5062
      %v5191 = vpack.c.b16 %v5079, %v5063
      %v5192 = vpack.c.b16 %v5080, %v5064
      %v5193 = vpack.c.b16 %v5081, %v5065
      %v5194 = vpack.c.b16 %v5082, %v5066
      %v5195 = vpack.c.b16 %v5083, %v5067
      %v5196 = vpack.c.b16 %v5084, %v5068
      %v5197 = vpack.c.b16 %v5085, %v5069
      %v5198 = vpack.c.b16 %v5086, %v5070
      %v5199 = vpack.c.b16 %v5087, %v5071
      %v5200 = vpack.c.b16 %v5088, %v5072
      %v5201 = vpack.c.b16 %v5089, %v5073
      %v5202 = vpack.c.b16 %v5090, %v5074
      %v5203 = vpack.c.b16 %v5091, %v5075
      %vm5300 = vcmask 883712
      %v5302 = vsel %vm5300, %v4637, 0
      %vm5304 = vcmask 1045504
      %v5306 = vsel %vm5304, %v5188, 0
      %v5309 = vsel %vm5304, %v5189, 0
      %v5312 = vsel %vm5304, %v5190, 0
      %v5315 = vsel %vm5304, %v5191, 0
      %v5318 = vsel %vm5304, %v5192, 0
      %v5321 = vsel %vm5304, %v5193, 0
      %v5324 = vsel %vm5304, %v5194, 0
      %v5327 = vsel %vm5304, %v5195, 0
      %v5330 = vsel %vm5304, %v5196, 0
      %v5333 = vsel %vm5304, %v5197, 0
      %v5336 = vsel %vm5304, %v5198, 0
      %v5339 = vsel %vm5304, %v5199, 0
      %v5342 = vsel %vm5304, %v5200, 0
      %v5345 = vsel %vm5304, %v5201, 0
      %v5348 = vsel %vm5304, %v5202, 0
      %v5351 = vsel %vm5304, %v5203, 0
      %5353 = vmatprep.subr.bf16.mxu0 %v5093
      %5354 = vmatpush1.bf16.msra.mxu0 %v5092
      %5355 = vmatprep.subr.bf16.mxu0 %v5109
      %5356 = vmatpush1.bf16.msra.mxu0 %v5108
      %5357 = vmatprep.subr.bf16.mxu0 %v5125
      %5358 = vmatpush1.bf16.msra.mxu0 %v5124
      %5359 = vmatprep.subr.bf16.mxu0 %v5141
      %5360 = vmatpush1.bf16.msra.mxu0 %v5140
      %5361 = vmatprep.subr.bf16.mxu0 %v5157
      %5362 = vmatpush1.bf16.msra.mxu0 %v5156
      %5363 = vmatprep.subr.bf16.mxu0 %v5173
      %5364 = vmatpush1.bf16.msra.mxu0 %v5172
      %5365 = vmatprep.subr.bf16.mxu0 %v5309
      %5366 = vmatpush1.bf16.msra.mxu0 %v5306
      %5367 = vmatprep.subr.bf16.mxu0 0
      %5368 = vmatpush1.bf16.msra.mxu0 0
      %5369 = vmatprep.subr.bf16.mxu0 0
      %5370 = vmatpush1.bf16.msra.mxu0 0
      %5371 = vmatprep.subr.bf16.mxu0 0
      %5372 = vmatpush1.bf16.msra.mxu0 0
      %5373 = vmatprep.subr.bf16.mxu0 0
      %5374 = vmatpush1.bf16.msra.mxu0 0
      %5375 = vmatprep.subr.bf16.mxu0 0
      %5376 = vmatpush1.bf16.msra.mxu0 0
      %5377 = vmatprep.subr.bf16.mxu0 0
      %5378 = vmatpush1.bf16.msra.mxu0 0
      %5379 = vmatprep.subr.bf16.mxu0 0
      %5380 = vmatpush1.bf16.msra.mxu0 0
      %5381 = vmatprep.subr.bf16.mxu0 0
      %5382 = vmatpush1.bf16.msra.mxu0 0
      %5383 = vmatprep.subr.bf16.mxu0 0
      %5384 = vmatpush1.bf16.msra.mxu0 0
      %5385 = vmatprep.mubr.bf16.mxu0 0
      %5386 = vmatmul.mubr.bf16.gmra.mrb[0].mxu0 %v5302
      %v5387 = vpop.f32.mrb[0].mxu0
      %v5388 = vadd.f32 %v4754, %v5387
      %v5389 = vpop.f32.mrb[0].mxu0
      %v5390 = vadd.f32 %v4754, %v5389
      %v5391 = vpop.f32.mrb[0].mxu0
      %v5392 = vpop.f32.mrb[0].mxu0
      %5393 = vdwg.mxu0
      %5394 = vmatprep.subr.bf16.mxu0 %v5095
      %5395 = vmatpush1.bf16.msra.mxu0 %v5094
      %5396 = vmatprep.subr.bf16.mxu0 %v5111
      %5397 = vmatpush1.bf16.msra.mxu0 %v5110
      %5398 = vmatprep.subr.bf16.mxu0 %v5127
      %5399 = vmatpush1.bf16.msra.mxu0 %v5126
      %5400 = vmatprep.subr.bf16.mxu0 %v5143
      %5401 = vmatpush1.bf16.msra.mxu0 %v5142
      %5402 = vmatprep.subr.bf16.mxu0 %v5159
      %5403 = vmatpush1.bf16.msra.mxu0 %v5158
      %5404 = vmatprep.subr.bf16.mxu0 %v5175
      %5405 = vmatpush1.bf16.msra.mxu0 %v5174
      %5406 = vmatprep.subr.bf16.mxu0 %v5315
      %5407 = vmatpush1.bf16.msra.mxu0 %v5312
      %5408 = vmatprep.subr.bf16.mxu0 0
      %5409 = vmatpush1.bf16.msra.mxu0 0
      %5410 = vmatprep.subr.bf16.mxu0 0
      %5411 = vmatpush1.bf16.msra.mxu0 0
      %5412 = vmatprep.subr.bf16.mxu0 0
      %5413 = vmatpush1.bf16.msra.mxu0 0
      %5414 = vmatprep.subr.bf16.mxu0 0
      %5415 = vmatpush1.bf16.msra.mxu0 0
      %5416 = vmatprep.subr.bf16.mxu0 0
      %5417 = vmatpush1.bf16.msra.mxu0 0
      %5418 = vmatprep.subr.bf16.mxu0 0
      %5419 = vmatpush1.bf16.msra.mxu0 0
      %5420 = vmatprep.subr.bf16.mxu0 0
      %5421 = vmatpush1.bf16.msra.mxu0 0
      %5422 = vmatprep.subr.bf16.mxu0 0
      %5423 = vmatpush1.bf16.msra.mxu0 0
      %5424 = vmatprep.subr.bf16.mxu0 0
      %5425 = vmatpush1.bf16.msra.mxu0 0
      %5426 = vmatprep.mubr.bf16.mxu0 0
      %5427 = vmatmul.mubr.bf16.gmra.mrb[0].mxu0 %v5302
      %v5428 = vpop.f32.mrb[0].mxu0
      %v5429 = vadd.f32 %v4754, %v5428
      %v5430 = vpop.f32.mrb[0].mxu0
      %v5431 = vadd.f32 %v4754, %v5430
      %v5432 = vpop.f32.mrb[0].mxu0
      %v5433 = vpop.f32.mrb[0].mxu0
      %5434 = vdwg.mxu0
      %5435 = vmatprep.subr.bf16.mxu0 %v5097
      %5436 = vmatpush1.bf16.msra.mxu0 %v5096
      %5437 = vmatprep.subr.bf16.mxu0 %v5113
      %5438 = vmatpush1.bf16.msra.mxu0 %v5112
      %5439 = vmatprep.subr.bf16.mxu0 %v5129
      %5440 = vmatpush1.bf16.msra.mxu0 %v5128
      %5441 = vmatprep.subr.bf16.mxu0 %v5145
      %5442 = vmatpush1.bf16.msra.mxu0 %v5144
      %5443 = vmatprep.subr.bf16.mxu0 %v5161
      %5444 = vmatpush1.bf16.msra.mxu0 %v5160
      %5445 = vmatprep.subr.bf16.mxu0 %v5177
      %5446 = vmatpush1.bf16.msra.mxu0 %v5176
      %5447 = vmatprep.subr.bf16.mxu0 %v5321
      %5448 = vmatpush1.bf16.msra.mxu0 %v5318
      %5449 = vmatprep.subr.bf16.mxu0 0
      %5450 = vmatpush1.bf16.msra.mxu0 0
      %5451 = vmatprep.subr.bf16.mxu0 0
      %5452 = vmatpush1.bf16.msra.mxu0 0
      %5453 = vmatprep.subr.bf16.mxu0 0
      %5454 = vmatpush1.bf16.msra.mxu0 0
      %5455 = vmatprep.subr.bf16.mxu0 0
      %5456 = vmatpush1.bf16.msra.mxu0 0
      %5457 = vmatprep.subr.bf16.mxu0 0
      %5458 = vmatpush1.bf16.msra.mxu0 0
      %5459 = vmatprep.subr.bf16.mxu0 0
      %5460 = vmatpush1.bf16.msra.mxu0 0
      %5461 = vmatprep.subr.bf16.mxu0 0
      %5462 = vmatpush1.bf16.msra.mxu0 0
      %5463 = vmatprep.subr.bf16.mxu0 0
      %5464 = vmatpush1.bf16.msra.mxu0 0
      %5465 = vmatprep.subr.bf16.mxu0 0
      %5466 = vmatpush1.bf16.msra.mxu0 0
      %5467 = vmatprep.mubr.bf16.mxu0 0
      %5468 = vmatmul.mubr.bf16.gmra.mrb[0].mxu0 %v5302
      %v5469 = vpop.f32.mrb[0].mxu0
      %v5470 = vadd.f32 %v4754, %v5469
      %v5471 = vpop.f32.mrb[0].mxu0
      %v5472 = vadd.f32 %v4754, %v5471
      %v5473 = vpop.f32.mrb[0].mxu0
      %v5474 = vpop.f32.mrb[0].mxu0
      %5475 = vdwg.mxu0
      %5476 = vmatprep.subr.bf16.mxu0 %v5099
      %5477 = vmatpush1.bf16.msra.mxu0 %v5098
      %5478 = vmatprep.subr.bf16.mxu0 %v5115
      %5479 = vmatpush1.bf16.msra.mxu0 %v5114
      %5480 = vmatprep.subr.bf16.mxu0 %v5131
      %5481 = vmatpush1.bf16.msra.mxu0 %v5130
      %5482 = vmatprep.subr.bf16.mxu0 %v5147
      %5483 = vmatpush1.bf16.msra.mxu0 %v5146
      %5484 = vmatprep.subr.bf16.mxu0 %v5163
      %5485 = vmatpush1.bf16.msra.mxu0 %v5162
      %5486 = vmatprep.subr.bf16.mxu0 %v5179
      %5487 = vmatpush1.bf16.msra.mxu0 %v5178
      %5488 = vmatprep.subr.bf16.mxu0 %v5327
      %5489 = vmatpush1.bf16.msra.mxu0 %v5324
      %5490 = vmatprep.subr.bf16.mxu0 0
      %5491 = vmatpush1.bf16.msra.mxu0 0
      %5492 = vmatprep.subr.bf16.mxu0 0
      %5493 = vmatpush1.bf16.msra.mxu0 0
      %5494 = vmatprep.subr.bf16.mxu0 0
      %5495 = vmatpush1.bf16.msra.mxu0 0
      %5496 = vmatprep.subr.bf16.mxu0 0
      %5497 = vmatpush1.bf16.msra.mxu0 0
      %5498 = vmatprep.subr.bf16.mxu0 0
      %5499 = vmatpush1.bf16.msra.mxu0 0
      %5500 = vmatprep.subr.bf16.mxu0 0
      %5501 = vmatpush1.bf16.msra.mxu0 0
      %5502 = vmatprep.subr.bf16.mxu0 0
      %5503 = vmatpush1.bf16.msra.mxu0 0
      %5504 = vmatprep.subr.bf16.mxu0 0
      %5505 = vmatpush1.bf16.msra.mxu0 0
      %5506 = vmatprep.subr.bf16.mxu0 0
      %5507 = vmatpush1.bf16.msra.mxu0 0
      %5508 = vmatprep.mubr.bf16.mxu0 0
      %5509 = vmatmul.mubr.bf16.gmra.mrb[0].mxu0 %v5302
      %v5510 = vpop.f32.mrb[0].mxu0
      %v5511 = vadd.f32 %v4754, %v5510
      %v5512 = vpop.f32.mrb[0].mxu0
      %v5513 = vadd.f32 %v4754, %v5512
      %v5514 = vpop.f32.mrb[0].mxu0
      %v5515 = vpop.f32.mrb[0].mxu0
      %5516 = vdwg.mxu0
      %5517 = vmatprep.subr.bf16.mxu0 %v5101
      %5518 = vmatpush1.bf16.msra.mxu0 %v5100
      %5519 = vmatprep.subr.bf16.mxu0 %v5117
      %5520 = vmatpush1.bf16.msra.mxu0 %v5116
      %5521 = vmatprep.subr.bf16.mxu0 %v5133
      %5522 = vmatpush1.bf16.msra.mxu0 %v5132
      %5523 = vmatprep.subr.bf16.mxu0 %v5149
      %5524 = vmatpush1.bf16.msra.mxu0 %v5148
      %5525 = vmatprep.subr.bf16.mxu0 %v5165
      %5526 = vmatpush1.bf16.msra.mxu0 %v5164
      %5527 = vmatprep.subr.bf16.mxu0 %v5181
      %5528 = vmatpush1.bf16.msra.mxu0 %v5180
      %5529 = vmatprep.subr.bf16.mxu0 %v5333
      %5530 = vmatpush1.bf16.msra.mxu0 %v5330
      %5531 = vmatprep.subr.bf16.mxu0 0
      %5532 = vmatpush1.bf16.msra.mxu0 0
      %5533 = vmatprep.subr.bf16.mxu0 0
      %5534 = vmatpush1.bf16.msra.mxu0 0
      %5535 = vmatprep.subr.bf16.mxu0 0
      %5536 = vmatpush1.bf16.msra.mxu0 0
      %5537 = vmatprep.subr.bf16.mxu0 0
      %5538 = vmatpush1.bf16.msra.mxu0 0
      %5539 = vmatprep.subr.bf16.mxu0 0
      %5540 = vmatpush1.bf16.msra.mxu0 0
      %5541 = vmatprep.subr.bf16.mxu0 0
      %5542 = vmatpush1.bf16.msra.mxu0 0
      %5543 = vmatprep.subr.bf16.mxu0 0
      %5544 = vmatpush1.bf16.msra.mxu0 0
      %5545 = vmatprep.subr.bf16.mxu0 0
      %5546 = vmatpush1.bf16.msra.mxu0 0
      %5547 = vmatprep.subr.bf16.mxu0 0
      %5548 = vmatpush1.bf16.msra.mxu0 0
      %5549 = vmatprep.mubr.bf16.mxu0 0
      %5550 = vmatmul.mubr.bf16.gmra.mrb[0].mxu0 %v5302
      %v5551 = vpop.f32.mrb[0].mxu0
      %v5552 = vadd.f32 %v4754, %v5551
      %v5553 = vpop.f32.mrb[0].mxu0
      %v5554 = vadd.f32 %v4754, %v5553
      %v5555 = vpop.f32.mrb[0].mxu0
      %v5556 = vpop.f32.mrb[0].mxu0
      %5557 = vdwg.mxu0
      %5558 = vmatprep.subr.bf16.mxu0 %v5103
      %5559 = vmatpush1.bf16.msra.mxu0 %v5102
      %5560 = vmatprep.subr.bf16.mxu0 %v5119
      %5561 = vmatpush1.bf16.msra.mxu0 %v5118
      %5562 = vmatprep.subr.bf16.mxu0 %v5135
      %5563 = vmatpush1.bf16.msra.mxu0 %v5134
      %5564 = vmatprep.subr.bf16.mxu0 %v5151
      %5565 = vmatpush1.bf16.msra.mxu0 %v5150
      %5566 = vmatprep.subr.bf16.mxu0 %v5167
      %5567 = vmatpush1.bf16.msra.mxu0 %v5166
      %5568 = vmatprep.subr.bf16.mxu0 %v5183
      %5569 = vmatpush1.bf16.msra.mxu0 %v5182
      %5570 = vmatprep.subr.bf16.mxu0 %v5339
      %5571 = vmatpush1.bf16.msra.mxu0 %v5336
      %5572 = vmatprep.subr.bf16.mxu0 0
      %5573 = vmatpush1.bf16.msra.mxu0 0
      %5574 = vmatprep.subr.bf16.mxu0 0
      %5575 = vmatpush1.bf16.msra.mxu0 0
      %5576 = vmatprep.subr.bf16.mxu0 0
      %5577 = vmatpush1.bf16.msra.mxu0 0
      %5578 = vmatprep.subr.bf16.mxu0 0
      %5579 = vmatpush1.bf16.msra.mxu0 0
      %5580 = vmatprep.subr.bf16.mxu0 0
      %5581 = vmatpush1.bf16.msra.mxu0 0
      %5582 = vmatprep.subr.bf16.mxu0 0
      %5583 = vmatpush1.bf16.msra.mxu0 0
      %5584 = vmatprep.subr.bf16.mxu0 0
      %5585 = vmatpush1.bf16.msra.mxu0 0
      %5586 = vmatprep.subr.bf16.mxu0 0
      %5587 = vmatpush1.bf16.msra.mxu0 0
      %5588 = vmatprep.subr.bf16.mxu0 0
      %5589 = vmatpush1.bf16.msra.mxu0 0
      %5590 = vmatprep.mubr.bf16.mxu0 0
      %5591 = vmatmul.mubr.bf16.gmra.mrb[0].mxu0 %v5302
      %v5592 = vpop.f32.mrb[0].mxu0
      %v5593 = vadd.f32 %v4754, %v5592
      %v5594 = vpop.f32.mrb[0].mxu0
      %v5595 = vadd.f32 %v4754, %v5594
      %v5596 = vpop.f32.mrb[0].mxu0
      %v5597 = vpop.f32.mrb[0].mxu0
      %5598 = vdwg.mxu0
      %5599 = vmatprep.subr.bf16.mxu0 %v5105
      %5600 = vmatpush1.bf16.msra.mxu0 %v5104
      %5601 = vmatprep.subr.bf16.mxu0 %v5121
      %5602 = vmatpush1.bf16.msra.mxu0 %v5120
      %5603 = vmatprep.subr.bf16.mxu0 %v5137
      %5604 = vmatpush1.bf16.msra.mxu0 %v5136
      %5605 = vmatprep.subr.bf16.mxu0 %v5153
      %5606 = vmatpush1.bf16.msra.mxu0 %v5152
      %5607 = vmatprep.subr.bf16.mxu0 %v5169
      %5608 = vmatpush1.bf16.msra.mxu0 %v5168
      %5609 = vmatprep.subr.bf16.mxu0 %v5185
      %5610 = vmatpush1.bf16.msra.mxu0 %v5184
      %5611 = vmatprep.subr.bf16.mxu0 %v5345
      %5612 = vmatpush1.bf16.msra.mxu0 %v5342
      %5613 = vmatprep.subr.bf16.mxu0 0
      %5614 = vmatpush1.bf16.msra.mxu0 0
      %5615 = vmatprep.subr.bf16.mxu0 0
      %5616 = vmatpush1.bf16.msra.mxu0 0
      %5617 = vmatprep.subr.bf16.mxu0 0
      %5618 = vmatpush1.bf16.msra.mxu0 0
      %5619 = vmatprep.subr.bf16.mxu0 0
      %5620 = vmatpush1.bf16.msra.mxu0 0
      %5621 = vmatprep.subr.bf16.mxu0 0
      %5622 = vmatpush1.bf16.msra.mxu0 0
      %5623 = vmatprep.subr.bf16.mxu0 0
      %5624 = vmatpush1.bf16.msra.mxu0 0
      %5625 = vmatprep.subr.bf16.mxu0 0
      %5626 = vmatpush1.bf16.msra.mxu0 0
      %5627 = vmatprep.subr.bf16.mxu0 0
      %5628 = vmatpush1.bf16.msra.mxu0 0
      %5629 = vmatprep.subr.bf16.mxu0 0
      %5630 = vmatpush1.bf16.msra.mxu0 0
      %5631 = vmatprep.mubr.bf16.mxu0 0
      %5632 = vmatmul.mubr.bf16.gmra.mrb[0].mxu0 %v5302
      %v5633 = vpop.f32.mrb[0].mxu0
      %v5634 = vadd.f32 %v4754, %v5633
      %v5635 = vpop.f32.mrb[0].mxu0
      %v5636 = vadd.f32 %v4754, %v5635
      %v5637 = vpop.f32.mrb[0].mxu0
      %v5638 = vpop.f32.mrb[0].mxu0
      %5639 = vdwg.mxu0
      %5640 = vmatprep.subr.bf16.mxu0 %v5107
      %5641 = vmatpush1.bf16.msra.mxu0 %v5106
      %5642 = vmatprep.subr.bf16.mxu0 %v5123
      %5643 = vmatpush1.bf16.msra.mxu0 %v5122
      %5644 = vmatprep.subr.bf16.mxu0 %v5139
      %5645 = vmatpush1.bf16.msra.mxu0 %v5138
      %5646 = vmatprep.subr.bf16.mxu0 %v5155
      %5647 = vmatpush1.bf16.msra.mxu0 %v5154
      %5648 = vmatprep.subr.bf16.mxu0 %v5171
      %5649 = vmatpush1.bf16.msra.mxu0 %v5170
      %5650 = vmatprep.subr.bf16.mxu0 %v5187
      %5651 = vmatpush1.bf16.msra.mxu0 %v5186
      %5652 = vmatprep.subr.bf16.mxu0 %v5351
      %5653 = vmatpush1.bf16.msra.mxu0 %v5348
      %5654 = vmatprep.subr.bf16.mxu0 0
      %5655 = vmatpush1.bf16.msra.mxu0 0
      %5656 = vmatprep.subr.bf16.mxu0 0
      %5657 = vmatpush1.bf16.msra.mxu0 0
      %5658 = vmatprep.subr.bf16.mxu0 0
      %5659 = vmatpush1.bf16.msra.mxu0 0
      %5660 = vmatprep.subr.bf16.mxu0 0
      %5661 = vmatpush1.bf16.msra.mxu0 0
      %5662 = vmatprep.subr.bf16.mxu0 0
      %5663 = vmatpush1.bf16.msra.mxu0 0
      %5664 = vmatprep.subr.bf16.mxu0 0
      %5665 = vmatpush1.bf16.msra.mxu0 0
      %5666 = vmatprep.subr.bf16.mxu0 0
      %5667 = vmatpush1.bf16.msra.mxu0 0
      %5668 = vmatprep.subr.bf16.mxu0 0
      %5669 = vmatpush1.bf16.msra.mxu0 0
      %5670 = vmatprep.subr.bf16.mxu0 0
      %5671 = vmatpush1.bf16.msra.mxu0 0
      %5672 = vmatprep.mubr.bf16.mxu0 0
      %5673 = vmatmul.mubr.bf16.gmra.mrb[0].mxu0 %v5302
      %v5674 = vpop.f32.mrb[0].mxu0
      %v5675 = vadd.f32 %v4754, %v5674
      %v5676 = vpop.f32.mrb[0].mxu0
      %v5677 = vadd.f32 %v4754, %v5676
      %v5678 = vpop.f32.mrb[0].mxu0
      %v5679 = vpop.f32.mrb[0].mxu0
      %5680 = vdwg.mxu0
      %v5681 = vmax.f32 %v5388, -1.0
      %v5682 = vmax.f32 %v5390, -1.0
      %v5683 = vmax.f32 %v5429, -1.0
      %v5684 = vmax.f32 %v5431, -1.0
      %v5685 = vmax.f32 %v5470, -1.0
      %v5686 = vmax.f32 %v5472, -1.0
      %v5687 = vmax.f32 %v5511, -1.0
      %v5688 = vmax.f32 %v5513, -1.0
      %v5689 = vmax.f32 %v5552, -1.0
      %v5690 = vmax.f32 %v5554, -1.0
      %v5691 = vmax.f32 %v5593, -1.0
      %v5692 = vmax.f32 %v5595, -1.0
      %v5693 = vmax.f32 %v5634, -1.0
      %v5694 = vmax.f32 %v5636, -1.0
      %v5695 = vmax.f32 %v5675, -1.0
      %v5696 = vmax.f32 %v5677, -1.0
      %v5697 = vmul.f32 %v5681, 0.5
      %v5698 = vmul.f32 %v5682, 0.5
      %v5699 = vmul.f32 %v5683, 0.5
      %v5700 = vmul.f32 %v5684, 0.5
      %v5701 = vmul.f32 %v5685, 0.5
      %v5702 = vmul.f32 %v5686, 0.5
      %v5703 = vmul.f32 %v5687, 0.5
      %v5704 = vmul.f32 %v5688, 0.5
      %v5705 = vmul.f32 %v5689, 0.5
      %v5706 = vmul.f32 %v5690, 0.5
      %v5707 = vmul.f32 %v5691, 0.5
      %v5708 = vmul.f32 %v5692, 0.5
      %v5709 = vmul.f32 %v5693, 0.5
      %v5710 = vmul.f32 %v5694, 0.5
      %v5711 = vmul.f32 %v5695, 0.5
      %v5712 = vmul.f32 %v5696, 0.5
      %5713 = vst [vmem:[%s192] sm:$0xff] %v5697
      %5714 = vst [vmem:[%s192 + $0x8] sm:$0xff] %v5698
      %5715 = vst [vmem:[%s192 + $0x10] sm:$0xff] %v5699
      %5716 = vst [vmem:[%s192 + $0x18] sm:$0xff] %v5700
      %5717 = vst [vmem:[%s192 + $0x20] sm:$0xff] %v5701
      %5718 = vst [vmem:[%s192 + $0x28] sm:$0xff] %v5702
      %5719 = vst [vmem:[%s192 + $0x30] sm:$0xff] %v5703
      %5720 = vst [vmem:[%s192 + $0x38] sm:$0xff] %v5704
      %5721 = vst [vmem:[%s192 + $0x40] sm:$0xff] %v5705
      %5722 = vst [vmem:[%s192 + $0x48] sm:$0xff] %v5706
      %5723 = vst [vmem:[%s192 + $0x50] sm:$0xff] %v5707
      %5724 = vst [vmem:[%s192 + $0x58] sm:$0xff] %v5708
      %5725 = vst [vmem:[%s192 + $0x60] sm:$0xff] %v5709
      %5726 = vst [vmem:[%s192 + $0x68] sm:$0xff] %v5710
      %5727 = vst [vmem:[%s192 + $0x70] sm:$0xff] %v5711
      %5728 = vst [vmem:[%s192 + $0x78] sm:$0xff] %v5712
      %s5729 = smul.u32 16, %s19
      %p5730 = scmp.lt.s32.totalorder %s18, 1
      %s5731 = scalar_select %p5730, %s18, 1
      %p5732 = scmp.lt.s32.totalorder %s5729, 31
      %s5733 = scalar_select %p5732, %s5729, 31
      %s5734 = smul.addr %s5731, 32
      %s5735 = sadd.s32 %s5733, %s5734
      %s5736 = smul.addr %s5735, 8
      %s5737 = scalar_lea.vmem %s3, %s5736
      // Predicated region
      $region33: #{_convt3d_clamp_div_forward.1} parent=31 // pred_check
        %p5738 = pneg %p114
      $region34: #{_convt3d_clamp_div_forward.1} parent=31 // pred_check_branch
        %5740 = sbr.rel (%p5738) target = $region36
      $region35: #{_convt3d_clamp_div_forward.1} parent=31 // pred_region
        %s5741 = smul.u32 16, %s19
      $region36: #{_convt3d_clamp_div_forward.1} parent=31 // pred_fallthru
        _
    $region32: #{_convt3d_clamp_div_forward.1} parent=5 // pred_fallthru
      _
    %p5742 = scmp.le.s32.totalorder 2, %s9
    // Predicated region
    $region37: #{_convt3d_clamp_div_forward.1} parent=5 // pred_check
      %p5743 = pneg %p5742
    $region38: #{_convt3d_clamp_div_forward.1} parent=5 // pred_check_branch
      %5745 = sbr.rel (%p5743) target = $region40
    $region39: #{_convt3d_clamp_div_forward.1} parent=5 // pred_region
      %s5746 = ssub.s32 %s9, 2
      // Predicated region
      $region41: #{_convt3d_clamp_div_forward.1} parent=39 // pred_check
        %p5747 = pneg %p120
      $region42: #{_convt3d_clamp_div_forward.1} parent=39 // pred_check_branch
        %5749 = sbr.rel (%p5747) target = $region44
      $region43: #{_convt3d_clamp_div_forward.1} parent=39 // pred_region
        %s5750 = smul.u32 16, %s21
        %p5751 = scmp.lt.s32.totalorder %s20, 1
        %s5752 = scalar_select %p5751, %s20, 1
        %p5753 = scmp.lt.s32.totalorder %s5750, 31
        %s5754 = scalar_select %p5753, %s5750, 31
        %s5755 = smul.addr %s5752, 32
        %s5756 = sadd.s32 %s5754, %s5755
        %s5757 = smul.addr %s5756, 8
        %s5758 = scalar_lea.vmem %s3, %s5757
      $region44: #{_convt3d_clamp_div_forward.1} parent=39 // pred_fallthru
        _
    $region40: #{_convt3d_clamp_div_forward.1} parent=5 // pred_fallthru
      _
  $region6: #{_convt3d_clamp_div_forward.1} parent=0 // loop_footer
    %s13 = sadd.s32 1, %s9
  $region7: #{_convt3d_clamp_div_forward.1} parent=0 // loop_footer_branch
    %8 = sbr.rel target = $region3
  $region8: #{_convt3d_clamp_div_forward.1} parent=0 // loop_exit
    _

</llo_original>
